<compile_context>
chip_gen: v7x
topology: tpu7x:2x2x1
jax: 0.10.0
libtpu: 0.0.40
codegen_flags: <defaults>
</compile_context>

<pallas_src>
import jax
import jax.numpy as jnp
from jax import lax
from jax.experimental import pallas as pl
from jax.experimental.pallas import tpu as pltpu


def _sigmoid(x):
    # exact rewrite: sigmoid(x) = 0.5 * (tanh(x/2) + 1)  -> single EUP push
    return 0.5 * (jnp.tanh(0.5 * x) + 1.0)


# ----------------------------- Pallas kernel ------------------------------- #
def lstm_mlp_kernel(x_ref,
                    wih0_ref, whh0_ref, b0_ref,
                    wih1_ref, whh1_ref, b1_ref,
                    wih2_ref, whh2_ref, b2_ref,
                    fc1w_ref, fc1b_ref, fc2w_ref, fc2b_ref,
                    out_ref, seq_ref, gx_ref):
    T, B, F = x_ref.shape          # B = padded batch block (multiple of 16)
    H = whh0_ref.shape[0]
    unroll = True if T <= 16 else 8   # full unroll only for short sequences

    def run_layer(x_2d, wih_ref, whh_ref, b_ref, write_seq):
        # ---- hoisted input projection + bias for ALL timesteps ------------- #
        gx = (jnp.dot(x_2d, wih_ref[...],
                      preferred_element_type=jnp.float32)
              + b_ref[...])                                   # (T*B, 4H) f32
        gx_ref[...] = gx.astype(gx_ref.dtype)                 # bf16 scratch

        whh = whh_ref[...]                                    # (H, 4H) bf16

        def step(t, carry):
            h, c = carry                                      # h bf16, c f32
            base = pl.multiple_of(t * B, B)                   # aligned slab vld
            gates = (gx_ref[pl.ds(base, B), :]
                     + jnp.dot(h, whh, preferred_element_type=jnp.float32))
            # gate order permuted to (i, f, o, g) in the wrapper:
            # one sigmoid/tanh push over the contiguous (B, 3H) slab.
            ifo = _sigmoid(gates[:, :3 * H])
            g = jnp.tanh(gates[:, 3 * H:])
            i = ifo[:, 0 * H:1 * H]
            f = ifo[:, 1 * H:2 * H]
            o = ifo[:, 2 * H:3 * H]
            c_new = f * c + i * g
            h_new = (o * jnp.tanh(c_new)).astype(jnp.bfloat16)
            if write_seq:                 # last layer: skip useless vst's
                seq_ref[t] = h_new
            return (h_new, c_new)

        init = (jnp.zeros((B, H), jnp.bfloat16),
                jnp.zeros((B, H), jnp.float32))
        h_last, _ = lax.fori_loop(0, T, step, init, unroll=unroll)
        return h_last

    # Layer 0 reads the input sequence; layers 1/2 read the previous layer's
    # outputs.  Reading seq_ref and then overwriting it inside the same call is
    # safe ONLY because the full gx projection is materialized before the loop.
    h = run_layer(x_ref[...].reshape(T * B, F),
                  wih0_ref, whh0_ref, b0_ref, write_seq=True)
    h = run_layer(seq_ref[...].reshape(T * B, H),
                  wih1_ref, whh1_ref, b1_ref, write_seq=True)
    h = run_layer(seq_ref[...].reshape(T * B, H),
                  wih2_ref, whh2_ref, b2_ref, write_seq=False)

    # dropout(p=0.3) is identity at inference; fc head is lane-dense
    # (zero-padded to 128 lanes) so stores are unmasked.
    h1 = jnp.maximum(
        jnp.dot(h, fc1w_ref[...], preferred_element_type=jnp.float32)
        + fc1b_ref[...], 0.0)
    out_ref[...] = (jnp.dot(h1.astype(jnp.bfloat16), fc2w_ref[...],
                            preferred_element_type=jnp.float32)
                    + fc2b_ref[...]).astype(out_ref.dtype)


# ------------------------------- wrapper ------------------------------------ #
def _round_up(x, m):
    return ((x + m - 1) // m) * m


def _permute_gates(w):
    # PyTorch gate order (i, f, g, o) -> kernel order (i, f, o, g)
    i, f, g, o = jnp.split(w, 4, axis=-1)
    return jnp.concatenate([i, f, o, g], axis=-1)


def _pick_batch_block(b):
    # multiple of 16 (bf16 sublane tile), cap 128 (MXU rows), and aim for
    # >= 2 grid blocks so v7x's two TensorCores both get work.
    b16 = _round_up(b, 16)
    if b16 <= 16:
        return 16
    return max(16, min(128, _round_up((b16 + 1) // 2, 16)))


def forward(params, notes, durations, velocities, intervals, batch_block=None):
    # Embedding lookups (gather) + concat: plain-JAX glue.
    x = jnp.concatenate(
        [params["emb_note"][notes],
         params["emb_dur"][durations],
         params["emb_vel"][velocities],
         params["emb_int"][intervals]], axis=-1)                  # (B, T, 4E)
    B, T, F = x.shape

    H = params["lstm"][0][1].shape[0]
    H4 = params["fc1_w"].shape[1]
    OUT = params["fc2_w"].shape[1]

    # --- adaptive batch block (>=2 grid blocks when B allows) -------------- #
    BB = _pick_batch_block(B) if batch_block is None else batch_block
    B_pad = _round_up(B, BB)
    if B_pad != B:
        x = jnp.pad(x, ((0, B_pad - B), (0, 0), (0, 0)))
    x_tbf = jnp.transpose(x, (1, 0, 2)).astype(jnp.bfloat16)      # (T,B_pad,4E)

    # --- lane-dense fc head: zero-pad fc1/fc2 outputs to 128 lanes ---------- #
    H4p = _round_up(H4, 128)
    OUTp = _round_up(OUT, 128)
    fc1_w = jnp.pad(params["fc1_w"], ((0, 0), (0, H4p - H4))).astype(jnp.bfloat16)
    fc1_b = jnp.pad(params["fc1_b"], ((0, 0), (0, H4p - H4)))
    fc2_w = jnp.pad(params["fc2_w"],
                    ((0, H4p - H4), (0, OUTp - OUT))).astype(jnp.bfloat16)
    fc2_b = jnp.pad(params["fc2_b"], ((0, 0), (0, OUTp - OUT)))

    # --- bf16 weights + gate-permuted layout (one-time prep, XLA side) ------ #
    flat_weights = []
    for (wih, whh, b) in params["lstm"]:
        flat_weights += [_permute_gates(wih).astype(jnp.bfloat16),
                         _permute_gates(whh).astype(jnp.bfloat16),
                         _permute_gates(b)]                      # bias stays f32
    flat_weights += [fc1_w, fc1_b, fc2_w, fc2_b]

    def _full_spec(a):
        idx = (0,) * a.ndim
        return pl.BlockSpec(a.shape, lambda b, _i=idx: _i)

    grid = (B_pad // BB,)
    out_full = pl.pallas_call(
        lstm_mlp_kernel,
        out_shape=jax.ShapeDtypeStruct((B_pad, OUTp), jnp.float32),
        grid=grid,
        in_specs=[pl.BlockSpec((T, BB, F), lambda b: (0, b, 0))]
                 + [_full_spec(w) for w in flat_weights],
        out_specs=pl.BlockSpec((BB, OUTp), lambda b: (b, 0)),
        scratch_shapes=[pltpu.VMEM((T, BB, H), jnp.bfloat16),        # seq buffer
                        pltpu.VMEM((T * BB, 4 * H), jnp.bfloat16)],  # gates_x
        compiler_params=pltpu.CompilerParams(
            dimension_semantics=("parallel",),      # batch blocks across TCs
            vmem_limit_bytes=64 * 1024 * 1024),
    )(x_tbf, *flat_weights)

    return out_full[:B, :OUT]


# --------------------------- pure-JAX reference ------------------------------ #
def reference(params, notes, durations, velocities, intervals):
    x = jnp.concatenate(
        [params["emb_note"][notes],
         params["emb_dur"][durations],
         params["emb_vel"][velocities],
         params["emb_int"][intervals]], axis=-1).astype(jnp.float32)  # (B,T,4E)
    B = x.shape[0]
    h_seq = jnp.transpose(x, (1, 0, 2))                               # (T,B,4E)
    for (wih, whh, b) in params["lstm"]:
        H = whh.shape[0]

        def step(carry, xt):
            h, c = carry
            gates = xt @ wih + h @ whh + b
            i = jax.nn.sigmoid(gates[:, 0 * H:1 * H])
            f = jax.nn.sigmoid(gates[:, 1 * H:2 * H])
            g = jnp.tanh(gates[:, 2 * H:3 * H])
            o = jax.nn.sigmoid(gates[:, 3 * H:4 * H])
            c = f * c + i * g
            h = o * jnp.tanh(c)
            return (h, c), h

        init = (jnp.zeros((B, H), jnp.float32), jnp.zeros((B, H), jnp.float32))
        (_, _), h_seq = lax.scan(step, init, h_seq)
    h_last = h_seq[-1]
    h1 = jnp.maximum(h_last @ params["fc1_w"] + params["fc1_b"], 0.0)
    return h1 @ params["fc2_w"] + params["fc2_b"]


# ------------------------------ param init ----------------------------------- #
def init_params(key, num_notes, num_durations, num_velocities, num_intervals,
                embed_dim, hidden_dim, output_dim, num_layers=3):
    keys = iter(jax.random.split(key, 64))

    def rnd(shape, scale=0.1):
        return (scale * jax.random.normal(next(keys), shape)).astype(jnp.float32)

    params = {
        "emb_note": rnd((num_notes, embed_dim)),
        "emb_dur": rnd((num_durations, embed_dim)),
        "emb_vel": rnd((num_velocities, embed_dim)),
        "emb_int": rnd((num_intervals, embed_dim)),
        "lstm": [],
        "fc1_w": rnd((hidden_dim, hidden_dim // 4)),
        "fc1_b": rnd((1, hidden_dim // 4)),
        "fc2_w": rnd((hidden_dim // 4, output_dim)),
        "fc2_b": rnd((1, output_dim)),
    }
    for layer in range(num_layers):
        d_in = embed_dim * 4 if layer == 0 else hidden_dim
        # stored pre-transposed, PyTorch gate order (i,f,g,o):
        #   gates = x @ W_ih + h @ W_hh + (b_ih + b_hh)
        params["lstm"].append((rnd((d_in, 4 * hidden_dim)),
                               rnd((hidden_dim, 4 * hidden_dim)),
                               rnd((1, 4 * hidden_dim))))
    return params


# --------------------------------- main -------------------------------------- #
if __name__ == "__main__":
    # small, module-consistent shapes
    B, T = 2, 8
    NUM_NOTES, NUM_DUR, NUM_VEL, NUM_INT = 12, 9, 7, 11
    EMBED_DIM, HIDDEN_DIM, OUTPUT_DIM, NUM_LAYERS = 32, 128, 16, 3

    root = jax.random.PRNGKey(0)
    k_p, k_n, k_d, k_v, k_i = jax.random.split(root, 5)

    params = init_params(k_p, NUM_NOTES, NUM_DUR, NUM_VEL, NUM_INT,
                         EMBED_DIM, HIDDEN_DIM, OUTPUT_DIM, NUM_LAYERS)

    notes = jax.random.randint(k_n, (B, T), 0, NUM_NOTES, dtype=jnp.int32)
    durations = jax.random.randint(k_d, (B, T), 0, NUM_DUR, dtype=jnp.int32)
    velocities = jax.random.randint(k_v, (B, T), 0, NUM_VEL, dtype=jnp.int32)
    intervals = jax.random.randint(k_i, (B, T), 0, NUM_INT, dtype=jnp.int32)

    out = forward(params, notes, durations, velocities, intervals)
    out = jax.block_until_ready(out)

    ref = jax.block_until_ready(
        reference(params, notes, durations, velocities, intervals))

    assert out.shape == (B, OUTPUT_DIM), out.shape
    # Tolerance loosened vs the f32 reference to cover bf16 weight/activation
    # quantization inside the kernel (observed error ~1e-3 at these scales).
    assert jnp.allclose(out, ref, atol=1e-2, rtol=1e-2), (
        float(jnp.max(jnp.abs(out - ref))))

    print("KERNEL_OK")
</pallas_src>

<mosaic_0001>
module attributes {stable_mosaic.version = 11 : i64} {
  func.func @lstm_mlp_kernel(%arg0: i32, %arg1: memref<8x16x128xbf16, #tpu.memory_space<vmem>>, %arg2: memref<128x512xbf16, #tpu.memory_space<vmem>>, %arg3: memref<128x512xbf16, #tpu.memory_space<vmem>>, %arg4: memref<1x512xf32, #tpu.memory_space<vmem>>, %arg5: memref<128x512xbf16, #tpu.memory_space<vmem>>, %arg6: memref<128x512xbf16, #tpu.memory_space<vmem>>, %arg7: memref<1x512xf32, #tpu.memory_space<vmem>>, %arg8: memref<128x512xbf16, #tpu.memory_space<vmem>>, %arg9: memref<128x512xbf16, #tpu.memory_space<vmem>>, %arg10: memref<1x512xf32, #tpu.memory_space<vmem>>, %arg11: memref<128x128xbf16, #tpu.memory_space<vmem>>, %arg12: memref<1x128xf32, #tpu.memory_space<vmem>>, %arg13: memref<128x128xbf16, #tpu.memory_space<vmem>>, %arg14: memref<1x128xf32, #tpu.memory_space<vmem>>, %arg15: memref<16x128xf32, #tpu.memory_space<vmem>>, %arg16: memref<8x16x128xbf16, #tpu.memory_space<vmem>>, %arg17: memref<128x512xbf16, #tpu.memory_space<vmem>>) attributes {dimension_semantics = [#tpu.dimension_semantics<parallel>], iteration_bounds = array<i64: 1>, scalar_prefetch = 0 : i64, scratch_operands = 2 : i64, tpu.core_type = #tpu.core_type<tc>, window_params = [{transform_indices = @transform_0, window_bounds = array<i64: 8, 16, 128>}, {pipeline_mode = #tpu.pipeline_mode<synchronous>, transform_indices = @transform_1, window_bounds = array<i64: 128, 512>}, {pipeline_mode = #tpu.pipeline_mode<synchronous>, transform_indices = @transform_2, window_bounds = array<i64: 128, 512>}, {pipeline_mode = #tpu.pipeline_mode<synchronous>, transform_indices = @transform_3, window_bounds = array<i64: 1, 512>}, {pipeline_mode = #tpu.pipeline_mode<synchronous>, transform_indices = @transform_4, window_bounds = array<i64: 128, 512>}, {pipeline_mode = #tpu.pipeline_mode<synchronous>, transform_indices = @transform_5, window_bounds = array<i64: 128, 512>}, {pipeline_mode = #tpu.pipeline_mode<synchronous>, transform_indices = @transform_6, window_bounds = array<i64: 1, 512>}, {pipeline_mode = #tpu.pipeline_mode<synchronous>, transform_indices = @transform_7, window_bounds = array<i64: 128, 512>}, {pipeline_mode = #tpu.pipeline_mode<synchronous>, transform_indices = @transform_8, window_bounds = array<i64: 128, 512>}, {pipeline_mode = #tpu.pipeline_mode<synchronous>, transform_indices = @transform_9, window_bounds = array<i64: 1, 512>}, {pipeline_mode = #tpu.pipeline_mode<synchronous>, transform_indices = @transform_10, window_bounds = array<i64: 128, 128>}, {pipeline_mode = #tpu.pipeline_mode<synchronous>, transform_indices = @transform_11, window_bounds = array<i64: 1, 128>}, {pipeline_mode = #tpu.pipeline_mode<synchronous>, transform_indices = @transform_12, window_bounds = array<i64: 128, 128>}, {pipeline_mode = #tpu.pipeline_mode<synchronous>, transform_indices = @transform_13, window_bounds = array<i64: 1, 128>}, {transform_indices = @transform_14, window_bounds = array<i64: 16, 128>}]} {
    %c0 = arith.constant 0 : index
    %c0_0 = arith.constant 0 : index
    %c0_1 = arith.constant 0 : index
    %0 = vector.load %arg1[%c0, %c0_0, %c0_1] : memref<8x16x128xbf16, #tpu.memory_space<vmem>>, vector<8x16x128xbf16>
    %1 = vector.shape_cast %0 : vector<8x16x128xbf16> to vector<128x128xbf16>
    %c0_2 = arith.constant 0 : index
    %c0_3 = arith.constant 0 : index
    %2 = vector.load %arg2[%c0_2, %c0_3] : memref<128x512xbf16, #tpu.memory_space<vmem>>, vector<128x512xbf16>
    %cst = arith.constant dense<0.000000e+00> : vector<128x512xf32>
    %3 = tpu.matmul %1, %2, %cst {dimension_numbers = #tpu.dot_dimension_numbers<[1], [0], [0], [1], [0, 0, 1, 1], [], []>} : vector<128x128xbf16>, vector<128x512xbf16>, vector<128x512xf32> -> vector<128x512xf32>
    %c0_4 = arith.constant 0 : index
    %c0_5 = arith.constant 0 : index
    %4 = vector.load %arg4[%c0_4, %c0_5] : memref<1x512xf32, #tpu.memory_space<vmem>>, vector<1x512xf32>
    %5 = vector.broadcast %4 : vector<1x512xf32> to vector<128x512xf32>
    %6 = arith.addf %3, %5 : vector<128x512xf32>
    %7 = arith.truncf %6 : vector<128x512xf32> to vector<128x512xbf16>
    %c0_6 = arith.constant 0 : index
    %c0_7 = arith.constant 0 : index
    %8 = vector.load %arg17[%c0_6, %c0_7] : memref<128x512xbf16, #tpu.memory_space<vmem>>, vector<128x512xbf16>
    tpu.vector_store %arg17[%c0_6, %c0_7], %7 {strides = array<i32>} : memref<128x512xbf16, #tpu.memory_space<vmem>>, vector<128x512xbf16>,
    %c0_8 = arith.constant 0 : index
    %c0_9 = arith.constant 0 : index
    %9 = vector.load %arg3[%c0_8, %c0_9] : memref<128x512xbf16, #tpu.memory_space<vmem>>, vector<128x512xbf16>
    %cst_10 = arith.constant 0.000000e+00 : bf16
    %10 = vector.broadcast %cst_10 : bf16 to vector<16x128xbf16>
    %cst_11 = arith.constant 0.000000e+00 : f32
    %11 = vector.broadcast %cst_11 : f32 to vector<16x128xf32>
    %c0_i32 = arith.constant 0 : i32
    %c16_i32 = arith.constant 16 : i32
    %12 = arith.muli %c0_i32, %c16_i32 : i32
    %13 = tpu.assume_multiple %12, 16 : i32
    %14 = arith.index_cast %13 : i32 to index
    %c0_12 = arith.constant 0 : index
    %15 = vector.load %arg17[%14, %c0_12] : memref<128x512xbf16, #tpu.memory_space<vmem>>, vector<16x512xbf16>
    %cst_13 = arith.constant dense<0.000000e+00> : vector<16x512xf32>
    %16 = tpu.matmul %10, %9, %cst_13 {dimension_numbers = #tpu.dot_dimension_numbers<[1], [0], [0], [1], [0, 0, 1, 1], [], []>} : vector<16x128xbf16>, vector<128x512xbf16>, vector<16x512xf32> -> vector<16x512xf32>
    %17 = arith.extf %15 : vector<16x512xbf16> to vector<16x512xf32>
    %18 = arith.addf %17, %16 : vector<16x512xf32>
    %19 = vector.extract_strided_slice %18 {offsets = [0, 0], sizes = [16, 384], strides = [1, 1]} : vector<16x512xf32> to vector<16x384xf32>
    %cst_14 = arith.constant 5.000000e-01 : f32
    %20 = vector.broadcast %cst_14 : f32 to vector<16x384xf32>
    %21 = arith.mulf %20, %19 : vector<16x384xf32>
    %22 = math.tanh %21 : vector<16x384xf32>
    %cst_15 = arith.constant 1.000000e+00 : f32
    %23 = vector.broadcast %cst_15 : f32 to vector<16x384xf32>
    %24 = arith.addf %22, %23 : vector<16x384xf32>
    %cst_16 = arith.constant 5.000000e-01 : f32
    %25 = vector.broadcast %cst_16 : f32 to vector<16x384xf32>
    %26 = arith.mulf %25, %24 : vector<16x384xf32>
    %27 = vector.extract_strided_slice %18 {offsets = [0, 384], sizes = [16, 128], strides = [1, 1]} : vector<16x512xf32> to vector<16x128xf32>
    %28 = math.tanh %27 : vector<16x128xf32>
    %29 = vector.extract_strided_slice %26 {offsets = [0, 0], sizes = [16, 128], strides = [1, 1]} : vector<16x384xf32> to vector<16x128xf32>
    %30 = vector.extract_strided_slice %26 {offsets = [0, 128], sizes = [16, 128], strides = [1, 1]} : vector<16x384xf32> to vector<16x128xf32>
    %31 = vector.extract_strided_slice %26 {offsets = [0, 256], sizes = [16, 128], strides = [1, 1]} : vector<16x384xf32> to vector<16x128xf32>
    %32 = arith.mulf %30, %11 : vector<16x128xf32>
    %33 = arith.mulf %29, %28 : vector<16x128xf32>
    %34 = arith.addf %32, %33 : vector<16x128xf32>
    %35 = math.tanh %34 : vector<16x128xf32>
    %36 = arith.mulf %31, %35 : vector<16x128xf32>
    %37 = arith.truncf %36 : vector<16x128xf32> to vector<16x128xbf16>
    %38 = arith.index_cast %c0_i32 : i32 to index
    %c0_17 = arith.constant 0 : index
    %c0_18 = arith.constant 0 : index
    %39 = vector.load %arg16[%38, %c0_17, %c0_18] : memref<8x16x128xbf16, #tpu.memory_space<vmem>>, vector<1x16x128xbf16>
    %40 = vector.shape_cast %39 : vector<1x16x128xbf16> to vector<16x128xbf16>
    %41 = vector.shape_cast %37 : vector<16x128xbf16> to vector<1x16x128xbf16>
    tpu.vector_store %arg16[%38, %c0_17, %c0_18], %41 {strides = array<i32>} : memref<8x16x128xbf16, #tpu.memory_space<vmem>>, vector<1x16x128xbf16>,
    %c1_i32 = arith.constant 1 : i32
    %c16_i32_19 = arith.constant 16 : i32
    %42 = arith.muli %c1_i32, %c16_i32_19 : i32
    %43 = tpu.assume_multiple %42, 16 : i32
    %44 = arith.index_cast %43 : i32 to index
    %c0_20 = arith.constant 0 : index
    %45 = vector.load %arg17[%44, %c0_20] : memref<128x512xbf16, #tpu.memory_space<vmem>>, vector<16x512xbf16>
    %cst_21 = arith.constant dense<0.000000e+00> : vector<16x512xf32>
    %46 = tpu.matmul %37, %9, %cst_21 {dimension_numbers = #tpu.dot_dimension_numbers<[1], [0], [0], [1], [0, 0, 1, 1], [], []>} : vector<16x128xbf16>, vector<128x512xbf16>, vector<16x512xf32> -> vector<16x512xf32>
    %47 = arith.extf %45 : vector<16x512xbf16> to vector<16x512xf32>
    %48 = arith.addf %47, %46 : vector<16x512xf32>
    %49 = vector.extract_strided_slice %48 {offsets = [0, 0], sizes = [16, 384], strides = [1, 1]} : vector<16x512xf32> to vector<16x384xf32>
    %cst_22 = arith.constant 5.000000e-01 : f32
    %50 = vector.broadcast %cst_22 : f32 to vector<16x384xf32>
    %51 = arith.mulf %50, %49 : vector<16x384xf32>
    %52 = math.tanh %51 : vector<16x384xf32>
    %cst_23 = arith.constant 1.000000e+00 : f32
    %53 = vector.broadcast %cst_23 : f32 to vector<16x384xf32>
    %54 = arith.addf %52, %53 : vector<16x384xf32>
    %cst_24 = arith.constant 5.000000e-01 : f32
    %55 = vector.broadcast %cst_24 : f32 to vector<16x384xf32>
    %56 = arith.mulf %55, %54 : vector<16x384xf32>
    %57 = vector.extract_strided_slice %48 {offsets = [0, 384], sizes = [16, 128], strides = [1, 1]} : vector<16x512xf32> to vector<16x128xf32>
    %58 = math.tanh %57 : vector<16x128xf32>
    %59 = vector.extract_strided_slice %56 {offsets = [0, 0], sizes = [16, 128], strides = [1, 1]} : vector<16x384xf32> to vector<16x128xf32>
    %60 = vector.extract_strided_slice %56 {offsets = [0, 128], sizes = [16, 128], strides = [1, 1]} : vector<16x384xf32> to vector<16x128xf32>
    %61 = vector.extract_strided_slice %56 {offsets = [0, 256], sizes = [16, 128], strides = [1, 1]} : vector<16x384xf32> to vector<16x128xf32>
    %62 = arith.mulf %60, %34 : vector<16x128xf32>
    %63 = arith.mulf %59, %58 : vector<16x128xf32>
    %64 = arith.addf %62, %63 : vector<16x128xf32>
    %65 = math.tanh %64 : vector<16x128xf32>
    %66 = arith.mulf %61, %65 : vector<16x128xf32>
    %67 = arith.truncf %66 : vector<16x128xf32> to vector<16x128xbf16>
    %68 = arith.index_cast %c1_i32 : i32 to index
    %c0_25 = arith.constant 0 : index
    %c0_26 = arith.constant 0 : index
    %69 = vector.load %arg16[%68, %c0_25, %c0_26] : memref<8x16x128xbf16, #tpu.memory_space<vmem>>, vector<1x16x128xbf16>
    %70 = vector.shape_cast %69 : vector<1x16x128xbf16> to vector<16x128xbf16>
    %71 = vector.shape_cast %67 : vector<16x128xbf16> to vector<1x16x128xbf16>
    tpu.vector_store %arg16[%68, %c0_25, %c0_26], %71 {strides = array<i32>} : memref<8x16x128xbf16, #tpu.memory_space<vmem>>, vector<1x16x128xbf16>,
    %c2_i32 = arith.constant 2 : i32
    %c16_i32_27 = arith.constant 16 : i32
    %72 = arith.muli %c2_i32, %c16_i32_27 : i32
    %73 = tpu.assume_multiple %72, 16 : i32
    %74 = arith.index_cast %73 : i32 to index
    %c0_28 = arith.constant 0 : index
    %75 = vector.load %arg17[%74, %c0_28] : memref<128x512xbf16, #tpu.memory_space<vmem>>, vector<16x512xbf16>
    %cst_29 = arith.constant dense<0.000000e+00> : vector<16x512xf32>
    %76 = tpu.matmul %67, %9, %cst_29 {dimension_numbers = #tpu.dot_dimension_numbers<[1], [0], [0], [1], [0, 0, 1, 1], [], []>} : vector<16x128xbf16>, vector<128x512xbf16>, vector<16x512xf32> -> vector<16x512xf32>
    %77 = arith.extf %75 : vector<16x512xbf16> to vector<16x512xf32>
    %78 = arith.addf %77, %76 : vector<16x512xf32>
    %79 = vector.extract_strided_slice %78 {offsets = [0, 0], sizes = [16, 384], strides = [1, 1]} : vector<16x512xf32> to vector<16x384xf32>
    %cst_30 = arith.constant 5.000000e-01 : f32
    %80 = vector.broadcast %cst_30 : f32 to vector<16x384xf32>
    %81 = arith.mulf %80, %79 : vector<16x384xf32>
    %82 = math.tanh %81 : vector<16x384xf32>
    %cst_31 = arith.constant 1.000000e+00 : f32
    %83 = vector.broadcast %cst_31 : f32 to vector<16x384xf32>
    %84 = arith.addf %82, %83 : vector<16x384xf32>
    %cst_32 = arith.constant 5.000000e-01 : f32
    %85 = vector.broadcast %cst_32 : f32 to vector<16x384xf32>
    %86 = arith.mulf %85, %84 : vector<16x384xf32>
    %87 = vector.extract_strided_slice %78 {offsets = [0, 384], sizes = [16, 128], strides = [1, 1]} : vector<16x512xf32> to vector<16x128xf32>
    %88 = math.tanh %87 : vector<16x128xf32>
    %89 = vector.extract_strided_slice %86 {offsets = [0, 0], sizes = [16, 128], strides = [1, 1]} : vector<16x384xf32> to vector<16x128xf32>
    %90 = vector.extract_strided_slice %86 {offsets = [0, 128], sizes = [16, 128], strides = [1, 1]} : vector<16x384xf32> to vector<16x128xf32>
    %91 = vector.extract_strided_slice %86 {offsets = [0, 256], sizes = [16, 128], strides = [1, 1]} : vector<16x384xf32> to vector<16x128xf32>
    %92 = arith.mulf %90, %64 : vector<16x128xf32>
    %93 = arith.mulf %89, %88 : vector<16x128xf32>
    %94 = arith.addf %92, %93 : vector<16x128xf32>
    %95 = math.tanh %94 : vector<16x128xf32>
    %96 = arith.mulf %91, %95 : vector<16x128xf32>
    %97 = arith.truncf %96 : vector<16x128xf32> to vector<16x128xbf16>
    %98 = arith.index_cast %c2_i32 : i32 to index
    %c0_33 = arith.constant 0 : index
    %c0_34 = arith.constant 0 : index
    %99 = vector.load %arg16[%98, %c0_33, %c0_34] : memref<8x16x128xbf16, #tpu.memory_space<vmem>>, vector<1x16x128xbf16>
    %100 = vector.shape_cast %99 : vector<1x16x128xbf16> to vector<16x128xbf16>
    %101 = vector.shape_cast %97 : vector<16x128xbf16> to vector<1x16x128xbf16>
    tpu.vector_store %arg16[%98, %c0_33, %c0_34], %101 {strides = array<i32>} : memref<8x16x128xbf16, #tpu.memory_space<vmem>>, vector<1x16x128xbf16>,
    %c3_i32 = arith.constant 3 : i32
    %c16_i32_35 = arith.constant 16 : i32
    %102 = arith.muli %c3_i32, %c16_i32_35 : i32
    %103 = tpu.assume_multiple %102, 16 : i32
    %104 = arith.index_cast %103 : i32 to index
    %c0_36 = arith.constant 0 : index
    %105 = vector.load %arg17[%104, %c0_36] : memref<128x512xbf16, #tpu.memory_space<vmem>>, vector<16x512xbf16>
    %cst_37 = arith.constant dense<0.000000e+00> : vector<16x512xf32>
    %106 = tpu.matmul %97, %9, %cst_37 {dimension_numbers = #tpu.dot_dimension_numbers<[1], [0], [0], [1], [0, 0, 1, 1], [], []>} : vector<16x128xbf16>, vector<128x512xbf16>, vector<16x512xf32> -> vector<16x512xf32>
    %107 = arith.extf %105 : vector<16x512xbf16> to vector<16x512xf32>
    %108 = arith.addf %107, %106 : vector<16x512xf32>
    %109 = vector.extract_strided_slice %108 {offsets = [0, 0], sizes = [16, 384], strides = [1, 1]} : vector<16x512xf32> to vector<16x384xf32>
    %cst_38 = arith.constant 5.000000e-01 : f32
    %110 = vector.broadcast %cst_38 : f32 to vector<16x384xf32>
    %111 = arith.mulf %110, %109 : vector<16x384xf32>
    %112 = math.tanh %111 : vector<16x384xf32>
    %cst_39 = arith.constant 1.000000e+00 : f32
    %113 = vector.broadcast %cst_39 : f32 to vector<16x384xf32>
    %114 = arith.addf %112, %113 : vector<16x384xf32>
    %cst_40 = arith.constant 5.000000e-01 : f32
    %115 = vector.broadcast %cst_40 : f32 to vector<16x384xf32>
    %116 = arith.mulf %115, %114 : vector<16x384xf32>
    %117 = vector.extract_strided_slice %108 {offsets = [0, 384], sizes = [16, 128], strides = [1, 1]} : vector<16x512xf32> to vector<16x128xf32>
    %118 = math.tanh %117 : vector<16x128xf32>
    %119 = vector.extract_strided_slice %116 {offsets = [0, 0], sizes = [16, 128], strides = [1, 1]} : vector<16x384xf32> to vector<16x128xf32>
    %120 = vector.extract_strided_slice %116 {offsets = [0, 128], sizes = [16, 128], strides = [1, 1]} : vector<16x384xf32> to vector<16x128xf32>
    %121 = vector.extract_strided_slice %116 {offsets = [0, 256], sizes = [16, 128], strides = [1, 1]} : vector<16x384xf32> to vector<16x128xf32>
    %122 = arith.mulf %120, %94 : vector<16x128xf32>
    %123 = arith.mulf %119, %118 : vector<16x128xf32>
    %124 = arith.addf %122, %123 : vector<16x128xf32>
    %125 = math.tanh %124 : vector<16x128xf32>
    %126 = arith.mulf %121, %125 : vector<16x128xf32>
    %127 = arith.truncf %126 : vector<16x128xf32> to vector<16x128xbf16>
    %128 = arith.index_cast %c3_i32 : i32 to index
    %c0_41 = arith.constant 0 : index
    %c0_42 = arith.constant 0 : index
    %129 = vector.load %arg16[%128, %c0_41, %c0_42] : memref<8x16x128xbf16, #tpu.memory_space<vmem>>, vector<1x16x128xbf16>
    %130 = vector.shape_cast %129 : vector<1x16x128xbf16> to vector<16x128xbf16>
    %131 = vector.shape_cast %127 : vector<16x128xbf16> to vector<1x16x128xbf16>
    tpu.vector_store %arg16[%128, %c0_41, %c0_42], %131 {strides = array<i32>} : memref<8x16x128xbf16, #tpu.memory_space<vmem>>, vector<1x16x128xbf16>,
    %c4_i32 = arith.constant 4 : i32
    %c16_i32_43 = arith.constant 16 : i32
    %132 = arith.muli %c4_i32, %c16_i32_43 : i32
    %133 = tpu.assume_multiple %132, 16 : i32
    %134 = arith.index_cast %133 : i32 to index
    %c0_44 = arith.constant 0 : index
    %135 = vector.load %arg17[%134, %c0_44] : memref<128x512xbf16, #tpu.memory_space<vmem>>, vector<16x512xbf16>
    %cst_45 = arith.constant dense<0.000000e+00> : vector<16x512xf32>
    %136 = tpu.matmul %127, %9, %cst_45 {dimension_numbers = #tpu.dot_dimension_numbers<[1], [0], [0], [1], [0, 0, 1, 1], [], []>} : vector<16x128xbf16>, vector<128x512xbf16>, vector<16x512xf32> -> vector<16x512xf32>
    %137 = arith.extf %135 : vector<16x512xbf16> to vector<16x512xf32>
    %138 = arith.addf %137, %136 : vector<16x512xf32>
    %139 = vector.extract_strided_slice %138 {offsets = [0, 0], sizes = [16, 384], strides = [1, 1]} : vector<16x512xf32> to vector<16x384xf32>
    %cst_46 = arith.constant 5.000000e-01 : f32
    %140 = vector.broadcast %cst_46 : f32 to vector<16x384xf32>
    %141 = arith.mulf %140, %139 : vector<16x384xf32>
    %142 = math.tanh %141 : vector<16x384xf32>
    %cst_47 = arith.constant 1.000000e+00 : f32
    %143 = vector.broadcast %cst_47 : f32 to vector<16x384xf32>
    %144 = arith.addf %142, %143 : vector<16x384xf32>
    %cst_48 = arith.constant 5.000000e-01 : f32
    %145 = vector.broadcast %cst_48 : f32 to vector<16x384xf32>
    %146 = arith.mulf %145, %144 : vector<16x384xf32>
    %147 = vector.extract_strided_slice %138 {offsets = [0, 384], sizes = [16, 128], strides = [1, 1]} : vector<16x512xf32> to vector<16x128xf32>
    %148 = math.tanh %147 : vector<16x128xf32>
    %149 = vector.extract_strided_slice %146 {offsets = [0, 0], sizes = [16, 128], strides = [1, 1]} : vector<16x384xf32> to vector<16x128xf32>
    %150 = vector.extract_strided_slice %146 {offsets = [0, 128], sizes = [16, 128], strides = [1, 1]} : vector<16x384xf32> to vector<16x128xf32>
    %151 = vector.extract_strided_slice %146 {offsets = [0, 256], sizes = [16, 128], strides = [1, 1]} : vector<16x384xf32> to vector<16x128xf32>
    %152 = arith.mulf %150, %124 : vector<16x128xf32>
    %153 = arith.mulf %149, %148 : vector<16x128xf32>
    %154 = arith.addf %152, %153 : vector<16x128xf32>
    %155 = math.tanh %154 : vector<16x128xf32>
    %156 = arith.mulf %151, %155 : vector<16x128xf32>
    %157 = arith.truncf %156 : vector<16x128xf32> to vector<16x128xbf16>
    %158 = arith.index_cast %c4_i32 : i32 to index
    %c0_49 = arith.constant 0 : index
    %c0_50 = arith.constant 0 : index
    %159 = vector.load %arg16[%158, %c0_49, %c0_50] : memref<8x16x128xbf16, #tpu.memory_space<vmem>>, vector<1x16x128xbf16>
    %160 = vector.shape_cast %159 : vector<1x16x128xbf16> to vector<16x128xbf16>
    %161 = vector.shape_cast %157 : vector<16x128xbf16> to vector<1x16x128xbf16>
    tpu.vector_store %arg16[%158, %c0_49, %c0_50], %161 {strides = array<i32>} : memref<8x16x128xbf16, #tpu.memory_space<vmem>>, vector<1x16x128xbf16>,
    %c5_i32 = arith.constant 5 : i32
    %c16_i32_51 = arith.constant 16 : i32
    %162 = arith.muli %c5_i32, %c16_i32_51 : i32
    %163 = tpu.assume_multiple %162, 16 : i32
    %164 = arith.index_cast %163 : i32 to index
    %c0_52 = arith.constant 0 : index
    %165 = vector.load %arg17[%164, %c0_52] : memref<128x512xbf16, #tpu.memory_space<vmem>>, vector<16x512xbf16>
    %cst_53 = arith.constant dense<0.000000e+00> : vector<16x512xf32>
    %166 = tpu.matmul %157, %9, %cst_53 {dimension_numbers = #tpu.dot_dimension_numbers<[1], [0], [0], [1], [0, 0, 1, 1], [], []>} : vector<16x128xbf16>, vector<128x512xbf16>, vector<16x512xf32> -> vector<16x512xf32>
    %167 = arith.extf %165 : vector<16x512xbf16> to vector<16x512xf32>
    %168 = arith.addf %167, %166 : vector<16x512xf32>
    %169 = vector.extract_strided_slice %168 {offsets = [0, 0], sizes = [16, 384], strides = [1, 1]} : vector<16x512xf32> to vector<16x384xf32>
    %cst_54 = arith.constant 5.000000e-01 : f32
    %170 = vector.broadcast %cst_54 : f32 to vector<16x384xf32>
    %171 = arith.mulf %170, %169 : vector<16x384xf32>
    %172 = math.tanh %171 : vector<16x384xf32>
    %cst_55 = arith.constant 1.000000e+00 : f32
    %173 = vector.broadcast %cst_55 : f32 to vector<16x384xf32>
    %174 = arith.addf %172, %173 : vector<16x384xf32>
    %cst_56 = arith.constant 5.000000e-01 : f32
    %175 = vector.broadcast %cst_56 : f32 to vector<16x384xf32>
    %176 = arith.mulf %175, %174 : vector<16x384xf32>
    %177 = vector.extract_strided_slice %168 {offsets = [0, 384], sizes = [16, 128], strides = [1, 1]} : vector<16x512xf32> to vector<16x128xf32>
    %178 = math.tanh %177 : vector<16x128xf32>
    %179 = vector.extract_strided_slice %176 {offsets = [0, 0], sizes = [16, 128], strides = [1, 1]} : vector<16x384xf32> to vector<16x128xf32>
    %180 = vector.extract_strided_slice %176 {offsets = [0, 128], sizes = [16, 128], strides = [1, 1]} : vector<16x384xf32> to vector<16x128xf32>
    %181 = vector.extract_strided_slice %176 {offsets = [0, 256], sizes = [16, 128], strides = [1, 1]} : vector<16x384xf32> to vector<16x128xf32>
    %182 = arith.mulf %180, %154 : vector<16x128xf32>
    %183 = arith.mulf %179, %178 : vector<16x128xf32>
    %184 = arith.addf %182, %183 : vector<16x128xf32>
    %185 = math.tanh %184 : vector<16x128xf32>
    %186 = arith.mulf %181, %185 : vector<16x128xf32>
    %187 = arith.truncf %186 : vector<16x128xf32> to vector<16x128xbf16>
    %188 = arith.index_cast %c5_i32 : i32 to index
    %c0_57 = arith.constant 0 : index
    %c0_58 = arith.constant 0 : index
    %189 = vector.load %arg16[%188, %c0_57, %c0_58] : memref<8x16x128xbf16, #tpu.memory_space<vmem>>, vector<1x16x128xbf16>
    %190 = vector.shape_cast %189 : vector<1x16x128xbf16> to vector<16x128xbf16>
    %191 = vector.shape_cast %187 : vector<16x128xbf16> to vector<1x16x128xbf16>
    tpu.vector_store %arg16[%188, %c0_57, %c0_58], %191 {strides = array<i32>} : memref<8x16x128xbf16, #tpu.memory_space<vmem>>, vector<1x16x128xbf16>,
    %c6_i32 = arith.constant 6 : i32
    %c16_i32_59 = arith.constant 16 : i32
    %192 = arith.muli %c6_i32, %c16_i32_59 : i32
    %193 = tpu.assume_multiple %192, 16 : i32
    %194 = arith.index_cast %193 : i32 to index
    %c0_60 = arith.constant 0 : index
    %195 = vector.load %arg17[%194, %c0_60] : memref<128x512xbf16, #tpu.memory_space<vmem>>, vector<16x512xbf16>
    %cst_61 = arith.constant dense<0.000000e+00> : vector<16x512xf32>
    %196 = tpu.matmul %187, %9, %cst_61 {dimension_numbers = #tpu.dot_dimension_numbers<[1], [0], [0], [1], [0, 0, 1, 1], [], []>} : vector<16x128xbf16>, vector<128x512xbf16>, vector<16x512xf32> -> vector<16x512xf32>
    %197 = arith.extf %195 : vector<16x512xbf16> to vector<16x512xf32>
    %198 = arith.addf %197, %196 : vector<16x512xf32>
    %199 = vector.extract_strided_slice %198 {offsets = [0, 0], sizes = [16, 384], strides = [1, 1]} : vector<16x512xf32> to vector<16x384xf32>
    %cst_62 = arith.constant 5.000000e-01 : f32
    %200 = vector.broadcast %cst_62 : f32 to vector<16x384xf32>
    %201 = arith.mulf %200, %199 : vector<16x384xf32>
    %202 = math.tanh %201 : vector<16x384xf32>
    %cst_63 = arith.constant 1.000000e+00 : f32
    %203 = vector.broadcast %cst_63 : f32 to vector<16x384xf32>
    %204 = arith.addf %202, %203 : vector<16x384xf32>
    %cst_64 = arith.constant 5.000000e-01 : f32
    %205 = vector.broadcast %cst_64 : f32 to vector<16x384xf32>
    %206 = arith.mulf %205, %204 : vector<16x384xf32>
    %207 = vector.extract_strided_slice %198 {offsets = [0, 384], sizes = [16, 128], strides = [1, 1]} : vector<16x512xf32> to vector<16x128xf32>
    %208 = math.tanh %207 : vector<16x128xf32>
    %209 = vector.extract_strided_slice %206 {offsets = [0, 0], sizes = [16, 128], strides = [1, 1]} : vector<16x384xf32> to vector<16x128xf32>
    %210 = vector.extract_strided_slice %206 {offsets = [0, 128], sizes = [16, 128], strides = [1, 1]} : vector<16x384xf32> to vector<16x128xf32>
    %211 = vector.extract_strided_slice %206 {offsets = [0, 256], sizes = [16, 128], strides = [1, 1]} : vector<16x384xf32> to vector<16x128xf32>
    %212 = arith.mulf %210, %184 : vector<16x128xf32>
    %213 = arith.mulf %209, %208 : vector<16x128xf32>
    %214 = arith.addf %212, %213 : vector<16x128xf32>
    %215 = math.tanh %214 : vector<16x128xf32>
    %216 = arith.mulf %211, %215 : vector<16x128xf32>
    %217 = arith.truncf %216 : vector<16x128xf32> to vector<16x128xbf16>
    %218 = arith.index_cast %c6_i32 : i32 to index
    %c0_65 = arith.constant 0 : index
    %c0_66 = arith.constant 0 : index
    %219 = vector.load %arg16[%218, %c0_65, %c0_66] : memref<8x16x128xbf16, #tpu.memory_space<vmem>>, vector<1x16x128xbf16>
    %220 = vector.shape_cast %219 : vector<1x16x128xbf16> to vector<16x128xbf16>
    %221 = vector.shape_cast %217 : vector<16x128xbf16> to vector<1x16x128xbf16>
    tpu.vector_store %arg16[%218, %c0_65, %c0_66], %221 {strides = array<i32>} : memref<8x16x128xbf16, #tpu.memory_space<vmem>>, vector<1x16x128xbf16>,
    %c7_i32 = arith.constant 7 : i32
    %c16_i32_67 = arith.constant 16 : i32
    %222 = arith.muli %c7_i32, %c16_i32_67 : i32
    %223 = tpu.assume_multiple %222, 16 : i32
    %224 = arith.index_cast %223 : i32 to index
    %c0_68 = arith.constant 0 : index
    %225 = vector.load %arg17[%224, %c0_68] : memref<128x512xbf16, #tpu.memory_space<vmem>>, vector<16x512xbf16>
    %cst_69 = arith.constant dense<0.000000e+00> : vector<16x512xf32>
    %226 = tpu.matmul %217, %9, %cst_69 {dimension_numbers = #tpu.dot_dimension_numbers<[1], [0], [0], [1], [0, 0, 1, 1], [], []>} : vector<16x128xbf16>, vector<128x512xbf16>, vector<16x512xf32> -> vector<16x512xf32>
    %227 = arith.extf %225 : vector<16x512xbf16> to vector<16x512xf32>
    %228 = arith.addf %227, %226 : vector<16x512xf32>
    %229 = vector.extract_strided_slice %228 {offsets = [0, 0], sizes = [16, 384], strides = [1, 1]} : vector<16x512xf32> to vector<16x384xf32>
    %cst_70 = arith.constant 5.000000e-01 : f32
    %230 = vector.broadcast %cst_70 : f32 to vector<16x384xf32>
    %231 = arith.mulf %230, %229 : vector<16x384xf32>
    %232 = math.tanh %231 : vector<16x384xf32>
    %cst_71 = arith.constant 1.000000e+00 : f32
    %233 = vector.broadcast %cst_71 : f32 to vector<16x384xf32>
    %234 = arith.addf %232, %233 : vector<16x384xf32>
    %cst_72 = arith.constant 5.000000e-01 : f32
    %235 = vector.broadcast %cst_72 : f32 to vector<16x384xf32>
    %236 = arith.mulf %235, %234 : vector<16x384xf32>
    %237 = vector.extract_strided_slice %228 {offsets = [0, 384], sizes = [16, 128], strides = [1, 1]} : vector<16x512xf32> to vector<16x128xf32>
    %238 = math.tanh %237 : vector<16x128xf32>
    %239 = vector.extract_strided_slice %236 {offsets = [0, 0], sizes = [16, 128], strides = [1, 1]} : vector<16x384xf32> to vector<16x128xf32>
    %240 = vector.extract_strided_slice %236 {offsets = [0, 128], sizes = [16, 128], strides = [1, 1]} : vector<16x384xf32> to vector<16x128xf32>
    %241 = vector.extract_strided_slice %236 {offsets = [0, 256], sizes = [16, 128], strides = [1, 1]} : vector<16x384xf32> to vector<16x128xf32>
    %242 = arith.mulf %240, %214 : vector<16x128xf32>
    %243 = arith.mulf %239, %238 : vector<16x128xf32>
    %244 = arith.addf %242, %243 : vector<16x128xf32>
    %245 = math.tanh %244 : vector<16x128xf32>
    %246 = arith.mulf %241, %245 : vector<16x128xf32>
    %247 = arith.truncf %246 : vector<16x128xf32> to vector<16x128xbf16>
    %248 = arith.index_cast %c7_i32 : i32 to index
    %c0_73 = arith.constant 0 : index
    %c0_74 = arith.constant 0 : index
    %249 = vector.load %arg16[%248, %c0_73, %c0_74] : memref<8x16x128xbf16, #tpu.memory_space<vmem>>, vector<1x16x128xbf16>
    %250 = vector.shape_cast %249 : vector<1x16x128xbf16> to vector<16x128xbf16>
    %251 = vector.shape_cast %247 : vector<16x128xbf16> to vector<1x16x128xbf16>
    tpu.vector_store %arg16[%248, %c0_73, %c0_74], %251 {strides = array<i32>} : memref<8x16x128xbf16, #tpu.memory_space<vmem>>, vector<1x16x128xbf16>,
    %c8_i32 = arith.constant 8 : i32
    %c0_75 = arith.constant 0 : index
    %c0_76 = arith.constant 0 : index
    %c0_77 = arith.constant 0 : index
    %252 = vector.load %arg16[%c0_75, %c0_76, %c0_77] : memref<8x16x128xbf16, #tpu.memory_space<vmem>>, vector<8x16x128xbf16>
    %253 = vector.shape_cast %252 : vector<8x16x128xbf16> to vector<128x128xbf16>
    %c0_78 = arith.constant 0 : index
    %c0_79 = arith.constant 0 : index
    %254 = vector.load %arg5[%c0_78, %c0_79] : memref<128x512xbf16, #tpu.memory_space<vmem>>, vector<128x512xbf16>
    %cst_80 = arith.constant dense<0.000000e+00> : vector<128x512xf32>
    %255 = tpu.matmul %253, %254, %cst_80 {dimension_numbers = #tpu.dot_dimension_numbers<[1], [0], [0], [1], [0, 0, 1, 1], [], []>} : vector<128x128xbf16>, vector<128x512xbf16>, vector<128x512xf32> -> vector<128x512xf32>
    %c0_81 = arith.constant 0 : index
    %c0_82 = arith.constant 0 : index
    %256 = vector.load %arg7[%c0_81, %c0_82] : memref<1x512xf32, #tpu.memory_space<vmem>>, vector<1x512xf32>
    %257 = vector.broadcast %256 : vector<1x512xf32> to vector<128x512xf32>
    %258 = arith.addf %255, %257 : vector<128x512xf32>
    %259 = arith.truncf %258 : vector<128x512xf32> to vector<128x512xbf16>
    %c0_83 = arith.constant 0 : index
    %c0_84 = arith.constant 0 : index
    %260 = vector.load %arg17[%c0_83, %c0_84] : memref<128x512xbf16, #tpu.memory_space<vmem>>, vector<128x512xbf16>
    tpu.vector_store %arg17[%c0_83, %c0_84], %259 {strides = array<i32>} : memref<128x512xbf16, #tpu.memory_space<vmem>>, vector<128x512xbf16>,
    %c0_85 = arith.constant 0 : index
    %c0_86 = arith.constant 0 : index
    %261 = vector.load %arg6[%c0_85, %c0_86] : memref<128x512xbf16, #tpu.memory_space<vmem>>, vector<128x512xbf16>
    %cst_87 = arith.constant 0.000000e+00 : bf16
    %262 = vector.broadcast %cst_87 : bf16 to vector<16x128xbf16>
    %cst_88 = arith.constant 0.000000e+00 : f32
    %263 = vector.broadcast %cst_88 : f32 to vector<16x128xf32>
    %c0_i32_89 = arith.constant 0 : i32
    %c16_i32_90 = arith.constant 16 : i32
    %264 = arith.muli %c0_i32_89, %c16_i32_90 : i32
    %265 = tpu.assume_multiple %264, 16 : i32
    %266 = arith.index_cast %265 : i32 to index
    %c0_91 = arith.constant 0 : index
    %267 = vector.load %arg17[%266, %c0_91] : memref<128x512xbf16, #tpu.memory_space<vmem>>, vector<16x512xbf16>
    %cst_92 = arith.constant dense<0.000000e+00> : vector<16x512xf32>
    %268 = tpu.matmul %262, %261, %cst_92 {dimension_numbers = #tpu.dot_dimension_numbers<[1], [0], [0], [1], [0, 0, 1, 1], [], []>} : vector<16x128xbf16>, vector<128x512xbf16>, vector<16x512xf32> -> vector<16x512xf32>
    %269 = arith.extf %267 : vector<16x512xbf16> to vector<16x512xf32>
    %270 = arith.addf %269, %268 : vector<16x512xf32>
    %271 = vector.extract_strided_slice %270 {offsets = [0, 0], sizes = [16, 384], strides = [1, 1]} : vector<16x512xf32> to vector<16x384xf32>
    %cst_93 = arith.constant 5.000000e-01 : f32
    %272 = vector.broadcast %cst_93 : f32 to vector<16x384xf32>
    %273 = arith.mulf %272, %271 : vector<16x384xf32>
    %274 = math.tanh %273 : vector<16x384xf32>
    %cst_94 = arith.constant 1.000000e+00 : f32
    %275 = vector.broadcast %cst_94 : f32 to vector<16x384xf32>
    %276 = arith.addf %274, %275 : vector<16x384xf32>
    %cst_95 = arith.constant 5.000000e-01 : f32
    %277 = vector.broadcast %cst_95 : f32 to vector<16x384xf32>
    %278 = arith.mulf %277, %276 : vector<16x384xf32>
    %279 = vector.extract_strided_slice %270 {offsets = [0, 384], sizes = [16, 128], strides = [1, 1]} : vector<16x512xf32> to vector<16x128xf32>
    %280 = math.tanh %279 : vector<16x128xf32>
    %281 = vector.extract_strided_slice %278 {offsets = [0, 0], sizes = [16, 128], strides = [1, 1]} : vector<16x384xf32> to vector<16x128xf32>
    %282 = vector.extract_strided_slice %278 {offsets = [0, 128], sizes = [16, 128], strides = [1, 1]} : vector<16x384xf32> to vector<16x128xf32>
    %283 = vector.extract_strided_slice %278 {offsets = [0, 256], sizes = [16, 128], strides = [1, 1]} : vector<16x384xf32> to vector<16x128xf32>
    %284 = arith.mulf %282, %263 : vector<16x128xf32>
    %285 = arith.mulf %281, %280 : vector<16x128xf32>
    %286 = arith.addf %284, %285 : vector<16x128xf32>
    %287 = math.tanh %286 : vector<16x128xf32>
    %288 = arith.mulf %283, %287 : vector<16x128xf32>
    %289 = arith.truncf %288 : vector<16x128xf32> to vector<16x128xbf16>
    %290 = arith.index_cast %c0_i32_89 : i32 to index
    %c0_96 = arith.constant 0 : index
    %c0_97 = arith.constant 0 : index
    %291 = vector.load %arg16[%290, %c0_96, %c0_97] : memref<8x16x128xbf16, #tpu.memory_space<vmem>>, vector<1x16x128xbf16>
    %292 = vector.shape_cast %291 : vector<1x16x128xbf16> to vector<16x128xbf16>
    %293 = vector.shape_cast %289 : vector<16x128xbf16> to vector<1x16x128xbf16>
    tpu.vector_store %arg16[%290, %c0_96, %c0_97], %293 {strides = array<i32>} : memref<8x16x128xbf16, #tpu.memory_space<vmem>>, vector<1x16x128xbf16>,
    %c1_i32_98 = arith.constant 1 : i32
    %c16_i32_99 = arith.constant 16 : i32
    %294 = arith.muli %c1_i32_98, %c16_i32_99 : i32
    %295 = tpu.assume_multiple %294, 16 : i32
    %296 = arith.index_cast %295 : i32 to index
    %c0_100 = arith.constant 0 : index
    %297 = vector.load %arg17[%296, %c0_100] : memref<128x512xbf16, #tpu.memory_space<vmem>>, vector<16x512xbf16>
    %cst_101 = arith.constant dense<0.000000e+00> : vector<16x512xf32>
    %298 = tpu.matmul %289, %261, %cst_101 {dimension_numbers = #tpu.dot_dimension_numbers<[1], [0], [0], [1], [0, 0, 1, 1], [], []>} : vector<16x128xbf16>, vector<128x512xbf16>, vector<16x512xf32> -> vector<16x512xf32>
    %299 = arith.extf %297 : vector<16x512xbf16> to vector<16x512xf32>
    %300 = arith.addf %299, %298 : vector<16x512xf32>
    %301 = vector.extract_strided_slice %300 {offsets = [0, 0], sizes = [16, 384], strides = [1, 1]} : vector<16x512xf32> to vector<16x384xf32>
    %cst_102 = arith.constant 5.000000e-01 : f32
    %302 = vector.broadcast %cst_102 : f32 to vector<16x384xf32>
    %303 = arith.mulf %302, %301 : vector<16x384xf32>
    %304 = math.tanh %303 : vector<16x384xf32>
    %cst_103 = arith.constant 1.000000e+00 : f32
    %305 = vector.broadcast %cst_103 : f32 to vector<16x384xf32>
    %306 = arith.addf %304, %305 : vector<16x384xf32>
    %cst_104 = arith.constant 5.000000e-01 : f32
    %307 = vector.broadcast %cst_104 : f32 to vector<16x384xf32>
    %308 = arith.mulf %307, %306 : vector<16x384xf32>
    %309 = vector.extract_strided_slice %300 {offsets = [0, 384], sizes = [16, 128], strides = [1, 1]} : vector<16x512xf32> to vector<16x128xf32>
    %310 = math.tanh %309 : vector<16x128xf32>
    %311 = vector.extract_strided_slice %308 {offsets = [0, 0], sizes = [16, 128], strides = [1, 1]} : vector<16x384xf32> to vector<16x128xf32>
    %312 = vector.extract_strided_slice %308 {offsets = [0, 128], sizes = [16, 128], strides = [1, 1]} : vector<16x384xf32> to vector<16x128xf32>
    %313 = vector.extract_strided_slice %308 {offsets = [0, 256], sizes = [16, 128], strides = [1, 1]} : vector<16x384xf32> to vector<16x128xf32>
    %314 = arith.mulf %312, %286 : vector<16x128xf32>
    %315 = arith.mulf %311, %310 : vector<16x128xf32>
    %316 = arith.addf %314, %315 : vector<16x128xf32>
    %317 = math.tanh %316 : vector<16x128xf32>
    %318 = arith.mulf %313, %317 : vector<16x128xf32>
    %319 = arith.truncf %318 : vector<16x128xf32> to vector<16x128xbf16>
    %320 = arith.index_cast %c1_i32_98 : i32 to index
    %c0_105 = arith.constant 0 : index
    %c0_106 = arith.constant 0 : index
    %321 = vector.load %arg16[%320, %c0_105, %c0_106] : memref<8x16x128xbf16, #tpu.memory_space<vmem>>, vector<1x16x128xbf16>
    %322 = vector.shape_cast %321 : vector<1x16x128xbf16> to vector<16x128xbf16>
    %323 = vector.shape_cast %319 : vector<16x128xbf16> to vector<1x16x128xbf16>
    tpu.vector_store %arg16[%320, %c0_105, %c0_106], %323 {strides = array<i32>} : memref<8x16x128xbf16, #tpu.memory_space<vmem>>, vector<1x16x128xbf16>,
    %c2_i32_107 = arith.constant 2 : i32
    %c16_i32_108 = arith.constant 16 : i32
    %324 = arith.muli %c2_i32_107, %c16_i32_108 : i32
    %325 = tpu.assume_multiple %324, 16 : i32
    %326 = arith.index_cast %325 : i32 to index
    %c0_109 = arith.constant 0 : index
    %327 = vector.load %arg17[%326, %c0_109] : memref<128x512xbf16, #tpu.memory_space<vmem>>, vector<16x512xbf16>
    %cst_110 = arith.constant dense<0.000000e+00> : vector<16x512xf32>
    %328 = tpu.matmul %319, %261, %cst_110 {dimension_numbers = #tpu.dot_dimension_numbers<[1], [0], [0], [1], [0, 0, 1, 1], [], []>} : vector<16x128xbf16>, vector<128x512xbf16>, vector<16x512xf32> -> vector<16x512xf32>
    %329 = arith.extf %327 : vector<16x512xbf16> to vector<16x512xf32>
    %330 = arith.addf %329, %328 : vector<16x512xf32>
    %331 = vector.extract_strided_slice %330 {offsets = [0, 0], sizes = [16, 384], strides = [1, 1]} : vector<16x512xf32> to vector<16x384xf32>
    %cst_111 = arith.constant 5.000000e-01 : f32
    %332 = vector.broadcast %cst_111 : f32 to vector<16x384xf32>
    %333 = arith.mulf %332, %331 : vector<16x384xf32>
    %334 = math.tanh %333 : vector<16x384xf32>
    %cst_112 = arith.constant 1.000000e+00 : f32
    %335 = vector.broadcast %cst_112 : f32 to vector<16x384xf32>
    %336 = arith.addf %334, %335 : vector<16x384xf32>
    %cst_113 = arith.constant 5.000000e-01 : f32
    %337 = vector.broadcast %cst_113 : f32 to vector<16x384xf32>
    %338 = arith.mulf %337, %336 : vector<16x384xf32>
    %339 = vector.extract_strided_slice %330 {offsets = [0, 384], sizes = [16, 128], strides = [1, 1]} : vector<16x512xf32> to vector<16x128xf32>
    %340 = math.tanh %339 : vector<16x128xf32>
    %341 = vector.extract_strided_slice %338 {offsets = [0, 0], sizes = [16, 128], strides = [1, 1]} : vector<16x384xf32> to vector<16x128xf32>
    %342 = vector.extract_strided_slice %338 {offsets = [0, 128], sizes = [16, 128], strides = [1, 1]} : vector<16x384xf32> to vector<16x128xf32>
    %343 = vector.extract_strided_slice %338 {offsets = [0, 256], sizes = [16, 128], strides = [1, 1]} : vector<16x384xf32> to vector<16x128xf32>
    %344 = arith.mulf %342, %316 : vector<16x128xf32>
    %345 = arith.mulf %341, %340 : vector<16x128xf32>
    %346 = arith.addf %344, %345 : vector<16x128xf32>
    %347 = math.tanh %346 : vector<16x128xf32>
    %348 = arith.mulf %343, %347 : vector<16x128xf32>
    %349 = arith.truncf %348 : vector<16x128xf32> to vector<16x128xbf16>
    %350 = arith.index_cast %c2_i32_107 : i32 to index
    %c0_114 = arith.constant 0 : index
    %c0_115 = arith.constant 0 : index
    %351 = vector.load %arg16[%350, %c0_114, %c0_115] : memref<8x16x128xbf16, #tpu.memory_space<vmem>>, vector<1x16x128xbf16>
    %352 = vector.shape_cast %351 : vector<1x16x128xbf16> to vector<16x128xbf16>
    %353 = vector.shape_cast %349 : vector<16x128xbf16> to vector<1x16x128xbf16>
    tpu.vector_store %arg16[%350, %c0_114, %c0_115], %353 {strides = array<i32>} : memref<8x16x128xbf16, #tpu.memory_space<vmem>>, vector<1x16x128xbf16>,
    %c3_i32_116 = arith.constant 3 : i32
    %c16_i32_117 = arith.constant 16 : i32
    %354 = arith.muli %c3_i32_116, %c16_i32_117 : i32
    %355 = tpu.assume_multiple %354, 16 : i32
    %356 = arith.index_cast %355 : i32 to index
    %c0_118 = arith.constant 0 : index
    %357 = vector.load %arg17[%356, %c0_118] : memref<128x512xbf16, #tpu.memory_space<vmem>>, vector<16x512xbf16>
    %cst_119 = arith.constant dense<0.000000e+00> : vector<16x512xf32>
    %358 = tpu.matmul %349, %261, %cst_119 {dimension_numbers = #tpu.dot_dimension_numbers<[1], [0], [0], [1], [0, 0, 1, 1], [], []>} : vector<16x128xbf16>, vector<128x512xbf16>, vector<16x512xf32> -> vector<16x512xf32>
    %359 = arith.extf %357 : vector<16x512xbf16> to vector<16x512xf32>
    %360 = arith.addf %359, %358 : vector<16x512xf32>
    %361 = vector.extract_strided_slice %360 {offsets = [0, 0], sizes = [16, 384], strides = [1, 1]} : vector<16x512xf32> to vector<16x384xf32>
    %cst_120 = arith.constant 5.000000e-01 : f32
    %362 = vector.broadcast %cst_120 : f32 to vector<16x384xf32>
    %363 = arith.mulf %362, %361 : vector<16x384xf32>
    %364 = math.tanh %363 : vector<16x384xf32>
    %cst_121 = arith.constant 1.000000e+00 : f32
    %365 = vector.broadcast %cst_121 : f32 to vector<16x384xf32>
    %366 = arith.addf %364, %365 : vector<16x384xf32>
    %cst_122 = arith.constant 5.000000e-01 : f32
    %367 = vector.broadcast %cst_122 : f32 to vector<16x384xf32>
    %368 = arith.mulf %367, %366 : vector<16x384xf32>
    %369 = vector.extract_strided_slice %360 {offsets = [0, 384], sizes = [16, 128], strides = [1, 1]} : vector<16x512xf32> to vector<16x128xf32>
    %370 = math.tanh %369 : vector<16x128xf32>
    %371 = vector.extract_strided_slice %368 {offsets = [0, 0], sizes = [16, 128], strides = [1, 1]} : vector<16x384xf32> to vector<16x128xf32>
    %372 = vector.extract_strided_slice %368 {offsets = [0, 128], sizes = [16, 128], strides = [1, 1]} : vector<16x384xf32> to vector<16x128xf32>
    %373 = vector.extract_strided_slice %368 {offsets = [0, 256], sizes = [16, 128], strides = [1, 1]} : vector<16x384xf32> to vector<16x128xf32>
    %374 = arith.mulf %372, %346 : vector<16x128xf32>
    %375 = arith.mulf %371, %370 : vector<16x128xf32>
    %376 = arith.addf %374, %375 : vector<16x128xf32>
    %377 = math.tanh %376 : vector<16x128xf32>
    %378 = arith.mulf %373, %377 : vector<16x128xf32>
    %379 = arith.truncf %378 : vector<16x128xf32> to vector<16x128xbf16>
    %380 = arith.index_cast %c3_i32_116 : i32 to index
    %c0_123 = arith.constant 0 : index
    %c0_124 = arith.constant 0 : index
    %381 = vector.load %arg16[%380, %c0_123, %c0_124] : memref<8x16x128xbf16, #tpu.memory_space<vmem>>, vector<1x16x128xbf16>
    %382 = vector.shape_cast %381 : vector<1x16x128xbf16> to vector<16x128xbf16>
    %383 = vector.shape_cast %379 : vector<16x128xbf16> to vector<1x16x128xbf16>
    tpu.vector_store %arg16[%380, %c0_123, %c0_124], %383 {strides = array<i32>} : memref<8x16x128xbf16, #tpu.memory_space<vmem>>, vector<1x16x128xbf16>,
    %c4_i32_125 = arith.constant 4 : i32
    %c16_i32_126 = arith.constant 16 : i32
    %384 = arith.muli %c4_i32_125, %c16_i32_126 : i32
    %385 = tpu.assume_multiple %384, 16 : i32
    %386 = arith.index_cast %385 : i32 to index
    %c0_127 = arith.constant 0 : index
    %387 = vector.load %arg17[%386, %c0_127] : memref<128x512xbf16, #tpu.memory_space<vmem>>, vector<16x512xbf16>
    %cst_128 = arith.constant dense<0.000000e+00> : vector<16x512xf32>
    %388 = tpu.matmul %379, %261, %cst_128 {dimension_numbers = #tpu.dot_dimension_numbers<[1], [0], [0], [1], [0, 0, 1, 1], [], []>} : vector<16x128xbf16>, vector<128x512xbf16>, vector<16x512xf32> -> vector<16x512xf32>
    %389 = arith.extf %387 : vector<16x512xbf16> to vector<16x512xf32>
    %390 = arith.addf %389, %388 : vector<16x512xf32>
    %391 = vector.extract_strided_slice %390 {offsets = [0, 0], sizes = [16, 384], strides = [1, 1]} : vector<16x512xf32> to vector<16x384xf32>
    %cst_129 = arith.constant 5.000000e-01 : f32
    %392 = vector.broadcast %cst_129 : f32 to vector<16x384xf32>
    %393 = arith.mulf %392, %391 : vector<16x384xf32>
    %394 = math.tanh %393 : vector<16x384xf32>
    %cst_130 = arith.constant 1.000000e+00 : f32
    %395 = vector.broadcast %cst_130 : f32 to vector<16x384xf32>
    %396 = arith.addf %394, %395 : vector<16x384xf32>
    %cst_131 = arith.constant 5.000000e-01 : f32
    %397 = vector.broadcast %cst_131 : f32 to vector<16x384xf32>
    %398 = arith.mulf %397, %396 : vector<16x384xf32>
    %399 = vector.extract_strided_slice %390 {offsets = [0, 384], sizes = [16, 128], strides = [1, 1]} : vector<16x512xf32> to vector<16x128xf32>
    %400 = math.tanh %399 : vector<16x128xf32>
    %401 = vector.extract_strided_slice %398 {offsets = [0, 0], sizes = [16, 128], strides = [1, 1]} : vector<16x384xf32> to vector<16x128xf32>
    %402 = vector.extract_strided_slice %398 {offsets = [0, 128], sizes = [16, 128], strides = [1, 1]} : vector<16x384xf32> to vector<16x128xf32>
    %403 = vector.extract_strided_slice %398 {offsets = [0, 256], sizes = [16, 128], strides = [1, 1]} : vector<16x384xf32> to vector<16x128xf32>
    %404 = arith.mulf %402, %376 : vector<16x128xf32>
    %405 = arith.mulf %401, %400 : vector<16x128xf32>
    %406 = arith.addf %404, %405 : vector<16x128xf32>
    %407 = math.tanh %406 : vector<16x128xf32>
    %408 = arith.mulf %403, %407 : vector<16x128xf32>
    %409 = arith.truncf %408 : vector<16x128xf32> to vector<16x128xbf16>
    %410 = arith.index_cast %c4_i32_125 : i32 to index
    %c0_132 = arith.constant 0 : index
    %c0_133 = arith.constant 0 : index
    %411 = vector.load %arg16[%410, %c0_132, %c0_133] : memref<8x16x128xbf16, #tpu.memory_space<vmem>>, vector<1x16x128xbf16>
    %412 = vector.shape_cast %411 : vector<1x16x128xbf16> to vector<16x128xbf16>
    %413 = vector.shape_cast %409 : vector<16x128xbf16> to vector<1x16x128xbf16>
    tpu.vector_store %arg16[%410, %c0_132, %c0_133], %413 {strides = array<i32>} : memref<8x16x128xbf16, #tpu.memory_space<vmem>>, vector<1x16x128xbf16>,
    %c5_i32_134 = arith.constant 5 : i32
    %c16_i32_135 = arith.constant 16 : i32
    %414 = arith.muli %c5_i32_134, %c16_i32_135 : i32
    %415 = tpu.assume_multiple %414, 16 : i32
    %416 = arith.index_cast %415 : i32 to index
    %c0_136 = arith.constant 0 : index
    %417 = vector.load %arg17[%416, %c0_136] : memref<128x512xbf16, #tpu.memory_space<vmem>>, vector<16x512xbf16>
    %cst_137 = arith.constant dense<0.000000e+00> : vector<16x512xf32>
    %418 = tpu.matmul %409, %261, %cst_137 {dimension_numbers = #tpu.dot_dimension_numbers<[1], [0], [0], [1], [0, 0, 1, 1], [], []>} : vector<16x128xbf16>, vector<128x512xbf16>, vector<16x512xf32> -> vector<16x512xf32>
    %419 = arith.extf %417 : vector<16x512xbf16> to vector<16x512xf32>
    %420 = arith.addf %419, %418 : vector<16x512xf32>
    %421 = vector.extract_strided_slice %420 {offsets = [0, 0], sizes = [16, 384], strides = [1, 1]} : vector<16x512xf32> to vector<16x384xf32>
    %cst_138 = arith.constant 5.000000e-01 : f32
    %422 = vector.broadcast %cst_138 : f32 to vector<16x384xf32>
    %423 = arith.mulf %422, %421 : vector<16x384xf32>
    %424 = math.tanh %423 : vector<16x384xf32>
    %cst_139 = arith.constant 1.000000e+00 : f32
    %425 = vector.broadcast %cst_139 : f32 to vector<16x384xf32>
    %426 = arith.addf %424, %425 : vector<16x384xf32>
    %cst_140 = arith.constant 5.000000e-01 : f32
    %427 = vector.broadcast %cst_140 : f32 to vector<16x384xf32>
    %428 = arith.mulf %427, %426 : vector<16x384xf32>
    %429 = vector.extract_strided_slice %420 {offsets = [0, 384], sizes = [16, 128], strides = [1, 1]} : vector<16x512xf32> to vector<16x128xf32>
    %430 = math.tanh %429 : vector<16x128xf32>
    %431 = vector.extract_strided_slice %428 {offsets = [0, 0], sizes = [16, 128], strides = [1, 1]} : vector<16x384xf32> to vector<16x128xf32>
    %432 = vector.extract_strided_slice %428 {offsets = [0, 128], sizes = [16, 128], strides = [1, 1]} : vector<16x384xf32> to vector<16x128xf32>
    %433 = vector.extract_strided_slice %428 {offsets = [0, 256], sizes = [16, 128], strides = [1, 1]} : vector<16x384xf32> to vector<16x128xf32>
    %434 = arith.mulf %432, %406 : vector<16x128xf32>
    %435 = arith.mulf %431, %430 : vector<16x128xf32>
    %436 = arith.addf %434, %435 : vector<16x128xf32>
    %437 = math.tanh %436 : vector<16x128xf32>
    %438 = arith.mulf %433, %437 : vector<16x128xf32>
    %439 = arith.truncf %438 : vector<16x128xf32> to vector<16x128xbf16>
    %440 = arith.index_cast %c5_i32_134 : i32 to index
    %c0_141 = arith.constant 0 : index
    %c0_142 = arith.constant 0 : index
    %441 = vector.load %arg16[%440, %c0_141, %c0_142] : memref<8x16x128xbf16, #tpu.memory_space<vmem>>, vector<1x16x128xbf16>
    %442 = vector.shape_cast %441 : vector<1x16x128xbf16> to vector<16x128xbf16>
    %443 = vector.shape_cast %439 : vector<16x128xbf16> to vector<1x16x128xbf16>
    tpu.vector_store %arg16[%440, %c0_141, %c0_142], %443 {strides = array<i32>} : memref<8x16x128xbf16, #tpu.memory_space<vmem>>, vector<1x16x128xbf16>,
    %c6_i32_143 = arith.constant 6 : i32
    %c16_i32_144 = arith.constant 16 : i32
    %444 = arith.muli %c6_i32_143, %c16_i32_144 : i32
    %445 = tpu.assume_multiple %444, 16 : i32
    %446 = arith.index_cast %445 : i32 to index
    %c0_145 = arith.constant 0 : index
    %447 = vector.load %arg17[%446, %c0_145] : memref<128x512xbf16, #tpu.memory_space<vmem>>, vector<16x512xbf16>
    %cst_146 = arith.constant dense<0.000000e+00> : vector<16x512xf32>
    %448 = tpu.matmul %439, %261, %cst_146 {dimension_numbers = #tpu.dot_dimension_numbers<[1], [0], [0], [1], [0, 0, 1, 1], [], []>} : vector<16x128xbf16>, vector<128x512xbf16>, vector<16x512xf32> -> vector<16x512xf32>
    %449 = arith.extf %447 : vector<16x512xbf16> to vector<16x512xf32>
    %450 = arith.addf %449, %448 : vector<16x512xf32>
    %451 = vector.extract_strided_slice %450 {offsets = [0, 0], sizes = [16, 384], strides = [1, 1]} : vector<16x512xf32> to vector<16x384xf32>
    %cst_147 = arith.constant 5.000000e-01 : f32
    %452 = vector.broadcast %cst_147 : f32 to vector<16x384xf32>
    %453 = arith.mulf %452, %451 : vector<16x384xf32>
    %454 = math.tanh %453 : vector<16x384xf32>
    %cst_148 = arith.constant 1.000000e+00 : f32
    %455 = vector.broadcast %cst_148 : f32 to vector<16x384xf32>
    %456 = arith.addf %454, %455 : vector<16x384xf32>
    %cst_149 = arith.constant 5.000000e-01 : f32
    %457 = vector.broadcast %cst_149 : f32 to vector<16x384xf32>
    %458 = arith.mulf %457, %456 : vector<16x384xf32>
    %459 = vector.extract_strided_slice %450 {offsets = [0, 384], sizes = [16, 128], strides = [1, 1]} : vector<16x512xf32> to vector<16x128xf32>
    %460 = math.tanh %459 : vector<16x128xf32>
    %461 = vector.extract_strided_slice %458 {offsets = [0, 0], sizes = [16, 128], strides = [1, 1]} : vector<16x384xf32> to vector<16x128xf32>
    %462 = vector.extract_strided_slice %458 {offsets = [0, 128], sizes = [16, 128], strides = [1, 1]} : vector<16x384xf32> to vector<16x128xf32>
    %463 = vector.extract_strided_slice %458 {offsets = [0, 256], sizes = [16, 128], strides = [1, 1]} : vector<16x384xf32> to vector<16x128xf32>
    %464 = arith.mulf %462, %436 : vector<16x128xf32>
    %465 = arith.mulf %461, %460 : vector<16x128xf32>
    %466 = arith.addf %464, %465 : vector<16x128xf32>
    %467 = math.tanh %466 : vector<16x128xf32>
    %468 = arith.mulf %463, %467 : vector<16x128xf32>
    %469 = arith.truncf %468 : vector<16x128xf32> to vector<16x128xbf16>
    %470 = arith.index_cast %c6_i32_143 : i32 to index
    %c0_150 = arith.constant 0 : index
    %c0_151 = arith.constant 0 : index
    %471 = vector.load %arg16[%470, %c0_150, %c0_151] : memref<8x16x128xbf16, #tpu.memory_space<vmem>>, vector<1x16x128xbf16>
    %472 = vector.shape_cast %471 : vector<1x16x128xbf16> to vector<16x128xbf16>
    %473 = vector.shape_cast %469 : vector<16x128xbf16> to vector<1x16x128xbf16>
    tpu.vector_store %arg16[%470, %c0_150, %c0_151], %473 {strides = array<i32>} : memref<8x16x128xbf16, #tpu.memory_space<vmem>>, vector<1x16x128xbf16>,
    %c7_i32_152 = arith.constant 7 : i32
    %c16_i32_153 = arith.constant 16 : i32
    %474 = arith.muli %c7_i32_152, %c16_i32_153 : i32
    %475 = tpu.assume_multiple %474, 16 : i32
    %476 = arith.index_cast %475 : i32 to index
    %c0_154 = arith.constant 0 : index
    %477 = vector.load %arg17[%476, %c0_154] : memref<128x512xbf16, #tpu.memory_space<vmem>>, vector<16x512xbf16>
    %cst_155 = arith.constant dense<0.000000e+00> : vector<16x512xf32>
    %478 = tpu.matmul %469, %261, %cst_155 {dimension_numbers = #tpu.dot_dimension_numbers<[1], [0], [0], [1], [0, 0, 1, 1], [], []>} : vector<16x128xbf16>, vector<128x512xbf16>, vector<16x512xf32> -> vector<16x512xf32>
    %479 = arith.extf %477 : vector<16x512xbf16> to vector<16x512xf32>
    %480 = arith.addf %479, %478 : vector<16x512xf32>
    %481 = vector.extract_strided_slice %480 {offsets = [0, 0], sizes = [16, 384], strides = [1, 1]} : vector<16x512xf32> to vector<16x384xf32>
    %cst_156 = arith.constant 5.000000e-01 : f32
    %482 = vector.broadcast %cst_156 : f32 to vector<16x384xf32>
    %483 = arith.mulf %482, %481 : vector<16x384xf32>
    %484 = math.tanh %483 : vector<16x384xf32>
    %cst_157 = arith.constant 1.000000e+00 : f32
    %485 = vector.broadcast %cst_157 : f32 to vector<16x384xf32>
    %486 = arith.addf %484, %485 : vector<16x384xf32>
    %cst_158 = arith.constant 5.000000e-01 : f32
    %487 = vector.broadcast %cst_158 : f32 to vector<16x384xf32>
    %488 = arith.mulf %487, %486 : vector<16x384xf32>
    %489 = vector.extract_strided_slice %480 {offsets = [0, 384], sizes = [16, 128], strides = [1, 1]} : vector<16x512xf32> to vector<16x128xf32>
    %490 = math.tanh %489 : vector<16x128xf32>
    %491 = vector.extract_strided_slice %488 {offsets = [0, 0], sizes = [16, 128], strides = [1, 1]} : vector<16x384xf32> to vector<16x128xf32>
    %492 = vector.extract_strided_slice %488 {offsets = [0, 128], sizes = [16, 128], strides = [1, 1]} : vector<16x384xf32> to vector<16x128xf32>
    %493 = vector.extract_strided_slice %488 {offsets = [0, 256], sizes = [16, 128], strides = [1, 1]} : vector<16x384xf32> to vector<16x128xf32>
    %494 = arith.mulf %492, %466 : vector<16x128xf32>
    %495 = arith.mulf %491, %490 : vector<16x128xf32>
    %496 = arith.addf %494, %495 : vector<16x128xf32>
    %497 = math.tanh %496 : vector<16x128xf32>
    %498 = arith.mulf %493, %497 : vector<16x128xf32>
    %499 = arith.truncf %498 : vector<16x128xf32> to vector<16x128xbf16>
    %500 = arith.index_cast %c7_i32_152 : i32 to index
    %c0_159 = arith.constant 0 : index
    %c0_160 = arith.constant 0 : index
    %501 = vector.load %arg16[%500, %c0_159, %c0_160] : memref<8x16x128xbf16, #tpu.memory_space<vmem>>, vector<1x16x128xbf16>
    %502 = vector.shape_cast %501 : vector<1x16x128xbf16> to vector<16x128xbf16>
    %503 = vector.shape_cast %499 : vector<16x128xbf16> to vector<1x16x128xbf16>
    tpu.vector_store %arg16[%500, %c0_159, %c0_160], %503 {strides = array<i32>} : memref<8x16x128xbf16, #tpu.memory_space<vmem>>, vector<1x16x128xbf16>,
    %c8_i32_161 = arith.constant 8 : i32
    %c0_162 = arith.constant 0 : index
    %c0_163 = arith.constant 0 : index
    %c0_164 = arith.constant 0 : index
    %504 = vector.load %arg16[%c0_162, %c0_163, %c0_164] : memref<8x16x128xbf16, #tpu.memory_space<vmem>>, vector<8x16x128xbf16>
    %505 = vector.shape_cast %504 : vector<8x16x128xbf16> to vector<128x128xbf16>
    %c0_165 = arith.constant 0 : index
    %c0_166 = arith.constant 0 : index
    %506 = vector.load %arg8[%c0_165, %c0_166] : memref<128x512xbf16, #tpu.memory_space<vmem>>, vector<128x512xbf16>
    %cst_167 = arith.constant dense<0.000000e+00> : vector<128x512xf32>
    %507 = tpu.matmul %505, %506, %cst_167 {dimension_numbers = #tpu.dot_dimension_numbers<[1], [0], [0], [1], [0, 0, 1, 1], [], []>} : vector<128x128xbf16>, vector<128x512xbf16>, vector<128x512xf32> -> vector<128x512xf32>
    %c0_168 = arith.constant 0 : index
    %c0_169 = arith.constant 0 : index
    %508 = vector.load %arg10[%c0_168, %c0_169] : memref<1x512xf32, #tpu.memory_space<vmem>>, vector<1x512xf32>
    %509 = vector.broadcast %508 : vector<1x512xf32> to vector<128x512xf32>
    %510 = arith.addf %507, %509 : vector<128x512xf32>
    %511 = arith.truncf %510 : vector<128x512xf32> to vector<128x512xbf16>
    %c0_170 = arith.constant 0 : index
    %c0_171 = arith.constant 0 : index
    %512 = vector.load %arg17[%c0_170, %c0_171] : memref<128x512xbf16, #tpu.memory_space<vmem>>, vector<128x512xbf16>
    tpu.vector_store %arg17[%c0_170, %c0_171], %511 {strides = array<i32>} : memref<128x512xbf16, #tpu.memory_space<vmem>>, vector<128x512xbf16>,
    %c0_172 = arith.constant 0 : index
    %c0_173 = arith.constant 0 : index
    %513 = vector.load %arg9[%c0_172, %c0_173] : memref<128x512xbf16, #tpu.memory_space<vmem>>, vector<128x512xbf16>
    %cst_174 = arith.constant 0.000000e+00 : bf16
    %514 = vector.broadcast %cst_174 : bf16 to vector<16x128xbf16>
    %cst_175 = arith.constant 0.000000e+00 : f32
    %515 = vector.broadcast %cst_175 : f32 to vector<16x128xf32>
    %c0_i32_176 = arith.constant 0 : i32
    %c16_i32_177 = arith.constant 16 : i32
    %516 = arith.muli %c0_i32_176, %c16_i32_177 : i32
    %517 = tpu.assume_multiple %516, 16 : i32
    %518 = arith.index_cast %517 : i32 to index
    %c0_178 = arith.constant 0 : index
    %519 = vector.load %arg17[%518, %c0_178] : memref<128x512xbf16, #tpu.memory_space<vmem>>, vector<16x512xbf16>
    %cst_179 = arith.constant dense<0.000000e+00> : vector<16x512xf32>
    %520 = tpu.matmul %514, %513, %cst_179 {dimension_numbers = #tpu.dot_dimension_numbers<[1], [0], [0], [1], [0, 0, 1, 1], [], []>} : vector<16x128xbf16>, vector<128x512xbf16>, vector<16x512xf32> -> vector<16x512xf32>
    %521 = arith.extf %519 : vector<16x512xbf16> to vector<16x512xf32>
    %522 = arith.addf %521, %520 : vector<16x512xf32>
    %523 = vector.extract_strided_slice %522 {offsets = [0, 0], sizes = [16, 384], strides = [1, 1]} : vector<16x512xf32> to vector<16x384xf32>
    %cst_180 = arith.constant 5.000000e-01 : f32
    %524 = vector.broadcast %cst_180 : f32 to vector<16x384xf32>
    %525 = arith.mulf %524, %523 : vector<16x384xf32>
    %526 = math.tanh %525 : vector<16x384xf32>
    %cst_181 = arith.constant 1.000000e+00 : f32
    %527 = vector.broadcast %cst_181 : f32 to vector<16x384xf32>
    %528 = arith.addf %526, %527 : vector<16x384xf32>
    %cst_182 = arith.constant 5.000000e-01 : f32
    %529 = vector.broadcast %cst_182 : f32 to vector<16x384xf32>
    %530 = arith.mulf %529, %528 : vector<16x384xf32>
    %531 = vector.extract_strided_slice %522 {offsets = [0, 384], sizes = [16, 128], strides = [1, 1]} : vector<16x512xf32> to vector<16x128xf32>
    %532 = math.tanh %531 : vector<16x128xf32>
    %533 = vector.extract_strided_slice %530 {offsets = [0, 0], sizes = [16, 128], strides = [1, 1]} : vector<16x384xf32> to vector<16x128xf32>
    %534 = vector.extract_strided_slice %530 {offsets = [0, 128], sizes = [16, 128], strides = [1, 1]} : vector<16x384xf32> to vector<16x128xf32>
    %535 = vector.extract_strided_slice %530 {offsets = [0, 256], sizes = [16, 128], strides = [1, 1]} : vector<16x384xf32> to vector<16x128xf32>
    %536 = arith.mulf %534, %515 : vector<16x128xf32>
    %537 = arith.mulf %533, %532 : vector<16x128xf32>
    %538 = arith.addf %536, %537 : vector<16x128xf32>
    %539 = math.tanh %538 : vector<16x128xf32>
    %540 = arith.mulf %535, %539 : vector<16x128xf32>
    %541 = arith.truncf %540 : vector<16x128xf32> to vector<16x128xbf16>
    %c1_i32_183 = arith.constant 1 : i32
    %c16_i32_184 = arith.constant 16 : i32
    %542 = arith.muli %c1_i32_183, %c16_i32_184 : i32
    %543 = tpu.assume_multiple %542, 16 : i32
    %544 = arith.index_cast %543 : i32 to index
    %c0_185 = arith.constant 0 : index
    %545 = vector.load %arg17[%544, %c0_185] : memref<128x512xbf16, #tpu.memory_space<vmem>>, vector<16x512xbf16>
    %cst_186 = arith.constant dense<0.000000e+00> : vector<16x512xf32>
    %546 = tpu.matmul %541, %513, %cst_186 {dimension_numbers = #tpu.dot_dimension_numbers<[1], [0], [0], [1], [0, 0, 1, 1], [], []>} : vector<16x128xbf16>, vector<128x512xbf16>, vector<16x512xf32> -> vector<16x512xf32>
    %547 = arith.extf %545 : vector<16x512xbf16> to vector<16x512xf32>
    %548 = arith.addf %547, %546 : vector<16x512xf32>
    %549 = vector.extract_strided_slice %548 {offsets = [0, 0], sizes = [16, 384], strides = [1, 1]} : vector<16x512xf32> to vector<16x384xf32>
    %cst_187 = arith.constant 5.000000e-01 : f32
    %550 = vector.broadcast %cst_187 : f32 to vector<16x384xf32>
    %551 = arith.mulf %550, %549 : vector<16x384xf32>
    %552 = math.tanh %551 : vector<16x384xf32>
    %cst_188 = arith.constant 1.000000e+00 : f32
    %553 = vector.broadcast %cst_188 : f32 to vector<16x384xf32>
    %554 = arith.addf %552, %553 : vector<16x384xf32>
    %cst_189 = arith.constant 5.000000e-01 : f32
    %555 = vector.broadcast %cst_189 : f32 to vector<16x384xf32>
    %556 = arith.mulf %555, %554 : vector<16x384xf32>
    %557 = vector.extract_strided_slice %548 {offsets = [0, 384], sizes = [16, 128], strides = [1, 1]} : vector<16x512xf32> to vector<16x128xf32>
    %558 = math.tanh %557 : vector<16x128xf32>
    %559 = vector.extract_strided_slice %556 {offsets = [0, 0], sizes = [16, 128], strides = [1, 1]} : vector<16x384xf32> to vector<16x128xf32>
    %560 = vector.extract_strided_slice %556 {offsets = [0, 128], sizes = [16, 128], strides = [1, 1]} : vector<16x384xf32> to vector<16x128xf32>
    %561 = vector.extract_strided_slice %556 {offsets = [0, 256], sizes = [16, 128], strides = [1, 1]} : vector<16x384xf32> to vector<16x128xf32>
    %562 = arith.mulf %560, %538 : vector<16x128xf32>
    %563 = arith.mulf %559, %558 : vector<16x128xf32>
    %564 = arith.addf %562, %563 : vector<16x128xf32>
    %565 = math.tanh %564 : vector<16x128xf32>
    %566 = arith.mulf %561, %565 : vector<16x128xf32>
    %567 = arith.truncf %566 : vector<16x128xf32> to vector<16x128xbf16>
    %c2_i32_190 = arith.constant 2 : i32
    %c16_i32_191 = arith.constant 16 : i32
    %568 = arith.muli %c2_i32_190, %c16_i32_191 : i32
    %569 = tpu.assume_multiple %568, 16 : i32
    %570 = arith.index_cast %569 : i32 to index
    %c0_192 = arith.constant 0 : index
    %571 = vector.load %arg17[%570, %c0_192] : memref<128x512xbf16, #tpu.memory_space<vmem>>, vector<16x512xbf16>
    %cst_193 = arith.constant dense<0.000000e+00> : vector<16x512xf32>
    %572 = tpu.matmul %567, %513, %cst_193 {dimension_numbers = #tpu.dot_dimension_numbers<[1], [0], [0], [1], [0, 0, 1, 1], [], []>} : vector<16x128xbf16>, vector<128x512xbf16>, vector<16x512xf32> -> vector<16x512xf32>
    %573 = arith.extf %571 : vector<16x512xbf16> to vector<16x512xf32>
    %574 = arith.addf %573, %572 : vector<16x512xf32>
    %575 = vector.extract_strided_slice %574 {offsets = [0, 0], sizes = [16, 384], strides = [1, 1]} : vector<16x512xf32> to vector<16x384xf32>
    %cst_194 = arith.constant 5.000000e-01 : f32
    %576 = vector.broadcast %cst_194 : f32 to vector<16x384xf32>
    %577 = arith.mulf %576, %575 : vector<16x384xf32>
    %578 = math.tanh %577 : vector<16x384xf32>
    %cst_195 = arith.constant 1.000000e+00 : f32
    %579 = vector.broadcast %cst_195 : f32 to vector<16x384xf32>
    %580 = arith.addf %578, %579 : vector<16x384xf32>
    %cst_196 = arith.constant 5.000000e-01 : f32
    %581 = vector.broadcast %cst_196 : f32 to vector<16x384xf32>
    %582 = arith.mulf %581, %580 : vector<16x384xf32>
    %583 = vector.extract_strided_slice %574 {offsets = [0, 384], sizes = [16, 128], strides = [1, 1]} : vector<16x512xf32> to vector<16x128xf32>
    %584 = math.tanh %583 : vector<16x128xf32>
    %585 = vector.extract_strided_slice %582 {offsets = [0, 0], sizes = [16, 128], strides = [1, 1]} : vector<16x384xf32> to vector<16x128xf32>
    %586 = vector.extract_strided_slice %582 {offsets = [0, 128], sizes = [16, 128], strides = [1, 1]} : vector<16x384xf32> to vector<16x128xf32>
    %587 = vector.extract_strided_slice %582 {offsets = [0, 256], sizes = [16, 128], strides = [1, 1]} : vector<16x384xf32> to vector<16x128xf32>
    %588 = arith.mulf %586, %564 : vector<16x128xf32>
    %589 = arith.mulf %585, %584 : vector<16x128xf32>
    %590 = arith.addf %588, %589 : vector<16x128xf32>
    %591 = math.tanh %590 : vector<16x128xf32>
    %592 = arith.mulf %587, %591 : vector<16x128xf32>
    %593 = arith.truncf %592 : vector<16x128xf32> to vector<16x128xbf16>
    %c3_i32_197 = arith.constant 3 : i32
    %c16_i32_198 = arith.constant 16 : i32
    %594 = arith.muli %c3_i32_197, %c16_i32_198 : i32
    %595 = tpu.assume_multiple %594, 16 : i32
    %596 = arith.index_cast %595 : i32 to index
    %c0_199 = arith.constant 0 : index
    %597 = vector.load %arg17[%596, %c0_199] : memref<128x512xbf16, #tpu.memory_space<vmem>>, vector<16x512xbf16>
    %cst_200 = arith.constant dense<0.000000e+00> : vector<16x512xf32>
    %598 = tpu.matmul %593, %513, %cst_200 {dimension_numbers = #tpu.dot_dimension_numbers<[1], [0], [0], [1], [0, 0, 1, 1], [], []>} : vector<16x128xbf16>, vector<128x512xbf16>, vector<16x512xf32> -> vector<16x512xf32>
    %599 = arith.extf %597 : vector<16x512xbf16> to vector<16x512xf32>
    %600 = arith.addf %599, %598 : vector<16x512xf32>
    %601 = vector.extract_strided_slice %600 {offsets = [0, 0], sizes = [16, 384], strides = [1, 1]} : vector<16x512xf32> to vector<16x384xf32>
    %cst_201 = arith.constant 5.000000e-01 : f32
    %602 = vector.broadcast %cst_201 : f32 to vector<16x384xf32>
    %603 = arith.mulf %602, %601 : vector<16x384xf32>
    %604 = math.tanh %603 : vector<16x384xf32>
    %cst_202 = arith.constant 1.000000e+00 : f32
    %605 = vector.broadcast %cst_202 : f32 to vector<16x384xf32>
    %606 = arith.addf %604, %605 : vector<16x384xf32>
    %cst_203 = arith.constant 5.000000e-01 : f32
    %607 = vector.broadcast %cst_203 : f32 to vector<16x384xf32>
    %608 = arith.mulf %607, %606 : vector<16x384xf32>
    %609 = vector.extract_strided_slice %600 {offsets = [0, 384], sizes = [16, 128], strides = [1, 1]} : vector<16x512xf32> to vector<16x128xf32>
    %610 = math.tanh %609 : vector<16x128xf32>
    %611 = vector.extract_strided_slice %608 {offsets = [0, 0], sizes = [16, 128], strides = [1, 1]} : vector<16x384xf32> to vector<16x128xf32>
    %612 = vector.extract_strided_slice %608 {offsets = [0, 128], sizes = [16, 128], strides = [1, 1]} : vector<16x384xf32> to vector<16x128xf32>
    %613 = vector.extract_strided_slice %608 {offsets = [0, 256], sizes = [16, 128], strides = [1, 1]} : vector<16x384xf32> to vector<16x128xf32>
    %614 = arith.mulf %612, %590 : vector<16x128xf32>
    %615 = arith.mulf %611, %610 : vector<16x128xf32>
    %616 = arith.addf %614, %615 : vector<16x128xf32>
    %617 = math.tanh %616 : vector<16x128xf32>
    %618 = arith.mulf %613, %617 : vector<16x128xf32>
    %619 = arith.truncf %618 : vector<16x128xf32> to vector<16x128xbf16>
    %c4_i32_204 = arith.constant 4 : i32
    %c16_i32_205 = arith.constant 16 : i32
    %620 = arith.muli %c4_i32_204, %c16_i32_205 : i32
    %621 = tpu.assume_multiple %620, 16 : i32
    %622 = arith.index_cast %621 : i32 to index
    %c0_206 = arith.constant 0 : index
    %623 = vector.load %arg17[%622, %c0_206] : memref<128x512xbf16, #tpu.memory_space<vmem>>, vector<16x512xbf16>
    %cst_207 = arith.constant dense<0.000000e+00> : vector<16x512xf32>
    %624 = tpu.matmul %619, %513, %cst_207 {dimension_numbers = #tpu.dot_dimension_numbers<[1], [0], [0], [1], [0, 0, 1, 1], [], []>} : vector<16x128xbf16>, vector<128x512xbf16>, vector<16x512xf32> -> vector<16x512xf32>
    %625 = arith.extf %623 : vector<16x512xbf16> to vector<16x512xf32>
    %626 = arith.addf %625, %624 : vector<16x512xf32>
    %627 = vector.extract_strided_slice %626 {offsets = [0, 0], sizes = [16, 384], strides = [1, 1]} : vector<16x512xf32> to vector<16x384xf32>
    %cst_208 = arith.constant 5.000000e-01 : f32
    %628 = vector.broadcast %cst_208 : f32 to vector<16x384xf32>
    %629 = arith.mulf %628, %627 : vector<16x384xf32>
    %630 = math.tanh %629 : vector<16x384xf32>
    %cst_209 = arith.constant 1.000000e+00 : f32
    %631 = vector.broadcast %cst_209 : f32 to vector<16x384xf32>
    %632 = arith.addf %630, %631 : vector<16x384xf32>
    %cst_210 = arith.constant 5.000000e-01 : f32
    %633 = vector.broadcast %cst_210 : f32 to vector<16x384xf32>
    %634 = arith.mulf %633, %632 : vector<16x384xf32>
    %635 = vector.extract_strided_slice %626 {offsets = [0, 384], sizes = [16, 128], strides = [1, 1]} : vector<16x512xf32> to vector<16x128xf32>
    %636 = math.tanh %635 : vector<16x128xf32>
    %637 = vector.extract_strided_slice %634 {offsets = [0, 0], sizes = [16, 128], strides = [1, 1]} : vector<16x384xf32> to vector<16x128xf32>
    %638 = vector.extract_strided_slice %634 {offsets = [0, 128], sizes = [16, 128], strides = [1, 1]} : vector<16x384xf32> to vector<16x128xf32>
    %639 = vector.extract_strided_slice %634 {offsets = [0, 256], sizes = [16, 128], strides = [1, 1]} : vector<16x384xf32> to vector<16x128xf32>
    %640 = arith.mulf %638, %616 : vector<16x128xf32>
    %641 = arith.mulf %637, %636 : vector<16x128xf32>
    %642 = arith.addf %640, %641 : vector<16x128xf32>
    %643 = math.tanh %642 : vector<16x128xf32>
    %644 = arith.mulf %639, %643 : vector<16x128xf32>
    %645 = arith.truncf %644 : vector<16x128xf32> to vector<16x128xbf16>
    %c5_i32_211 = arith.constant 5 : i32
    %c16_i32_212 = arith.constant 16 : i32
    %646 = arith.muli %c5_i32_211, %c16_i32_212 : i32
    %647 = tpu.assume_multiple %646, 16 : i32
    %648 = arith.index_cast %647 : i32 to index
    %c0_213 = arith.constant 0 : index
    %649 = vector.load %arg17[%648, %c0_213] : memref<128x512xbf16, #tpu.memory_space<vmem>>, vector<16x512xbf16>
    %cst_214 = arith.constant dense<0.000000e+00> : vector<16x512xf32>
    %650 = tpu.matmul %645, %513, %cst_214 {dimension_numbers = #tpu.dot_dimension_numbers<[1], [0], [0], [1], [0, 0, 1, 1], [], []>} : vector<16x128xbf16>, vector<128x512xbf16>, vector<16x512xf32> -> vector<16x512xf32>
    %651 = arith.extf %649 : vector<16x512xbf16> to vector<16x512xf32>
    %652 = arith.addf %651, %650 : vector<16x512xf32>
    %653 = vector.extract_strided_slice %652 {offsets = [0, 0], sizes = [16, 384], strides = [1, 1]} : vector<16x512xf32> to vector<16x384xf32>
    %cst_215 = arith.constant 5.000000e-01 : f32
    %654 = vector.broadcast %cst_215 : f32 to vector<16x384xf32>
    %655 = arith.mulf %654, %653 : vector<16x384xf32>
    %656 = math.tanh %655 : vector<16x384xf32>
    %cst_216 = arith.constant 1.000000e+00 : f32
    %657 = vector.broadcast %cst_216 : f32 to vector<16x384xf32>
    %658 = arith.addf %656, %657 : vector<16x384xf32>
    %cst_217 = arith.constant 5.000000e-01 : f32
    %659 = vector.broadcast %cst_217 : f32 to vector<16x384xf32>
    %660 = arith.mulf %659, %658 : vector<16x384xf32>
    %661 = vector.extract_strided_slice %652 {offsets = [0, 384], sizes = [16, 128], strides = [1, 1]} : vector<16x512xf32> to vector<16x128xf32>
    %662 = math.tanh %661 : vector<16x128xf32>
    %663 = vector.extract_strided_slice %660 {offsets = [0, 0], sizes = [16, 128], strides = [1, 1]} : vector<16x384xf32> to vector<16x128xf32>
    %664 = vector.extract_strided_slice %660 {offsets = [0, 128], sizes = [16, 128], strides = [1, 1]} : vector<16x384xf32> to vector<16x128xf32>
    %665 = vector.extract_strided_slice %660 {offsets = [0, 256], sizes = [16, 128], strides = [1, 1]} : vector<16x384xf32> to vector<16x128xf32>
    %666 = arith.mulf %664, %642 : vector<16x128xf32>
    %667 = arith.mulf %663, %662 : vector<16x128xf32>
    %668 = arith.addf %666, %667 : vector<16x128xf32>
    %669 = math.tanh %668 : vector<16x128xf32>
    %670 = arith.mulf %665, %669 : vector<16x128xf32>
    %671 = arith.truncf %670 : vector<16x128xf32> to vector<16x128xbf16>
    %c6_i32_218 = arith.constant 6 : i32
    %c16_i32_219 = arith.constant 16 : i32
    %672 = arith.muli %c6_i32_218, %c16_i32_219 : i32
    %673 = tpu.assume_multiple %672, 16 : i32
    %674 = arith.index_cast %673 : i32 to index
    %c0_220 = arith.constant 0 : index
    %675 = vector.load %arg17[%674, %c0_220] : memref<128x512xbf16, #tpu.memory_space<vmem>>, vector<16x512xbf16>
    %cst_221 = arith.constant dense<0.000000e+00> : vector<16x512xf32>
    %676 = tpu.matmul %671, %513, %cst_221 {dimension_numbers = #tpu.dot_dimension_numbers<[1], [0], [0], [1], [0, 0, 1, 1], [], []>} : vector<16x128xbf16>, vector<128x512xbf16>, vector<16x512xf32> -> vector<16x512xf32>
    %677 = arith.extf %675 : vector<16x512xbf16> to vector<16x512xf32>
    %678 = arith.addf %677, %676 : vector<16x512xf32>
    %679 = vector.extract_strided_slice %678 {offsets = [0, 0], sizes = [16, 384], strides = [1, 1]} : vector<16x512xf32> to vector<16x384xf32>
    %cst_222 = arith.constant 5.000000e-01 : f32
    %680 = vector.broadcast %cst_222 : f32 to vector<16x384xf32>
    %681 = arith.mulf %680, %679 : vector<16x384xf32>
    %682 = math.tanh %681 : vector<16x384xf32>
    %cst_223 = arith.constant 1.000000e+00 : f32
    %683 = vector.broadcast %cst_223 : f32 to vector<16x384xf32>
    %684 = arith.addf %682, %683 : vector<16x384xf32>
    %cst_224 = arith.constant 5.000000e-01 : f32
    %685 = vector.broadcast %cst_224 : f32 to vector<16x384xf32>
    %686 = arith.mulf %685, %684 : vector<16x384xf32>
    %687 = vector.extract_strided_slice %678 {offsets = [0, 384], sizes = [16, 128], strides = [1, 1]} : vector<16x512xf32> to vector<16x128xf32>
    %688 = math.tanh %687 : vector<16x128xf32>
    %689 = vector.extract_strided_slice %686 {offsets = [0, 0], sizes = [16, 128], strides = [1, 1]} : vector<16x384xf32> to vector<16x128xf32>
    %690 = vector.extract_strided_slice %686 {offsets = [0, 128], sizes = [16, 128], strides = [1, 1]} : vector<16x384xf32> to vector<16x128xf32>
    %691 = vector.extract_strided_slice %686 {offsets = [0, 256], sizes = [16, 128], strides = [1, 1]} : vector<16x384xf32> to vector<16x128xf32>
    %692 = arith.mulf %690, %668 : vector<16x128xf32>
    %693 = arith.mulf %689, %688 : vector<16x128xf32>
    %694 = arith.addf %692, %693 : vector<16x128xf32>
    %695 = math.tanh %694 : vector<16x128xf32>
    %696 = arith.mulf %691, %695 : vector<16x128xf32>
    %697 = arith.truncf %696 : vector<16x128xf32> to vector<16x128xbf16>
    %c7_i32_225 = arith.constant 7 : i32
    %c16_i32_226 = arith.constant 16 : i32
    %698 = arith.muli %c7_i32_225, %c16_i32_226 : i32
    %699 = tpu.assume_multiple %698, 16 : i32
    %700 = arith.index_cast %699 : i32 to index
    %c0_227 = arith.constant 0 : index
    %701 = vector.load %arg17[%700, %c0_227] : memref<128x512xbf16, #tpu.memory_space<vmem>>, vector<16x512xbf16>
    %cst_228 = arith.constant dense<0.000000e+00> : vector<16x512xf32>
    %702 = tpu.matmul %697, %513, %cst_228 {dimension_numbers = #tpu.dot_dimension_numbers<[1], [0], [0], [1], [0, 0, 1, 1], [], []>} : vector<16x128xbf16>, vector<128x512xbf16>, vector<16x512xf32> -> vector<16x512xf32>
    %703 = arith.extf %701 : vector<16x512xbf16> to vector<16x512xf32>
    %704 = arith.addf %703, %702 : vector<16x512xf32>
    %705 = vector.extract_strided_slice %704 {offsets = [0, 0], sizes = [16, 384], strides = [1, 1]} : vector<16x512xf32> to vector<16x384xf32>
    %cst_229 = arith.constant 5.000000e-01 : f32
    %706 = vector.broadcast %cst_229 : f32 to vector<16x384xf32>
    %707 = arith.mulf %706, %705 : vector<16x384xf32>
    %708 = math.tanh %707 : vector<16x384xf32>
    %cst_230 = arith.constant 1.000000e+00 : f32
    %709 = vector.broadcast %cst_230 : f32 to vector<16x384xf32>
    %710 = arith.addf %708, %709 : vector<16x384xf32>
    %cst_231 = arith.constant 5.000000e-01 : f32
    %711 = vector.broadcast %cst_231 : f32 to vector<16x384xf32>
    %712 = arith.mulf %711, %710 : vector<16x384xf32>
    %713 = vector.extract_strided_slice %704 {offsets = [0, 384], sizes = [16, 128], strides = [1, 1]} : vector<16x512xf32> to vector<16x128xf32>
    %714 = math.tanh %713 : vector<16x128xf32>
    %715 = vector.extract_strided_slice %712 {offsets = [0, 0], sizes = [16, 128], strides = [1, 1]} : vector<16x384xf32> to vector<16x128xf32>
    %716 = vector.extract_strided_slice %712 {offsets = [0, 128], sizes = [16, 128], strides = [1, 1]} : vector<16x384xf32> to vector<16x128xf32>
    %717 = vector.extract_strided_slice %712 {offsets = [0, 256], sizes = [16, 128], strides = [1, 1]} : vector<16x384xf32> to vector<16x128xf32>
    %718 = arith.mulf %716, %694 : vector<16x128xf32>
    %719 = arith.mulf %715, %714 : vector<16x128xf32>
    %720 = arith.addf %718, %719 : vector<16x128xf32>
    %721 = math.tanh %720 : vector<16x128xf32>
    %722 = arith.mulf %717, %721 : vector<16x128xf32>
    %723 = arith.truncf %722 : vector<16x128xf32> to vector<16x128xbf16>
    %c8_i32_232 = arith.constant 8 : i32
    %c0_233 = arith.constant 0 : index
    %c0_234 = arith.constant 0 : index
    %724 = vector.load %arg11[%c0_233, %c0_234] : memref<128x128xbf16, #tpu.memory_space<vmem>>, vector<128x128xbf16>
    %cst_235 = arith.constant dense<0.000000e+00> : vector<16x128xf32>
    %725 = tpu.matmul %723, %724, %cst_235 {dimension_numbers = #tpu.dot_dimension_numbers<[1], [0], [0], [1], [0, 0, 1, 1], [], []>} : vector<16x128xbf16>, vector<128x128xbf16>, vector<16x128xf32> -> vector<16x128xf32>
    %c0_236 = arith.constant 0 : index
    %c0_237 = arith.constant 0 : index
    %726 = vector.load %arg12[%c0_236, %c0_237] : memref<1x128xf32, #tpu.memory_space<vmem>>, vector<1x128xf32>
    %727 = vector.broadcast %726 : vector<1x128xf32> to vector<16x128xf32>
    %728 = arith.addf %725, %727 : vector<16x128xf32>
    %cst_238 = arith.constant 0.000000e+00 : f32
    %729 = vector.broadcast %cst_238 : f32 to vector<16x128xf32>
    %730 = arith.maximumf %728, %729 : vector<16x128xf32>
    %731 = arith.truncf %730 : vector<16x128xf32> to vector<16x128xbf16>
    %c0_239 = arith.constant 0 : index
    %c0_240 = arith.constant 0 : index
    %732 = vector.load %arg13[%c0_239, %c0_240] : memref<128x128xbf16, #tpu.memory_space<vmem>>, vector<128x128xbf16>
    %cst_241 = arith.constant dense<0.000000e+00> : vector<16x128xf32>
    %733 = tpu.matmul %731, %732, %cst_241 {dimension_numbers = #tpu.dot_dimension_numbers<[1], [0], [0], [1], [0, 0, 1, 1], [], []>} : vector<16x128xbf16>, vector<128x128xbf16>, vector<16x128xf32> -> vector<16x128xf32>
    %c0_242 = arith.constant 0 : index
    %c0_243 = arith.constant 0 : index
    %734 = vector.load %arg14[%c0_242, %c0_243] : memref<1x128xf32, #tpu.memory_space<vmem>>, vector<1x128xf32>
    %735 = vector.broadcast %734 : vector<1x128xf32> to vector<16x128xf32>
    %736 = arith.addf %733, %735 : vector<16x128xf32>
    %c0_244 = arith.constant 0 : index
    %c0_245 = arith.constant 0 : index
    %737 = vector.load %arg15[%c0_244, %c0_245] : memref<16x128xf32, #tpu.memory_space<vmem>>, vector<16x128xf32>
    tpu.vector_store %arg15[%c0_244, %c0_245], %736 {strides = array<i32>} : memref<16x128xf32, #tpu.memory_space<vmem>>, vector<16x128xf32>,
    return
  }
  func.func @transform_0(%arg0: i32) -> (i32, i32, i32) {
    %c0_i32 = arith.constant 0 : i32
    %c0_i32_0 = arith.constant 0 : i32
    %c0_i32_1 = arith.constant 0 : i32
    return %c0_i32, %arg0, %c0_i32_0 : i32, i32, i32
  }
  func.func @transform_1(%arg0: i32) -> (i32, i32) {
    %c0_i32 = arith.constant 0 : i32
    %c0_i32_0 = arith.constant 0 : i32
    %c0_i32_1 = arith.constant 0 : i32
    return %c0_i32, %c0_i32_0 : i32, i32
  }
  func.func @transform_2(%arg0: i32) -> (i32, i32) {
    %c0_i32 = arith.constant 0 : i32
    %c0_i32_0 = arith.constant 0 : i32
    %c0_i32_1 = arith.constant 0 : i32
    return %c0_i32, %c0_i32_0 : i32, i32
  }
  func.func @transform_3(%arg0: i32) -> (i32, i32) {
    %c0_i32 = arith.constant 0 : i32
    %c0_i32_0 = arith.constant 0 : i32
    %c0_i32_1 = arith.constant 0 : i32
    return %c0_i32, %c0_i32_0 : i32, i32
  }
  func.func @transform_4(%arg0: i32) -> (i32, i32) {
    %c0_i32 = arith.constant 0 : i32
    %c0_i32_0 = arith.constant 0 : i32
    %c0_i32_1 = arith.constant 0 : i32
    return %c0_i32, %c0_i32_0 : i32, i32
  }
  func.func @transform_5(%arg0: i32) -> (i32, i32) {
    %c0_i32 = arith.constant 0 : i32
    %c0_i32_0 = arith.constant 0 : i32
    %c0_i32_1 = arith.constant 0 : i32
    return %c0_i32, %c0_i32_0 : i32, i32
  }
  func.func @transform_6(%arg0: i32) -> (i32, i32) {
    %c0_i32 = arith.constant 0 : i32
    %c0_i32_0 = arith.constant 0 : i32
    %c0_i32_1 = arith.constant 0 : i32
    return %c0_i32, %c0_i32_0 : i32, i32
  }
  func.func @transform_7(%arg0: i32) -> (i32, i32) {
    %c0_i32 = arith.constant 0 : i32
    %c0_i32_0 = arith.constant 0 : i32
    %c0_i32_1 = arith.constant 0 : i32
    return %c0_i32, %c0_i32_0 : i32, i32
  }
  func.func @transform_8(%arg0: i32) -> (i32, i32) {
    %c0_i32 = arith.constant 0 : i32
    %c0_i32_0 = arith.constant 0 : i32
    %c0_i32_1 = arith.constant 0 : i32
    return %c0_i32, %c0_i32_0 : i32, i32
  }
  func.func @transform_9(%arg0: i32) -> (i32, i32) {
    %c0_i32 = arith.constant 0 : i32
    %c0_i32_0 = arith.constant 0 : i32
    %c0_i32_1 = arith.constant 0 : i32
    return %c0_i32, %c0_i32_0 : i32, i32
  }
  func.func @transform_10(%arg0: i32) -> (i32, i32) {
    %c0_i32 = arith.constant 0 : i32
    %c0_i32_0 = arith.constant 0 : i32
    %c0_i32_1 = arith.constant 0 : i32
    return %c0_i32, %c0_i32_0 : i32, i32
  }
  func.func @transform_11(%arg0: i32) -> (i32, i32) {
    %c0_i32 = arith.constant 0 : i32
    %c0_i32_0 = arith.constant 0 : i32
    %c0_i32_1 = arith.constant 0 : i32
    return %c0_i32, %c0_i32_0 : i32, i32
  }
  func.func @transform_12(%arg0: i32) -> (i32, i32) {
    %c0_i32 = arith.constant 0 : i32
    %c0_i32_0 = arith.constant 0 : i32
    %c0_i32_1 = arith.constant 0 : i32
    return %c0_i32, %c0_i32_0 : i32, i32
  }
  func.func @transform_13(%arg0: i32) -> (i32, i32) {
    %c0_i32 = arith.constant 0 : i32
    %c0_i32_0 = arith.constant 0 : i32
    %c0_i32_1 = arith.constant 0 : i32
    return %c0_i32, %c0_i32_0 : i32, i32
  }
  func.func @transform_14(%arg0: i32) -> (i32, i32) {
    %c0_i32 = arith.constant 0 : i32
    %c0_i32_0 = arith.constant 0 : i32
    return %arg0, %c0_i32 : i32, i32
  }
}

</mosaic_0001>

<llo_original>
// kernel: tpu_custom_call.1
$region0: #{tpu_custom_call.1}
  #allocation0 [shape = 'u32[]', space=smem, size = 0x4, offset = 0x4, fixed_abs, tag = 'smem constant byte address 0x4 - core index']
  #allocation1 [shape = 'u32[144,128]{1,0:T(1,128)}', space=vmem, size = 0x12000, scoped, tag = 'internal scratch']
  #allocation2 [shape = 'bf16[8,16,128]{2,1,0:T(16,128)(2,1)}', space=vmem, size = 0x8000, scoped, tag = 'scratch operand']
  #allocation3 [shape = 'bf16[128,512]{1,0:T(16,128)(2,1)}', space=vmem, size = 0x20000, scoped, tag = 'scratch operand']
  %s0 = inlined_call_operand.hbm [shape: bf16[8,16,128], index: 0, kind: input, shape index: {}]
  %s1 = inlined_call_operand.hbm [shape: bf16[128,512], index: 1, kind: input, shape index: {}]
  %s2 = inlined_call_operand.hbm [shape: bf16[128,512], index: 2, kind: input, shape index: {}]
  %s3 = inlined_call_operand.hbm [shape: f32[1,512], index: 3, kind: input, shape index: {}]
  %s4 = inlined_call_operand.hbm [shape: bf16[128,512], index: 4, kind: input, shape index: {}]
  %s5 = inlined_call_operand.hbm [shape: bf16[128,512], index: 5, kind: input, shape index: {}]
  %s6 = inlined_call_operand.hbm [shape: f32[1,512], index: 6, kind: input, shape index: {}]
  %s7 = inlined_call_operand.hbm [shape: bf16[128,512], index: 7, kind: input, shape index: {}]
  %s8 = inlined_call_operand.hbm [shape: bf16[128,512], index: 8, kind: input, shape index: {}]
  %s9 = inlined_call_operand.hbm [shape: f32[1,512], index: 9, kind: input, shape index: {}]
  %s10 = inlined_call_operand.hbm [shape: bf16[128,128], index: 10, kind: input, shape index: {}]
  %s11 = inlined_call_operand.hbm [shape: f32[1,128], index: 11, kind: input, shape index: {}]
  %s12 = inlined_call_operand.hbm [shape: bf16[128,128], index: 12, kind: input, shape index: {}]
  %s13 = inlined_call_operand.hbm [shape: f32[1,128], index: 13, kind: input, shape index: {}]
  %s14 = inlined_call_operand.hbm [shape: f32[16,128], index: 14, kind: output, shape index: {}]
  %s15 = sld [smem:[#allocation0]]
  $region122: #{tpu_custom_call.1} parent=0
    _
  %s17 = ssub.s32 1, %s15
  %s18 = scalar_select 0, %s17, %s15
  $region1: #{tpu_custom_call.1} parent=0
    #allocation4 [shape = 'u8[32768]{0}', space=vmem, size = 0x8000, scoped, tag = 'input window, operand 0, single buffered']
    #allocation5 [shape = 's32[1]{0}', space=sflag, size = 0x4, scoped, tag = 'scoped memory for tpu_custom_call.1']
    #allocation6 [shape = 's32[1]{0}', space=sflag, size = 0x4, scoped, tag = 'scoped memory for tpu_custom_call.1']
    #allocation7 [shape = 'u8[131072]{0}', space=vmem, size = 0x20000, scoped, tag = 'input window, operand 1, single buffered']
    #allocation8 [shape = 's32[1]{0}', space=sflag, size = 0x4, scoped, tag = 'scoped memory for tpu_custom_call.1']
    #allocation9 [shape = 'u8[131072]{0}', space=vmem, size = 0x20000, scoped, tag = 'input window, operand 2, single buffered']
    #allocation10 [shape = 'u8[2048]{0}', space=vmem, size = 0x800, scoped, tag = 'input window, operand 3, single buffered']
    #allocation11 [shape = 's32[1]{0}', space=sflag, size = 0x4, scoped, tag = 'scoped memory for tpu_custom_call.1']
    #allocation12 [shape = 'u8[131072]{0}', space=vmem, size = 0x20000, scoped, tag = 'input window, operand 4, single buffered']
    #allocation13 [shape = 'u8[131072]{0}', space=vmem, size = 0x20000, scoped, tag = 'input window, operand 5, single buffered']
    #allocation14 [shape = 's32[1]{0}', space=sflag, size = 0x4, scoped, tag = 'scoped memory for tpu_custom_call.1']
    #allocation15 [shape = 'u8[2048]{0}', space=vmem, size = 0x800, scoped, tag = 'input window, operand 6, single buffered']
    #allocation16 [shape = 'u8[131072]{0}', space=vmem, size = 0x20000, scoped, tag = 'input window, operand 7, single buffered']
    #allocation17 [shape = 's32[1]{0}', space=sflag, size = 0x4, scoped, tag = 'scoped memory for tpu_custom_call.1']
    #allocation18 [shape = 'u8[131072]{0}', space=vmem, size = 0x20000, scoped, tag = 'input window, operand 8, single buffered']
    #allocation19 [shape = 'u8[2048]{0}', space=vmem, size = 0x800, scoped, tag = 'input window, operand 9, single buffered']
    #allocation20 [shape = 's32[1]{0}', space=sflag, size = 0x4, scoped, tag = 'scoped memory for tpu_custom_call.1']
    #allocation21 [shape = 'u8[32768]{0}', space=vmem, size = 0x8000, scoped, tag = 'input window, operand 10, single buffered']
    #allocation22 [shape = 'u8[512]{0}', space=vmem, size = 0x400, scoped, tag = 'input window, operand 11, single buffered']
    #allocation23 [shape = 's32[1]{0}', space=sflag, size = 0x4, scoped, tag = 'scoped memory for tpu_custom_call.1']
    #allocation24 [shape = 'u8[32768]{0}', space=vmem, size = 0x8000, scoped, tag = 'input window, operand 12, single buffered']
    #allocation25 [shape = 'u8[512]{0}', space=vmem, size = 0x400, scoped, tag = 'input window, operand 13, single buffered']
    #allocation26 [shape = 's32[1]{0}', space=sflag, size = 0x4, scoped, tag = 'scoped memory for tpu_custom_call.1']
    #allocation27 [shape = 'u8[8192]{0}', space=vmem, size = 0x2000, scoped, tag = 'output window, operand 0, single buffered']
    %19 = vsyncpa [#allocation5], 0
    %20 = vsyncpa [#allocation8], 0
    %21 = vsyncpa [#allocation11], 0
    %22 = vsyncpa [#allocation14], 0
    %23 = vsyncpa [#allocation17], 0
    %24 = vsyncpa [#allocation20], 0
    %25 = vsyncpa [#allocation23], 0
    %26 = vsyncpa [#allocation26], 0
    %27 = vsyncpa [#allocation6], 0
    // Predicated region
    $region2: #{tpu_custom_call.1} parent=1 // pred_check
      _
    $region3: #{tpu_custom_call.1} parent=1 // pred_check_branch
      %29 = sbr.rel (0) target = $region5
    $region4: #{tpu_custom_call.1} parent=1 // pred_region
      %s31 = ssub.s32 1024, 1024
      %32 = vsyncadd [#allocation5], %s31
      %s33 = sshll.u32 [#allocation4], 4
      %s34 = int_to_ptr.vmem [resolvable:$true] %s33
      %39 = dma.hbm_to_vmem [thread:$0]  %s0, 1024, %s34, [#allocation5], 64, 64, 4
    $region5: #{tpu_custom_call.1} parent=1 // pred_fallthru
      _
    // Predicated region
    $region6: #{tpu_custom_call.1} parent=1 // pred_check
      _
    $region7: #{tpu_custom_call.1} parent=1 // pred_check_branch
      %41 = sbr.rel (0) target = $region9
    $region8: #{tpu_custom_call.1} parent=1 // pred_region
      %s43 = ssub.s32 4096, 4096
      %44 = vsyncadd [#allocation8], %s43
      %s45 = sshll.u32 [#allocation7], 4
      %s46 = int_to_ptr.vmem [resolvable:$true] %s45
      %51 = dma.hbm_to_vmem [thread:$0]  %s1, 4096, %s46, [#allocation8], 256, 256, 16
    $region9: #{tpu_custom_call.1} parent=1 // pred_fallthru
      _
    // Predicated region
    $region10: #{tpu_custom_call.1} parent=1 // pred_check
      _
    $region11: #{tpu_custom_call.1} parent=1 // pred_check_branch
      %53 = sbr.rel (0) target = $region13
    $region12: #{tpu_custom_call.1} parent=1 // pred_region
      %s55 = ssub.s32 4096, 4096
      %56 = vsyncadd [#allocation8], %s55
      %s57 = sshll.u32 [#allocation9], 4
      %s58 = int_to_ptr.vmem [resolvable:$true] %s57
      %63 = dma.hbm_to_vmem [thread:$0]  %s2, 4096, %s58, [#allocation8], 256, 256, 16
    $region13: #{tpu_custom_call.1} parent=1 // pred_fallthru
      _
    // Predicated region
    $region14: #{tpu_custom_call.1} parent=1 // pred_check
      _
    $region15: #{tpu_custom_call.1} parent=1 // pred_check_branch
      %65 = sbr.rel (0) target = $region17
    $region16: #{tpu_custom_call.1} parent=1 // pred_region
      %s67 = ssub.s32 64, 64
      %68 = vsyncadd [#allocation11], %s67
      %s70 = sshll.u32 [#allocation10], 4
      %s71 = int_to_ptr.vmem [resolvable:$true] %s70
      %73 = dma.hbm_to_vmem [thread:$0]  %s3, 64, %s71, [#allocation11]
    $region17: #{tpu_custom_call.1} parent=1 // pred_fallthru
      _
    // Predicated region
    $region18: #{tpu_custom_call.1} parent=1 // pred_check
      _
    $region19: #{tpu_custom_call.1} parent=1 // pred_check_branch
      %75 = sbr.rel (0) target = $region21
    $region20: #{tpu_custom_call.1} parent=1 // pred_region
      %s77 = ssub.s32 4096, 4096
      %78 = vsyncadd [#allocation11], %s77
      %s79 = sshll.u32 [#allocation12], 4
      %s80 = int_to_ptr.vmem [resolvable:$true] %s79
      %85 = dma.hbm_to_vmem [thread:$0]  %s4, 4096, %s80, [#allocation11], 256, 256, 16
    $region21: #{tpu_custom_call.1} parent=1 // pred_fallthru
      _
    // Predicated region
    $region22: #{tpu_custom_call.1} parent=1 // pred_check
      _
    $region23: #{tpu_custom_call.1} parent=1 // pred_check_branch
      %87 = sbr.rel (0) target = $region25
    $region24: #{tpu_custom_call.1} parent=1 // pred_region
      %s89 = ssub.s32 4096, 4096
      %90 = vsyncadd [#allocation14], %s89
      %s91 = sshll.u32 [#allocation13], 4
      %s92 = int_to_ptr.vmem [resolvable:$true] %s91
      %97 = dma.hbm_to_vmem [thread:$0]  %s5, 4096, %s92, [#allocation14], 256, 256, 16
    $region25: #{tpu_custom_call.1} parent=1 // pred_fallthru
      _
    // Predicated region
    $region26: #{tpu_custom_call.1} parent=1 // pred_check
      _
    $region27: #{tpu_custom_call.1} parent=1 // pred_check_branch
      %99 = sbr.rel (0) target = $region29
    $region28: #{tpu_custom_call.1} parent=1 // pred_region
      %s101 = ssub.s32 64, 64
      %102 = vsyncadd [#allocation14], %s101
      %s104 = sshll.u32 [#allocation15], 4
      %s105 = int_to_ptr.vmem [resolvable:$true] %s104
      %107 = dma.hbm_to_vmem [thread:$0]  %s6, 64, %s105, [#allocation14]
    $region29: #{tpu_custom_call.1} parent=1 // pred_fallthru
      _
    // Predicated region
    $region30: #{tpu_custom_call.1} parent=1 // pred_check
      _
    $region31: #{tpu_custom_call.1} parent=1 // pred_check_branch
      %109 = sbr.rel (0) target = $region33
    $region32: #{tpu_custom_call.1} parent=1 // pred_region
      %s111 = ssub.s32 4096, 4096
      %112 = vsyncadd [#allocation17], %s111
      %s113 = sshll.u32 [#allocation16], 4
      %s114 = int_to_ptr.vmem [resolvable:$true] %s113
      %119 = dma.hbm_to_vmem [thread:$0]  %s7, 4096, %s114, [#allocation17], 256, 256, 16
    $region33: #{tpu_custom_call.1} parent=1 // pred_fallthru
      _
    // Predicated region
    $region34: #{tpu_custom_call.1} parent=1 // pred_check
      _
    $region35: #{tpu_custom_call.1} parent=1 // pred_check_branch
      %121 = sbr.rel (0) target = $region37
    $region36: #{tpu_custom_call.1} parent=1 // pred_region
      %s123 = ssub.s32 4096, 4096
      %124 = vsyncadd [#allocation17], %s123
      %s125 = sshll.u32 [#allocation18], 4
      %s126 = int_to_ptr.vmem [resolvable:$true] %s125
      %131 = dma.hbm_to_vmem [thread:$0]  %s8, 4096, %s126, [#allocation17], 256, 256, 16
    $region37: #{tpu_custom_call.1} parent=1 // pred_fallthru
      _
    // Predicated region
    $region38: #{tpu_custom_call.1} parent=1 // pred_check
      _
    $region39: #{tpu_custom_call.1} parent=1 // pred_check_branch
      %133 = sbr.rel (0) target = $region41
    $region40: #{tpu_custom_call.1} parent=1 // pred_region
      %s135 = ssub.s32 64, 64
      %136 = vsyncadd [#allocation20], %s135
      %s138 = sshll.u32 [#allocation19], 4
      %s139 = int_to_ptr.vmem [resolvable:$true] %s138
      %141 = dma.hbm_to_vmem [thread:$0]  %s9, 64, %s139, [#allocation20]
    $region41: #{tpu_custom_call.1} parent=1 // pred_fallthru
      _
    // Predicated region
    $region42: #{tpu_custom_call.1} parent=1 // pred_check
      _
    $region43: #{tpu_custom_call.1} parent=1 // pred_check_branch
      %143 = sbr.rel (0) target = $region45
    $region44: #{tpu_custom_call.1} parent=1 // pred_region
      %s145 = ssub.s32 1024, 1024
      %146 = vsyncadd [#allocation20], %s145
      %s147 = sshll.u32 [#allocation21], 4
      %s148 = int_to_ptr.vmem [resolvable:$true] %s147
      %153 = dma.hbm_to_vmem [thread:$0]  %s10, 1024, %s148, [#allocation20], 64, 64, 4
    $region45: #{tpu_custom_call.1} parent=1 // pred_fallthru
      _
    // Predicated region
    $region46: #{tpu_custom_call.1} parent=1 // pred_check
      _
    $region47: #{tpu_custom_call.1} parent=1 // pred_check_branch
      %155 = sbr.rel (0) target = $region49
    $region48: #{tpu_custom_call.1} parent=1 // pred_region
      %s157 = ssub.s32 16, 16
      %158 = vsyncadd [#allocation23], %s157
      %s160 = sshll.u32 [#allocation22], 4
      %s161 = int_to_ptr.vmem [resolvable:$true] %s160
      %163 = dma.hbm_to_vmem [thread:$0]  %s11, 16, %s161, [#allocation23]
    $region49: #{tpu_custom_call.1} parent=1 // pred_fallthru
      _
    // Predicated region
    $region50: #{tpu_custom_call.1} parent=1 // pred_check
      _
    $region51: #{tpu_custom_call.1} parent=1 // pred_check_branch
      %165 = sbr.rel (0) target = $region53
    $region52: #{tpu_custom_call.1} parent=1 // pred_region
      %s167 = ssub.s32 1024, 1024
      %168 = vsyncadd [#allocation23], %s167
      %s169 = sshll.u32 [#allocation24], 4
      %s170 = int_to_ptr.vmem [resolvable:$true] %s169
      %175 = dma.hbm_to_vmem [thread:$0]  %s12, 1024, %s170, [#allocation23], 64, 64, 4
    $region53: #{tpu_custom_call.1} parent=1 // pred_fallthru
      _
    // Predicated region
    $region54: #{tpu_custom_call.1} parent=1 // pred_check
      _
    $region55: #{tpu_custom_call.1} parent=1 // pred_check_branch
      %177 = sbr.rel (0) target = $region57
    $region56: #{tpu_custom_call.1} parent=1 // pred_region
      %s179 = ssub.s32 16, 16
      %180 = vsyncadd [#allocation26], %s179
      %s182 = sshll.u32 [#allocation25], 4
      %s183 = int_to_ptr.vmem [resolvable:$true] %s182
      %185 = dma.hbm_to_vmem [thread:$0]  %s13, 16, %s183, [#allocation26]
    $region57: #{tpu_custom_call.1} parent=1 // pred_fallthru
      _
    // Predicated region
    $region58: #{tpu_custom_call.1} parent=1 // pred_check
      _
    $region59: #{tpu_custom_call.1} parent=1 // pred_check_branch
      %187 = sbr.rel (0) target = $region61
    $region60: #{tpu_custom_call.1} parent=1 // pred_region
      %188 = dma.done [#allocation5], 1024
    $region61: #{tpu_custom_call.1} parent=1 // pred_fallthru
      _
    // Predicated region
    $region62: #{tpu_custom_call.1} parent=1 // pred_check
      _
    $region63: #{tpu_custom_call.1} parent=1 // pred_check_branch
      %190 = sbr.rel (0) target = $region65
    $region64: #{tpu_custom_call.1} parent=1 // pred_region
      %191 = dma.done [#allocation8], 4096
    $region65: #{tpu_custom_call.1} parent=1 // pred_fallthru
      _
    // Predicated region
    $region66: #{tpu_custom_call.1} parent=1 // pred_check
      _
    $region67: #{tpu_custom_call.1} parent=1 // pred_check_branch
      %193 = sbr.rel (0) target = $region69
    $region68: #{tpu_custom_call.1} parent=1 // pred_region
      %194 = dma.done [#allocation8], 4096
    $region69: #{tpu_custom_call.1} parent=1 // pred_fallthru
      _
    // Predicated region
    $region70: #{tpu_custom_call.1} parent=1 // pred_check
      _
    $region71: #{tpu_custom_call.1} parent=1 // pred_check_branch
      %196 = sbr.rel (0) target = $region73
    $region72: #{tpu_custom_call.1} parent=1 // pred_region
      %197 = dma.done [#allocation11], 64
    $region73: #{tpu_custom_call.1} parent=1 // pred_fallthru
      _
    // Predicated region
    $region74: #{tpu_custom_call.1} parent=1 // pred_check
      _
    $region75: #{tpu_custom_call.1} parent=1 // pred_check_branch
      %199 = sbr.rel (0) target = $region77
    $region76: #{tpu_custom_call.1} parent=1 // pred_region
      %200 = dma.done [#allocation11], 4096
    $region77: #{tpu_custom_call.1} parent=1 // pred_fallthru
      _
    // Predicated region
    $region78: #{tpu_custom_call.1} parent=1 // pred_check
      _
    $region79: #{tpu_custom_call.1} parent=1 // pred_check_branch
      %202 = sbr.rel (0) target = $region81
    $region80: #{tpu_custom_call.1} parent=1 // pred_region
      %203 = dma.done [#allocation14], 4096
    $region81: #{tpu_custom_call.1} parent=1 // pred_fallthru
      _
    // Predicated region
    $region82: #{tpu_custom_call.1} parent=1 // pred_check
      _
    $region83: #{tpu_custom_call.1} parent=1 // pred_check_branch
      %205 = sbr.rel (0) target = $region85
    $region84: #{tpu_custom_call.1} parent=1 // pred_region
      %206 = dma.done [#allocation14], 64
    $region85: #{tpu_custom_call.1} parent=1 // pred_fallthru
      _
    // Predicated region
    $region86: #{tpu_custom_call.1} parent=1 // pred_check
      _
    $region87: #{tpu_custom_call.1} parent=1 // pred_check_branch
      %208 = sbr.rel (0) target = $region89
    $region88: #{tpu_custom_call.1} parent=1 // pred_region
      %209 = dma.done [#allocation17], 4096
    $region89: #{tpu_custom_call.1} parent=1 // pred_fallthru
      _
    // Predicated region
    $region90: #{tpu_custom_call.1} parent=1 // pred_check
      _
    $region91: #{tpu_custom_call.1} parent=1 // pred_check_branch
      %211 = sbr.rel (0) target = $region93
    $region92: #{tpu_custom_call.1} parent=1 // pred_region
      %212 = dma.done [#allocation17], 4096
    $region93: #{tpu_custom_call.1} parent=1 // pred_fallthru
      _
    // Predicated region
    $region94: #{tpu_custom_call.1} parent=1 // pred_check
      _
    $region95: #{tpu_custom_call.1} parent=1 // pred_check_branch
      %214 = sbr.rel (0) target = $region97
    $region96: #{tpu_custom_call.1} parent=1 // pred_region
      %215 = dma.done [#allocation20], 64
    $region97: #{tpu_custom_call.1} parent=1 // pred_fallthru
      _
    // Predicated region
    $region98: #{tpu_custom_call.1} parent=1 // pred_check
      _
    $region99: #{tpu_custom_call.1} parent=1 // pred_check_branch
      %217 = sbr.rel (0) target = $region101
    $region100: #{tpu_custom_call.1} parent=1 // pred_region
      %218 = dma.done [#allocation20], 1024
    $region101: #{tpu_custom_call.1} parent=1 // pred_fallthru
      _
    // Predicated region
    $region102: #{tpu_custom_call.1} parent=1 // pred_check
      _
    $region103: #{tpu_custom_call.1} parent=1 // pred_check_branch
      %220 = sbr.rel (0) target = $region105
    $region104: #{tpu_custom_call.1} parent=1 // pred_region
      %221 = dma.done [#allocation23], 16
    $region105: #{tpu_custom_call.1} parent=1 // pred_fallthru
      _
    // Predicated region
    $region106: #{tpu_custom_call.1} parent=1 // pred_check
      _
    $region107: #{tpu_custom_call.1} parent=1 // pred_check_branch
      %223 = sbr.rel (0) target = $region109
    $region108: #{tpu_custom_call.1} parent=1 // pred_region
      %224 = dma.done [#allocation23], 1024
    $region109: #{tpu_custom_call.1} parent=1 // pred_fallthru
      _
    // Predicated region
    $region110: #{tpu_custom_call.1} parent=1 // pred_check
      _
    $region111: #{tpu_custom_call.1} parent=1 // pred_check_branch
      %226 = sbr.rel (0) target = $region113
    $region112: #{tpu_custom_call.1} parent=1 // pred_region
      %227 = dma.done [#allocation26], 16
    $region113: #{tpu_custom_call.1} parent=1 // pred_fallthru
      _
    %v229 = vld [vmem:[#allocation4] sm:$0xf]
    %v230 = vld [vmem:[#allocation4 + $0x4] sm:$0xf]
    %v231 = vld [vmem:[#allocation4 + $0x8] sm:$0xf]
    %v232 = vld [vmem:[#allocation4 + $0xc] sm:$0xf]
    %v233 = vld [vmem:[#allocation4 + $0x10] sm:$0xf]
    %v234 = vld [vmem:[#allocation4 + $0x14] sm:$0xf]
    %v235 = vld [vmem:[#allocation4 + $0x18] sm:$0xf]
    %v236 = vld [vmem:[#allocation4 + $0x1c] sm:$0xf]
    %v237 = vld [vmem:[#allocation4 + $0x20] sm:$0xf]
    %v238 = vld [vmem:[#allocation4 + $0x24] sm:$0xf]
    %v239 = vld [vmem:[#allocation4 + $0x28] sm:$0xf]
    %v240 = vld [vmem:[#allocation4 + $0x2c] sm:$0xf]
    %v241 = vld [vmem:[#allocation4 + $0x30] sm:$0xf]
    %v242 = vld [vmem:[#allocation4 + $0x34] sm:$0xf]
    %v243 = vld [vmem:[#allocation4 + $0x38] sm:$0xf]
    %v244 = vld [vmem:[#allocation4 + $0x3c] sm:$0xf]
    %v245 = vld [vmem:[#allocation7] sm:$0xff]
    %v246 = vld [vmem:[#allocation7 + $0x8] sm:$0xff]
    %v247 = vld [vmem:[#allocation7 + $0x10] sm:$0xff]
    %v248 = vld [vmem:[#allocation7 + $0x18] sm:$0xff]
    %v249 = vld [vmem:[#allocation7 + $0x20] sm:$0xff]
    %v250 = vld [vmem:[#allocation7 + $0x28] sm:$0xff]
    %v251 = vld [vmem:[#allocation7 + $0x30] sm:$0xff]
    %v252 = vld [vmem:[#allocation7 + $0x38] sm:$0xff]
    %v253 = vld [vmem:[#allocation7 + $0x40] sm:$0xff]
    %v254 = vld [vmem:[#allocation7 + $0x48] sm:$0xff]
    %v255 = vld [vmem:[#allocation7 + $0x50] sm:$0xff]
    %v256 = vld [vmem:[#allocation7 + $0x58] sm:$0xff]
    %v257 = vld [vmem:[#allocation7 + $0x60] sm:$0xff]
    %v258 = vld [vmem:[#allocation7 + $0x68] sm:$0xff]
    %v259 = vld [vmem:[#allocation7 + $0x70] sm:$0xff]
    %v260 = vld [vmem:[#allocation7 + $0x78] sm:$0xff]
    %v261 = vld [vmem:[#allocation7 + $0x80] sm:$0xff]
    %v262 = vld [vmem:[#allocation7 + $0x88] sm:$0xff]
    %v263 = vld [vmem:[#allocation7 + $0x90] sm:$0xff]
    %v264 = vld [vmem:[#allocation7 + $0x98] sm:$0xff]
    %v265 = vld [vmem:[#allocation7 + $0xa0] sm:$0xff]
    %v266 = vld [vmem:[#allocation7 + $0xa8] sm:$0xff]
    %v267 = vld [vmem:[#allocation7 + $0xb0] sm:$0xff]
    %v268 = vld [vmem:[#allocation7 + $0xb8] sm:$0xff]
    %v269 = vld [vmem:[#allocation7 + $0xc0] sm:$0xff]
    %v270 = vld [vmem:[#allocation7 + $0xc8] sm:$0xff]
    %v271 = vld [vmem:[#allocation7 + $0xd0] sm:$0xff]
    %v272 = vld [vmem:[#allocation7 + $0xd8] sm:$0xff]
    %v273 = vld [vmem:[#allocation7 + $0xe0] sm:$0xff]
    %v274 = vld [vmem:[#allocation7 + $0xe8] sm:$0xff]
    %v275 = vld [vmem:[#allocation7 + $0xf0] sm:$0xff]
    %v276 = vld [vmem:[#allocation7 + $0xf8] sm:$0xff]
    %v277 = vld [vmem:[#allocation10] sm:$0xf]
    %v279 = vlaneseq
    %v280 = vshrl.u32 %v279, 7
    %v281 = vsub.s32 0, %v280
    %v282 = vrot.slane %v277, %v281
    %v283 = vlaneseq
    %v284 = vshrl.u32 %v283, 7
    %v285 = vsub.s32 1, %v284
    %v286 = vrot.slane %v277, %v285
    %v287 = vlaneseq
    %v288 = vshrl.u32 %v287, 7
    %v289 = vsub.s32 2, %v288
    %v290 = vrot.slane %v277, %v289
    %v291 = vlaneseq
    %v292 = vshrl.u32 %v291, 7
    %v293 = vsub.s32 3, %v292
    %v294 = vrot.slane %v277, %v293
    %v315 = vunpack.c.l.b16 %v229
    %v316 = vunpack.c.l.b16 %v230
    %v317 = vunpack.c.l.b16 %v231
    %v318 = vunpack.c.l.b16 %v232
    %v319 = vunpack.c.l.b16 %v233
    %v320 = vunpack.c.l.b16 %v234
    %v321 = vunpack.c.l.b16 %v235
    %v322 = vunpack.c.l.b16 %v236
    %v323 = vunpack.c.l.b16 %v237
    %v324 = vunpack.c.l.b16 %v238
    %v325 = vunpack.c.l.b16 %v239
    %v326 = vunpack.c.l.b16 %v240
    %v327 = vunpack.c.l.b16 %v241
    %v328 = vunpack.c.l.b16 %v242
    %v329 = vunpack.c.l.b16 %v243
    %v330 = vunpack.c.l.b16 %v244
    %v331 = vpack.c.b16 %v316, %v315
    %v332 = vpack.c.b16 %v318, %v317
    %v333 = vpack.c.b16 %v320, %v319
    %v334 = vpack.c.b16 %v322, %v321
    %v335 = vpack.c.b16 %v324, %v323
    %v336 = vpack.c.b16 %v326, %v325
    %v337 = vpack.c.b16 %v328, %v327
    %v338 = vpack.c.b16 %v330, %v329
    %v379 = vunpack.c.l.b16 %v245
    %v380 = vunpack.c.h.b16 %v245
    %v381 = vunpack.c.l.b16 %v246
    %v382 = vunpack.c.h.b16 %v246
    %v383 = vunpack.c.l.b16 %v247
    %v384 = vunpack.c.h.b16 %v247
    %v385 = vunpack.c.l.b16 %v248
    %v386 = vunpack.c.h.b16 %v248
    %v387 = vunpack.c.l.b16 %v249
    %v388 = vunpack.c.h.b16 %v249
    %v389 = vunpack.c.l.b16 %v250
    %v390 = vunpack.c.h.b16 %v250
    %v391 = vunpack.c.l.b16 %v251
    %v392 = vunpack.c.h.b16 %v251
    %v393 = vunpack.c.l.b16 %v252
    %v394 = vunpack.c.h.b16 %v252
    %v395 = vunpack.c.l.b16 %v253
    %v396 = vunpack.c.h.b16 %v253
    %v397 = vunpack.c.l.b16 %v254
    %v398 = vunpack.c.h.b16 %v254
    %v399 = vunpack.c.l.b16 %v255
    %v400 = vunpack.c.h.b16 %v255
    %v401 = vunpack.c.l.b16 %v256
    %v402 = vunpack.c.h.b16 %v256
    %v403 = vunpack.c.l.b16 %v257
    %v404 = vunpack.c.h.b16 %v257
    %v405 = vunpack.c.l.b16 %v258
    %v406 = vunpack.c.h.b16 %v258
    %v407 = vunpack.c.l.b16 %v259
    %v408 = vunpack.c.h.b16 %v259
    %v409 = vunpack.c.l.b16 %v260
    %v410 = vunpack.c.h.b16 %v260
    %v411 = vunpack.c.l.b16 %v261
    %v412 = vunpack.c.h.b16 %v261
    %v413 = vunpack.c.l.b16 %v262
    %v414 = vunpack.c.h.b16 %v262
    %v415 = vunpack.c.l.b16 %v263
    %v416 = vunpack.c.h.b16 %v263
    %v417 = vunpack.c.l.b16 %v264
    %v418 = vunpack.c.h.b16 %v264
    %v419 = vunpack.c.l.b16 %v265
    %v420 = vunpack.c.h.b16 %v265
    %v421 = vunpack.c.l.b16 %v266
    %v422 = vunpack.c.h.b16 %v266
    %v423 = vunpack.c.l.b16 %v267
    %v424 = vunpack.c.h.b16 %v267
    %v425 = vunpack.c.l.b16 %v268
    %v426 = vunpack.c.h.b16 %v268
    %v427 = vunpack.c.l.b16 %v269
    %v428 = vunpack.c.h.b16 %v269
    %v429 = vunpack.c.l.b16 %v270
    %v430 = vunpack.c.h.b16 %v270
    %v431 = vunpack.c.l.b16 %v271
    %v432 = vunpack.c.h.b16 %v271
    %v433 = vunpack.c.l.b16 %v272
    %v434 = vunpack.c.h.b16 %v272
    %v435 = vunpack.c.l.b16 %v273
    %v436 = vunpack.c.h.b16 %v273
    %v437 = vunpack.c.l.b16 %v274
    %v438 = vunpack.c.h.b16 %v274
    %v439 = vunpack.c.l.b16 %v275
    %v440 = vunpack.c.h.b16 %v275
    %v441 = vunpack.c.l.b16 %v276
    %v442 = vunpack.c.h.b16 %v276
    %v443 = vpack.c.b16 %v383, %v379
    %v444 = vpack.c.b16 %v384, %v380
    %v445 = vpack.c.b16 %v385, %v381
    %v446 = vpack.c.b16 %v386, %v382
    %v447 = vpack.c.b16 %v391, %v387
    %v448 = vpack.c.b16 %v392, %v388
    %v449 = vpack.c.b16 %v393, %v389
    %v450 = vpack.c.b16 %v394, %v390
    %v451 = vpack.c.b16 %v399, %v395
    %v452 = vpack.c.b16 %v400, %v396
    %v453 = vpack.c.b16 %v401, %v397
    %v454 = vpack.c.b16 %v402, %v398
    %v455 = vpack.c.b16 %v407, %v403
    %v456 = vpack.c.b16 %v408, %v404
    %v457 = vpack.c.b16 %v409, %v405
    %v458 = vpack.c.b16 %v410, %v406
    %v459 = vpack.c.b16 %v415, %v411
    %v460 = vpack.c.b16 %v416, %v412
    %v461 = vpack.c.b16 %v417, %v413
    %v462 = vpack.c.b16 %v418, %v414
    %v463 = vpack.c.b16 %v423, %v419
    %v464 = vpack.c.b16 %v424, %v420
    %v465 = vpack.c.b16 %v425, %v421
    %v466 = vpack.c.b16 %v426, %v422
    %v467 = vpack.c.b16 %v431, %v427
    %v468 = vpack.c.b16 %v432, %v428
    %v469 = vpack.c.b16 %v433, %v429
    %v470 = vpack.c.b16 %v434, %v430
    %v471 = vpack.c.b16 %v439, %v435
    %v472 = vpack.c.b16 %v440, %v436
    %v473 = vpack.c.b16 %v441, %v437
    %v474 = vpack.c.b16 %v442, %v438
    %507 = vmatprep.subr.bf16.mxu0 %v444
    %508 = vmatpush1.bf16.msra.mxu0 %v443
    %509 = vmatprep.subr.bf16.mxu0 %v448
    %510 = vmatpush1.bf16.msra.mxu0 %v447
    %511 = vmatprep.subr.bf16.mxu0 %v452
    %512 = vmatpush1.bf16.msra.mxu0 %v451
    %513 = vmatprep.subr.bf16.mxu0 %v456
    %514 = vmatpush1.bf16.msra.mxu0 %v455
    %515 = vmatprep.subr.bf16.mxu0 %v460
    %516 = vmatpush1.bf16.msra.mxu0 %v459
    %517 = vmatprep.subr.bf16.mxu0 %v464
    %518 = vmatpush1.bf16.msra.mxu0 %v463
    %519 = vmatprep.subr.bf16.mxu0 %v468
    %520 = vmatpush1.bf16.msra.mxu0 %v467
    %521 = vmatprep.subr.bf16.mxu0 %v472
    %522 = vmatpush1.bf16.msra.mxu0 %v471
    %523 = vmatprep.subr.bf16.mxu0 0
    %524 = vmatpush1.bf16.msra.mxu0 0
    %525 = vmatprep.subr.bf16.mxu0 0
    %526 = vmatpush1.bf16.msra.mxu0 0
    %527 = vmatprep.subr.bf16.mxu0 0
    %528 = vmatpush1.bf16.msra.mxu0 0
    %529 = vmatprep.subr.bf16.mxu0 0
    %530 = vmatpush1.bf16.msra.mxu0 0
    %531 = vmatprep.subr.bf16.mxu0 0
    %532 = vmatpush1.bf16.msra.mxu0 0
    %533 = vmatprep.subr.bf16.mxu0 0
    %534 = vmatpush1.bf16.msra.mxu0 0
    %535 = vmatprep.subr.bf16.mxu0 0
    %536 = vmatpush1.bf16.msra.mxu0 0
    %537 = vmatprep.subr.bf16.mxu0 0
    %538 = vmatpush1.bf16.msra.mxu0 0
    %539 = vmatprep.mubr.bf16.mxu0 0
    %540 = vmatmul.mubr.bf16.gmra.mrb[0].mxu0 %v331
    %v541 = vpop.f32.mrb[0].mxu0
    %v542 = vadd.f32 %v282, %v541
    %v543 = vpop.f32.mrb[0].mxu0
    %v544 = vadd.f32 %v286, %v543
    %v545 = vpop.f32.mrb[0].mxu0
    %v546 = vadd.f32 %v282, %v545
    %v547 = vpop.f32.mrb[0].mxu0
    %v548 = vadd.f32 %v286, %v547
    %549 = vmatprep.mubr.bf16.mxu0 0
    %550 = vmatmul.mubr.bf16.gmra.mrb[0].mxu0 %v332
    %v551 = vpop.f32.mrb[0].mxu0
    %v552 = vadd.f32 %v282, %v551
    %v553 = vpop.f32.mrb[0].mxu0
    %v554 = vadd.f32 %v286, %v553
    %v555 = vpop.f32.mrb[0].mxu0
    %v556 = vadd.f32 %v282, %v555
    %v557 = vpop.f32.mrb[0].mxu0
    %v558 = vadd.f32 %v286, %v557
    %559 = vmatprep.mubr.bf16.mxu0 0
    %560 = vmatmul.mubr.bf16.gmra.mrb[0].mxu0 %v333
    %v561 = vpop.f32.mrb[0].mxu0
    %v562 = vadd.f32 %v282, %v561
    %v563 = vpop.f32.mrb[0].mxu0
    %v564 = vadd.f32 %v286, %v563
    %v565 = vpop.f32.mrb[0].mxu0
    %v566 = vadd.f32 %v282, %v565
    %v567 = vpop.f32.mrb[0].mxu0
    %v568 = vadd.f32 %v286, %v567
    %569 = vmatprep.mubr.bf16.mxu0 0
    %570 = vmatmul.mubr.bf16.gmra.mrb[0].mxu0 %v334
    %v571 = vpop.f32.mrb[0].mxu0
    %v572 = vadd.f32 %v282, %v571
    %v573 = vpop.f32.mrb[0].mxu0
    %v574 = vadd.f32 %v286, %v573
    %v575 = vpop.f32.mrb[0].mxu0
    %v576 = vadd.f32 %v282, %v575
    %v577 = vpop.f32.mrb[0].mxu0
    %v578 = vadd.f32 %v286, %v577
    %579 = vmatprep.mubr.bf16.mxu0 0
    %580 = vmatmul.mubr.bf16.gmra.mrb[0].mxu0 %v335
    %v581 = vpop.f32.mrb[0].mxu0
    %v582 = vadd.f32 %v282, %v581
    %v583 = vpop.f32.mrb[0].mxu0
    %v584 = vadd.f32 %v286, %v583
    %v585 = vpop.f32.mrb[0].mxu0
    %v586 = vadd.f32 %v282, %v585
    %v587 = vpop.f32.mrb[0].mxu0
    %v588 = vadd.f32 %v286, %v587
    %589 = vmatprep.mubr.bf16.mxu0 0
    %590 = vmatmul.mubr.bf16.gmra.mrb[0].mxu0 %v336
    %v591 = vpop.f32.mrb[0].mxu0
    %v592 = vadd.f32 %v282, %v591
    %v593 = vpop.f32.mrb[0].mxu0
    %v594 = vadd.f32 %v286, %v593
    %v595 = vpop.f32.mrb[0].mxu0
    %v596 = vadd.f32 %v282, %v595
    %v597 = vpop.f32.mrb[0].mxu0
    %v598 = vadd.f32 %v286, %v597
    %599 = vmatprep.mubr.bf16.mxu0 0
    %600 = vmatmul.mubr.bf16.gmra.mrb[0].mxu0 %v337
    %v601 = vpop.f32.mrb[0].mxu0
    %v602 = vadd.f32 %v282, %v601
    %v603 = vpop.f32.mrb[0].mxu0
    %v604 = vadd.f32 %v286, %v603
    %v605 = vpop.f32.mrb[0].mxu0
    %v606 = vadd.f32 %v282, %v605
    %v607 = vpop.f32.mrb[0].mxu0
    %v608 = vadd.f32 %v286, %v607
    %609 = vmatprep.mubr.bf16.mxu0 0
    %610 = vmatmul.mubr.bf16.gmra.mrb[0].mxu0 %v338
    %v611 = vpop.f32.mrb[0].mxu0
    %v612 = vadd.f32 %v282, %v611
    %v613 = vpop.f32.mrb[0].mxu0
    %v614 = vadd.f32 %v286, %v613
    %v615 = vpop.f32.mrb[0].mxu0
    %v616 = vadd.f32 %v282, %v615
    %v617 = vpop.f32.mrb[0].mxu0
    %v618 = vadd.f32 %v286, %v617
    %619 = vdwg.mxu0
    %620 = vmatprep.subr.bf16.mxu0 %v446
    %621 = vmatpush1.bf16.msra.mxu0 %v445
    %622 = vmatprep.subr.bf16.mxu0 %v450
    %623 = vmatpush1.bf16.msra.mxu0 %v449
    %624 = vmatprep.subr.bf16.mxu0 %v454
    %625 = vmatpush1.bf16.msra.mxu0 %v453
    %626 = vmatprep.subr.bf16.mxu0 %v458
    %627 = vmatpush1.bf16.msra.mxu0 %v457
    %628 = vmatprep.subr.bf16.mxu0 %v462
    %629 = vmatpush1.bf16.msra.mxu0 %v461
    %630 = vmatprep.subr.bf16.mxu0 %v466
    %631 = vmatpush1.bf16.msra.mxu0 %v465
    %632 = vmatprep.subr.bf16.mxu0 %v470
    %633 = vmatpush1.bf16.msra.mxu0 %v469
    %634 = vmatprep.subr.bf16.mxu0 %v474
    %635 = vmatpush1.bf16.msra.mxu0 %v473
    %636 = vmatprep.subr.bf16.mxu0 0
    %637 = vmatpush1.bf16.msra.mxu0 0
    %638 = vmatprep.subr.bf16.mxu0 0
    %639 = vmatpush1.bf16.msra.mxu0 0
    %640 = vmatprep.subr.bf16.mxu0 0
    %641 = vmatpush1.bf16.msra.mxu0 0
    %642 = vmatprep.subr.bf16.mxu0 0
    %643 = vmatpush1.bf16.msra.mxu0 0
    %644 = vmatprep.subr.bf16.mxu0 0
    %645 = vmatpush1.bf16.msra.mxu0 0
    %646 = vmatprep.subr.bf16.mxu0 0
    %647 = vmatpush1.bf16.msra.mxu0 0
    %648 = vmatprep.subr.bf16.mxu0 0
    %649 = vmatpush1.bf16.msra.mxu0 0
    %650 = vmatprep.subr.bf16.mxu0 0
    %651 = vmatpush1.bf16.msra.mxu0 0
    %652 = vmatprep.mubr.bf16.mxu0 0
    %653 = vmatmul.mubr.bf16.gmra.mrb[0].mxu0 %v331
    %v654 = vpop.f32.mrb[0].mxu0
    %v655 = vadd.f32 %v290, %v654
    %v656 = vpop.f32.mrb[0].mxu0
    %v657 = vadd.f32 %v294, %v656
    %v658 = vpop.f32.mrb[0].mxu0
    %v659 = vadd.f32 %v290, %v658
    %v660 = vpop.f32.mrb[0].mxu0
    %v661 = vadd.f32 %v294, %v660
    %662 = vmatprep.mubr.bf16.mxu0 0
    %663 = vmatmul.mubr.bf16.gmra.mrb[0].mxu0 %v332
    %v664 = vpop.f32.mrb[0].mxu0
    %v665 = vadd.f32 %v290, %v664
    %v666 = vpop.f32.mrb[0].mxu0
    %v667 = vadd.f32 %v294, %v666
    %v668 = vpop.f32.mrb[0].mxu0
    %v669 = vadd.f32 %v290, %v668
    %v670 = vpop.f32.mrb[0].mxu0
    %v671 = vadd.f32 %v294, %v670
    %672 = vmatprep.mubr.bf16.mxu0 0
    %673 = vmatmul.mubr.bf16.gmra.mrb[0].mxu0 %v333
    %v674 = vpop.f32.mrb[0].mxu0
    %v675 = vadd.f32 %v290, %v674
    %v676 = vpop.f32.mrb[0].mxu0
    %v677 = vadd.f32 %v294, %v676
    %v678 = vpop.f32.mrb[0].mxu0
    %v679 = vadd.f32 %v290, %v678
    %v680 = vpop.f32.mrb[0].mxu0
    %v681 = vadd.f32 %v294, %v680
    %682 = vmatprep.mubr.bf16.mxu0 0
    %683 = vmatmul.mubr.bf16.gmra.mrb[0].mxu0 %v334
    %v684 = vpop.f32.mrb[0].mxu0
    %v685 = vadd.f32 %v290, %v684
    %v686 = vpop.f32.mrb[0].mxu0
    %v687 = vadd.f32 %v294, %v686
    %v688 = vpop.f32.mrb[0].mxu0
    %v689 = vadd.f32 %v290, %v688
    %v690 = vpop.f32.mrb[0].mxu0
    %v691 = vadd.f32 %v294, %v690
    %692 = vmatprep.mubr.bf16.mxu0 0
    %693 = vmatmul.mubr.bf16.gmra.mrb[0].mxu0 %v335
    %v694 = vpop.f32.mrb[0].mxu0
    %v695 = vadd.f32 %v290, %v694
    %v696 = vpop.f32.mrb[0].mxu0
    %v697 = vadd.f32 %v294, %v696
    %v698 = vpop.f32.mrb[0].mxu0
    %v699 = vadd.f32 %v290, %v698
    %v700 = vpop.f32.mrb[0].mxu0
    %v701 = vadd.f32 %v294, %v700
    %702 = vmatprep.mubr.bf16.mxu0 0
    %703 = vmatmul.mubr.bf16.gmra.mrb[0].mxu0 %v336
    %v704 = vpop.f32.mrb[0].mxu0
    %v705 = vadd.f32 %v290, %v704
    %v706 = vpop.f32.mrb[0].mxu0
    %v707 = vadd.f32 %v294, %v706
    %v708 = vpop.f32.mrb[0].mxu0
    %v709 = vadd.f32 %v290, %v708
    %v710 = vpop.f32.mrb[0].mxu0
    %v711 = vadd.f32 %v294, %v710
    %712 = vmatprep.mubr.bf16.mxu0 0
    %713 = vmatmul.mubr.bf16.gmra.mrb[0].mxu0 %v337
    %v714 = vpop.f32.mrb[0].mxu0
    %v715 = vadd.f32 %v290, %v714
    %v716 = vpop.f32.mrb[0].mxu0
    %v717 = vadd.f32 %v294, %v716
    %v718 = vpop.f32.mrb[0].mxu0
    %v719 = vadd.f32 %v290, %v718
    %v720 = vpop.f32.mrb[0].mxu0
    %v721 = vadd.f32 %v294, %v720
    %722 = vmatprep.mubr.bf16.mxu0 0
    %723 = vmatmul.mubr.bf16.gmra.mrb[0].mxu0 %v338
    %v724 = vpop.f32.mrb[0].mxu0
    %v725 = vadd.f32 %v290, %v724
    %v726 = vpop.f32.mrb[0].mxu0
    %v727 = vadd.f32 %v294, %v726
    %v728 = vpop.f32.mrb[0].mxu0
    %v729 = vadd.f32 %v290, %v728
    %v730 = vpop.f32.mrb[0].mxu0
    %v731 = vadd.f32 %v294, %v730
    %732 = vdwg.mxu0
    %v733 = vpack.c.bf16 %v546, %v542
    %v734 = vpack.c.bf16 %v548, %v544
    %v735 = vpack.c.bf16 %v659, %v655
    %v736 = vpack.c.bf16 %v661, %v657
    %v737 = vpack.c.bf16 %v556, %v552
    %v738 = vpack.c.bf16 %v558, %v554
    %v739 = vpack.c.bf16 %v669, %v665
    %v740 = vpack.c.bf16 %v671, %v667
    %v741 = vpack.c.bf16 %v566, %v562
    %v742 = vpack.c.bf16 %v568, %v564
    %v743 = vpack.c.bf16 %v679, %v675
    %v744 = vpack.c.bf16 %v681, %v677
    %v745 = vpack.c.bf16 %v576, %v572
    %v746 = vpack.c.bf16 %v578, %v574
    %v747 = vpack.c.bf16 %v689, %v685
    %v748 = vpack.c.bf16 %v691, %v687
    %v749 = vpack.c.bf16 %v586, %v582
    %v750 = vpack.c.bf16 %v588, %v584
    %v751 = vpack.c.bf16 %v699, %v695
    %v752 = vpack.c.bf16 %v701, %v697
    %v753 = vpack.c.bf16 %v596, %v592
    %v754 = vpack.c.bf16 %v598, %v594
    %v755 = vpack.c.bf16 %v709, %v705
    %v756 = vpack.c.bf16 %v711, %v707
    %v757 = vpack.c.bf16 %v606, %v602
    %v758 = vpack.c.bf16 %v608, %v604
    %v759 = vpack.c.bf16 %v719, %v715
    %v760 = vpack.c.bf16 %v721, %v717
    %v761 = vpack.c.bf16 %v616, %v612
    %v762 = vpack.c.bf16 %v618, %v614
    %v763 = vpack.c.bf16 %v729, %v725
    %v764 = vpack.c.bf16 %v731, %v727
    %765 = vst [vmem:[#allocation3] sm:$0xff] %v733
    %766 = vst [vmem:[#allocation3 + $0x8] sm:$0xff] %v734
    %767 = vst [vmem:[#allocation3 + $0x10] sm:$0xff] %v735
    %768 = vst [vmem:[#allocation3 + $0x18] sm:$0xff] %v736
    %769 = vst [vmem:[#allocation3 + $0x20] sm:$0xff] %v737
    %770 = vst [vmem:[#allocation3 + $0x28] sm:$0xff] %v738
    %771 = vst [vmem:[#allocation3 + $0x30] sm:$0xff] %v739
    %772 = vst [vmem:[#allocation3 + $0x38] sm:$0xff] %v740
    %773 = vst [vmem:[#allocation3 + $0x40] sm:$0xff] %v741
    %774 = vst [vmem:[#allocation3 + $0x48] sm:$0xff] %v742
    %775 = vst [vmem:[#allocation3 + $0x50] sm:$0xff] %v743
    %776 = vst [vmem:[#allocation3 + $0x58] sm:$0xff] %v744
    %777 = vst [vmem:[#allocation3 + $0x60] sm:$0xff] %v745
    %778 = vst [vmem:[#allocation3 + $0x68] sm:$0xff] %v746
    %779 = vst [vmem:[#allocation3 + $0x70] sm:$0xff] %v747
    %780 = vst [vmem:[#allocation3 + $0x78] sm:$0xff] %v748
    %781 = vst [vmem:[#allocation3 + $0x80] sm:$0xff] %v749
    %782 = vst [vmem:[#allocation3 + $0x88] sm:$0xff] %v750
    %783 = vst [vmem:[#allocation3 + $0x90] sm:$0xff] %v751
    %784 = vst [vmem:[#allocation3 + $0x98] sm:$0xff] %v752
    %785 = vst [vmem:[#allocation3 + $0xa0] sm:$0xff] %v753
    %786 = vst [vmem:[#allocation3 + $0xa8] sm:$0xff] %v754
    %787 = vst [vmem:[#allocation3 + $0xb0] sm:$0xff] %v755
    %788 = vst [vmem:[#allocation3 + $0xb8] sm:$0xff] %v756
    %789 = vst [vmem:[#allocation3 + $0xc0] sm:$0xff] %v757
    %790 = vst [vmem:[#allocation3 + $0xc8] sm:$0xff] %v758
    %791 = vst [vmem:[#allocation3 + $0xd0] sm:$0xff] %v759
    %792 = vst [vmem:[#allocation3 + $0xd8] sm:$0xff] %v760
    %793 = vst [vmem:[#allocation3 + $0xe0] sm:$0xff] %v761
    %794 = vst [vmem:[#allocation3 + $0xe8] sm:$0xff] %v762
    %795 = vst [vmem:[#allocation3 + $0xf0] sm:$0xff] %v763
    %796 = vst [vmem:[#allocation3 + $0xf8] sm:$0xff] %v764
    %v797 = vld [vmem:[#allocation9] sm:$0xff]
    %v798 = vld [vmem:[#allocation9 + $0x8] sm:$0xff]
    %v799 = vld [vmem:[#allocation9 + $0x10] sm:$0xff]
    %v800 = vld [vmem:[#allocation9 + $0x18] sm:$0xff]
    %v801 = vld [vmem:[#allocation9 + $0x20] sm:$0xff]
    %v802 = vld [vmem:[#allocation9 + $0x28] sm:$0xff]
    %v803 = vld [vmem:[#allocation9 + $0x30] sm:$0xff]
    %v804 = vld [vmem:[#allocation9 + $0x38] sm:$0xff]
    %v805 = vld [vmem:[#allocation9 + $0x40] sm:$0xff]
    %v806 = vld [vmem:[#allocation9 + $0x48] sm:$0xff]
    %v807 = vld [vmem:[#allocation9 + $0x50] sm:$0xff]
    %v808 = vld [vmem:[#allocation9 + $0x58] sm:$0xff]
    %v809 = vld [vmem:[#allocation9 + $0x60] sm:$0xff]
    %v810 = vld [vmem:[#allocation9 + $0x68] sm:$0xff]
    %v811 = vld [vmem:[#allocation9 + $0x70] sm:$0xff]
    %v812 = vld [vmem:[#allocation9 + $0x78] sm:$0xff]
    %v813 = vld [vmem:[#allocation9 + $0x80] sm:$0xff]
    %v814 = vld [vmem:[#allocation9 + $0x88] sm:$0xff]
    %v815 = vld [vmem:[#allocation9 + $0x90] sm:$0xff]
    %v816 = vld [vmem:[#allocation9 + $0x98] sm:$0xff]
    %v817 = vld [vmem:[#allocation9 + $0xa0] sm:$0xff]
    %v818 = vld [vmem:[#allocation9 + $0xa8] sm:$0xff]
    %v819 = vld [vmem:[#allocation9 + $0xb0] sm:$0xff]
    %v820 = vld [vmem:[#allocation9 + $0xb8] sm:$0xff]
    %v821 = vld [vmem:[#allocation9 + $0xc0] sm:$0xff]
    %v822 = vld [vmem:[#allocation9 + $0xc8] sm:$0xff]
    %v823 = vld [vmem:[#allocation9 + $0xd0] sm:$0xff]
    %v824 = vld [vmem:[#allocation9 + $0xd8] sm:$0xff]
    %v825 = vld [vmem:[#allocation9 + $0xe0] sm:$0xff]
    %v826 = vld [vmem:[#allocation9 + $0xe8] sm:$0xff]
    %v827 = vld [vmem:[#allocation9 + $0xf0] sm:$0xff]
    %v828 = vld [vmem:[#allocation9 + $0xf8] sm:$0xff]
    %s829 = smul.u32 0, 4
    %s830 = smul.addr %s829, 8
    %s831 = scalar_lea.vmem [#allocation3], %s830
    %v832 = vld [vmem:[%s831] sm:$0xff]
    %v833 = vld [vmem:[%s831 + $0x8] sm:$0xff]
    %v834 = vld [vmem:[%s831 + $0x10] sm:$0xff]
    %v835 = vld [vmem:[%s831 + $0x18] sm:$0xff]
    %v868 = vunpack.c.l.b16 %v797
    %v869 = vunpack.c.h.b16 %v797
    %v870 = vunpack.c.l.b16 %v798
    %v871 = vunpack.c.h.b16 %v798
    %v872 = vunpack.c.l.b16 %v799
    %v873 = vunpack.c.h.b16 %v799
    %v874 = vunpack.c.l.b16 %v800
    %v875 = vunpack.c.h.b16 %v800
    %v876 = vunpack.c.l.b16 %v801
    %v877 = vunpack.c.h.b16 %v801
    %v878 = vunpack.c.l.b16 %v802
    %v879 = vunpack.c.h.b16 %v802
    %v880 = vunpack.c.l.b16 %v803
    %v881 = vunpack.c.h.b16 %v803
    %v882 = vunpack.c.l.b16 %v804
    %v883 = vunpack.c.h.b16 %v804
    %v884 = vunpack.c.l.b16 %v805
    %v885 = vunpack.c.h.b16 %v805
    %v886 = vunpack.c.l.b16 %v806
    %v887 = vunpack.c.h.b16 %v806
    %v888 = vunpack.c.l.b16 %v807
    %v889 = vunpack.c.h.b16 %v807
    %v890 = vunpack.c.l.b16 %v808
    %v891 = vunpack.c.h.b16 %v808
    %v892 = vunpack.c.l.b16 %v809
    %v893 = vunpack.c.h.b16 %v809
    %v894 = vunpack.c.l.b16 %v810
    %v895 = vunpack.c.h.b16 %v810
    %v896 = vunpack.c.l.b16 %v811
    %v897 = vunpack.c.h.b16 %v811
    %v898 = vunpack.c.l.b16 %v812
    %v899 = vunpack.c.h.b16 %v812
    %v900 = vunpack.c.l.b16 %v813
    %v901 = vunpack.c.h.b16 %v813
    %v902 = vunpack.c.l.b16 %v814
    %v903 = vunpack.c.h.b16 %v814
    %v904 = vunpack.c.l.b16 %v815
    %v905 = vunpack.c.h.b16 %v815
    %v906 = vunpack.c.l.b16 %v816
    %v907 = vunpack.c.h.b16 %v816
    %v908 = vunpack.c.l.b16 %v817
    %v909 = vunpack.c.h.b16 %v817
    %v910 = vunpack.c.l.b16 %v818
    %v911 = vunpack.c.h.b16 %v818
    %v912 = vunpack.c.l.b16 %v819
    %v913 = vunpack.c.h.b16 %v819
    %v914 = vunpack.c.l.b16 %v820
    %v915 = vunpack.c.h.b16 %v820
    %v916 = vunpack.c.l.b16 %v821
    %v917 = vunpack.c.h.b16 %v821
    %v918 = vunpack.c.l.b16 %v822
    %v919 = vunpack.c.h.b16 %v822
    %v920 = vunpack.c.l.b16 %v823
    %v921 = vunpack.c.h.b16 %v823
    %v922 = vunpack.c.l.b16 %v824
    %v923 = vunpack.c.h.b16 %v824
    %v924 = vunpack.c.l.b16 %v825
    %v925 = vunpack.c.h.b16 %v825
    %v926 = vunpack.c.l.b16 %v826
    %v927 = vunpack.c.h.b16 %v826
    %v928 = vunpack.c.l.b16 %v827
    %v929 = vunpack.c.h.b16 %v827
    %v930 = vunpack.c.l.b16 %v828
    %v931 = vunpack.c.h.b16 %v828
    %v932 = vpack.c.b16 %v872, %v868
    %v933 = vpack.c.b16 %v873, %v869
    %v934 = vpack.c.b16 %v874, %v870
    %v935 = vpack.c.b16 %v875, %v871
    %v936 = vpack.c.b16 %v880, %v876
    %v937 = vpack.c.b16 %v881, %v877
    %v938 = vpack.c.b16 %v882, %v878
    %v939 = vpack.c.b16 %v883, %v879
    %v940 = vpack.c.b16 %v888, %v884
    %v941 = vpack.c.b16 %v889, %v885
    %v942 = vpack.c.b16 %v890, %v886
    %v943 = vpack.c.b16 %v891, %v887
    %v944 = vpack.c.b16 %v896, %v892
    %v945 = vpack.c.b16 %v897, %v893
    %v946 = vpack.c.b16 %v898, %v894
    %v947 = vpack.c.b16 %v899, %v895
    %v948 = vpack.c.b16 %v904, %v900
    %v949 = vpack.c.b16 %v905, %v901
    %v950 = vpack.c.b16 %v906, %v902
    %v951 = vpack.c.b16 %v907, %v903
    %v952 = vpack.c.b16 %v912, %v908
    %v953 = vpack.c.b16 %v913, %v909
    %v954 = vpack.c.b16 %v914, %v910
    %v955 = vpack.c.b16 %v915, %v911
    %v956 = vpack.c.b16 %v920, %v916
    %v957 = vpack.c.b16 %v921, %v917
    %v958 = vpack.c.b16 %v922, %v918
    %v959 = vpack.c.b16 %v923, %v919
    %v960 = vpack.c.b16 %v928, %v924
    %v961 = vpack.c.b16 %v929, %v925
    %v962 = vpack.c.b16 %v930, %v926
    %v963 = vpack.c.b16 %v931, %v927
    %996 = vmatprep.subr.bf16.mxu0 %v933
    %997 = vmatpush1.bf16.msra.mxu0 %v932
    %998 = vmatprep.subr.bf16.mxu0 %v937
    %999 = vmatpush1.bf16.msra.mxu0 %v936
    %1000 = vmatprep.subr.bf16.mxu0 %v941
    %1001 = vmatpush1.bf16.msra.mxu0 %v940
    %1002 = vmatprep.subr.bf16.mxu0 %v945
    %1003 = vmatpush1.bf16.msra.mxu0 %v944
    %1004 = vmatprep.subr.bf16.mxu0 %v949
    %1005 = vmatpush1.bf16.msra.mxu0 %v948
    %1006 = vmatprep.subr.bf16.mxu0 %v953
    %1007 = vmatpush1.bf16.msra.mxu0 %v952
    %1008 = vmatprep.subr.bf16.mxu0 %v957
    %1009 = vmatpush1.bf16.msra.mxu0 %v956
    %1010 = vmatprep.subr.bf16.mxu0 %v961
    %1011 = vmatpush1.bf16.msra.mxu0 %v960
    %1012 = vmatprep.subr.bf16.mxu0 0
    %1013 = vmatpush1.bf16.msra.mxu0 0
    %1014 = vmatprep.subr.bf16.mxu0 0
    %1015 = vmatpush1.bf16.msra.mxu0 0
    %1016 = vmatprep.subr.bf16.mxu0 0
    %1017 = vmatpush1.bf16.msra.mxu0 0
    %1018 = vmatprep.subr.bf16.mxu0 0
    %1019 = vmatpush1.bf16.msra.mxu0 0
    %1020 = vmatprep.subr.bf16.mxu0 0
    %1021 = vmatpush1.bf16.msra.mxu0 0
    %1022 = vmatprep.subr.bf16.mxu0 0
    %1023 = vmatpush1.bf16.msra.mxu0 0
    %1024 = vmatprep.subr.bf16.mxu0 0
    %1025 = vmatpush1.bf16.msra.mxu0 0
    %1026 = vmatprep.subr.bf16.mxu0 0
    %1027 = vmatpush1.bf16.msra.mxu0 0
    %1028 = vmatprep.mubr.bf16.mxu0 0
    %1029 = vmatmul.mubr.bf16.gmra.mrb[0].mxu0 0
    %v1030 = vpop.f32.mrb[0].mxu0
    %v1031 = vadd.f32 0.0, %v1030
    %v1032 = vpop.f32.mrb[0].mxu0
    %v1033 = vadd.f32 0.0, %v1032
    %v1034 = vpop.f32.mrb[0].mxu0
    %v1035 = vadd.f32 0.0, %v1034
    %v1036 = vpop.f32.mrb[0].mxu0
    %v1037 = vadd.f32 0.0, %v1036
    %1038 = vdwg.mxu0
    %1039 = vmatprep.subr.bf16.mxu0 %v935
    %1040 = vmatpush1.bf16.msra.mxu0 %v934
    %1041 = vmatprep.subr.bf16.mxu0 %v939
    %1042 = vmatpush1.bf16.msra.mxu0 %v938
    %1043 = vmatprep.subr.bf16.mxu0 %v943
    %1044 = vmatpush1.bf16.msra.mxu0 %v942
    %1045 = vmatprep.subr.bf16.mxu0 %v947
    %1046 = vmatpush1.bf16.msra.mxu0 %v946
    %1047 = vmatprep.subr.bf16.mxu0 %v951
    %1048 = vmatpush1.bf16.msra.mxu0 %v950
    %1049 = vmatprep.subr.bf16.mxu0 %v955
    %1050 = vmatpush1.bf16.msra.mxu0 %v954
    %1051 = vmatprep.subr.bf16.mxu0 %v959
    %1052 = vmatpush1.bf16.msra.mxu0 %v958
    %1053 = vmatprep.subr.bf16.mxu0 %v963
    %1054 = vmatpush1.bf16.msra.mxu0 %v962
    %1055 = vmatprep.subr.bf16.mxu0 0
    %1056 = vmatpush1.bf16.msra.mxu0 0
    %1057 = vmatprep.subr.bf16.mxu0 0
    %1058 = vmatpush1.bf16.msra.mxu0 0
    %1059 = vmatprep.subr.bf16.mxu0 0
    %1060 = vmatpush1.bf16.msra.mxu0 0
    %1061 = vmatprep.subr.bf16.mxu0 0
    %1062 = vmatpush1.bf16.msra.mxu0 0
    %1063 = vmatprep.subr.bf16.mxu0 0
    %1064 = vmatpush1.bf16.msra.mxu0 0
    %1065 = vmatprep.subr.bf16.mxu0 0
    %1066 = vmatpush1.bf16.msra.mxu0 0
    %1067 = vmatprep.subr.bf16.mxu0 0
    %1068 = vmatpush1.bf16.msra.mxu0 0
    %1069 = vmatprep.subr.bf16.mxu0 0
    %1070 = vmatpush1.bf16.msra.mxu0 0
    %1071 = vmatprep.mubr.bf16.mxu0 0
    %1072 = vmatmul.mubr.bf16.gmra.mrb[0].mxu0 0
    %v1073 = vpop.f32.mrb[0].mxu0
    %v1074 = vadd.f32 0.0, %v1073
    %v1075 = vpop.f32.mrb[0].mxu0
    %v1076 = vadd.f32 0.0, %v1075
    %v1077 = vpop.f32.mrb[0].mxu0
    %v1078 = vadd.f32 0.0, %v1077
    %v1079 = vpop.f32.mrb[0].mxu0
    %v1080 = vadd.f32 0.0, %v1079
    %1081 = vdwg.mxu0
    %v1082 = vunpack.c.l.bf16 %v832
    %v1083 = vunpack.c.l.bf16 %v833
    %v1084 = vunpack.c.l.bf16 %v834
    %v1085 = vunpack.c.l.bf16 %v835
    %v1086 = vunpack.c.h.bf16 %v832
    %v1087 = vunpack.c.h.bf16 %v833
    %v1088 = vunpack.c.h.bf16 %v834
    %v1089 = vunpack.c.h.bf16 %v835
    %v1090 = vadd.f32 %v1082, %v1031
    %v1091 = vadd.f32 %v1083, %v1033
    %v1092 = vadd.f32 %v1084, %v1074
    %v1093 = vadd.f32 %v1085, %v1076
    %v1094 = vadd.f32 %v1086, %v1035
    %v1095 = vadd.f32 %v1087, %v1037
    %v1096 = vadd.f32 %v1088, %v1078
    %v1097 = vadd.f32 %v1089, %v1080
    %v1098 = vmul.f32 %v1090, 0.5
    %v1099 = vmul.f32 %v1091, 0.5
    %v1100 = vmul.f32 %v1092, 0.5
    %v1101 = vmul.f32 %v1094, 0.5
    %v1102 = vmul.f32 %v1095, 0.5
    %v1103 = vmul.f32 %v1096, 0.5
    %v1104 = vtanh.pop %v1098
    %v1105 = vtanh.pop %v1099
    %v1106 = vtanh.pop %v1100
    %v1107 = vtanh.pop %v1101
    %v1108 = vtanh.pop %v1102
    %v1109 = vtanh.pop %v1103
    %v1110 = vadd.f32 %v1104, 1.0
    %v1111 = vadd.f32 %v1105, 1.0
    %v1112 = vadd.f32 %v1106, 1.0
    %v1113 = vadd.f32 %v1107, 1.0
    %v1114 = vadd.f32 %v1108, 1.0
    %v1115 = vadd.f32 %v1109, 1.0
    %v1116 = vmul.f32 %v1110, 0.5
    %v1117 = vmul.f32 %v1111, 0.5
    %v1118 = vmul.f32 %v1112, 0.5
    %v1119 = vmul.f32 %v1113, 0.5
    %v1120 = vmul.f32 %v1114, 0.5
    %v1121 = vmul.f32 %v1115, 0.5
    %v1122 = vtanh.pop %v1093
    %v1123 = vtanh.pop %v1097
    %v1124 = vmul.f32 %v1117, 0.0
    %v1125 = vmul.f32 %v1120, 0.0
    %v1126 = vmul.f32 %v1116, %v1122
    %v1127 = vmul.f32 %v1119, %v1123
    %v1128 = vadd.f32 %v1124, %v1126
    %v1129 = vadd.f32 %v1125, %v1127
    %v1130 = vtanh.pop %v1128
    %v1131 = vtanh.pop %v1129
    %v1132 = vmul.f32 %v1118, %v1130
    %v1133 = vmul.f32 %v1121, %v1131
    %v1134 = vpack.c.bf16 %v1133, %v1132
    %1135 = vst [vmem:[#allocation2] sm:$0xff] %v1134
    %s1136 = smul.u32 1, 4
    %s1137 = smul.addr %s1136, 8
    %s1138 = scalar_lea.vmem [#allocation3], %s1137
    %v1139 = vld [vmem:[%s1138] sm:$0xff]
    %v1140 = vld [vmem:[%s1138 + $0x8] sm:$0xff]
    %v1141 = vld [vmem:[%s1138 + $0x10] sm:$0xff]
    %v1142 = vld [vmem:[%s1138 + $0x18] sm:$0xff]
    %1143 = vmatprep.subr.bf16.mxu0 %v933
    %1144 = vmatpush1.bf16.msra.mxu0 %v932
    %1145 = vmatprep.subr.bf16.mxu0 %v937
    %1146 = vmatpush1.bf16.msra.mxu0 %v936
    %1147 = vmatprep.subr.bf16.mxu0 %v941
    %1148 = vmatpush1.bf16.msra.mxu0 %v940
    %1149 = vmatprep.subr.bf16.mxu0 %v945
    %1150 = vmatpush1.bf16.msra.mxu0 %v944
    %1151 = vmatprep.subr.bf16.mxu0 %v949
    %1152 = vmatpush1.bf16.msra.mxu0 %v948
    %1153 = vmatprep.subr.bf16.mxu0 %v953
    %1154 = vmatpush1.bf16.msra.mxu0 %v952
    %1155 = vmatprep.subr.bf16.mxu0 %v957
    %1156 = vmatpush1.bf16.msra.mxu0 %v956
    %1157 = vmatprep.subr.bf16.mxu0 %v961
    %1158 = vmatpush1.bf16.msra.mxu0 %v960
    %1159 = vmatprep.subr.bf16.mxu0 0
    %1160 = vmatpush1.bf16.msra.mxu0 0
    %1161 = vmatprep.subr.bf16.mxu0 0
    %1162 = vmatpush1.bf16.msra.mxu0 0
    %1163 = vmatprep.subr.bf16.mxu0 0
    %1164 = vmatpush1.bf16.msra.mxu0 0
    %1165 = vmatprep.subr.bf16.mxu0 0
    %1166 = vmatpush1.bf16.msra.mxu0 0
    %1167 = vmatprep.subr.bf16.mxu0 0
    %1168 = vmatpush1.bf16.msra.mxu0 0
    %1169 = vmatprep.subr.bf16.mxu0 0
    %1170 = vmatpush1.bf16.msra.mxu0 0
    %1171 = vmatprep.subr.bf16.mxu0 0
    %1172 = vmatpush1.bf16.msra.mxu0 0
    %1173 = vmatprep.subr.bf16.mxu0 0
    %1174 = vmatpush1.bf16.msra.mxu0 0
    %1175 = vmatprep.mubr.bf16.mxu0 0
    %1176 = vmatmul.mubr.bf16.gmra.mrb[0].mxu0 %v1134
    %v1177 = vpop.f32.mrb[0].mxu0
    %v1178 = vadd.f32 0.0, %v1177
    %v1179 = vpop.f32.mrb[0].mxu0
    %v1180 = vadd.f32 0.0, %v1179
    %v1181 = vpop.f32.mrb[0].mxu0
    %v1182 = vadd.f32 0.0, %v1181
    %v1183 = vpop.f32.mrb[0].mxu0
    %v1184 = vadd.f32 0.0, %v1183
    %1185 = vdwg.mxu0
    %1186 = vmatprep.subr.bf16.mxu0 %v935
    %1187 = vmatpush1.bf16.msra.mxu0 %v934
    %1188 = vmatprep.subr.bf16.mxu0 %v939
    %1189 = vmatpush1.bf16.msra.mxu0 %v938
    %1190 = vmatprep.subr.bf16.mxu0 %v943
    %1191 = vmatpush1.bf16.msra.mxu0 %v942
    %1192 = vmatprep.subr.bf16.mxu0 %v947
    %1193 = vmatpush1.bf16.msra.mxu0 %v946
    %1194 = vmatprep.subr.bf16.mxu0 %v951
    %1195 = vmatpush1.bf16.msra.mxu0 %v950
    %1196 = vmatprep.subr.bf16.mxu0 %v955
    %1197 = vmatpush1.bf16.msra.mxu0 %v954
    %1198 = vmatprep.subr.bf16.mxu0 %v959
    %1199 = vmatpush1.bf16.msra.mxu0 %v958
    %1200 = vmatprep.subr.bf16.mxu0 %v963
    %1201 = vmatpush1.bf16.msra.mxu0 %v962
    %1202 = vmatprep.subr.bf16.mxu0 0
    %1203 = vmatpush1.bf16.msra.mxu0 0
    %1204 = vmatprep.subr.bf16.mxu0 0
    %1205 = vmatpush1.bf16.msra.mxu0 0
    %1206 = vmatprep.subr.bf16.mxu0 0
    %1207 = vmatpush1.bf16.msra.mxu0 0
    %1208 = vmatprep.subr.bf16.mxu0 0
    %1209 = vmatpush1.bf16.msra.mxu0 0
    %1210 = vmatprep.subr.bf16.mxu0 0
    %1211 = vmatpush1.bf16.msra.mxu0 0
    %1212 = vmatprep.subr.bf16.mxu0 0
    %1213 = vmatpush1.bf16.msra.mxu0 0
    %1214 = vmatprep.subr.bf16.mxu0 0
    %1215 = vmatpush1.bf16.msra.mxu0 0
    %1216 = vmatprep.subr.bf16.mxu0 0
    %1217 = vmatpush1.bf16.msra.mxu0 0
    %1218 = vmatprep.mubr.bf16.mxu0 0
    %1219 = vmatmul.mubr.bf16.gmra.mrb[0].mxu0 %v1134
    %v1220 = vpop.f32.mrb[0].mxu0
    %v1221 = vadd.f32 0.0, %v1220
    %v1222 = vpop.f32.mrb[0].mxu0
    %v1223 = vadd.f32 0.0, %v1222
    %v1224 = vpop.f32.mrb[0].mxu0
    %v1225 = vadd.f32 0.0, %v1224
    %v1226 = vpop.f32.mrb[0].mxu0
    %v1227 = vadd.f32 0.0, %v1226
    %1228 = vdwg.mxu0
    %v1229 = vunpack.c.l.bf16 %v1139
    %v1230 = vunpack.c.l.bf16 %v1140
    %v1231 = vunpack.c.l.bf16 %v1141
    %v1232 = vunpack.c.l.bf16 %v1142
    %v1233 = vunpack.c.h.bf16 %v1139
    %v1234 = vunpack.c.h.bf16 %v1140
    %v1235 = vunpack.c.h.bf16 %v1141
    %v1236 = vunpack.c.h.bf16 %v1142
    %v1237 = vadd.f32 %v1229, %v1178
    %v1238 = vadd.f32 %v1230, %v1180
    %v1239 = vadd.f32 %v1231, %v1221
    %v1240 = vadd.f32 %v1232, %v1223
    %v1241 = vadd.f32 %v1233, %v1182
    %v1242 = vadd.f32 %v1234, %v1184
    %v1243 = vadd.f32 %v1235, %v1225
    %v1244 = vadd.f32 %v1236, %v1227
    %v1245 = vmul.f32 %v1237, 0.5
    %v1246 = vmul.f32 %v1238, 0.5
    %v1247 = vmul.f32 %v1239, 0.5
    %v1248 = vmul.f32 %v1241, 0.5
    %v1249 = vmul.f32 %v1242, 0.5
    %v1250 = vmul.f32 %v1243, 0.5
    %v1251 = vtanh.pop %v1245
    %v1252 = vtanh.pop %v1246
    %v1253 = vtanh.pop %v1247
    %v1254 = vtanh.pop %v1248
    %v1255 = vtanh.pop %v1249
    %v1256 = vtanh.pop %v1250
    %v1257 = vadd.f32 %v1251, 1.0
    %v1258 = vadd.f32 %v1252, 1.0
    %v1259 = vadd.f32 %v1253, 1.0
    %v1260 = vadd.f32 %v1254, 1.0
    %v1261 = vadd.f32 %v1255, 1.0
    %v1262 = vadd.f32 %v1256, 1.0
    %v1263 = vmul.f32 %v1257, 0.5
    %v1264 = vmul.f32 %v1258, 0.5
    %v1265 = vmul.f32 %v1259, 0.5
    %v1266 = vmul.f32 %v1260, 0.5
    %v1267 = vmul.f32 %v1261, 0.5
    %v1268 = vmul.f32 %v1262, 0.5
    %v1269 = vtanh.pop %v1240
    %v1270 = vtanh.pop %v1244
    %v1271 = vmul.f32 %v1264, %v1128
    %v1272 = vmul.f32 %v1267, %v1129
    %v1273 = vmul.f32 %v1263, %v1269
    %v1274 = vmul.f32 %v1266, %v1270
    %v1275 = vadd.f32 %v1271, %v1273
    %v1276 = vadd.f32 %v1272, %v1274
    %v1277 = vtanh.pop %v1275
    %v1278 = vtanh.pop %v1276
    %v1279 = vmul.f32 %v1265, %v1277
    %v1280 = vmul.f32 %v1268, %v1278
    %v1281 = vpack.c.bf16 %v1280, %v1279
    %s1282 = scalar_lea.vmem [#allocation2], 8
    %1283 = vst [vmem:[%s1282] sm:$0xff] %v1281
    %s1284 = smul.u32 2, 4
    %s1285 = smul.addr %s1284, 8
    %s1286 = scalar_lea.vmem [#allocation3], %s1285
    %v1287 = vld [vmem:[%s1286] sm:$0xff]
    %v1288 = vld [vmem:[%s1286 + $0x8] sm:$0xff]
    %v1289 = vld [vmem:[%s1286 + $0x10] sm:$0xff]
    %v1290 = vld [vmem:[%s1286 + $0x18] sm:$0xff]
    %1291 = vmatprep.subr.bf16.mxu0 %v933
    %1292 = vmatpush1.bf16.msra.mxu0 %v932
    %1293 = vmatprep.subr.bf16.mxu0 %v937
    %1294 = vmatpush1.bf16.msra.mxu0 %v936
    %1295 = vmatprep.subr.bf16.mxu0 %v941
    %1296 = vmatpush1.bf16.msra.mxu0 %v940
    %1297 = vmatprep.subr.bf16.mxu0 %v945
    %1298 = vmatpush1.bf16.msra.mxu0 %v944
    %1299 = vmatprep.subr.bf16.mxu0 %v949
    %1300 = vmatpush1.bf16.msra.mxu0 %v948
    %1301 = vmatprep.subr.bf16.mxu0 %v953
    %1302 = vmatpush1.bf16.msra.mxu0 %v952
    %1303 = vmatprep.subr.bf16.mxu0 %v957
    %1304 = vmatpush1.bf16.msra.mxu0 %v956
    %1305 = vmatprep.subr.bf16.mxu0 %v961
    %1306 = vmatpush1.bf16.msra.mxu0 %v960
    %1307 = vmatprep.subr.bf16.mxu0 0
    %1308 = vmatpush1.bf16.msra.mxu0 0
    %1309 = vmatprep.subr.bf16.mxu0 0
    %1310 = vmatpush1.bf16.msra.mxu0 0
    %1311 = vmatprep.subr.bf16.mxu0 0
    %1312 = vmatpush1.bf16.msra.mxu0 0
    %1313 = vmatprep.subr.bf16.mxu0 0
    %1314 = vmatpush1.bf16.msra.mxu0 0
    %1315 = vmatprep.subr.bf16.mxu0 0
    %1316 = vmatpush1.bf16.msra.mxu0 0
    %1317 = vmatprep.subr.bf16.mxu0 0
    %1318 = vmatpush1.bf16.msra.mxu0 0
    %1319 = vmatprep.subr.bf16.mxu0 0
    %1320 = vmatpush1.bf16.msra.mxu0 0
    %1321 = vmatprep.subr.bf16.mxu0 0
    %1322 = vmatpush1.bf16.msra.mxu0 0
    %1323 = vmatprep.mubr.bf16.mxu0 0
    %1324 = vmatmul.mubr.bf16.gmra.mrb[0].mxu0 %v1281
    %v1325 = vpop.f32.mrb[0].mxu0
    %v1326 = vadd.f32 0.0, %v1325
    %v1327 = vpop.f32.mrb[0].mxu0
    %v1328 = vadd.f32 0.0, %v1327
    %v1329 = vpop.f32.mrb[0].mxu0
    %v1330 = vadd.f32 0.0, %v1329
    %v1331 = vpop.f32.mrb[0].mxu0
    %v1332 = vadd.f32 0.0, %v1331
    %1333 = vdwg.mxu0
    %1334 = vmatprep.subr.bf16.mxu0 %v935
    %1335 = vmatpush1.bf16.msra.mxu0 %v934
    %1336 = vmatprep.subr.bf16.mxu0 %v939
    %1337 = vmatpush1.bf16.msra.mxu0 %v938
    %1338 = vmatprep.subr.bf16.mxu0 %v943
    %1339 = vmatpush1.bf16.msra.mxu0 %v942
    %1340 = vmatprep.subr.bf16.mxu0 %v947
    %1341 = vmatpush1.bf16.msra.mxu0 %v946
    %1342 = vmatprep.subr.bf16.mxu0 %v951
    %1343 = vmatpush1.bf16.msra.mxu0 %v950
    %1344 = vmatprep.subr.bf16.mxu0 %v955
    %1345 = vmatpush1.bf16.msra.mxu0 %v954
    %1346 = vmatprep.subr.bf16.mxu0 %v959
    %1347 = vmatpush1.bf16.msra.mxu0 %v958
    %1348 = vmatprep.subr.bf16.mxu0 %v963
    %1349 = vmatpush1.bf16.msra.mxu0 %v962
    %1350 = vmatprep.subr.bf16.mxu0 0
    %1351 = vmatpush1.bf16.msra.mxu0 0
    %1352 = vmatprep.subr.bf16.mxu0 0
    %1353 = vmatpush1.bf16.msra.mxu0 0
    %1354 = vmatprep.subr.bf16.mxu0 0
    %1355 = vmatpush1.bf16.msra.mxu0 0
    %1356 = vmatprep.subr.bf16.mxu0 0
    %1357 = vmatpush1.bf16.msra.mxu0 0
    %1358 = vmatprep.subr.bf16.mxu0 0
    %1359 = vmatpush1.bf16.msra.mxu0 0
    %1360 = vmatprep.subr.bf16.mxu0 0
    %1361 = vmatpush1.bf16.msra.mxu0 0
    %1362 = vmatprep.subr.bf16.mxu0 0
    %1363 = vmatpush1.bf16.msra.mxu0 0
    %1364 = vmatprep.subr.bf16.mxu0 0
    %1365 = vmatpush1.bf16.msra.mxu0 0
    %1366 = vmatprep.mubr.bf16.mxu0 0
    %1367 = vmatmul.mubr.bf16.gmra.mrb[0].mxu0 %v1281
    %v1368 = vpop.f32.mrb[0].mxu0
    %v1369 = vadd.f32 0.0, %v1368
    %v1370 = vpop.f32.mrb[0].mxu0
    %v1371 = vadd.f32 0.0, %v1370
    %v1372 = vpop.f32.mrb[0].mxu0
    %v1373 = vadd.f32 0.0, %v1372
    %v1374 = vpop.f32.mrb[0].mxu0
    %v1375 = vadd.f32 0.0, %v1374
    %1376 = vdwg.mxu0
    %v1377 = vunpack.c.l.bf16 %v1287
    %v1378 = vunpack.c.l.bf16 %v1288
    %v1379 = vunpack.c.l.bf16 %v1289
    %v1380 = vunpack.c.l.bf16 %v1290
    %v1381 = vunpack.c.h.bf16 %v1287
    %v1382 = vunpack.c.h.bf16 %v1288
    %v1383 = vunpack.c.h.bf16 %v1289
    %v1384 = vunpack.c.h.bf16 %v1290
    %v1385 = vadd.f32 %v1377, %v1326
    %v1386 = vadd.f32 %v1378, %v1328
    %v1387 = vadd.f32 %v1379, %v1369
    %v1388 = vadd.f32 %v1380, %v1371
    %v1389 = vadd.f32 %v1381, %v1330
    %v1390 = vadd.f32 %v1382, %v1332
    %v1391 = vadd.f32 %v1383, %v1373
    %v1392 = vadd.f32 %v1384, %v1375
    %v1393 = vmul.f32 %v1385, 0.5
    %v1394 = vmul.f32 %v1386, 0.5
    %v1395 = vmul.f32 %v1387, 0.5
    %v1396 = vmul.f32 %v1389, 0.5
    %v1397 = vmul.f32 %v1390, 0.5
    %v1398 = vmul.f32 %v1391, 0.5
    %v1399 = vtanh.pop %v1393
    %v1400 = vtanh.pop %v1394
    %v1401 = vtanh.pop %v1395
    %v1402 = vtanh.pop %v1396
    %v1403 = vtanh.pop %v1397
    %v1404 = vtanh.pop %v1398
    %v1405 = vadd.f32 %v1399, 1.0
    %v1406 = vadd.f32 %v1400, 1.0
    %v1407 = vadd.f32 %v1401, 1.0
    %v1408 = vadd.f32 %v1402, 1.0
    %v1409 = vadd.f32 %v1403, 1.0
    %v1410 = vadd.f32 %v1404, 1.0
    %v1411 = vmul.f32 %v1405, 0.5
    %v1412 = vmul.f32 %v1406, 0.5
    %v1413 = vmul.f32 %v1407, 0.5
    %v1414 = vmul.f32 %v1408, 0.5
    %v1415 = vmul.f32 %v1409, 0.5
    %v1416 = vmul.f32 %v1410, 0.5
    %v1417 = vtanh.pop %v1388
    %v1418 = vtanh.pop %v1392
    %v1419 = vmul.f32 %v1412, %v1275
    %v1420 = vmul.f32 %v1415, %v1276
    %v1421 = vmul.f32 %v1411, %v1417
    %v1422 = vmul.f32 %v1414, %v1418
    %v1423 = vadd.f32 %v1419, %v1421
    %v1424 = vadd.f32 %v1420, %v1422
    %v1425 = vtanh.pop %v1423
    %v1426 = vtanh.pop %v1424
    %v1427 = vmul.f32 %v1413, %v1425
    %v1428 = vmul.f32 %v1416, %v1426
    %v1429 = vpack.c.bf16 %v1428, %v1427
    %s1430 = scalar_lea.vmem [#allocation2], 16
    %1431 = vst [vmem:[%s1430] sm:$0xff] %v1429
    %s1432 = smul.u32 3, 4
    %s1433 = smul.addr %s1432, 8
    %s1434 = scalar_lea.vmem [#allocation3], %s1433
    %v1435 = vld [vmem:[%s1434] sm:$0xff]
    %v1436 = vld [vmem:[%s1434 + $0x8] sm:$0xff]
    %v1437 = vld [vmem:[%s1434 + $0x10] sm:$0xff]
    %v1438 = vld [vmem:[%s1434 + $0x18] sm:$0xff]
    %1439 = vmatprep.subr.bf16.mxu0 %v933
    %1440 = vmatpush1.bf16.msra.mxu0 %v932
    %1441 = vmatprep.subr.bf16.mxu0 %v937
    %1442 = vmatpush1.bf16.msra.mxu0 %v936
    %1443 = vmatprep.subr.bf16.mxu0 %v941
    %1444 = vmatpush1.bf16.msra.mxu0 %v940
    %1445 = vmatprep.subr.bf16.mxu0 %v945
    %1446 = vmatpush1.bf16.msra.mxu0 %v944
    %1447 = vmatprep.subr.bf16.mxu0 %v949
    %1448 = vmatpush1.bf16.msra.mxu0 %v948
    %1449 = vmatprep.subr.bf16.mxu0 %v953
    %1450 = vmatpush1.bf16.msra.mxu0 %v952
    %1451 = vmatprep.subr.bf16.mxu0 %v957
    %1452 = vmatpush1.bf16.msra.mxu0 %v956
    %1453 = vmatprep.subr.bf16.mxu0 %v961
    %1454 = vmatpush1.bf16.msra.mxu0 %v960
    %1455 = vmatprep.subr.bf16.mxu0 0
    %1456 = vmatpush1.bf16.msra.mxu0 0
    %1457 = vmatprep.subr.bf16.mxu0 0
    %1458 = vmatpush1.bf16.msra.mxu0 0
    %1459 = vmatprep.subr.bf16.mxu0 0
    %1460 = vmatpush1.bf16.msra.mxu0 0
    %1461 = vmatprep.subr.bf16.mxu0 0
    %1462 = vmatpush1.bf16.msra.mxu0 0
    %1463 = vmatprep.subr.bf16.mxu0 0
    %1464 = vmatpush1.bf16.msra.mxu0 0
    %1465 = vmatprep.subr.bf16.mxu0 0
    %1466 = vmatpush1.bf16.msra.mxu0 0
    %1467 = vmatprep.subr.bf16.mxu0 0
    %1468 = vmatpush1.bf16.msra.mxu0 0
    %1469 = vmatprep.subr.bf16.mxu0 0
    %1470 = vmatpush1.bf16.msra.mxu0 0
    %1471 = vmatprep.mubr.bf16.mxu0 0
    %1472 = vmatmul.mubr.bf16.gmra.mrb[0].mxu0 %v1429
    %v1473 = vpop.f32.mrb[0].mxu0
    %v1474 = vadd.f32 0.0, %v1473
    %v1475 = vpop.f32.mrb[0].mxu0
    %v1476 = vadd.f32 0.0, %v1475
    %v1477 = vpop.f32.mrb[0].mxu0
    %v1478 = vadd.f32 0.0, %v1477
    %v1479 = vpop.f32.mrb[0].mxu0
    %v1480 = vadd.f32 0.0, %v1479
    %1481 = vdwg.mxu0
    %1482 = vmatprep.subr.bf16.mxu0 %v935
    %1483 = vmatpush1.bf16.msra.mxu0 %v934
    %1484 = vmatprep.subr.bf16.mxu0 %v939
    %1485 = vmatpush1.bf16.msra.mxu0 %v938
    %1486 = vmatprep.subr.bf16.mxu0 %v943
    %1487 = vmatpush1.bf16.msra.mxu0 %v942
    %1488 = vmatprep.subr.bf16.mxu0 %v947
    %1489 = vmatpush1.bf16.msra.mxu0 %v946
    %1490 = vmatprep.subr.bf16.mxu0 %v951
    %1491 = vmatpush1.bf16.msra.mxu0 %v950
    %1492 = vmatprep.subr.bf16.mxu0 %v955
    %1493 = vmatpush1.bf16.msra.mxu0 %v954
    %1494 = vmatprep.subr.bf16.mxu0 %v959
    %1495 = vmatpush1.bf16.msra.mxu0 %v958
    %1496 = vmatprep.subr.bf16.mxu0 %v963
    %1497 = vmatpush1.bf16.msra.mxu0 %v962
    %1498 = vmatprep.subr.bf16.mxu0 0
    %1499 = vmatpush1.bf16.msra.mxu0 0
    %1500 = vmatprep.subr.bf16.mxu0 0
    %1501 = vmatpush1.bf16.msra.mxu0 0
    %1502 = vmatprep.subr.bf16.mxu0 0
    %1503 = vmatpush1.bf16.msra.mxu0 0
    %1504 = vmatprep.subr.bf16.mxu0 0
    %1505 = vmatpush1.bf16.msra.mxu0 0
    %1506 = vmatprep.subr.bf16.mxu0 0
    %1507 = vmatpush1.bf16.msra.mxu0 0
    %1508 = vmatprep.subr.bf16.mxu0 0
    %1509 = vmatpush1.bf16.msra.mxu0 0
    %1510 = vmatprep.subr.bf16.mxu0 0
    %1511 = vmatpush1.bf16.msra.mxu0 0
    %1512 = vmatprep.subr.bf16.mxu0 0
    %1513 = vmatpush1.bf16.msra.mxu0 0
    %1514 = vmatprep.mubr.bf16.mxu0 0
    %1515 = vmatmul.mubr.bf16.gmra.mrb[0].mxu0 %v1429
    %v1516 = vpop.f32.mrb[0].mxu0
    %v1517 = vadd.f32 0.0, %v1516
    %v1518 = vpop.f32.mrb[0].mxu0
    %v1519 = vadd.f32 0.0, %v1518
    %v1520 = vpop.f32.mrb[0].mxu0
    %v1521 = vadd.f32 0.0, %v1520
    %v1522 = vpop.f32.mrb[0].mxu0
    %v1523 = vadd.f32 0.0, %v1522
    %1524 = vdwg.mxu0
    %v1525 = vunpack.c.l.bf16 %v1435
    %v1526 = vunpack.c.l.bf16 %v1436
    %v1527 = vunpack.c.l.bf16 %v1437
    %v1528 = vunpack.c.l.bf16 %v1438
    %v1529 = vunpack.c.h.bf16 %v1435
    %v1530 = vunpack.c.h.bf16 %v1436
    %v1531 = vunpack.c.h.bf16 %v1437
    %v1532 = vunpack.c.h.bf16 %v1438
    %v1533 = vadd.f32 %v1525, %v1474
    %v1534 = vadd.f32 %v1526, %v1476
    %v1535 = vadd.f32 %v1527, %v1517
    %v1536 = vadd.f32 %v1528, %v1519
    %v1537 = vadd.f32 %v1529, %v1478
    %v1538 = vadd.f32 %v1530, %v1480
    %v1539 = vadd.f32 %v1531, %v1521
    %v1540 = vadd.f32 %v1532, %v1523
    %v1541 = vmul.f32 %v1533, 0.5
    %v1542 = vmul.f32 %v1534, 0.5
    %v1543 = vmul.f32 %v1535, 0.5
    %v1544 = vmul.f32 %v1537, 0.5
    %v1545 = vmul.f32 %v1538, 0.5
    %v1546 = vmul.f32 %v1539, 0.5
    %v1547 = vtanh.pop %v1541
    %v1548 = vtanh.pop %v1542
    %v1549 = vtanh.pop %v1543
    %v1550 = vtanh.pop %v1544
    %v1551 = vtanh.pop %v1545
    %v1552 = vtanh.pop %v1546
    %v1553 = vadd.f32 %v1547, 1.0
    %v1554 = vadd.f32 %v1548, 1.0
    %v1555 = vadd.f32 %v1549, 1.0
    %v1556 = vadd.f32 %v1550, 1.0
    %v1557 = vadd.f32 %v1551, 1.0
    %v1558 = vadd.f32 %v1552, 1.0
    %v1559 = vmul.f32 %v1553, 0.5
    %v1560 = vmul.f32 %v1554, 0.5
    %v1561 = vmul.f32 %v1555, 0.5
    %v1562 = vmul.f32 %v1556, 0.5
    %v1563 = vmul.f32 %v1557, 0.5
    %v1564 = vmul.f32 %v1558, 0.5
    %v1565 = vtanh.pop %v1536
    %v1566 = vtanh.pop %v1540
    %v1567 = vmul.f32 %v1560, %v1423
    %v1568 = vmul.f32 %v1563, %v1424
    %v1569 = vmul.f32 %v1559, %v1565
    %v1570 = vmul.f32 %v1562, %v1566
    %v1571 = vadd.f32 %v1567, %v1569
    %v1572 = vadd.f32 %v1568, %v1570
    %v1573 = vtanh.pop %v1571
    %v1574 = vtanh.pop %v1572
    %v1575 = vmul.f32 %v1561, %v1573
    %v1576 = vmul.f32 %v1564, %v1574
    %v1577 = vpack.c.bf16 %v1576, %v1575
    %s1578 = scalar_lea.vmem [#allocation2], 24
    %1579 = vst [vmem:[%s1578] sm:$0xff] %v1577
    %s1580 = smul.u32 4, 4
    %s1581 = smul.addr %s1580, 8
    %s1582 = scalar_lea.vmem [#allocation3], %s1581
    %v1583 = vld [vmem:[%s1582] sm:$0xff]
    %v1584 = vld [vmem:[%s1582 + $0x8] sm:$0xff]
    %v1585 = vld [vmem:[%s1582 + $0x10] sm:$0xff]
    %v1586 = vld [vmem:[%s1582 + $0x18] sm:$0xff]
    %1587 = vmatprep.subr.bf16.mxu0 %v933
    %1588 = vmatpush1.bf16.msra.mxu0 %v932
    %1589 = vmatprep.subr.bf16.mxu0 %v937
    %1590 = vmatpush1.bf16.msra.mxu0 %v936
    %1591 = vmatprep.subr.bf16.mxu0 %v941
    %1592 = vmatpush1.bf16.msra.mxu0 %v940
    %1593 = vmatprep.subr.bf16.mxu0 %v945
    %1594 = vmatpush1.bf16.msra.mxu0 %v944
    %1595 = vmatprep.subr.bf16.mxu0 %v949
    %1596 = vmatpush1.bf16.msra.mxu0 %v948
    %1597 = vmatprep.subr.bf16.mxu0 %v953
    %1598 = vmatpush1.bf16.msra.mxu0 %v952
    %1599 = vmatprep.subr.bf16.mxu0 %v957
    %1600 = vmatpush1.bf16.msra.mxu0 %v956
    %1601 = vmatprep.subr.bf16.mxu0 %v961
    %1602 = vmatpush1.bf16.msra.mxu0 %v960
    %1603 = vmatprep.subr.bf16.mxu0 0
    %1604 = vmatpush1.bf16.msra.mxu0 0
    %1605 = vmatprep.subr.bf16.mxu0 0
    %1606 = vmatpush1.bf16.msra.mxu0 0
    %1607 = vmatprep.subr.bf16.mxu0 0
    %1608 = vmatpush1.bf16.msra.mxu0 0
    %1609 = vmatprep.subr.bf16.mxu0 0
    %1610 = vmatpush1.bf16.msra.mxu0 0
    %1611 = vmatprep.subr.bf16.mxu0 0
    %1612 = vmatpush1.bf16.msra.mxu0 0
    %1613 = vmatprep.subr.bf16.mxu0 0
    %1614 = vmatpush1.bf16.msra.mxu0 0
    %1615 = vmatprep.subr.bf16.mxu0 0
    %1616 = vmatpush1.bf16.msra.mxu0 0
    %1617 = vmatprep.subr.bf16.mxu0 0
    %1618 = vmatpush1.bf16.msra.mxu0 0
    %1619 = vmatprep.mubr.bf16.mxu0 0
    %1620 = vmatmul.mubr.bf16.gmra.mrb[0].mxu0 %v1577
    %v1621 = vpop.f32.mrb[0].mxu0
    %v1622 = vadd.f32 0.0, %v1621
    %v1623 = vpop.f32.mrb[0].mxu0
    %v1624 = vadd.f32 0.0, %v1623
    %v1625 = vpop.f32.mrb[0].mxu0
    %v1626 = vadd.f32 0.0, %v1625
    %v1627 = vpop.f32.mrb[0].mxu0
    %v1628 = vadd.f32 0.0, %v1627
    %1629 = vdwg.mxu0
    %1630 = vmatprep.subr.bf16.mxu0 %v935
    %1631 = vmatpush1.bf16.msra.mxu0 %v934
    %1632 = vmatprep.subr.bf16.mxu0 %v939
    %1633 = vmatpush1.bf16.msra.mxu0 %v938
    %1634 = vmatprep.subr.bf16.mxu0 %v943
    %1635 = vmatpush1.bf16.msra.mxu0 %v942
    %1636 = vmatprep.subr.bf16.mxu0 %v947
    %1637 = vmatpush1.bf16.msra.mxu0 %v946
    %1638 = vmatprep.subr.bf16.mxu0 %v951
    %1639 = vmatpush1.bf16.msra.mxu0 %v950
    %1640 = vmatprep.subr.bf16.mxu0 %v955
    %1641 = vmatpush1.bf16.msra.mxu0 %v954
    %1642 = vmatprep.subr.bf16.mxu0 %v959
    %1643 = vmatpush1.bf16.msra.mxu0 %v958
    %1644 = vmatprep.subr.bf16.mxu0 %v963
    %1645 = vmatpush1.bf16.msra.mxu0 %v962
    %1646 = vmatprep.subr.bf16.mxu0 0
    %1647 = vmatpush1.bf16.msra.mxu0 0
    %1648 = vmatprep.subr.bf16.mxu0 0
    %1649 = vmatpush1.bf16.msra.mxu0 0
    %1650 = vmatprep.subr.bf16.mxu0 0
    %1651 = vmatpush1.bf16.msra.mxu0 0
    %1652 = vmatprep.subr.bf16.mxu0 0
    %1653 = vmatpush1.bf16.msra.mxu0 0
    %1654 = vmatprep.subr.bf16.mxu0 0
    %1655 = vmatpush1.bf16.msra.mxu0 0
    %1656 = vmatprep.subr.bf16.mxu0 0
    %1657 = vmatpush1.bf16.msra.mxu0 0
    %1658 = vmatprep.subr.bf16.mxu0 0
    %1659 = vmatpush1.bf16.msra.mxu0 0
    %1660 = vmatprep.subr.bf16.mxu0 0
    %1661 = vmatpush1.bf16.msra.mxu0 0
    %1662 = vmatprep.mubr.bf16.mxu0 0
    %1663 = vmatmul.mubr.bf16.gmra.mrb[0].mxu0 %v1577
    %v1664 = vpop.f32.mrb[0].mxu0
    %v1665 = vadd.f32 0.0, %v1664
    %v1666 = vpop.f32.mrb[0].mxu0
    %v1667 = vadd.f32 0.0, %v1666
    %v1668 = vpop.f32.mrb[0].mxu0
    %v1669 = vadd.f32 0.0, %v1668
    %v1670 = vpop.f32.mrb[0].mxu0
    %v1671 = vadd.f32 0.0, %v1670
    %1672 = vdwg.mxu0
    %v1673 = vunpack.c.l.bf16 %v1583
    %v1674 = vunpack.c.l.bf16 %v1584
    %v1675 = vunpack.c.l.bf16 %v1585
    %v1676 = vunpack.c.l.bf16 %v1586
    %v1677 = vunpack.c.h.bf16 %v1583
    %v1678 = vunpack.c.h.bf16 %v1584
    %v1679 = vunpack.c.h.bf16 %v1585
    %v1680 = vunpack.c.h.bf16 %v1586
    %v1681 = vadd.f32 %v1673, %v1622
    %v1682 = vadd.f32 %v1674, %v1624
    %v1683 = vadd.f32 %v1675, %v1665
    %v1684 = vadd.f32 %v1676, %v1667
    %v1685 = vadd.f32 %v1677, %v1626
    %v1686 = vadd.f32 %v1678, %v1628
    %v1687 = vadd.f32 %v1679, %v1669
    %v1688 = vadd.f32 %v1680, %v1671
    %v1689 = vmul.f32 %v1681, 0.5
    %v1690 = vmul.f32 %v1682, 0.5
    %v1691 = vmul.f32 %v1683, 0.5
    %v1692 = vmul.f32 %v1685, 0.5
    %v1693 = vmul.f32 %v1686, 0.5
    %v1694 = vmul.f32 %v1687, 0.5
    %v1695 = vtanh.pop %v1689
    %v1696 = vtanh.pop %v1690
    %v1697 = vtanh.pop %v1691
    %v1698 = vtanh.pop %v1692
    %v1699 = vtanh.pop %v1693
    %v1700 = vtanh.pop %v1694
    %v1701 = vadd.f32 %v1695, 1.0
    %v1702 = vadd.f32 %v1696, 1.0
    %v1703 = vadd.f32 %v1697, 1.0
    %v1704 = vadd.f32 %v1698, 1.0
    %v1705 = vadd.f32 %v1699, 1.0
    %v1706 = vadd.f32 %v1700, 1.0
    %v1707 = vmul.f32 %v1701, 0.5
    %v1708 = vmul.f32 %v1702, 0.5
    %v1709 = vmul.f32 %v1703, 0.5
    %v1710 = vmul.f32 %v1704, 0.5
    %v1711 = vmul.f32 %v1705, 0.5
    %v1712 = vmul.f32 %v1706, 0.5
    %v1713 = vtanh.pop %v1684
    %v1714 = vtanh.pop %v1688
    %v1715 = vmul.f32 %v1708, %v1571
    %v1716 = vmul.f32 %v1711, %v1572
    %v1717 = vmul.f32 %v1707, %v1713
    %v1718 = vmul.f32 %v1710, %v1714
    %v1719 = vadd.f32 %v1715, %v1717
    %v1720 = vadd.f32 %v1716, %v1718
    %v1721 = vtanh.pop %v1719
    %v1722 = vtanh.pop %v1720
    %v1723 = vmul.f32 %v1709, %v1721
    %v1724 = vmul.f32 %v1712, %v1722
    %v1725 = vpack.c.bf16 %v1724, %v1723
    %s1726 = scalar_lea.vmem [#allocation2], 32
    %1727 = vst [vmem:[%s1726] sm:$0xff] %v1725
    %s1728 = smul.u32 5, 4
    %s1729 = smul.addr %s1728, 8
    %s1730 = scalar_lea.vmem [#allocation3], %s1729
    %v1731 = vld [vmem:[%s1730] sm:$0xff]
    %v1732 = vld [vmem:[%s1730 + $0x8] sm:$0xff]
    %v1733 = vld [vmem:[%s1730 + $0x10] sm:$0xff]
    %v1734 = vld [vmem:[%s1730 + $0x18] sm:$0xff]
    %1735 = vmatprep.subr.bf16.mxu0 %v933
    %1736 = vmatpush1.bf16.msra.mxu0 %v932
    %1737 = vmatprep.subr.bf16.mxu0 %v937
    %1738 = vmatpush1.bf16.msra.mxu0 %v936
    %1739 = vmatprep.subr.bf16.mxu0 %v941
    %1740 = vmatpush1.bf16.msra.mxu0 %v940
    %1741 = vmatprep.subr.bf16.mxu0 %v945
    %1742 = vmatpush1.bf16.msra.mxu0 %v944
    %1743 = vmatprep.subr.bf16.mxu0 %v949
    %1744 = vmatpush1.bf16.msra.mxu0 %v948
    %1745 = vmatprep.subr.bf16.mxu0 %v953
    %1746 = vmatpush1.bf16.msra.mxu0 %v952
    %1747 = vmatprep.subr.bf16.mxu0 %v957
    %1748 = vmatpush1.bf16.msra.mxu0 %v956
    %1749 = vmatprep.subr.bf16.mxu0 %v961
    %1750 = vmatpush1.bf16.msra.mxu0 %v960
    %1751 = vmatprep.subr.bf16.mxu0 0
    %1752 = vmatpush1.bf16.msra.mxu0 0
    %1753 = vmatprep.subr.bf16.mxu0 0
    %1754 = vmatpush1.bf16.msra.mxu0 0
    %1755 = vmatprep.subr.bf16.mxu0 0
    %1756 = vmatpush1.bf16.msra.mxu0 0
    %1757 = vmatprep.subr.bf16.mxu0 0
    %1758 = vmatpush1.bf16.msra.mxu0 0
    %1759 = vmatprep.subr.bf16.mxu0 0
    %1760 = vmatpush1.bf16.msra.mxu0 0
    %1761 = vmatprep.subr.bf16.mxu0 0
    %1762 = vmatpush1.bf16.msra.mxu0 0
    %1763 = vmatprep.subr.bf16.mxu0 0
    %1764 = vmatpush1.bf16.msra.mxu0 0
    %1765 = vmatprep.subr.bf16.mxu0 0
    %1766 = vmatpush1.bf16.msra.mxu0 0
    %1767 = vmatprep.mubr.bf16.mxu0 0
    %1768 = vmatmul.mubr.bf16.gmra.mrb[0].mxu0 %v1725
    %v1769 = vpop.f32.mrb[0].mxu0
    %v1770 = vadd.f32 0.0, %v1769
    %v1771 = vpop.f32.mrb[0].mxu0
    %v1772 = vadd.f32 0.0, %v1771
    %v1773 = vpop.f32.mrb[0].mxu0
    %v1774 = vadd.f32 0.0, %v1773
    %v1775 = vpop.f32.mrb[0].mxu0
    %v1776 = vadd.f32 0.0, %v1775
    %1777 = vdwg.mxu0
    %1778 = vmatprep.subr.bf16.mxu0 %v935
    %1779 = vmatpush1.bf16.msra.mxu0 %v934
    %1780 = vmatprep.subr.bf16.mxu0 %v939
    %1781 = vmatpush1.bf16.msra.mxu0 %v938
    %1782 = vmatprep.subr.bf16.mxu0 %v943
    %1783 = vmatpush1.bf16.msra.mxu0 %v942
    %1784 = vmatprep.subr.bf16.mxu0 %v947
    %1785 = vmatpush1.bf16.msra.mxu0 %v946
    %1786 = vmatprep.subr.bf16.mxu0 %v951
    %1787 = vmatpush1.bf16.msra.mxu0 %v950
    %1788 = vmatprep.subr.bf16.mxu0 %v955
    %1789 = vmatpush1.bf16.msra.mxu0 %v954
    %1790 = vmatprep.subr.bf16.mxu0 %v959
    %1791 = vmatpush1.bf16.msra.mxu0 %v958
    %1792 = vmatprep.subr.bf16.mxu0 %v963
    %1793 = vmatpush1.bf16.msra.mxu0 %v962
    %1794 = vmatprep.subr.bf16.mxu0 0
    %1795 = vmatpush1.bf16.msra.mxu0 0
    %1796 = vmatprep.subr.bf16.mxu0 0
    %1797 = vmatpush1.bf16.msra.mxu0 0
    %1798 = vmatprep.subr.bf16.mxu0 0
    %1799 = vmatpush1.bf16.msra.mxu0 0
    %1800 = vmatprep.subr.bf16.mxu0 0
    %1801 = vmatpush1.bf16.msra.mxu0 0
    %1802 = vmatprep.subr.bf16.mxu0 0
    %1803 = vmatpush1.bf16.msra.mxu0 0
    %1804 = vmatprep.subr.bf16.mxu0 0
    %1805 = vmatpush1.bf16.msra.mxu0 0
    %1806 = vmatprep.subr.bf16.mxu0 0
    %1807 = vmatpush1.bf16.msra.mxu0 0
    %1808 = vmatprep.subr.bf16.mxu0 0
    %1809 = vmatpush1.bf16.msra.mxu0 0
    %1810 = vmatprep.mubr.bf16.mxu0 0
    %1811 = vmatmul.mubr.bf16.gmra.mrb[0].mxu0 %v1725
    %v1812 = vpop.f32.mrb[0].mxu0
    %v1813 = vadd.f32 0.0, %v1812
    %v1814 = vpop.f32.mrb[0].mxu0
    %v1815 = vadd.f32 0.0, %v1814
    %v1816 = vpop.f32.mrb[0].mxu0
    %v1817 = vadd.f32 0.0, %v1816
    %v1818 = vpop.f32.mrb[0].mxu0
    %v1819 = vadd.f32 0.0, %v1818
    %1820 = vdwg.mxu0
    %v1821 = vunpack.c.l.bf16 %v1731
    %v1822 = vunpack.c.l.bf16 %v1732
    %v1823 = vunpack.c.l.bf16 %v1733
    %v1824 = vunpack.c.l.bf16 %v1734
    %v1825 = vunpack.c.h.bf16 %v1731
    %v1826 = vunpack.c.h.bf16 %v1732
    %v1827 = vunpack.c.h.bf16 %v1733
    %v1828 = vunpack.c.h.bf16 %v1734
    %v1829 = vadd.f32 %v1821, %v1770
    %v1830 = vadd.f32 %v1822, %v1772
    %v1831 = vadd.f32 %v1823, %v1813
    %v1832 = vadd.f32 %v1824, %v1815
    %v1833 = vadd.f32 %v1825, %v1774
    %v1834 = vadd.f32 %v1826, %v1776
    %v1835 = vadd.f32 %v1827, %v1817
    %v1836 = vadd.f32 %v1828, %v1819
    %v1837 = vmul.f32 %v1829, 0.5
    %v1838 = vmul.f32 %v1830, 0.5
    %v1839 = vmul.f32 %v1831, 0.5
    %v1840 = vmul.f32 %v1833, 0.5
    %v1841 = vmul.f32 %v1834, 0.5
    %v1842 = vmul.f32 %v1835, 0.5
    %v1843 = vtanh.pop %v1837
    %v1844 = vtanh.pop %v1838
    %v1845 = vtanh.pop %v1839
    %v1846 = vtanh.pop %v1840
    %v1847 = vtanh.pop %v1841
    %v1848 = vtanh.pop %v1842
    %v1849 = vadd.f32 %v1843, 1.0
    %v1850 = vadd.f32 %v1844, 1.0
    %v1851 = vadd.f32 %v1845, 1.0
    %v1852 = vadd.f32 %v1846, 1.0
    %v1853 = vadd.f32 %v1847, 1.0
    %v1854 = vadd.f32 %v1848, 1.0
    %v1855 = vmul.f32 %v1849, 0.5
    %v1856 = vmul.f32 %v1850, 0.5
    %v1857 = vmul.f32 %v1851, 0.5
    %v1858 = vmul.f32 %v1852, 0.5
    %v1859 = vmul.f32 %v1853, 0.5
    %v1860 = vmul.f32 %v1854, 0.5
    %v1861 = vtanh.pop %v1832
    %v1862 = vtanh.pop %v1836
    %v1863 = vmul.f32 %v1856, %v1719
    %v1864 = vmul.f32 %v1859, %v1720
    %v1865 = vmul.f32 %v1855, %v1861
    %v1866 = vmul.f32 %v1858, %v1862
    %v1867 = vadd.f32 %v1863, %v1865
    %v1868 = vadd.f32 %v1864, %v1866
    %v1869 = vtanh.pop %v1867
    %v1870 = vtanh.pop %v1868
    %v1871 = vmul.f32 %v1857, %v1869
    %v1872 = vmul.f32 %v1860, %v1870
    %v1873 = vpack.c.bf16 %v1872, %v1871
    %s1874 = scalar_lea.vmem [#allocation2], 40
    %1875 = vst [vmem:[%s1874] sm:$0xff] %v1873
    %s1876 = smul.u32 6, 4
    %s1877 = smul.addr %s1876, 8
    %s1878 = scalar_lea.vmem [#allocation3], %s1877
    %v1879 = vld [vmem:[%s1878] sm:$0xff]
    %v1880 = vld [vmem:[%s1878 + $0x8] sm:$0xff]
    %v1881 = vld [vmem:[%s1878 + $0x10] sm:$0xff]
    %v1882 = vld [vmem:[%s1878 + $0x18] sm:$0xff]
    %1883 = vmatprep.subr.bf16.mxu0 %v933
    %1884 = vmatpush1.bf16.msra.mxu0 %v932
    %1885 = vmatprep.subr.bf16.mxu0 %v937
    %1886 = vmatpush1.bf16.msra.mxu0 %v936
    %1887 = vmatprep.subr.bf16.mxu0 %v941
    %1888 = vmatpush1.bf16.msra.mxu0 %v940
    %1889 = vmatprep.subr.bf16.mxu0 %v945
    %1890 = vmatpush1.bf16.msra.mxu0 %v944
    %1891 = vmatprep.subr.bf16.mxu0 %v949
    %1892 = vmatpush1.bf16.msra.mxu0 %v948
    %1893 = vmatprep.subr.bf16.mxu0 %v953
    %1894 = vmatpush1.bf16.msra.mxu0 %v952
    %1895 = vmatprep.subr.bf16.mxu0 %v957
    %1896 = vmatpush1.bf16.msra.mxu0 %v956
    %1897 = vmatprep.subr.bf16.mxu0 %v961
    %1898 = vmatpush1.bf16.msra.mxu0 %v960
    %1899 = vmatprep.subr.bf16.mxu0 0
    %1900 = vmatpush1.bf16.msra.mxu0 0
    %1901 = vmatprep.subr.bf16.mxu0 0
    %1902 = vmatpush1.bf16.msra.mxu0 0
    %1903 = vmatprep.subr.bf16.mxu0 0
    %1904 = vmatpush1.bf16.msra.mxu0 0
    %1905 = vmatprep.subr.bf16.mxu0 0
    %1906 = vmatpush1.bf16.msra.mxu0 0
    %1907 = vmatprep.subr.bf16.mxu0 0
    %1908 = vmatpush1.bf16.msra.mxu0 0
    %1909 = vmatprep.subr.bf16.mxu0 0
    %1910 = vmatpush1.bf16.msra.mxu0 0
    %1911 = vmatprep.subr.bf16.mxu0 0
    %1912 = vmatpush1.bf16.msra.mxu0 0
    %1913 = vmatprep.subr.bf16.mxu0 0
    %1914 = vmatpush1.bf16.msra.mxu0 0
    %1915 = vmatprep.mubr.bf16.mxu0 0
    %1916 = vmatmul.mubr.bf16.gmra.mrb[0].mxu0 %v1873
    %v1917 = vpop.f32.mrb[0].mxu0
    %v1918 = vadd.f32 0.0, %v1917
    %v1919 = vpop.f32.mrb[0].mxu0
    %v1920 = vadd.f32 0.0, %v1919
    %v1921 = vpop.f32.mrb[0].mxu0
    %v1922 = vadd.f32 0.0, %v1921
    %v1923 = vpop.f32.mrb[0].mxu0
    %v1924 = vadd.f32 0.0, %v1923
    %1925 = vdwg.mxu0
    %1926 = vmatprep.subr.bf16.mxu0 %v935
    %1927 = vmatpush1.bf16.msra.mxu0 %v934
    %1928 = vmatprep.subr.bf16.mxu0 %v939
    %1929 = vmatpush1.bf16.msra.mxu0 %v938
    %1930 = vmatprep.subr.bf16.mxu0 %v943
    %1931 = vmatpush1.bf16.msra.mxu0 %v942
    %1932 = vmatprep.subr.bf16.mxu0 %v947
    %1933 = vmatpush1.bf16.msra.mxu0 %v946
    %1934 = vmatprep.subr.bf16.mxu0 %v951
    %1935 = vmatpush1.bf16.msra.mxu0 %v950
    %1936 = vmatprep.subr.bf16.mxu0 %v955
    %1937 = vmatpush1.bf16.msra.mxu0 %v954
    %1938 = vmatprep.subr.bf16.mxu0 %v959
    %1939 = vmatpush1.bf16.msra.mxu0 %v958
    %1940 = vmatprep.subr.bf16.mxu0 %v963
    %1941 = vmatpush1.bf16.msra.mxu0 %v962
    %1942 = vmatprep.subr.bf16.mxu0 0
    %1943 = vmatpush1.bf16.msra.mxu0 0
    %1944 = vmatprep.subr.bf16.mxu0 0
    %1945 = vmatpush1.bf16.msra.mxu0 0
    %1946 = vmatprep.subr.bf16.mxu0 0
    %1947 = vmatpush1.bf16.msra.mxu0 0
    %1948 = vmatprep.subr.bf16.mxu0 0
    %1949 = vmatpush1.bf16.msra.mxu0 0
    %1950 = vmatprep.subr.bf16.mxu0 0
    %1951 = vmatpush1.bf16.msra.mxu0 0
    %1952 = vmatprep.subr.bf16.mxu0 0
    %1953 = vmatpush1.bf16.msra.mxu0 0
    %1954 = vmatprep.subr.bf16.mxu0 0
    %1955 = vmatpush1.bf16.msra.mxu0 0
    %1956 = vmatprep.subr.bf16.mxu0 0
    %1957 = vmatpush1.bf16.msra.mxu0 0
    %1958 = vmatprep.mubr.bf16.mxu0 0
    %1959 = vmatmul.mubr.bf16.gmra.mrb[0].mxu0 %v1873
    %v1960 = vpop.f32.mrb[0].mxu0
    %v1961 = vadd.f32 0.0, %v1960
    %v1962 = vpop.f32.mrb[0].mxu0
    %v1963 = vadd.f32 0.0, %v1962
    %v1964 = vpop.f32.mrb[0].mxu0
    %v1965 = vadd.f32 0.0, %v1964
    %v1966 = vpop.f32.mrb[0].mxu0
    %v1967 = vadd.f32 0.0, %v1966
    %1968 = vdwg.mxu0
    %v1969 = vunpack.c.l.bf16 %v1879
    %v1970 = vunpack.c.l.bf16 %v1880
    %v1971 = vunpack.c.l.bf16 %v1881
    %v1972 = vunpack.c.l.bf16 %v1882
    %v1973 = vunpack.c.h.bf16 %v1879
    %v1974 = vunpack.c.h.bf16 %v1880
    %v1975 = vunpack.c.h.bf16 %v1881
    %v1976 = vunpack.c.h.bf16 %v1882
    %v1977 = vadd.f32 %v1969, %v1918
    %v1978 = vadd.f32 %v1970, %v1920
    %v1979 = vadd.f32 %v1971, %v1961
    %v1980 = vadd.f32 %v1972, %v1963
    %v1981 = vadd.f32 %v1973, %v1922
    %v1982 = vadd.f32 %v1974, %v1924
    %v1983 = vadd.f32 %v1975, %v1965
    %v1984 = vadd.f32 %v1976, %v1967
    %v1985 = vmul.f32 %v1977, 0.5
    %v1986 = vmul.f32 %v1978, 0.5
    %v1987 = vmul.f32 %v1979, 0.5
    %v1988 = vmul.f32 %v1981, 0.5
    %v1989 = vmul.f32 %v1982, 0.5
    %v1990 = vmul.f32 %v1983, 0.5
    %v1991 = vtanh.pop %v1985
    %v1992 = vtanh.pop %v1986
    %v1993 = vtanh.pop %v1987
    %v1994 = vtanh.pop %v1988
    %v1995 = vtanh.pop %v1989
    %v1996 = vtanh.pop %v1990
    %v1997 = vadd.f32 %v1991, 1.0
    %v1998 = vadd.f32 %v1992, 1.0
    %v1999 = vadd.f32 %v1993, 1.0
    %v2000 = vadd.f32 %v1994, 1.0
    %v2001 = vadd.f32 %v1995, 1.0
    %v2002 = vadd.f32 %v1996, 1.0
    %v2003 = vmul.f32 %v1997, 0.5
    %v2004 = vmul.f32 %v1998, 0.5
    %v2005 = vmul.f32 %v1999, 0.5
    %v2006 = vmul.f32 %v2000, 0.5
    %v2007 = vmul.f32 %v2001, 0.5
    %v2008 = vmul.f32 %v2002, 0.5
    %v2009 = vtanh.pop %v1980
    %v2010 = vtanh.pop %v1984
    %v2011 = vmul.f32 %v2004, %v1867
    %v2012 = vmul.f32 %v2007, %v1868
    %v2013 = vmul.f32 %v2003, %v2009
    %v2014 = vmul.f32 %v2006, %v2010
    %v2015 = vadd.f32 %v2011, %v2013
    %v2016 = vadd.f32 %v2012, %v2014
    %v2017 = vtanh.pop %v2015
    %v2018 = vtanh.pop %v2016
    %v2019 = vmul.f32 %v2005, %v2017
    %v2020 = vmul.f32 %v2008, %v2018
    %v2021 = vpack.c.bf16 %v2020, %v2019
    %s2022 = scalar_lea.vmem [#allocation2], 48
    %2023 = vst [vmem:[%s2022] sm:$0xff] %v2021
    %s2024 = smul.u32 7, 4
    %s2025 = smul.addr %s2024, 8
    %s2026 = scalar_lea.vmem [#allocation3], %s2025
    %v2027 = vld [vmem:[%s2026] sm:$0xff]
    %v2028 = vld [vmem:[%s2026 + $0x8] sm:$0xff]
    %v2029 = vld [vmem:[%s2026 + $0x10] sm:$0xff]
    %v2030 = vld [vmem:[%s2026 + $0x18] sm:$0xff]
    %2031 = vmatprep.subr.bf16.mxu0 %v933
    %2032 = vmatpush1.bf16.msra.mxu0 %v932
    %2033 = vmatprep.subr.bf16.mxu0 %v937
    %2034 = vmatpush1.bf16.msra.mxu0 %v936
    %2035 = vmatprep.subr.bf16.mxu0 %v941
    %2036 = vmatpush1.bf16.msra.mxu0 %v940
    %2037 = vmatprep.subr.bf16.mxu0 %v945
    %2038 = vmatpush1.bf16.msra.mxu0 %v944
    %2039 = vmatprep.subr.bf16.mxu0 %v949
    %2040 = vmatpush1.bf16.msra.mxu0 %v948
    %2041 = vmatprep.subr.bf16.mxu0 %v953
    %2042 = vmatpush1.bf16.msra.mxu0 %v952
    %2043 = vmatprep.subr.bf16.mxu0 %v957
    %2044 = vmatpush1.bf16.msra.mxu0 %v956
    %2045 = vmatprep.subr.bf16.mxu0 %v961
    %2046 = vmatpush1.bf16.msra.mxu0 %v960
    %2047 = vmatprep.subr.bf16.mxu0 0
    %2048 = vmatpush1.bf16.msra.mxu0 0
    %2049 = vmatprep.subr.bf16.mxu0 0
    %2050 = vmatpush1.bf16.msra.mxu0 0
    %2051 = vmatprep.subr.bf16.mxu0 0
    %2052 = vmatpush1.bf16.msra.mxu0 0
    %2053 = vmatprep.subr.bf16.mxu0 0
    %2054 = vmatpush1.bf16.msra.mxu0 0
    %2055 = vmatprep.subr.bf16.mxu0 0
    %2056 = vmatpush1.bf16.msra.mxu0 0
    %2057 = vmatprep.subr.bf16.mxu0 0
    %2058 = vmatpush1.bf16.msra.mxu0 0
    %2059 = vmatprep.subr.bf16.mxu0 0
    %2060 = vmatpush1.bf16.msra.mxu0 0
    %2061 = vmatprep.subr.bf16.mxu0 0
    %2062 = vmatpush1.bf16.msra.mxu0 0
    %2063 = vmatprep.mubr.bf16.mxu0 0
    %2064 = vmatmul.mubr.bf16.gmra.mrb[0].mxu0 %v2021
    %v2065 = vpop.f32.mrb[0].mxu0
    %v2066 = vadd.f32 0.0, %v2065
    %v2067 = vpop.f32.mrb[0].mxu0
    %v2068 = vadd.f32 0.0, %v2067
    %v2069 = vpop.f32.mrb[0].mxu0
    %v2070 = vadd.f32 0.0, %v2069
    %v2071 = vpop.f32.mrb[0].mxu0
    %v2072 = vadd.f32 0.0, %v2071
    %2073 = vdwg.mxu0
    %2074 = vmatprep.subr.bf16.mxu0 %v935
    %2075 = vmatpush1.bf16.msra.mxu0 %v934
    %2076 = vmatprep.subr.bf16.mxu0 %v939
    %2077 = vmatpush1.bf16.msra.mxu0 %v938
    %2078 = vmatprep.subr.bf16.mxu0 %v943
    %2079 = vmatpush1.bf16.msra.mxu0 %v942
    %2080 = vmatprep.subr.bf16.mxu0 %v947
    %2081 = vmatpush1.bf16.msra.mxu0 %v946
    %2082 = vmatprep.subr.bf16.mxu0 %v951
    %2083 = vmatpush1.bf16.msra.mxu0 %v950
    %2084 = vmatprep.subr.bf16.mxu0 %v955
    %2085 = vmatpush1.bf16.msra.mxu0 %v954
    %2086 = vmatprep.subr.bf16.mxu0 %v959
    %2087 = vmatpush1.bf16.msra.mxu0 %v958
    %2088 = vmatprep.subr.bf16.mxu0 %v963
    %2089 = vmatpush1.bf16.msra.mxu0 %v962
    %2090 = vmatprep.subr.bf16.mxu0 0
    %2091 = vmatpush1.bf16.msra.mxu0 0
    %2092 = vmatprep.subr.bf16.mxu0 0
    %2093 = vmatpush1.bf16.msra.mxu0 0
    %2094 = vmatprep.subr.bf16.mxu0 0
    %2095 = vmatpush1.bf16.msra.mxu0 0
    %2096 = vmatprep.subr.bf16.mxu0 0
    %2097 = vmatpush1.bf16.msra.mxu0 0
    %2098 = vmatprep.subr.bf16.mxu0 0
    %2099 = vmatpush1.bf16.msra.mxu0 0
    %2100 = vmatprep.subr.bf16.mxu0 0
    %2101 = vmatpush1.bf16.msra.mxu0 0
    %2102 = vmatprep.subr.bf16.mxu0 0
    %2103 = vmatpush1.bf16.msra.mxu0 0
    %2104 = vmatprep.subr.bf16.mxu0 0
    %2105 = vmatpush1.bf16.msra.mxu0 0
    %2106 = vmatprep.mubr.bf16.mxu0 0
    %2107 = vmatmul.mubr.bf16.gmra.mrb[0].mxu0 %v2021
    %v2108 = vpop.f32.mrb[0].mxu0
    %v2109 = vadd.f32 0.0, %v2108
    %v2110 = vpop.f32.mrb[0].mxu0
    %v2111 = vadd.f32 0.0, %v2110
    %v2112 = vpop.f32.mrb[0].mxu0
    %v2113 = vadd.f32 0.0, %v2112
    %v2114 = vpop.f32.mrb[0].mxu0
    %v2115 = vadd.f32 0.0, %v2114
    %2116 = vdwg.mxu0
    %v2117 = vunpack.c.l.bf16 %v2027
    %v2118 = vunpack.c.l.bf16 %v2028
    %v2119 = vunpack.c.l.bf16 %v2029
    %v2120 = vunpack.c.l.bf16 %v2030
    %v2121 = vunpack.c.h.bf16 %v2027
    %v2122 = vunpack.c.h.bf16 %v2028
    %v2123 = vunpack.c.h.bf16 %v2029
    %v2124 = vunpack.c.h.bf16 %v2030
    %v2125 = vadd.f32 %v2117, %v2066
    %v2126 = vadd.f32 %v2118, %v2068
    %v2127 = vadd.f32 %v2119, %v2109
    %v2128 = vadd.f32 %v2120, %v2111
    %v2129 = vadd.f32 %v2121, %v2070
    %v2130 = vadd.f32 %v2122, %v2072
    %v2131 = vadd.f32 %v2123, %v2113
    %v2132 = vadd.f32 %v2124, %v2115
    %v2133 = vmul.f32 %v2125, 0.5
    %v2134 = vmul.f32 %v2126, 0.5
    %v2135 = vmul.f32 %v2127, 0.5
    %v2136 = vmul.f32 %v2129, 0.5
    %v2137 = vmul.f32 %v2130, 0.5
    %v2138 = vmul.f32 %v2131, 0.5
    %v2139 = vtanh.pop %v2133
    %v2140 = vtanh.pop %v2134
    %v2141 = vtanh.pop %v2135
    %v2142 = vtanh.pop %v2136
    %v2143 = vtanh.pop %v2137
    %v2144 = vtanh.pop %v2138
    %v2145 = vadd.f32 %v2139, 1.0
    %v2146 = vadd.f32 %v2140, 1.0
    %v2147 = vadd.f32 %v2141, 1.0
    %v2148 = vadd.f32 %v2142, 1.0
    %v2149 = vadd.f32 %v2143, 1.0
    %v2150 = vadd.f32 %v2144, 1.0
    %v2151 = vmul.f32 %v2145, 0.5
    %v2152 = vmul.f32 %v2146, 0.5
    %v2153 = vmul.f32 %v2147, 0.5
    %v2154 = vmul.f32 %v2148, 0.5
    %v2155 = vmul.f32 %v2149, 0.5
    %v2156 = vmul.f32 %v2150, 0.5
    %v2157 = vtanh.pop %v2128
    %v2158 = vtanh.pop %v2132
    %v2159 = vmul.f32 %v2152, %v2015
    %v2160 = vmul.f32 %v2155, %v2016
    %v2161 = vmul.f32 %v2151, %v2157
    %v2162 = vmul.f32 %v2154, %v2158
    %v2163 = vadd.f32 %v2159, %v2161
    %v2164 = vadd.f32 %v2160, %v2162
    %v2165 = vtanh.pop %v2163
    %v2166 = vtanh.pop %v2164
    %v2167 = vmul.f32 %v2153, %v2165
    %v2168 = vmul.f32 %v2156, %v2166
    %v2169 = vpack.c.bf16 %v2168, %v2167
    %s2170 = scalar_lea.vmem [#allocation2], 56
    %2171 = vst [vmem:[%s2170] sm:$0xff] %v2169
    %v2172 = vld [vmem:[#allocation2] sm:$0xff]
    %v2173 = vld [vmem:[#allocation2 + $0x8] sm:$0xff]
    %v2174 = vld [vmem:[#allocation2 + $0x10] sm:$0xff]
    %v2175 = vld [vmem:[#allocation2 + $0x18] sm:$0xff]
    %v2176 = vld [vmem:[#allocation2 + $0x20] sm:$0xff]
    %v2177 = vld [vmem:[#allocation2 + $0x28] sm:$0xff]
    %v2178 = vld [vmem:[#allocation2 + $0x30] sm:$0xff]
    %v2179 = vld [vmem:[#allocation2 + $0x38] sm:$0xff]
    %v2180 = vld [vmem:[#allocation12] sm:$0xff]
    %v2181 = vld [vmem:[#allocation12 + $0x8] sm:$0xff]
    %v2182 = vld [vmem:[#allocation12 + $0x10] sm:$0xff]
    %v2183 = vld [vmem:[#allocation12 + $0x18] sm:$0xff]
    %v2184 = vld [vmem:[#allocation12 + $0x20] sm:$0xff]
    %v2185 = vld [vmem:[#allocation12 + $0x28] sm:$0xff]
    %v2186 = vld [vmem:[#allocation12 + $0x30] sm:$0xff]
    %v2187 = vld [vmem:[#allocation12 + $0x38] sm:$0xff]
    %v2188 = vld [vmem:[#allocation12 + $0x40] sm:$0xff]
    %v2189 = vld [vmem:[#allocation12 + $0x48] sm:$0xff]
    %v2190 = vld [vmem:[#allocation12 + $0x50] sm:$0xff]
    %v2191 = vld [vmem:[#allocation12 + $0x58] sm:$0xff]
    %v2192 = vld [vmem:[#allocation12 + $0x60] sm:$0xff]
    %v2193 = vld [vmem:[#allocation12 + $0x68] sm:$0xff]
    %v2194 = vld [vmem:[#allocation12 + $0x70] sm:$0xff]
    %v2195 = vld [vmem:[#allocation12 + $0x78] sm:$0xff]
    %v2196 = vld [vmem:[#allocation12 + $0x80] sm:$0xff]
    %v2197 = vld [vmem:[#allocation12 + $0x88] sm:$0xff]
    %v2198 = vld [vmem:[#allocation12 + $0x90] sm:$0xff]
    %v2199 = vld [vmem:[#allocation12 + $0x98] sm:$0xff]
    %v2200 = vld [vmem:[#allocation12 + $0xa0] sm:$0xff]
    %v2201 = vld [vmem:[#allocation12 + $0xa8] sm:$0xff]
    %v2202 = vld [vmem:[#allocation12 + $0xb0] sm:$0xff]
    %v2203 = vld [vmem:[#allocation12 + $0xb8] sm:$0xff]
    %v2204 = vld [vmem:[#allocation12 + $0xc0] sm:$0xff]
    %v2205 = vld [vmem:[#allocation12 + $0xc8] sm:$0xff]
    %v2206 = vld [vmem:[#allocation12 + $0xd0] sm:$0xff]
    %v2207 = vld [vmem:[#allocation12 + $0xd8] sm:$0xff]
    %v2208 = vld [vmem:[#allocation12 + $0xe0] sm:$0xff]
    %v2209 = vld [vmem:[#allocation12 + $0xe8] sm:$0xff]
    %v2210 = vld [vmem:[#allocation12 + $0xf0] sm:$0xff]
    %v2211 = vld [vmem:[#allocation12 + $0xf8] sm:$0xff]
    %v2212 = vld [vmem:[#allocation15] sm:$0xf]
    %v2214 = vlaneseq
    %v2215 = vshrl.u32 %v2214, 7
    %v2216 = vsub.s32 0, %v2215
    %v2217 = vrot.slane %v2212, %v2216
    %v2218 = vlaneseq
    %v2219 = vshrl.u32 %v2218, 7
    %v2220 = vsub.s32 1, %v2219
    %v2221 = vrot.slane %v2212, %v2220
    %v2222 = vlaneseq
    %v2223 = vshrl.u32 %v2222, 7
    %v2224 = vsub.s32 2, %v2223
    %v2225 = vrot.slane %v2212, %v2224
    %v2226 = vlaneseq
    %v2227 = vshrl.u32 %v2226, 7
    %v2228 = vsub.s32 3, %v2227
    %v2229 = vrot.slane %v2212, %v2228
    %v2266 = vunpack.c.l.b16 %v2180
    %v2267 = vunpack.c.h.b16 %v2180
    %v2268 = vunpack.c.l.b16 %v2181
    %v2269 = vunpack.c.h.b16 %v2181
    %v2270 = vunpack.c.l.b16 %v2182
    %v2271 = vunpack.c.h.b16 %v2182
    %v2272 = vunpack.c.l.b16 %v2183
    %v2273 = vunpack.c.h.b16 %v2183
    %v2274 = vunpack.c.l.b16 %v2184
    %v2275 = vunpack.c.h.b16 %v2184
    %v2276 = vunpack.c.l.b16 %v2185
    %v2277 = vunpack.c.h.b16 %v2185
    %v2278 = vunpack.c.l.b16 %v2186
    %v2279 = vunpack.c.h.b16 %v2186
    %v2280 = vunpack.c.l.b16 %v2187
    %v2281 = vunpack.c.h.b16 %v2187
    %v2282 = vunpack.c.l.b16 %v2188
    %v2283 = vunpack.c.h.b16 %v2188
    %v2284 = vunpack.c.l.b16 %v2189
    %v2285 = vunpack.c.h.b16 %v2189
    %v2286 = vunpack.c.l.b16 %v2190
    %v2287 = vunpack.c.h.b16 %v2190
    %v2288 = vunpack.c.l.b16 %v2191
    %v2289 = vunpack.c.h.b16 %v2191
    %v2290 = vunpack.c.l.b16 %v2192
    %v2291 = vunpack.c.h.b16 %v2192
    %v2292 = vunpack.c.l.b16 %v2193
    %v2293 = vunpack.c.h.b16 %v2193
    %v2294 = vunpack.c.l.b16 %v2194
    %v2295 = vunpack.c.h.b16 %v2194
    %v2296 = vunpack.c.l.b16 %v2195
    %v2297 = vunpack.c.h.b16 %v2195
    %v2298 = vunpack.c.l.b16 %v2196
    %v2299 = vunpack.c.h.b16 %v2196
    %v2300 = vunpack.c.l.b16 %v2197
    %v2301 = vunpack.c.h.b16 %v2197
    %v2302 = vunpack.c.l.b16 %v2198
    %v2303 = vunpack.c.h.b16 %v2198
    %v2304 = vunpack.c.l.b16 %v2199
    %v2305 = vunpack.c.h.b16 %v2199
    %v2306 = vunpack.c.l.b16 %v2200
    %v2307 = vunpack.c.h.b16 %v2200
    %v2308 = vunpack.c.l.b16 %v2201
    %v2309 = vunpack.c.h.b16 %v2201
    %v2310 = vunpack.c.l.b16 %v2202
    %v2311 = vunpack.c.h.b16 %v2202
    %v2312 = vunpack.c.l.b16 %v2203
    %v2313 = vunpack.c.h.b16 %v2203
    %v2314 = vunpack.c.l.b16 %v2204
    %v2315 = vunpack.c.h.b16 %v2204
    %v2316 = vunpack.c.l.b16 %v2205
    %v2317 = vunpack.c.h.b16 %v2205
    %v2318 = vunpack.c.l.b16 %v2206
    %v2319 = vunpack.c.h.b16 %v2206
    %v2320 = vunpack.c.l.b16 %v2207
    %v2321 = vunpack.c.h.b16 %v2207
    %v2322 = vunpack.c.l.b16 %v2208
    %v2323 = vunpack.c.h.b16 %v2208
    %v2324 = vunpack.c.l.b16 %v2209
    %v2325 = vunpack.c.h.b16 %v2209
    %v2326 = vunpack.c.l.b16 %v2210
    %v2327 = vunpack.c.h.b16 %v2210
    %v2328 = vunpack.c.l.b16 %v2211
    %v2329 = vunpack.c.h.b16 %v2211
    %v2330 = vpack.c.b16 %v2270, %v2266
    %v2331 = vpack.c.b16 %v2271, %v2267
    %v2332 = vpack.c.b16 %v2272, %v2268
    %v2333 = vpack.c.b16 %v2273, %v2269
    %v2334 = vpack.c.b16 %v2278, %v2274
    %v2335 = vpack.c.b16 %v2279, %v2275
    %v2336 = vpack.c.b16 %v2280, %v2276
    %v2337 = vpack.c.b16 %v2281, %v2277
    %v2338 = vpack.c.b16 %v2286, %v2282
    %v2339 = vpack.c.b16 %v2287, %v2283
    %v2340 = vpack.c.b16 %v2288, %v2284
    %v2341 = vpack.c.b16 %v2289, %v2285
    %v2342 = vpack.c.b16 %v2294, %v2290
    %v2343 = vpack.c.b16 %v2295, %v2291
    %v2344 = vpack.c.b16 %v2296, %v2292
    %v2345 = vpack.c.b16 %v2297, %v2293
    %v2346 = vpack.c.b16 %v2302, %v2298
    %v2347 = vpack.c.b16 %v2303, %v2299
    %v2348 = vpack.c.b16 %v2304, %v2300
    %v2349 = vpack.c.b16 %v2305, %v2301
    %v2350 = vpack.c.b16 %v2310, %v2306
    %v2351 = vpack.c.b16 %v2311, %v2307
    %v2352 = vpack.c.b16 %v2312, %v2308
    %v2353 = vpack.c.b16 %v2313, %v2309
    %v2354 = vpack.c.b16 %v2318, %v2314
    %v2355 = vpack.c.b16 %v2319, %v2315
    %v2356 = vpack.c.b16 %v2320, %v2316
    %v2357 = vpack.c.b16 %v2321, %v2317
    %v2358 = vpack.c.b16 %v2326, %v2322
    %v2359 = vpack.c.b16 %v2327, %v2323
    %v2360 = vpack.c.b16 %v2328, %v2324
    %v2361 = vpack.c.b16 %v2329, %v2325
    %2394 = vmatprep.subr.bf16.mxu0 %v2331
    %2395 = vmatpush1.bf16.msra.mxu0 %v2330
    %2396 = vmatprep.subr.bf16.mxu0 %v2335
    %2397 = vmatpush1.bf16.msra.mxu0 %v2334
    %2398 = vmatprep.subr.bf16.mxu0 %v2339
    %2399 = vmatpush1.bf16.msra.mxu0 %v2338
    %2400 = vmatprep.subr.bf16.mxu0 %v2343
    %2401 = vmatpush1.bf16.msra.mxu0 %v2342
    %2402 = vmatprep.subr.bf16.mxu0 %v2347
    %2403 = vmatpush1.bf16.msra.mxu0 %v2346
    %2404 = vmatprep.subr.bf16.mxu0 %v2351
    %2405 = vmatpush1.bf16.msra.mxu0 %v2350
    %2406 = vmatprep.subr.bf16.mxu0 %v2355
    %2407 = vmatpush1.bf16.msra.mxu0 %v2354
    %2408 = vmatprep.subr.bf16.mxu0 %v2359
    %2409 = vmatpush1.bf16.msra.mxu0 %v2358
    %2410 = vmatprep.subr.bf16.mxu0 0
    %2411 = vmatpush1.bf16.msra.mxu0 0
    %2412 = vmatprep.subr.bf16.mxu0 0
    %2413 = vmatpush1.bf16.msra.mxu0 0
    %2414 = vmatprep.subr.bf16.mxu0 0
    %2415 = vmatpush1.bf16.msra.mxu0 0
    %2416 = vmatprep.subr.bf16.mxu0 0
    %2417 = vmatpush1.bf16.msra.mxu0 0
    %2418 = vmatprep.subr.bf16.mxu0 0
    %2419 = vmatpush1.bf16.msra.mxu0 0
    %2420 = vmatprep.subr.bf16.mxu0 0
    %2421 = vmatpush1.bf16.msra.mxu0 0
    %2422 = vmatprep.subr.bf16.mxu0 0
    %2423 = vmatpush1.bf16.msra.mxu0 0
    %2424 = vmatprep.subr.bf16.mxu0 0
    %2425 = vmatpush1.bf16.msra.mxu0 0
    %2426 = vmatprep.mubr.bf16.mxu0 0
    %2427 = vmatmul.mubr.bf16.gmra.mrb[0].mxu0 %v2172
    %v2428 = vpop.f32.mrb[0].mxu0
    %v2429 = vadd.f32 %v2217, %v2428
    %v2430 = vpop.f32.mrb[0].mxu0
    %v2431 = vadd.f32 %v2221, %v2430
    %v2432 = vpop.f32.mrb[0].mxu0
    %v2433 = vadd.f32 %v2217, %v2432
    %v2434 = vpop.f32.mrb[0].mxu0
    %v2435 = vadd.f32 %v2221, %v2434
    %2436 = vmatprep.mubr.bf16.mxu0 0
    %2437 = vmatmul.mubr.bf16.gmra.mrb[0].mxu0 %v2173
    %v2438 = vpop.f32.mrb[0].mxu0
    %v2439 = vadd.f32 %v2217, %v2438
    %v2440 = vpop.f32.mrb[0].mxu0
    %v2441 = vadd.f32 %v2221, %v2440
    %v2442 = vpop.f32.mrb[0].mxu0
    %v2443 = vadd.f32 %v2217, %v2442
    %v2444 = vpop.f32.mrb[0].mxu0
    %v2445 = vadd.f32 %v2221, %v2444
    %2446 = vmatprep.mubr.bf16.mxu0 0
    %2447 = vmatmul.mubr.bf16.gmra.mrb[0].mxu0 %v2174
    %v2448 = vpop.f32.mrb[0].mxu0
    %v2449 = vadd.f32 %v2217, %v2448
    %v2450 = vpop.f32.mrb[0].mxu0
    %v2451 = vadd.f32 %v2221, %v2450
    %v2452 = vpop.f32.mrb[0].mxu0
    %v2453 = vadd.f32 %v2217, %v2452
    %v2454 = vpop.f32.mrb[0].mxu0
    %v2455 = vadd.f32 %v2221, %v2454
    %2456 = vmatprep.mubr.bf16.mxu0 0
    %2457 = vmatmul.mubr.bf16.gmra.mrb[0].mxu0 %v2175
    %v2458 = vpop.f32.mrb[0].mxu0
    %v2459 = vadd.f32 %v2217, %v2458
    %v2460 = vpop.f32.mrb[0].mxu0
    %v2461 = vadd.f32 %v2221, %v2460
    %v2462 = vpop.f32.mrb[0].mxu0
    %v2463 = vadd.f32 %v2217, %v2462
    %v2464 = vpop.f32.mrb[0].mxu0
    %v2465 = vadd.f32 %v2221, %v2464
    %2466 = vmatprep.mubr.bf16.mxu0 0
    %2467 = vmatmul.mubr.bf16.gmra.mrb[0].mxu0 %v2176
    %v2468 = vpop.f32.mrb[0].mxu0
    %v2469 = vadd.f32 %v2217, %v2468
    %v2470 = vpop.f32.mrb[0].mxu0
    %v2471 = vadd.f32 %v2221, %v2470
    %v2472 = vpop.f32.mrb[0].mxu0
    %v2473 = vadd.f32 %v2217, %v2472
    %v2474 = vpop.f32.mrb[0].mxu0
    %v2475 = vadd.f32 %v2221, %v2474
    %2476 = vmatprep.mubr.bf16.mxu0 0
    %2477 = vmatmul.mubr.bf16.gmra.mrb[0].mxu0 %v2177
    %v2478 = vpop.f32.mrb[0].mxu0
    %v2479 = vadd.f32 %v2217, %v2478
    %v2480 = vpop.f32.mrb[0].mxu0
    %v2481 = vadd.f32 %v2221, %v2480
    %v2482 = vpop.f32.mrb[0].mxu0
    %v2483 = vadd.f32 %v2217, %v2482
    %v2484 = vpop.f32.mrb[0].mxu0
    %v2485 = vadd.f32 %v2221, %v2484
    %2486 = vmatprep.mubr.bf16.mxu0 0
    %2487 = vmatmul.mubr.bf16.gmra.mrb[0].mxu0 %v2178
    %v2488 = vpop.f32.mrb[0].mxu0
    %v2489 = vadd.f32 %v2217, %v2488
    %v2490 = vpop.f32.mrb[0].mxu0
    %v2491 = vadd.f32 %v2221, %v2490
    %v2492 = vpop.f32.mrb[0].mxu0
    %v2493 = vadd.f32 %v2217, %v2492
    %v2494 = vpop.f32.mrb[0].mxu0
    %v2495 = vadd.f32 %v2221, %v2494
    %2496 = vmatprep.mubr.bf16.mxu0 0
    %2497 = vmatmul.mubr.bf16.gmra.mrb[0].mxu0 %v2179
    %v2498 = vpop.f32.mrb[0].mxu0
    %v2499 = vadd.f32 %v2217, %v2498
    %v2500 = vpop.f32.mrb[0].mxu0
    %v2501 = vadd.f32 %v2221, %v2500
    %v2502 = vpop.f32.mrb[0].mxu0
    %v2503 = vadd.f32 %v2217, %v2502
    %v2504 = vpop.f32.mrb[0].mxu0
    %v2505 = vadd.f32 %v2221, %v2504
    %2506 = vdwg.mxu0
    %2507 = vmatprep.subr.bf16.mxu0 %v2333
    %2508 = vmatpush1.bf16.msra.mxu0 %v2332
    %2509 = vmatprep.subr.bf16.mxu0 %v2337
    %2510 = vmatpush1.bf16.msra.mxu0 %v2336
    %2511 = vmatprep.subr.bf16.mxu0 %v2341
    %2512 = vmatpush1.bf16.msra.mxu0 %v2340
    %2513 = vmatprep.subr.bf16.mxu0 %v2345
    %2514 = vmatpush1.bf16.msra.mxu0 %v2344
    %2515 = vmatprep.subr.bf16.mxu0 %v2349
    %2516 = vmatpush1.bf16.msra.mxu0 %v2348
    %2517 = vmatprep.subr.bf16.mxu0 %v2353
    %2518 = vmatpush1.bf16.msra.mxu0 %v2352
    %2519 = vmatprep.subr.bf16.mxu0 %v2357
    %2520 = vmatpush1.bf16.msra.mxu0 %v2356
    %2521 = vmatprep.subr.bf16.mxu0 %v2361
    %2522 = vmatpush1.bf16.msra.mxu0 %v2360
    %2523 = vmatprep.subr.bf16.mxu0 0
    %2524 = vmatpush1.bf16.msra.mxu0 0
    %2525 = vmatprep.subr.bf16.mxu0 0
    %2526 = vmatpush1.bf16.msra.mxu0 0
    %2527 = vmatprep.subr.bf16.mxu0 0
    %2528 = vmatpush1.bf16.msra.mxu0 0
    %2529 = vmatprep.subr.bf16.mxu0 0
    %2530 = vmatpush1.bf16.msra.mxu0 0
    %2531 = vmatprep.subr.bf16.mxu0 0
    %2532 = vmatpush1.bf16.msra.mxu0 0
    %2533 = vmatprep.subr.bf16.mxu0 0
    %2534 = vmatpush1.bf16.msra.mxu0 0
    %2535 = vmatprep.subr.bf16.mxu0 0
    %2536 = vmatpush1.bf16.msra.mxu0 0
    %2537 = vmatprep.subr.bf16.mxu0 0
    %2538 = vmatpush1.bf16.msra.mxu0 0
    %2539 = vmatprep.mubr.bf16.mxu0 0
    %2540 = vmatmul.mubr.bf16.gmra.mrb[0].mxu0 %v2172
    %v2541 = vpop.f32.mrb[0].mxu0
    %v2542 = vadd.f32 %v2225, %v2541
    %v2543 = vpop.f32.mrb[0].mxu0
    %v2544 = vadd.f32 %v2229, %v2543
    %v2545 = vpop.f32.mrb[0].mxu0
    %v2546 = vadd.f32 %v2225, %v2545
    %v2547 = vpop.f32.mrb[0].mxu0
    %v2548 = vadd.f32 %v2229, %v2547
    %2549 = vmatprep.mubr.bf16.mxu0 0
    %2550 = vmatmul.mubr.bf16.gmra.mrb[0].mxu0 %v2173
    %v2551 = vpop.f32.mrb[0].mxu0
    %v2552 = vadd.f32 %v2225, %v2551
    %v2553 = vpop.f32.mrb[0].mxu0
    %v2554 = vadd.f32 %v2229, %v2553
    %v2555 = vpop.f32.mrb[0].mxu0
    %v2556 = vadd.f32 %v2225, %v2555
    %v2557 = vpop.f32.mrb[0].mxu0
    %v2558 = vadd.f32 %v2229, %v2557
    %2559 = vmatprep.mubr.bf16.mxu0 0
    %2560 = vmatmul.mubr.bf16.gmra.mrb[0].mxu0 %v2174
    %v2561 = vpop.f32.mrb[0].mxu0
    %v2562 = vadd.f32 %v2225, %v2561
    %v2563 = vpop.f32.mrb[0].mxu0
    %v2564 = vadd.f32 %v2229, %v2563
    %v2565 = vpop.f32.mrb[0].mxu0
    %v2566 = vadd.f32 %v2225, %v2565
    %v2567 = vpop.f32.mrb[0].mxu0
    %v2568 = vadd.f32 %v2229, %v2567
    %2569 = vmatprep.mubr.bf16.mxu0 0
    %2570 = vmatmul.mubr.bf16.gmra.mrb[0].mxu0 %v2175
    %v2571 = vpop.f32.mrb[0].mxu0
    %v2572 = vadd.f32 %v2225, %v2571
    %v2573 = vpop.f32.mrb[0].mxu0
    %v2574 = vadd.f32 %v2229, %v2573
    %v2575 = vpop.f32.mrb[0].mxu0
    %v2576 = vadd.f32 %v2225, %v2575
    %v2577 = vpop.f32.mrb[0].mxu0
    %v2578 = vadd.f32 %v2229, %v2577
    %2579 = vmatprep.mubr.bf16.mxu0 0
    %2580 = vmatmul.mubr.bf16.gmra.mrb[0].mxu0 %v2176
    %v2581 = vpop.f32.mrb[0].mxu0
    %v2582 = vadd.f32 %v2225, %v2581
    %v2583 = vpop.f32.mrb[0].mxu0
    %v2584 = vadd.f32 %v2229, %v2583
    %v2585 = vpop.f32.mrb[0].mxu0
    %v2586 = vadd.f32 %v2225, %v2585
    %v2587 = vpop.f32.mrb[0].mxu0
    %v2588 = vadd.f32 %v2229, %v2587
    %2589 = vmatprep.mubr.bf16.mxu0 0
    %2590 = vmatmul.mubr.bf16.gmra.mrb[0].mxu0 %v2177
    %v2591 = vpop.f32.mrb[0].mxu0
    %v2592 = vadd.f32 %v2225, %v2591
    %v2593 = vpop.f32.mrb[0].mxu0
    %v2594 = vadd.f32 %v2229, %v2593
    %v2595 = vpop.f32.mrb[0].mxu0
    %v2596 = vadd.f32 %v2225, %v2595
    %v2597 = vpop.f32.mrb[0].mxu0
    %v2598 = vadd.f32 %v2229, %v2597
    %2599 = vmatprep.mubr.bf16.mxu0 0
    %2600 = vmatmul.mubr.bf16.gmra.mrb[0].mxu0 %v2178
    %v2601 = vpop.f32.mrb[0].mxu0
    %v2602 = vadd.f32 %v2225, %v2601
    %v2603 = vpop.f32.mrb[0].mxu0
    %v2604 = vadd.f32 %v2229, %v2603
    %v2605 = vpop.f32.mrb[0].mxu0
    %v2606 = vadd.f32 %v2225, %v2605
    %v2607 = vpop.f32.mrb[0].mxu0
    %v2608 = vadd.f32 %v2229, %v2607
    %2609 = vmatprep.mubr.bf16.mxu0 0
    %2610 = vmatmul.mubr.bf16.gmra.mrb[0].mxu0 %v2179
    %v2611 = vpop.f32.mrb[0].mxu0
    %v2612 = vadd.f32 %v2225, %v2611
    %v2613 = vpop.f32.mrb[0].mxu0
    %v2614 = vadd.f32 %v2229, %v2613
    %v2615 = vpop.f32.mrb[0].mxu0
    %v2616 = vadd.f32 %v2225, %v2615
    %v2617 = vpop.f32.mrb[0].mxu0
    %v2618 = vadd.f32 %v2229, %v2617
    %2619 = vdwg.mxu0
    %v2620 = vpack.c.bf16 %v2433, %v2429
    %v2621 = vpack.c.bf16 %v2435, %v2431
    %v2622 = vpack.c.bf16 %v2546, %v2542
    %v2623 = vpack.c.bf16 %v2548, %v2544
    %v2624 = vpack.c.bf16 %v2443, %v2439
    %v2625 = vpack.c.bf16 %v2445, %v2441
    %v2626 = vpack.c.bf16 %v2556, %v2552
    %v2627 = vpack.c.bf16 %v2558, %v2554
    %v2628 = vpack.c.bf16 %v2453, %v2449
    %v2629 = vpack.c.bf16 %v2455, %v2451
    %v2630 = vpack.c.bf16 %v2566, %v2562
    %v2631 = vpack.c.bf16 %v2568, %v2564
    %v2632 = vpack.c.bf16 %v2463, %v2459
    %v2633 = vpack.c.bf16 %v2465, %v2461
    %v2634 = vpack.c.bf16 %v2576, %v2572
    %v2635 = vpack.c.bf16 %v2578, %v2574
    %v2636 = vpack.c.bf16 %v2473, %v2469
    %v2637 = vpack.c.bf16 %v2475, %v2471
    %v2638 = vpack.c.bf16 %v2586, %v2582
    %v2639 = vpack.c.bf16 %v2588, %v2584
    %v2640 = vpack.c.bf16 %v2483, %v2479
    %v2641 = vpack.c.bf16 %v2485, %v2481
    %v2642 = vpack.c.bf16 %v2596, %v2592
    %v2643 = vpack.c.bf16 %v2598, %v2594
    %v2644 = vpack.c.bf16 %v2493, %v2489
    %v2645 = vpack.c.bf16 %v2495, %v2491
    %v2646 = vpack.c.bf16 %v2606, %v2602
    %v2647 = vpack.c.bf16 %v2608, %v2604
    %v2648 = vpack.c.bf16 %v2503, %v2499
    %v2649 = vpack.c.bf16 %v2505, %v2501
    %v2650 = vpack.c.bf16 %v2616, %v2612
    %v2651 = vpack.c.bf16 %v2618, %v2614
    %2652 = vst [vmem:[#allocation3] sm:$0xff] %v2620
    %2653 = vst [vmem:[#allocation3 + $0x8] sm:$0xff] %v2621
    %2654 = vst [vmem:[#allocation3 + $0x10] sm:$0xff] %v2622
    %2655 = vst [vmem:[#allocation3 + $0x18] sm:$0xff] %v2623
    %2656 = vst [vmem:[#allocation3 + $0x20] sm:$0xff] %v2624
    %2657 = vst [vmem:[#allocation3 + $0x28] sm:$0xff] %v2625
    %2658 = vst [vmem:[#allocation3 + $0x30] sm:$0xff] %v2626
    %2659 = vst [vmem:[#allocation3 + $0x38] sm:$0xff] %v2627
    %2660 = vst [vmem:[#allocation3 + $0x40] sm:$0xff] %v2628
    %2661 = vst [vmem:[#allocation3 + $0x48] sm:$0xff] %v2629
    %2662 = vst [vmem:[#allocation3 + $0x50] sm:$0xff] %v2630
    %2663 = vst [vmem:[#allocation3 + $0x58] sm:$0xff] %v2631
    %2664 = vst [vmem:[#allocation3 + $0x60] sm:$0xff] %v2632
    %2665 = vst [vmem:[#allocation3 + $0x68] sm:$0xff] %v2633
    %2666 = vst [vmem:[#allocation3 + $0x70] sm:$0xff] %v2634
    %2667 = vst [vmem:[#allocation3 + $0x78] sm:$0xff] %v2635
    %2668 = vst [vmem:[#allocation3 + $0x80] sm:$0xff] %v2636
    %2669 = vst [vmem:[#allocation3 + $0x88] sm:$0xff] %v2637
    %2670 = vst [vmem:[#allocation3 + $0x90] sm:$0xff] %v2638
    %2671 = vst [vmem:[#allocation3 + $0x98] sm:$0xff] %v2639
    %2672 = vst [vmem:[#allocation3 + $0xa0] sm:$0xff] %v2640
    %2673 = vst [vmem:[#allocation3 + $0xa8] sm:$0xff] %v2641
    %2674 = vst [vmem:[#allocation3 + $0xb0] sm:$0xff] %v2642
    %2675 = vst [vmem:[#allocation3 + $0xb8] sm:$0xff] %v2643
    %2676 = vst [vmem:[#allocation3 + $0xc0] sm:$0xff] %v2644
    %2677 = vst [vmem:[#allocation3 + $0xc8] sm:$0xff] %v2645
    %2678 = vst [vmem:[#allocation3 + $0xd0] sm:$0xff] %v2646
    %2679 = vst [vmem:[#allocation3 + $0xd8] sm:$0xff] %v2647
    %2680 = vst [vmem:[#allocation3 + $0xe0] sm:$0xff] %v2648
    %2681 = vst [vmem:[#allocation3 + $0xe8] sm:$0xff] %v2649
    %2682 = vst [vmem:[#allocation3 + $0xf0] sm:$0xff] %v2650
    %2683 = vst [vmem:[#allocation3 + $0xf8] sm:$0xff] %v2651
    %v2684 = vld [vmem:[#allocation13] sm:$0xff]
    %v2685 = vld [vmem:[#allocation13 + $0x8] sm:$0xff]
    %v2686 = vld [vmem:[#allocation13 + $0x10] sm:$0xff]
    %v2687 = vld [vmem:[#allocation13 + $0x18] sm:$0xff]
    %v2688 = vld [vmem:[#allocation13 + $0x20] sm:$0xff]
    %v2689 = vld [vmem:[#allocation13 + $0x28] sm:$0xff]
    %v2690 = vld [vmem:[#allocation13 + $0x30] sm:$0xff]
    %v2691 = vld [vmem:[#allocation13 + $0x38] sm:$0xff]
    %v2692 = vld [vmem:[#allocation13 + $0x40] sm:$0xff]
    %v2693 = vld [vmem:[#allocation13 + $0x48] sm:$0xff]
    %v2694 = vld [vmem:[#allocation13 + $0x50] sm:$0xff]
    %v2695 = vld [vmem:[#allocation13 + $0x58] sm:$0xff]
    %v2696 = vld [vmem:[#allocation13 + $0x60] sm:$0xff]
    %v2697 = vld [vmem:[#allocation13 + $0x68] sm:$0xff]
    %v2698 = vld [vmem:[#allocation13 + $0x70] sm:$0xff]
    %v2699 = vld [vmem:[#allocation13 + $0x78] sm:$0xff]
    %v2700 = vld [vmem:[#allocation13 + $0x80] sm:$0xff]
    %v2701 = vld [vmem:[#allocation13 + $0x88] sm:$0xff]
    %v2702 = vld [vmem:[#allocation13 + $0x90] sm:$0xff]
    %v2703 = vld [vmem:[#allocation13 + $0x98] sm:$0xff]
    %v2704 = vld [vmem:[#allocation13 + $0xa0] sm:$0xff]
    %v2705 = vld [vmem:[#allocation13 + $0xa8] sm:$0xff]
    %v2706 = vld [vmem:[#allocation13 + $0xb0] sm:$0xff]
    %v2707 = vld [vmem:[#allocation13 + $0xb8] sm:$0xff]
    %v2708 = vld [vmem:[#allocation13 + $0xc0] sm:$0xff]
    %v2709 = vld [vmem:[#allocation13 + $0xc8] sm:$0xff]
    %v2710 = vld [vmem:[#allocation13 + $0xd0] sm:$0xff]
    %v2711 = vld [vmem:[#allocation13 + $0xd8] sm:$0xff]
    %v2712 = vld [vmem:[#allocation13 + $0xe0] sm:$0xff]
    %v2713 = vld [vmem:[#allocation13 + $0xe8] sm:$0xff]
    %v2714 = vld [vmem:[#allocation13 + $0xf0] sm:$0xff]
    %v2715 = vld [vmem:[#allocation13 + $0xf8] sm:$0xff]
    %v2716 = vld [vmem:[%s831] sm:$0xff]
    %v2717 = vld [vmem:[%s831 + $0x8] sm:$0xff]
    %v2718 = vld [vmem:[%s831 + $0x10] sm:$0xff]
    %v2719 = vld [vmem:[%s831 + $0x18] sm:$0xff]
    %v2752 = vunpack.c.l.b16 %v2684
    %v2753 = vunpack.c.h.b16 %v2684
    %v2754 = vunpack.c.l.b16 %v2685
    %v2755 = vunpack.c.h.b16 %v2685
    %v2756 = vunpack.c.l.b16 %v2686
    %v2757 = vunpack.c.h.b16 %v2686
    %v2758 = vunpack.c.l.b16 %v2687
    %v2759 = vunpack.c.h.b16 %v2687
    %v2760 = vunpack.c.l.b16 %v2688
    %v2761 = vunpack.c.h.b16 %v2688
    %v2762 = vunpack.c.l.b16 %v2689
    %v2763 = vunpack.c.h.b16 %v2689
    %v2764 = vunpack.c.l.b16 %v2690
    %v2765 = vunpack.c.h.b16 %v2690
    %v2766 = vunpack.c.l.b16 %v2691
    %v2767 = vunpack.c.h.b16 %v2691
    %v2768 = vunpack.c.l.b16 %v2692
    %v2769 = vunpack.c.h.b16 %v2692
    %v2770 = vunpack.c.l.b16 %v2693
    %v2771 = vunpack.c.h.b16 %v2693
    %v2772 = vunpack.c.l.b16 %v2694
    %v2773 = vunpack.c.h.b16 %v2694
    %v2774 = vunpack.c.l.b16 %v2695
    %v2775 = vunpack.c.h.b16 %v2695
    %v2776 = vunpack.c.l.b16 %v2696
    %v2777 = vunpack.c.h.b16 %v2696
    %v2778 = vunpack.c.l.b16 %v2697
    %v2779 = vunpack.c.h.b16 %v2697
    %v2780 = vunpack.c.l.b16 %v2698
    %v2781 = vunpack.c.h.b16 %v2698
    %v2782 = vunpack.c.l.b16 %v2699
    %v2783 = vunpack.c.h.b16 %v2699
    %v2784 = vunpack.c.l.b16 %v2700
    %v2785 = vunpack.c.h.b16 %v2700
    %v2786 = vunpack.c.l.b16 %v2701
    %v2787 = vunpack.c.h.b16 %v2701
    %v2788 = vunpack.c.l.b16 %v2702
    %v2789 = vunpack.c.h.b16 %v2702
    %v2790 = vunpack.c.l.b16 %v2703
    %v2791 = vunpack.c.h.b16 %v2703
    %v2792 = vunpack.c.l.b16 %v2704
    %v2793 = vunpack.c.h.b16 %v2704
    %v2794 = vunpack.c.l.b16 %v2705
    %v2795 = vunpack.c.h.b16 %v2705
    %v2796 = vunpack.c.l.b16 %v2706
    %v2797 = vunpack.c.h.b16 %v2706
    %v2798 = vunpack.c.l.b16 %v2707
    %v2799 = vunpack.c.h.b16 %v2707
    %v2800 = vunpack.c.l.b16 %v2708
    %v2801 = vunpack.c.h.b16 %v2708
    %v2802 = vunpack.c.l.b16 %v2709
    %v2803 = vunpack.c.h.b16 %v2709
    %v2804 = vunpack.c.l.b16 %v2710
    %v2805 = vunpack.c.h.b16 %v2710
    %v2806 = vunpack.c.l.b16 %v2711
    %v2807 = vunpack.c.h.b16 %v2711
    %v2808 = vunpack.c.l.b16 %v2712
    %v2809 = vunpack.c.h.b16 %v2712
    %v2810 = vunpack.c.l.b16 %v2713
    %v2811 = vunpack.c.h.b16 %v2713
    %v2812 = vunpack.c.l.b16 %v2714
    %v2813 = vunpack.c.h.b16 %v2714
    %v2814 = vunpack.c.l.b16 %v2715
    %v2815 = vunpack.c.h.b16 %v2715
    %v2816 = vpack.c.b16 %v2756, %v2752
    %v2817 = vpack.c.b16 %v2757, %v2753
    %v2818 = vpack.c.b16 %v2758, %v2754
    %v2819 = vpack.c.b16 %v2759, %v2755
    %v2820 = vpack.c.b16 %v2764, %v2760
    %v2821 = vpack.c.b16 %v2765, %v2761
    %v2822 = vpack.c.b16 %v2766, %v2762
    %v2823 = vpack.c.b16 %v2767, %v2763
    %v2824 = vpack.c.b16 %v2772, %v2768
    %v2825 = vpack.c.b16 %v2773, %v2769
    %v2826 = vpack.c.b16 %v2774, %v2770
    %v2827 = vpack.c.b16 %v2775, %v2771
    %v2828 = vpack.c.b16 %v2780, %v2776
    %v2829 = vpack.c.b16 %v2781, %v2777
    %v2830 = vpack.c.b16 %v2782, %v2778
    %v2831 = vpack.c.b16 %v2783, %v2779
    %v2832 = vpack.c.b16 %v2788, %v2784
    %v2833 = vpack.c.b16 %v2789, %v2785
    %v2834 = vpack.c.b16 %v2790, %v2786
    %v2835 = vpack.c.b16 %v2791, %v2787
    %v2836 = vpack.c.b16 %v2796, %v2792
    %v2837 = vpack.c.b16 %v2797, %v2793
    %v2838 = vpack.c.b16 %v2798, %v2794
    %v2839 = vpack.c.b16 %v2799, %v2795
    %v2840 = vpack.c.b16 %v2804, %v2800
    %v2841 = vpack.c.b16 %v2805, %v2801
    %v2842 = vpack.c.b16 %v2806, %v2802
    %v2843 = vpack.c.b16 %v2807, %v2803
    %v2844 = vpack.c.b16 %v2812, %v2808
    %v2845 = vpack.c.b16 %v2813, %v2809
    %v2846 = vpack.c.b16 %v2814, %v2810
    %v2847 = vpack.c.b16 %v2815, %v2811
    %2880 = vmatprep.subr.bf16.mxu0 %v2817
    %2881 = vmatpush1.bf16.msra.mxu0 %v2816
    %2882 = vmatprep.subr.bf16.mxu0 %v2821
    %2883 = vmatpush1.bf16.msra.mxu0 %v2820
    %2884 = vmatprep.subr.bf16.mxu0 %v2825
    %2885 = vmatpush1.bf16.msra.mxu0 %v2824
    %2886 = vmatprep.subr.bf16.mxu0 %v2829
    %2887 = vmatpush1.bf16.msra.mxu0 %v2828
    %2888 = vmatprep.subr.bf16.mxu0 %v2833
    %2889 = vmatpush1.bf16.msra.mxu0 %v2832
    %2890 = vmatprep.subr.bf16.mxu0 %v2837
    %2891 = vmatpush1.bf16.msra.mxu0 %v2836
    %2892 = vmatprep.subr.bf16.mxu0 %v2841
    %2893 = vmatpush1.bf16.msra.mxu0 %v2840
    %2894 = vmatprep.subr.bf16.mxu0 %v2845
    %2895 = vmatpush1.bf16.msra.mxu0 %v2844
    %2896 = vmatprep.subr.bf16.mxu0 0
    %2897 = vmatpush1.bf16.msra.mxu0 0
    %2898 = vmatprep.subr.bf16.mxu0 0
    %2899 = vmatpush1.bf16.msra.mxu0 0
    %2900 = vmatprep.subr.bf16.mxu0 0
    %2901 = vmatpush1.bf16.msra.mxu0 0
    %2902 = vmatprep.subr.bf16.mxu0 0
    %2903 = vmatpush1.bf16.msra.mxu0 0
    %2904 = vmatprep.subr.bf16.mxu0 0
    %2905 = vmatpush1.bf16.msra.mxu0 0
    %2906 = vmatprep.subr.bf16.mxu0 0
    %2907 = vmatpush1.bf16.msra.mxu0 0
    %2908 = vmatprep.subr.bf16.mxu0 0
    %2909 = vmatpush1.bf16.msra.mxu0 0
    %2910 = vmatprep.subr.bf16.mxu0 0
    %2911 = vmatpush1.bf16.msra.mxu0 0
    %2912 = vmatprep.mubr.bf16.mxu0 0
    %2913 = vmatmul.mubr.bf16.gmra.mrb[0].mxu0 0
    %v2914 = vpop.f32.mrb[0].mxu0
    %v2915 = vadd.f32 0.0, %v2914
    %v2916 = vpop.f32.mrb[0].mxu0
    %v2917 = vadd.f32 0.0, %v2916
    %v2918 = vpop.f32.mrb[0].mxu0
    %v2919 = vadd.f32 0.0, %v2918
    %v2920 = vpop.f32.mrb[0].mxu0
    %v2921 = vadd.f32 0.0, %v2920
    %2922 = vdwg.mxu0
    %2923 = vmatprep.subr.bf16.mxu0 %v2819
    %2924 = vmatpush1.bf16.msra.mxu0 %v2818
    %2925 = vmatprep.subr.bf16.mxu0 %v2823
    %2926 = vmatpush1.bf16.msra.mxu0 %v2822
    %2927 = vmatprep.subr.bf16.mxu0 %v2827
    %2928 = vmatpush1.bf16.msra.mxu0 %v2826
    %2929 = vmatprep.subr.bf16.mxu0 %v2831
    %2930 = vmatpush1.bf16.msra.mxu0 %v2830
    %2931 = vmatprep.subr.bf16.mxu0 %v2835
    %2932 = vmatpush1.bf16.msra.mxu0 %v2834
    %2933 = vmatprep.subr.bf16.mxu0 %v2839
    %2934 = vmatpush1.bf16.msra.mxu0 %v2838
    %2935 = vmatprep.subr.bf16.mxu0 %v2843
    %2936 = vmatpush1.bf16.msra.mxu0 %v2842
    %2937 = vmatprep.subr.bf16.mxu0 %v2847
    %2938 = vmatpush1.bf16.msra.mxu0 %v2846
    %2939 = vmatprep.subr.bf16.mxu0 0
    %2940 = vmatpush1.bf16.msra.mxu0 0
    %2941 = vmatprep.subr.bf16.mxu0 0
    %2942 = vmatpush1.bf16.msra.mxu0 0
    %2943 = vmatprep.subr.bf16.mxu0 0
    %2944 = vmatpush1.bf16.msra.mxu0 0
    %2945 = vmatprep.subr.bf16.mxu0 0
    %2946 = vmatpush1.bf16.msra.mxu0 0
    %2947 = vmatprep.subr.bf16.mxu0 0
    %2948 = vmatpush1.bf16.msra.mxu0 0
    %2949 = vmatprep.subr.bf16.mxu0 0
    %2950 = vmatpush1.bf16.msra.mxu0 0
    %2951 = vmatprep.subr.bf16.mxu0 0
    %2952 = vmatpush1.bf16.msra.mxu0 0
    %2953 = vmatprep.subr.bf16.mxu0 0
    %2954 = vmatpush1.bf16.msra.mxu0 0
    %2955 = vmatprep.mubr.bf16.mxu0 0
    %2956 = vmatmul.mubr.bf16.gmra.mrb[0].mxu0 0
    %v2957 = vpop.f32.mrb[0].mxu0
    %v2958 = vadd.f32 0.0, %v2957
    %v2959 = vpop.f32.mrb[0].mxu0
    %v2960 = vadd.f32 0.0, %v2959
    %v2961 = vpop.f32.mrb[0].mxu0
    %v2962 = vadd.f32 0.0, %v2961
    %v2963 = vpop.f32.mrb[0].mxu0
    %v2964 = vadd.f32 0.0, %v2963
    %2965 = vdwg.mxu0
    %v2966 = vunpack.c.l.bf16 %v2716
    %v2967 = vunpack.c.l.bf16 %v2717
    %v2968 = vunpack.c.l.bf16 %v2718
    %v2969 = vunpack.c.l.bf16 %v2719
    %v2970 = vunpack.c.h.bf16 %v2716
    %v2971 = vunpack.c.h.bf16 %v2717
    %v2972 = vunpack.c.h.bf16 %v2718
    %v2973 = vunpack.c.h.bf16 %v2719
    %v2974 = vadd.f32 %v2966, %v2915
    %v2975 = vadd.f32 %v2967, %v2917
    %v2976 = vadd.f32 %v2968, %v2958
    %v2977 = vadd.f32 %v2969, %v2960
    %v2978 = vadd.f32 %v2970, %v2919
    %v2979 = vadd.f32 %v2971, %v2921
    %v2980 = vadd.f32 %v2972, %v2962
    %v2981 = vadd.f32 %v2973, %v2964
    %v2982 = vmul.f32 %v2974, 0.5
    %v2983 = vmul.f32 %v2975, 0.5
    %v2984 = vmul.f32 %v2976, 0.5
    %v2985 = vmul.f32 %v2978, 0.5
    %v2986 = vmul.f32 %v2979, 0.5
    %v2987 = vmul.f32 %v2980, 0.5
    %v2988 = vtanh.pop %v2982
    %v2989 = vtanh.pop %v2983
    %v2990 = vtanh.pop %v2984
    %v2991 = vtanh.pop %v2985
    %v2992 = vtanh.pop %v2986
    %v2993 = vtanh.pop %v2987
    %v2994 = vadd.f32 %v2988, 1.0
    %v2995 = vadd.f32 %v2989, 1.0
    %v2996 = vadd.f32 %v2990, 1.0
    %v2997 = vadd.f32 %v2991, 1.0
    %v2998 = vadd.f32 %v2992, 1.0
    %v2999 = vadd.f32 %v2993, 1.0
    %v3000 = vmul.f32 %v2994, 0.5
    %v3001 = vmul.f32 %v2995, 0.5
    %v3002 = vmul.f32 %v2996, 0.5
    %v3003 = vmul.f32 %v2997, 0.5
    %v3004 = vmul.f32 %v2998, 0.5
    %v3005 = vmul.f32 %v2999, 0.5
    %v3006 = vtanh.pop %v2977
    %v3007 = vtanh.pop %v2981
    %v3008 = vmul.f32 %v3001, 0.0
    %v3009 = vmul.f32 %v3004, 0.0
    %v3010 = vmul.f32 %v3000, %v3006
    %v3011 = vmul.f32 %v3003, %v3007
    %v3012 = vadd.f32 %v3008, %v3010
    %v3013 = vadd.f32 %v3009, %v3011
    %v3014 = vtanh.pop %v3012
    %v3015 = vtanh.pop %v3013
    %v3016 = vmul.f32 %v3002, %v3014
    %v3017 = vmul.f32 %v3005, %v3015
    %v3018 = vpack.c.bf16 %v3017, %v3016
    %3019 = vst [vmem:[#allocation2] sm:$0xff] %v3018
    %v3020 = vld [vmem:[%s1138] sm:$0xff]
    %v3021 = vld [vmem:[%s1138 + $0x8] sm:$0xff]
    %v3022 = vld [vmem:[%s1138 + $0x10] sm:$0xff]
    %v3023 = vld [vmem:[%s1138 + $0x18] sm:$0xff]
    %3024 = vmatprep.subr.bf16.mxu0 %v2817
    %3025 = vmatpush1.bf16.msra.mxu0 %v2816
    %3026 = vmatprep.subr.bf16.mxu0 %v2821
    %3027 = vmatpush1.bf16.msra.mxu0 %v2820
    %3028 = vmatprep.subr.bf16.mxu0 %v2825
    %3029 = vmatpush1.bf16.msra.mxu0 %v2824
    %3030 = vmatprep.subr.bf16.mxu0 %v2829
    %3031 = vmatpush1.bf16.msra.mxu0 %v2828
    %3032 = vmatprep.subr.bf16.mxu0 %v2833
    %3033 = vmatpush1.bf16.msra.mxu0 %v2832
    %3034 = vmatprep.subr.bf16.mxu0 %v2837
    %3035 = vmatpush1.bf16.msra.mxu0 %v2836
    %3036 = vmatprep.subr.bf16.mxu0 %v2841
    %3037 = vmatpush1.bf16.msra.mxu0 %v2840
    %3038 = vmatprep.subr.bf16.mxu0 %v2845
    %3039 = vmatpush1.bf16.msra.mxu0 %v2844
    %3040 = vmatprep.subr.bf16.mxu0 0
    %3041 = vmatpush1.bf16.msra.mxu0 0
    %3042 = vmatprep.subr.bf16.mxu0 0
    %3043 = vmatpush1.bf16.msra.mxu0 0
    %3044 = vmatprep.subr.bf16.mxu0 0
    %3045 = vmatpush1.bf16.msra.mxu0 0
    %3046 = vmatprep.subr.bf16.mxu0 0
    %3047 = vmatpush1.bf16.msra.mxu0 0
    %3048 = vmatprep.subr.bf16.mxu0 0
    %3049 = vmatpush1.bf16.msra.mxu0 0
    %3050 = vmatprep.subr.bf16.mxu0 0
    %3051 = vmatpush1.bf16.msra.mxu0 0
    %3052 = vmatprep.subr.bf16.mxu0 0
    %3053 = vmatpush1.bf16.msra.mxu0 0
    %3054 = vmatprep.subr.bf16.mxu0 0
    %3055 = vmatpush1.bf16.msra.mxu0 0
    %3056 = vmatprep.mubr.bf16.mxu0 0
    %3057 = vmatmul.mubr.bf16.gmra.mrb[0].mxu0 %v3018
    %v3058 = vpop.f32.mrb[0].mxu0
    %v3059 = vadd.f32 0.0, %v3058
    %v3060 = vpop.f32.mrb[0].mxu0
    %v3061 = vadd.f32 0.0, %v3060
    %v3062 = vpop.f32.mrb[0].mxu0
    %v3063 = vadd.f32 0.0, %v3062
    %v3064 = vpop.f32.mrb[0].mxu0
    %v3065 = vadd.f32 0.0, %v3064
    %3066 = vdwg.mxu0
    %3067 = vmatprep.subr.bf16.mxu0 %v2819
    %3068 = vmatpush1.bf16.msra.mxu0 %v2818
    %3069 = vmatprep.subr.bf16.mxu0 %v2823
    %3070 = vmatpush1.bf16.msra.mxu0 %v2822
    %3071 = vmatprep.subr.bf16.mxu0 %v2827
    %3072 = vmatpush1.bf16.msra.mxu0 %v2826
    %3073 = vmatprep.subr.bf16.mxu0 %v2831
    %3074 = vmatpush1.bf16.msra.mxu0 %v2830
    %3075 = vmatprep.subr.bf16.mxu0 %v2835
    %3076 = vmatpush1.bf16.msra.mxu0 %v2834
    %3077 = vmatprep.subr.bf16.mxu0 %v2839
    %3078 = vmatpush1.bf16.msra.mxu0 %v2838
    %3079 = vmatprep.subr.bf16.mxu0 %v2843
    %3080 = vmatpush1.bf16.msra.mxu0 %v2842
    %3081 = vmatprep.subr.bf16.mxu0 %v2847
    %3082 = vmatpush1.bf16.msra.mxu0 %v2846
    %3083 = vmatprep.subr.bf16.mxu0 0
    %3084 = vmatpush1.bf16.msra.mxu0 0
    %3085 = vmatprep.subr.bf16.mxu0 0
    %3086 = vmatpush1.bf16.msra.mxu0 0
    %3087 = vmatprep.subr.bf16.mxu0 0
    %3088 = vmatpush1.bf16.msra.mxu0 0
    %3089 = vmatprep.subr.bf16.mxu0 0
    %3090 = vmatpush1.bf16.msra.mxu0 0
    %3091 = vmatprep.subr.bf16.mxu0 0
    %3092 = vmatpush1.bf16.msra.mxu0 0
    %3093 = vmatprep.subr.bf16.mxu0 0
    %3094 = vmatpush1.bf16.msra.mxu0 0
    %3095 = vmatprep.subr.bf16.mxu0 0
    %3096 = vmatpush1.bf16.msra.mxu0 0
    %3097 = vmatprep.subr.bf16.mxu0 0
    %3098 = vmatpush1.bf16.msra.mxu0 0
    %3099 = vmatprep.mubr.bf16.mxu0 0
    %3100 = vmatmul.mubr.bf16.gmra.mrb[0].mxu0 %v3018
    %v3101 = vpop.f32.mrb[0].mxu0
    %v3102 = vadd.f32 0.0, %v3101
    %v3103 = vpop.f32.mrb[0].mxu0
    %v3104 = vadd.f32 0.0, %v3103
    %v3105 = vpop.f32.mrb[0].mxu0
    %v3106 = vadd.f32 0.0, %v3105
    %v3107 = vpop.f32.mrb[0].mxu0
    %v3108 = vadd.f32 0.0, %v3107
    %3109 = vdwg.mxu0
    %v3110 = vunpack.c.l.bf16 %v3020
    %v3111 = vunpack.c.l.bf16 %v3021
    %v3112 = vunpack.c.l.bf16 %v3022
    %v3113 = vunpack.c.l.bf16 %v3023
    %v3114 = vunpack.c.h.bf16 %v3020
    %v3115 = vunpack.c.h.bf16 %v3021
    %v3116 = vunpack.c.h.bf16 %v3022
    %v3117 = vunpack.c.h.bf16 %v3023
    %v3118 = vadd.f32 %v3110, %v3059
    %v3119 = vadd.f32 %v3111, %v3061
    %v3120 = vadd.f32 %v3112, %v3102
    %v3121 = vadd.f32 %v3113, %v3104
    %v3122 = vadd.f32 %v3114, %v3063
    %v3123 = vadd.f32 %v3115, %v3065
    %v3124 = vadd.f32 %v3116, %v3106
    %v3125 = vadd.f32 %v3117, %v3108
    %v3126 = vmul.f32 %v3118, 0.5
    %v3127 = vmul.f32 %v3119, 0.5
    %v3128 = vmul.f32 %v3120, 0.5
    %v3129 = vmul.f32 %v3122, 0.5
    %v3130 = vmul.f32 %v3123, 0.5
    %v3131 = vmul.f32 %v3124, 0.5
    %v3132 = vtanh.pop %v3126
    %v3133 = vtanh.pop %v3127
    %v3134 = vtanh.pop %v3128
    %v3135 = vtanh.pop %v3129
    %v3136 = vtanh.pop %v3130
    %v3137 = vtanh.pop %v3131
    %v3138 = vadd.f32 %v3132, 1.0
    %v3139 = vadd.f32 %v3133, 1.0
    %v3140 = vadd.f32 %v3134, 1.0
    %v3141 = vadd.f32 %v3135, 1.0
    %v3142 = vadd.f32 %v3136, 1.0
    %v3143 = vadd.f32 %v3137, 1.0
    %v3144 = vmul.f32 %v3138, 0.5
    %v3145 = vmul.f32 %v3139, 0.5
    %v3146 = vmul.f32 %v3140, 0.5
    %v3147 = vmul.f32 %v3141, 0.5
    %v3148 = vmul.f32 %v3142, 0.5
    %v3149 = vmul.f32 %v3143, 0.5
    %v3150 = vtanh.pop %v3121
    %v3151 = vtanh.pop %v3125
    %v3152 = vmul.f32 %v3145, %v3012
    %v3153 = vmul.f32 %v3148, %v3013
    %v3154 = vmul.f32 %v3144, %v3150
    %v3155 = vmul.f32 %v3147, %v3151
    %v3156 = vadd.f32 %v3152, %v3154
    %v3157 = vadd.f32 %v3153, %v3155
    %v3158 = vtanh.pop %v3156
    %v3159 = vtanh.pop %v3157
    %v3160 = vmul.f32 %v3146, %v3158
    %v3161 = vmul.f32 %v3149, %v3159
    %v3162 = vpack.c.bf16 %v3161, %v3160
    %3163 = vst [vmem:[%s1282] sm:$0xff] %v3162
    %v3164 = vld [vmem:[%s1286] sm:$0xff]
    %v3165 = vld [vmem:[%s1286 + $0x8] sm:$0xff]
    %v3166 = vld [vmem:[%s1286 + $0x10] sm:$0xff]
    %v3167 = vld [vmem:[%s1286 + $0x18] sm:$0xff]
    %3168 = vmatprep.subr.bf16.mxu0 %v2817
    %3169 = vmatpush1.bf16.msra.mxu0 %v2816
    %3170 = vmatprep.subr.bf16.mxu0 %v2821
    %3171 = vmatpush1.bf16.msra.mxu0 %v2820
    %3172 = vmatprep.subr.bf16.mxu0 %v2825
    %3173 = vmatpush1.bf16.msra.mxu0 %v2824
    %3174 = vmatprep.subr.bf16.mxu0 %v2829
    %3175 = vmatpush1.bf16.msra.mxu0 %v2828
    %3176 = vmatprep.subr.bf16.mxu0 %v2833
    %3177 = vmatpush1.bf16.msra.mxu0 %v2832
    %3178 = vmatprep.subr.bf16.mxu0 %v2837
    %3179 = vmatpush1.bf16.msra.mxu0 %v2836
    %3180 = vmatprep.subr.bf16.mxu0 %v2841
    %3181 = vmatpush1.bf16.msra.mxu0 %v2840
    %3182 = vmatprep.subr.bf16.mxu0 %v2845
    %3183 = vmatpush1.bf16.msra.mxu0 %v2844
    %3184 = vmatprep.subr.bf16.mxu0 0
    %3185 = vmatpush1.bf16.msra.mxu0 0
    %3186 = vmatprep.subr.bf16.mxu0 0
    %3187 = vmatpush1.bf16.msra.mxu0 0
    %3188 = vmatprep.subr.bf16.mxu0 0
    %3189 = vmatpush1.bf16.msra.mxu0 0
    %3190 = vmatprep.subr.bf16.mxu0 0
    %3191 = vmatpush1.bf16.msra.mxu0 0
    %3192 = vmatprep.subr.bf16.mxu0 0
    %3193 = vmatpush1.bf16.msra.mxu0 0
    %3194 = vmatprep.subr.bf16.mxu0 0
    %3195 = vmatpush1.bf16.msra.mxu0 0
    %3196 = vmatprep.subr.bf16.mxu0 0
    %3197 = vmatpush1.bf16.msra.mxu0 0
    %3198 = vmatprep.subr.bf16.mxu0 0
    %3199 = vmatpush1.bf16.msra.mxu0 0
    %3200 = vmatprep.mubr.bf16.mxu0 0
    %3201 = vmatmul.mubr.bf16.gmra.mrb[0].mxu0 %v3162
    %v3202 = vpop.f32.mrb[0].mxu0
    %v3203 = vadd.f32 0.0, %v3202
    %v3204 = vpop.f32.mrb[0].mxu0
    %v3205 = vadd.f32 0.0, %v3204
    %v3206 = vpop.f32.mrb[0].mxu0
    %v3207 = vadd.f32 0.0, %v3206
    %v3208 = vpop.f32.mrb[0].mxu0
    %v3209 = vadd.f32 0.0, %v3208
    %3210 = vdwg.mxu0
    %3211 = vmatprep.subr.bf16.mxu0 %v2819
    %3212 = vmatpush1.bf16.msra.mxu0 %v2818
    %3213 = vmatprep.subr.bf16.mxu0 %v2823
    %3214 = vmatpush1.bf16.msra.mxu0 %v2822
    %3215 = vmatprep.subr.bf16.mxu0 %v2827
    %3216 = vmatpush1.bf16.msra.mxu0 %v2826
    %3217 = vmatprep.subr.bf16.mxu0 %v2831
    %3218 = vmatpush1.bf16.msra.mxu0 %v2830
    %3219 = vmatprep.subr.bf16.mxu0 %v2835
    %3220 = vmatpush1.bf16.msra.mxu0 %v2834
    %3221 = vmatprep.subr.bf16.mxu0 %v2839
    %3222 = vmatpush1.bf16.msra.mxu0 %v2838
    %3223 = vmatprep.subr.bf16.mxu0 %v2843
    %3224 = vmatpush1.bf16.msra.mxu0 %v2842
    %3225 = vmatprep.subr.bf16.mxu0 %v2847
    %3226 = vmatpush1.bf16.msra.mxu0 %v2846
    %3227 = vmatprep.subr.bf16.mxu0 0
    %3228 = vmatpush1.bf16.msra.mxu0 0
    %3229 = vmatprep.subr.bf16.mxu0 0
    %3230 = vmatpush1.bf16.msra.mxu0 0
    %3231 = vmatprep.subr.bf16.mxu0 0
    %3232 = vmatpush1.bf16.msra.mxu0 0
    %3233 = vmatprep.subr.bf16.mxu0 0
    %3234 = vmatpush1.bf16.msra.mxu0 0
    %3235 = vmatprep.subr.bf16.mxu0 0
    %3236 = vmatpush1.bf16.msra.mxu0 0
    %3237 = vmatprep.subr.bf16.mxu0 0
    %3238 = vmatpush1.bf16.msra.mxu0 0
    %3239 = vmatprep.subr.bf16.mxu0 0
    %3240 = vmatpush1.bf16.msra.mxu0 0
    %3241 = vmatprep.subr.bf16.mxu0 0
    %3242 = vmatpush1.bf16.msra.mxu0 0
    %3243 = vmatprep.mubr.bf16.mxu0 0
    %3244 = vmatmul.mubr.bf16.gmra.mrb[0].mxu0 %v3162
    %v3245 = vpop.f32.mrb[0].mxu0
    %v3246 = vadd.f32 0.0, %v3245
    %v3247 = vpop.f32.mrb[0].mxu0
    %v3248 = vadd.f32 0.0, %v3247
    %v3249 = vpop.f32.mrb[0].mxu0
    %v3250 = vadd.f32 0.0, %v3249
    %v3251 = vpop.f32.mrb[0].mxu0
    %v3252 = vadd.f32 0.0, %v3251
    %3253 = vdwg.mxu0
    %v3254 = vunpack.c.l.bf16 %v3164
    %v3255 = vunpack.c.l.bf16 %v3165
    %v3256 = vunpack.c.l.bf16 %v3166
    %v3257 = vunpack.c.l.bf16 %v3167
    %v3258 = vunpack.c.h.bf16 %v3164
    %v3259 = vunpack.c.h.bf16 %v3165
    %v3260 = vunpack.c.h.bf16 %v3166
    %v3261 = vunpack.c.h.bf16 %v3167
    %v3262 = vadd.f32 %v3254, %v3203
    %v3263 = vadd.f32 %v3255, %v3205
    %v3264 = vadd.f32 %v3256, %v3246
    %v3265 = vadd.f32 %v3257, %v3248
    %v3266 = vadd.f32 %v3258, %v3207
    %v3267 = vadd.f32 %v3259, %v3209
    %v3268 = vadd.f32 %v3260, %v3250
    %v3269 = vadd.f32 %v3261, %v3252
    %v3270 = vmul.f32 %v3262, 0.5
    %v3271 = vmul.f32 %v3263, 0.5
    %v3272 = vmul.f32 %v3264, 0.5
    %v3273 = vmul.f32 %v3266, 0.5
    %v3274 = vmul.f32 %v3267, 0.5
    %v3275 = vmul.f32 %v3268, 0.5
    %v3276 = vtanh.pop %v3270
    %v3277 = vtanh.pop %v3271
    %v3278 = vtanh.pop %v3272
    %v3279 = vtanh.pop %v3273
    %v3280 = vtanh.pop %v3274
    %v3281 = vtanh.pop %v3275
    %v3282 = vadd.f32 %v3276, 1.0
    %v3283 = vadd.f32 %v3277, 1.0
    %v3284 = vadd.f32 %v3278, 1.0
    %v3285 = vadd.f32 %v3279, 1.0
    %v3286 = vadd.f32 %v3280, 1.0
    %v3287 = vadd.f32 %v3281, 1.0
    %v3288 = vmul.f32 %v3282, 0.5
    %v3289 = vmul.f32 %v3283, 0.5
    %v3290 = vmul.f32 %v3284, 0.5
    %v3291 = vmul.f32 %v3285, 0.5
    %v3292 = vmul.f32 %v3286, 0.5
    %v3293 = vmul.f32 %v3287, 0.5
    %v3294 = vtanh.pop %v3265
    %v3295 = vtanh.pop %v3269
    %v3296 = vmul.f32 %v3289, %v3156
    %v3297 = vmul.f32 %v3292, %v3157
    %v3298 = vmul.f32 %v3288, %v3294
    %v3299 = vmul.f32 %v3291, %v3295
    %v3300 = vadd.f32 %v3296, %v3298
    %v3301 = vadd.f32 %v3297, %v3299
    %v3302 = vtanh.pop %v3300
    %v3303 = vtanh.pop %v3301
    %v3304 = vmul.f32 %v3290, %v3302
    %v3305 = vmul.f32 %v3293, %v3303
    %v3306 = vpack.c.bf16 %v3305, %v3304
    %3307 = vst [vmem:[%s1430] sm:$0xff] %v3306
    %v3308 = vld [vmem:[%s1434] sm:$0xff]
    %v3309 = vld [vmem:[%s1434 + $0x8] sm:$0xff]
    %v3310 = vld [vmem:[%s1434 + $0x10] sm:$0xff]
    %v3311 = vld [vmem:[%s1434 + $0x18] sm:$0xff]
    %3312 = vmatprep.subr.bf16.mxu0 %v2817
    %3313 = vmatpush1.bf16.msra.mxu0 %v2816
    %3314 = vmatprep.subr.bf16.mxu0 %v2821
    %3315 = vmatpush1.bf16.msra.mxu0 %v2820
    %3316 = vmatprep.subr.bf16.mxu0 %v2825
    %3317 = vmatpush1.bf16.msra.mxu0 %v2824
    %3318 = vmatprep.subr.bf16.mxu0 %v2829
    %3319 = vmatpush1.bf16.msra.mxu0 %v2828
    %3320 = vmatprep.subr.bf16.mxu0 %v2833
    %3321 = vmatpush1.bf16.msra.mxu0 %v2832
    %3322 = vmatprep.subr.bf16.mxu0 %v2837
    %3323 = vmatpush1.bf16.msra.mxu0 %v2836
    %3324 = vmatprep.subr.bf16.mxu0 %v2841
    %3325 = vmatpush1.bf16.msra.mxu0 %v2840
    %3326 = vmatprep.subr.bf16.mxu0 %v2845
    %3327 = vmatpush1.bf16.msra.mxu0 %v2844
    %3328 = vmatprep.subr.bf16.mxu0 0
    %3329 = vmatpush1.bf16.msra.mxu0 0
    %3330 = vmatprep.subr.bf16.mxu0 0
    %3331 = vmatpush1.bf16.msra.mxu0 0
    %3332 = vmatprep.subr.bf16.mxu0 0
    %3333 = vmatpush1.bf16.msra.mxu0 0
    %3334 = vmatprep.subr.bf16.mxu0 0
    %3335 = vmatpush1.bf16.msra.mxu0 0
    %3336 = vmatprep.subr.bf16.mxu0 0
    %3337 = vmatpush1.bf16.msra.mxu0 0
    %3338 = vmatprep.subr.bf16.mxu0 0
    %3339 = vmatpush1.bf16.msra.mxu0 0
    %3340 = vmatprep.subr.bf16.mxu0 0
    %3341 = vmatpush1.bf16.msra.mxu0 0
    %3342 = vmatprep.subr.bf16.mxu0 0
    %3343 = vmatpush1.bf16.msra.mxu0 0
    %3344 = vmatprep.mubr.bf16.mxu0 0
    %3345 = vmatmul.mubr.bf16.gmra.mrb[0].mxu0 %v3306
    %v3346 = vpop.f32.mrb[0].mxu0
    %v3347 = vadd.f32 0.0, %v3346
    %v3348 = vpop.f32.mrb[0].mxu0
    %v3349 = vadd.f32 0.0, %v3348
    %v3350 = vpop.f32.mrb[0].mxu0
    %v3351 = vadd.f32 0.0, %v3350
    %v3352 = vpop.f32.mrb[0].mxu0
    %v3353 = vadd.f32 0.0, %v3352
    %3354 = vdwg.mxu0
    %3355 = vmatprep.subr.bf16.mxu0 %v2819
    %3356 = vmatpush1.bf16.msra.mxu0 %v2818
    %3357 = vmatprep.subr.bf16.mxu0 %v2823
    %3358 = vmatpush1.bf16.msra.mxu0 %v2822
    %3359 = vmatprep.subr.bf16.mxu0 %v2827
    %3360 = vmatpush1.bf16.msra.mxu0 %v2826
    %3361 = vmatprep.subr.bf16.mxu0 %v2831
    %3362 = vmatpush1.bf16.msra.mxu0 %v2830
    %3363 = vmatprep.subr.bf16.mxu0 %v2835
    %3364 = vmatpush1.bf16.msra.mxu0 %v2834
    %3365 = vmatprep.subr.bf16.mxu0 %v2839
    %3366 = vmatpush1.bf16.msra.mxu0 %v2838
    %3367 = vmatprep.subr.bf16.mxu0 %v2843
    %3368 = vmatpush1.bf16.msra.mxu0 %v2842
    %3369 = vmatprep.subr.bf16.mxu0 %v2847
    %3370 = vmatpush1.bf16.msra.mxu0 %v2846
    %3371 = vmatprep.subr.bf16.mxu0 0
    %3372 = vmatpush1.bf16.msra.mxu0 0
    %3373 = vmatprep.subr.bf16.mxu0 0
    %3374 = vmatpush1.bf16.msra.mxu0 0
    %3375 = vmatprep.subr.bf16.mxu0 0
    %3376 = vmatpush1.bf16.msra.mxu0 0
    %3377 = vmatprep.subr.bf16.mxu0 0
    %3378 = vmatpush1.bf16.msra.mxu0 0
    %3379 = vmatprep.subr.bf16.mxu0 0
    %3380 = vmatpush1.bf16.msra.mxu0 0
    %3381 = vmatprep.subr.bf16.mxu0 0
    %3382 = vmatpush1.bf16.msra.mxu0 0
    %3383 = vmatprep.subr.bf16.mxu0 0
    %3384 = vmatpush1.bf16.msra.mxu0 0
    %3385 = vmatprep.subr.bf16.mxu0 0
    %3386 = vmatpush1.bf16.msra.mxu0 0
    %3387 = vmatprep.mubr.bf16.mxu0 0
    %3388 = vmatmul.mubr.bf16.gmra.mrb[0].mxu0 %v3306
    %v3389 = vpop.f32.mrb[0].mxu0
    %v3390 = vadd.f32 0.0, %v3389
    %v3391 = vpop.f32.mrb[0].mxu0
    %v3392 = vadd.f32 0.0, %v3391
    %v3393 = vpop.f32.mrb[0].mxu0
    %v3394 = vadd.f32 0.0, %v3393
    %v3395 = vpop.f32.mrb[0].mxu0
    %v3396 = vadd.f32 0.0, %v3395
    %3397 = vdwg.mxu0
    %v3398 = vunpack.c.l.bf16 %v3308
    %v3399 = vunpack.c.l.bf16 %v3309
    %v3400 = vunpack.c.l.bf16 %v3310
    %v3401 = vunpack.c.l.bf16 %v3311
    %v3402 = vunpack.c.h.bf16 %v3308
    %v3403 = vunpack.c.h.bf16 %v3309
    %v3404 = vunpack.c.h.bf16 %v3310
    %v3405 = vunpack.c.h.bf16 %v3311
    %v3406 = vadd.f32 %v3398, %v3347
    %v3407 = vadd.f32 %v3399, %v3349
    %v3408 = vadd.f32 %v3400, %v3390
    %v3409 = vadd.f32 %v3401, %v3392
    %v3410 = vadd.f32 %v3402, %v3351
    %v3411 = vadd.f32 %v3403, %v3353
    %v3412 = vadd.f32 %v3404, %v3394
    %v3413 = vadd.f32 %v3405, %v3396
    %v3414 = vmul.f32 %v3406, 0.5
    %v3415 = vmul.f32 %v3407, 0.5
    %v3416 = vmul.f32 %v3408, 0.5
    %v3417 = vmul.f32 %v3410, 0.5
    %v3418 = vmul.f32 %v3411, 0.5
    %v3419 = vmul.f32 %v3412, 0.5
    %v3420 = vtanh.pop %v3414
    %v3421 = vtanh.pop %v3415
    %v3422 = vtanh.pop %v3416
    %v3423 = vtanh.pop %v3417
    %v3424 = vtanh.pop %v3418
    %v3425 = vtanh.pop %v3419
    %v3426 = vadd.f32 %v3420, 1.0
    %v3427 = vadd.f32 %v3421, 1.0
    %v3428 = vadd.f32 %v3422, 1.0
    %v3429 = vadd.f32 %v3423, 1.0
    %v3430 = vadd.f32 %v3424, 1.0
    %v3431 = vadd.f32 %v3425, 1.0
    %v3432 = vmul.f32 %v3426, 0.5
    %v3433 = vmul.f32 %v3427, 0.5
    %v3434 = vmul.f32 %v3428, 0.5
    %v3435 = vmul.f32 %v3429, 0.5
    %v3436 = vmul.f32 %v3430, 0.5
    %v3437 = vmul.f32 %v3431, 0.5
    %v3438 = vtanh.pop %v3409
    %v3439 = vtanh.pop %v3413
    %v3440 = vmul.f32 %v3433, %v3300
    %v3441 = vmul.f32 %v3436, %v3301
    %v3442 = vmul.f32 %v3432, %v3438
    %v3443 = vmul.f32 %v3435, %v3439
    %v3444 = vadd.f32 %v3440, %v3442
    %v3445 = vadd.f32 %v3441, %v3443
    %v3446 = vtanh.pop %v3444
    %v3447 = vtanh.pop %v3445
    %v3448 = vmul.f32 %v3434, %v3446
    %v3449 = vmul.f32 %v3437, %v3447
    %v3450 = vpack.c.bf16 %v3449, %v3448
    %3451 = vst [vmem:[%s1578] sm:$0xff] %v3450
    %v3452 = vld [vmem:[%s1582] sm:$0xff]
    %v3453 = vld [vmem:[%s1582 + $0x8] sm:$0xff]
    %v3454 = vld [vmem:[%s1582 + $0x10] sm:$0xff]
    %v3455 = vld [vmem:[%s1582 + $0x18] sm:$0xff]
    %3456 = vmatprep.subr.bf16.mxu0 %v2817
    %3457 = vmatpush1.bf16.msra.mxu0 %v2816
    %3458 = vmatprep.subr.bf16.mxu0 %v2821
    %3459 = vmatpush1.bf16.msra.mxu0 %v2820
    %3460 = vmatprep.subr.bf16.mxu0 %v2825
    %3461 = vmatpush1.bf16.msra.mxu0 %v2824
    %3462 = vmatprep.subr.bf16.mxu0 %v2829
    %3463 = vmatpush1.bf16.msra.mxu0 %v2828
    %3464 = vmatprep.subr.bf16.mxu0 %v2833
    %3465 = vmatpush1.bf16.msra.mxu0 %v2832
    %3466 = vmatprep.subr.bf16.mxu0 %v2837
    %3467 = vmatpush1.bf16.msra.mxu0 %v2836
    %3468 = vmatprep.subr.bf16.mxu0 %v2841
    %3469 = vmatpush1.bf16.msra.mxu0 %v2840
    %3470 = vmatprep.subr.bf16.mxu0 %v2845
    %3471 = vmatpush1.bf16.msra.mxu0 %v2844
    %3472 = vmatprep.subr.bf16.mxu0 0
    %3473 = vmatpush1.bf16.msra.mxu0 0
    %3474 = vmatprep.subr.bf16.mxu0 0
    %3475 = vmatpush1.bf16.msra.mxu0 0
    %3476 = vmatprep.subr.bf16.mxu0 0
    %3477 = vmatpush1.bf16.msra.mxu0 0
    %3478 = vmatprep.subr.bf16.mxu0 0
    %3479 = vmatpush1.bf16.msra.mxu0 0
    %3480 = vmatprep.subr.bf16.mxu0 0
    %3481 = vmatpush1.bf16.msra.mxu0 0
    %3482 = vmatprep.subr.bf16.mxu0 0
    %3483 = vmatpush1.bf16.msra.mxu0 0
    %3484 = vmatprep.subr.bf16.mxu0 0
    %3485 = vmatpush1.bf16.msra.mxu0 0
    %3486 = vmatprep.subr.bf16.mxu0 0
    %3487 = vmatpush1.bf16.msra.mxu0 0
    %3488 = vmatprep.mubr.bf16.mxu0 0
    %3489 = vmatmul.mubr.bf16.gmra.mrb[0].mxu0 %v3450
    %v3490 = vpop.f32.mrb[0].mxu0
    %v3491 = vadd.f32 0.0, %v3490
    %v3492 = vpop.f32.mrb[0].mxu0
    %v3493 = vadd.f32 0.0, %v3492
    %v3494 = vpop.f32.mrb[0].mxu0
    %v3495 = vadd.f32 0.0, %v3494
    %v3496 = vpop.f32.mrb[0].mxu0
    %v3497 = vadd.f32 0.0, %v3496
    %3498 = vdwg.mxu0
    %3499 = vmatprep.subr.bf16.mxu0 %v2819
    %3500 = vmatpush1.bf16.msra.mxu0 %v2818
    %3501 = vmatprep.subr.bf16.mxu0 %v2823
    %3502 = vmatpush1.bf16.msra.mxu0 %v2822
    %3503 = vmatprep.subr.bf16.mxu0 %v2827
    %3504 = vmatpush1.bf16.msra.mxu0 %v2826
    %3505 = vmatprep.subr.bf16.mxu0 %v2831
    %3506 = vmatpush1.bf16.msra.mxu0 %v2830
    %3507 = vmatprep.subr.bf16.mxu0 %v2835
    %3508 = vmatpush1.bf16.msra.mxu0 %v2834
    %3509 = vmatprep.subr.bf16.mxu0 %v2839
    %3510 = vmatpush1.bf16.msra.mxu0 %v2838
    %3511 = vmatprep.subr.bf16.mxu0 %v2843
    %3512 = vmatpush1.bf16.msra.mxu0 %v2842
    %3513 = vmatprep.subr.bf16.mxu0 %v2847
    %3514 = vmatpush1.bf16.msra.mxu0 %v2846
    %3515 = vmatprep.subr.bf16.mxu0 0
    %3516 = vmatpush1.bf16.msra.mxu0 0
    %3517 = vmatprep.subr.bf16.mxu0 0
    %3518 = vmatpush1.bf16.msra.mxu0 0
    %3519 = vmatprep.subr.bf16.mxu0 0
    %3520 = vmatpush1.bf16.msra.mxu0 0
    %3521 = vmatprep.subr.bf16.mxu0 0
    %3522 = vmatpush1.bf16.msra.mxu0 0
    %3523 = vmatprep.subr.bf16.mxu0 0
    %3524 = vmatpush1.bf16.msra.mxu0 0
    %3525 = vmatprep.subr.bf16.mxu0 0
    %3526 = vmatpush1.bf16.msra.mxu0 0
    %3527 = vmatprep.subr.bf16.mxu0 0
    %3528 = vmatpush1.bf16.msra.mxu0 0
    %3529 = vmatprep.subr.bf16.mxu0 0
    %3530 = vmatpush1.bf16.msra.mxu0 0
    %3531 = vmatprep.mubr.bf16.mxu0 0
    %3532 = vmatmul.mubr.bf16.gmra.mrb[0].mxu0 %v3450
    %v3533 = vpop.f32.mrb[0].mxu0
    %v3534 = vadd.f32 0.0, %v3533
    %v3535 = vpop.f32.mrb[0].mxu0
    %v3536 = vadd.f32 0.0, %v3535
    %v3537 = vpop.f32.mrb[0].mxu0
    %v3538 = vadd.f32 0.0, %v3537
    %v3539 = vpop.f32.mrb[0].mxu0
    %v3540 = vadd.f32 0.0, %v3539
    %3541 = vdwg.mxu0
    %v3542 = vunpack.c.l.bf16 %v3452
    %v3543 = vunpack.c.l.bf16 %v3453
    %v3544 = vunpack.c.l.bf16 %v3454
    %v3545 = vunpack.c.l.bf16 %v3455
    %v3546 = vunpack.c.h.bf16 %v3452
    %v3547 = vunpack.c.h.bf16 %v3453
    %v3548 = vunpack.c.h.bf16 %v3454
    %v3549 = vunpack.c.h.bf16 %v3455
    %v3550 = vadd.f32 %v3542, %v3491
    %v3551 = vadd.f32 %v3543, %v3493
    %v3552 = vadd.f32 %v3544, %v3534
    %v3553 = vadd.f32 %v3545, %v3536
    %v3554 = vadd.f32 %v3546, %v3495
    %v3555 = vadd.f32 %v3547, %v3497
    %v3556 = vadd.f32 %v3548, %v3538
    %v3557 = vadd.f32 %v3549, %v3540
    %v3558 = vmul.f32 %v3550, 0.5
    %v3559 = vmul.f32 %v3551, 0.5
    %v3560 = vmul.f32 %v3552, 0.5
    %v3561 = vmul.f32 %v3554, 0.5
    %v3562 = vmul.f32 %v3555, 0.5
    %v3563 = vmul.f32 %v3556, 0.5
    %v3564 = vtanh.pop %v3558
    %v3565 = vtanh.pop %v3559
    %v3566 = vtanh.pop %v3560
    %v3567 = vtanh.pop %v3561
    %v3568 = vtanh.pop %v3562
    %v3569 = vtanh.pop %v3563
    %v3570 = vadd.f32 %v3564, 1.0
    %v3571 = vadd.f32 %v3565, 1.0
    %v3572 = vadd.f32 %v3566, 1.0
    %v3573 = vadd.f32 %v3567, 1.0
    %v3574 = vadd.f32 %v3568, 1.0
    %v3575 = vadd.f32 %v3569, 1.0
    %v3576 = vmul.f32 %v3570, 0.5
    %v3577 = vmul.f32 %v3571, 0.5
    %v3578 = vmul.f32 %v3572, 0.5
    %v3579 = vmul.f32 %v3573, 0.5
    %v3580 = vmul.f32 %v3574, 0.5
    %v3581 = vmul.f32 %v3575, 0.5
    %v3582 = vtanh.pop %v3553
    %v3583 = vtanh.pop %v3557
    %v3584 = vmul.f32 %v3577, %v3444
    %v3585 = vmul.f32 %v3580, %v3445
    %v3586 = vmul.f32 %v3576, %v3582
    %v3587 = vmul.f32 %v3579, %v3583
    %v3588 = vadd.f32 %v3584, %v3586
    %v3589 = vadd.f32 %v3585, %v3587
    %v3590 = vtanh.pop %v3588
    %v3591 = vtanh.pop %v3589
    %v3592 = vmul.f32 %v3578, %v3590
    %v3593 = vmul.f32 %v3581, %v3591
    %v3594 = vpack.c.bf16 %v3593, %v3592
    %3595 = vst [vmem:[%s1726] sm:$0xff] %v3594
    %v3596 = vld [vmem:[%s1730] sm:$0xff]
    %v3597 = vld [vmem:[%s1730 + $0x8] sm:$0xff]
    %v3598 = vld [vmem:[%s1730 + $0x10] sm:$0xff]
    %v3599 = vld [vmem:[%s1730 + $0x18] sm:$0xff]
    %3600 = vmatprep.subr.bf16.mxu0 %v2817
    %3601 = vmatpush1.bf16.msra.mxu0 %v2816
    %3602 = vmatprep.subr.bf16.mxu0 %v2821
    %3603 = vmatpush1.bf16.msra.mxu0 %v2820
    %3604 = vmatprep.subr.bf16.mxu0 %v2825
    %3605 = vmatpush1.bf16.msra.mxu0 %v2824
    %3606 = vmatprep.subr.bf16.mxu0 %v2829
    %3607 = vmatpush1.bf16.msra.mxu0 %v2828
    %3608 = vmatprep.subr.bf16.mxu0 %v2833
    %3609 = vmatpush1.bf16.msra.mxu0 %v2832
    %3610 = vmatprep.subr.bf16.mxu0 %v2837
    %3611 = vmatpush1.bf16.msra.mxu0 %v2836
    %3612 = vmatprep.subr.bf16.mxu0 %v2841
    %3613 = vmatpush1.bf16.msra.mxu0 %v2840
    %3614 = vmatprep.subr.bf16.mxu0 %v2845
    %3615 = vmatpush1.bf16.msra.mxu0 %v2844
    %3616 = vmatprep.subr.bf16.mxu0 0
    %3617 = vmatpush1.bf16.msra.mxu0 0
    %3618 = vmatprep.subr.bf16.mxu0 0
    %3619 = vmatpush1.bf16.msra.mxu0 0
    %3620 = vmatprep.subr.bf16.mxu0 0
    %3621 = vmatpush1.bf16.msra.mxu0 0
    %3622 = vmatprep.subr.bf16.mxu0 0
    %3623 = vmatpush1.bf16.msra.mxu0 0
    %3624 = vmatprep.subr.bf16.mxu0 0
    %3625 = vmatpush1.bf16.msra.mxu0 0
    %3626 = vmatprep.subr.bf16.mxu0 0
    %3627 = vmatpush1.bf16.msra.mxu0 0
    %3628 = vmatprep.subr.bf16.mxu0 0
    %3629 = vmatpush1.bf16.msra.mxu0 0
    %3630 = vmatprep.subr.bf16.mxu0 0
    %3631 = vmatpush1.bf16.msra.mxu0 0
    %3632 = vmatprep.mubr.bf16.mxu0 0
    %3633 = vmatmul.mubr.bf16.gmra.mrb[0].mxu0 %v3594
    %v3634 = vpop.f32.mrb[0].mxu0
    %v3635 = vadd.f32 0.0, %v3634
    %v3636 = vpop.f32.mrb[0].mxu0
    %v3637 = vadd.f32 0.0, %v3636
    %v3638 = vpop.f32.mrb[0].mxu0
    %v3639 = vadd.f32 0.0, %v3638
    %v3640 = vpop.f32.mrb[0].mxu0
    %v3641 = vadd.f32 0.0, %v3640
    %3642 = vdwg.mxu0
    %3643 = vmatprep.subr.bf16.mxu0 %v2819
    %3644 = vmatpush1.bf16.msra.mxu0 %v2818
    %3645 = vmatprep.subr.bf16.mxu0 %v2823
    %3646 = vmatpush1.bf16.msra.mxu0 %v2822
    %3647 = vmatprep.subr.bf16.mxu0 %v2827
    %3648 = vmatpush1.bf16.msra.mxu0 %v2826
    %3649 = vmatprep.subr.bf16.mxu0 %v2831
    %3650 = vmatpush1.bf16.msra.mxu0 %v2830
    %3651 = vmatprep.subr.bf16.mxu0 %v2835
    %3652 = vmatpush1.bf16.msra.mxu0 %v2834
    %3653 = vmatprep.subr.bf16.mxu0 %v2839
    %3654 = vmatpush1.bf16.msra.mxu0 %v2838
    %3655 = vmatprep.subr.bf16.mxu0 %v2843
    %3656 = vmatpush1.bf16.msra.mxu0 %v2842
    %3657 = vmatprep.subr.bf16.mxu0 %v2847
    %3658 = vmatpush1.bf16.msra.mxu0 %v2846
    %3659 = vmatprep.subr.bf16.mxu0 0
    %3660 = vmatpush1.bf16.msra.mxu0 0
    %3661 = vmatprep.subr.bf16.mxu0 0
    %3662 = vmatpush1.bf16.msra.mxu0 0
    %3663 = vmatprep.subr.bf16.mxu0 0
    %3664 = vmatpush1.bf16.msra.mxu0 0
    %3665 = vmatprep.subr.bf16.mxu0 0
    %3666 = vmatpush1.bf16.msra.mxu0 0
    %3667 = vmatprep.subr.bf16.mxu0 0
    %3668 = vmatpush1.bf16.msra.mxu0 0
    %3669 = vmatprep.subr.bf16.mxu0 0
    %3670 = vmatpush1.bf16.msra.mxu0 0
    %3671 = vmatprep.subr.bf16.mxu0 0
    %3672 = vmatpush1.bf16.msra.mxu0 0
    %3673 = vmatprep.subr.bf16.mxu0 0
    %3674 = vmatpush1.bf16.msra.mxu0 0
    %3675 = vmatprep.mubr.bf16.mxu0 0
    %3676 = vmatmul.mubr.bf16.gmra.mrb[0].mxu0 %v3594
    %v3677 = vpop.f32.mrb[0].mxu0
    %v3678 = vadd.f32 0.0, %v3677
    %v3679 = vpop.f32.mrb[0].mxu0
    %v3680 = vadd.f32 0.0, %v3679
    %v3681 = vpop.f32.mrb[0].mxu0
    %v3682 = vadd.f32 0.0, %v3681
    %v3683 = vpop.f32.mrb[0].mxu0
    %v3684 = vadd.f32 0.0, %v3683
    %3685 = vdwg.mxu0
    %v3686 = vunpack.c.l.bf16 %v3596
    %v3687 = vunpack.c.l.bf16 %v3597
    %v3688 = vunpack.c.l.bf16 %v3598
    %v3689 = vunpack.c.l.bf16 %v3599
    %v3690 = vunpack.c.h.bf16 %v3596
    %v3691 = vunpack.c.h.bf16 %v3597
    %v3692 = vunpack.c.h.bf16 %v3598
    %v3693 = vunpack.c.h.bf16 %v3599
    %v3694 = vadd.f32 %v3686, %v3635
    %v3695 = vadd.f32 %v3687, %v3637
    %v3696 = vadd.f32 %v3688, %v3678
    %v3697 = vadd.f32 %v3689, %v3680
    %v3698 = vadd.f32 %v3690, %v3639
    %v3699 = vadd.f32 %v3691, %v3641
    %v3700 = vadd.f32 %v3692, %v3682
    %v3701 = vadd.f32 %v3693, %v3684
    %v3702 = vmul.f32 %v3694, 0.5
    %v3703 = vmul.f32 %v3695, 0.5
    %v3704 = vmul.f32 %v3696, 0.5
    %v3705 = vmul.f32 %v3698, 0.5
    %v3706 = vmul.f32 %v3699, 0.5
    %v3707 = vmul.f32 %v3700, 0.5
    %v3708 = vtanh.pop %v3702
    %v3709 = vtanh.pop %v3703
    %v3710 = vtanh.pop %v3704
    %v3711 = vtanh.pop %v3705
    %v3712 = vtanh.pop %v3706
    %v3713 = vtanh.pop %v3707
    %v3714 = vadd.f32 %v3708, 1.0
    %v3715 = vadd.f32 %v3709, 1.0
    %v3716 = vadd.f32 %v3710, 1.0
    %v3717 = vadd.f32 %v3711, 1.0
    %v3718 = vadd.f32 %v3712, 1.0
    %v3719 = vadd.f32 %v3713, 1.0
    %v3720 = vmul.f32 %v3714, 0.5
    %v3721 = vmul.f32 %v3715, 0.5
    %v3722 = vmul.f32 %v3716, 0.5
    %v3723 = vmul.f32 %v3717, 0.5
    %v3724 = vmul.f32 %v3718, 0.5
    %v3725 = vmul.f32 %v3719, 0.5
    %v3726 = vtanh.pop %v3697
    %v3727 = vtanh.pop %v3701
    %v3728 = vmul.f32 %v3721, %v3588
    %v3729 = vmul.f32 %v3724, %v3589
    %v3730 = vmul.f32 %v3720, %v3726
    %v3731 = vmul.f32 %v3723, %v3727
    %v3732 = vadd.f32 %v3728, %v3730
    %v3733 = vadd.f32 %v3729, %v3731
    %v3734 = vtanh.pop %v3732
    %v3735 = vtanh.pop %v3733
    %v3736 = vmul.f32 %v3722, %v3734
    %v3737 = vmul.f32 %v3725, %v3735
    %v3738 = vpack.c.bf16 %v3737, %v3736
    %3739 = vst [vmem:[%s1874] sm:$0xff] %v3738
    %v3740 = vld [vmem:[%s1878] sm:$0xff]
    %v3741 = vld [vmem:[%s1878 + $0x8] sm:$0xff]
    %v3742 = vld [vmem:[%s1878 + $0x10] sm:$0xff]
    %v3743 = vld [vmem:[%s1878 + $0x18] sm:$0xff]
    %3744 = vmatprep.subr.bf16.mxu0 %v2817
    %3745 = vmatpush1.bf16.msra.mxu0 %v2816
    %3746 = vmatprep.subr.bf16.mxu0 %v2821
    %3747 = vmatpush1.bf16.msra.mxu0 %v2820
    %3748 = vmatprep.subr.bf16.mxu0 %v2825
    %3749 = vmatpush1.bf16.msra.mxu0 %v2824
    %3750 = vmatprep.subr.bf16.mxu0 %v2829
    %3751 = vmatpush1.bf16.msra.mxu0 %v2828
    %3752 = vmatprep.subr.bf16.mxu0 %v2833
    %3753 = vmatpush1.bf16.msra.mxu0 %v2832
    %3754 = vmatprep.subr.bf16.mxu0 %v2837
    %3755 = vmatpush1.bf16.msra.mxu0 %v2836
    %3756 = vmatprep.subr.bf16.mxu0 %v2841
    %3757 = vmatpush1.bf16.msra.mxu0 %v2840
    %3758 = vmatprep.subr.bf16.mxu0 %v2845
    %3759 = vmatpush1.bf16.msra.mxu0 %v2844
    %3760 = vmatprep.subr.bf16.mxu0 0
    %3761 = vmatpush1.bf16.msra.mxu0 0
    %3762 = vmatprep.subr.bf16.mxu0 0
    %3763 = vmatpush1.bf16.msra.mxu0 0
    %3764 = vmatprep.subr.bf16.mxu0 0
    %3765 = vmatpush1.bf16.msra.mxu0 0
    %3766 = vmatprep.subr.bf16.mxu0 0
    %3767 = vmatpush1.bf16.msra.mxu0 0
    %3768 = vmatprep.subr.bf16.mxu0 0
    %3769 = vmatpush1.bf16.msra.mxu0 0
    %3770 = vmatprep.subr.bf16.mxu0 0
    %3771 = vmatpush1.bf16.msra.mxu0 0
    %3772 = vmatprep.subr.bf16.mxu0 0
    %3773 = vmatpush1.bf16.msra.mxu0 0
    %3774 = vmatprep.subr.bf16.mxu0 0
    %3775 = vmatpush1.bf16.msra.mxu0 0
    %3776 = vmatprep.mubr.bf16.mxu0 0
    %3777 = vmatmul.mubr.bf16.gmra.mrb[0].mxu0 %v3738
    %v3778 = vpop.f32.mrb[0].mxu0
    %v3779 = vadd.f32 0.0, %v3778
    %v3780 = vpop.f32.mrb[0].mxu0
    %v3781 = vadd.f32 0.0, %v3780
    %v3782 = vpop.f32.mrb[0].mxu0
    %v3783 = vadd.f32 0.0, %v3782
    %v3784 = vpop.f32.mrb[0].mxu0
    %v3785 = vadd.f32 0.0, %v3784
    %3786 = vdwg.mxu0
    %3787 = vmatprep.subr.bf16.mxu0 %v2819
    %3788 = vmatpush1.bf16.msra.mxu0 %v2818
    %3789 = vmatprep.subr.bf16.mxu0 %v2823
    %3790 = vmatpush1.bf16.msra.mxu0 %v2822
    %3791 = vmatprep.subr.bf16.mxu0 %v2827
    %3792 = vmatpush1.bf16.msra.mxu0 %v2826
    %3793 = vmatprep.subr.bf16.mxu0 %v2831
    %3794 = vmatpush1.bf16.msra.mxu0 %v2830
    %3795 = vmatprep.subr.bf16.mxu0 %v2835
    %3796 = vmatpush1.bf16.msra.mxu0 %v2834
    %3797 = vmatprep.subr.bf16.mxu0 %v2839
    %3798 = vmatpush1.bf16.msra.mxu0 %v2838
    %3799 = vmatprep.subr.bf16.mxu0 %v2843
    %3800 = vmatpush1.bf16.msra.mxu0 %v2842
    %3801 = vmatprep.subr.bf16.mxu0 %v2847
    %3802 = vmatpush1.bf16.msra.mxu0 %v2846
    %3803 = vmatprep.subr.bf16.mxu0 0
    %3804 = vmatpush1.bf16.msra.mxu0 0
    %3805 = vmatprep.subr.bf16.mxu0 0
    %3806 = vmatpush1.bf16.msra.mxu0 0
    %3807 = vmatprep.subr.bf16.mxu0 0
    %3808 = vmatpush1.bf16.msra.mxu0 0
    %3809 = vmatprep.subr.bf16.mxu0 0
    %3810 = vmatpush1.bf16.msra.mxu0 0
    %3811 = vmatprep.subr.bf16.mxu0 0
    %3812 = vmatpush1.bf16.msra.mxu0 0
    %3813 = vmatprep.subr.bf16.mxu0 0
    %3814 = vmatpush1.bf16.msra.mxu0 0
    %3815 = vmatprep.subr.bf16.mxu0 0
    %3816 = vmatpush1.bf16.msra.mxu0 0
    %3817 = vmatprep.subr.bf16.mxu0 0
    %3818 = vmatpush1.bf16.msra.mxu0 0
    %3819 = vmatprep.mubr.bf16.mxu0 0
    %3820 = vmatmul.mubr.bf16.gmra.mrb[0].mxu0 %v3738
    %v3821 = vpop.f32.mrb[0].mxu0
    %v3822 = vadd.f32 0.0, %v3821
    %v3823 = vpop.f32.mrb[0].mxu0
    %v3824 = vadd.f32 0.0, %v3823
    %v3825 = vpop.f32.mrb[0].mxu0
    %v3826 = vadd.f32 0.0, %v3825
    %v3827 = vpop.f32.mrb[0].mxu0
    %v3828 = vadd.f32 0.0, %v3827
    %3829 = vdwg.mxu0
    %v3830 = vunpack.c.l.bf16 %v3740
    %v3831 = vunpack.c.l.bf16 %v3741
    %v3832 = vunpack.c.l.bf16 %v3742
    %v3833 = vunpack.c.l.bf16 %v3743
    %v3834 = vunpack.c.h.bf16 %v3740
    %v3835 = vunpack.c.h.bf16 %v3741
    %v3836 = vunpack.c.h.bf16 %v3742
    %v3837 = vunpack.c.h.bf16 %v3743
    %v3838 = vadd.f32 %v3830, %v3779
    %v3839 = vadd.f32 %v3831, %v3781
    %v3840 = vadd.f32 %v3832, %v3822
    %v3841 = vadd.f32 %v3833, %v3824
    %v3842 = vadd.f32 %v3834, %v3783
    %v3843 = vadd.f32 %v3835, %v3785
    %v3844 = vadd.f32 %v3836, %v3826
    %v3845 = vadd.f32 %v3837, %v3828
    %v3846 = vmul.f32 %v3838, 0.5
    %v3847 = vmul.f32 %v3839, 0.5
    %v3848 = vmul.f32 %v3840, 0.5
    %v3849 = vmul.f32 %v3842, 0.5
    %v3850 = vmul.f32 %v3843, 0.5
    %v3851 = vmul.f32 %v3844, 0.5
    %v3852 = vtanh.pop %v3846
    %v3853 = vtanh.pop %v3847
    %v3854 = vtanh.pop %v3848
    %v3855 = vtanh.pop %v3849
    %v3856 = vtanh.pop %v3850
    %v3857 = vtanh.pop %v3851
    %v3858 = vadd.f32 %v3852, 1.0
    %v3859 = vadd.f32 %v3853, 1.0
    %v3860 = vadd.f32 %v3854, 1.0
    %v3861 = vadd.f32 %v3855, 1.0
    %v3862 = vadd.f32 %v3856, 1.0
    %v3863 = vadd.f32 %v3857, 1.0
    %v3864 = vmul.f32 %v3858, 0.5
    %v3865 = vmul.f32 %v3859, 0.5
    %v3866 = vmul.f32 %v3860, 0.5
    %v3867 = vmul.f32 %v3861, 0.5
    %v3868 = vmul.f32 %v3862, 0.5
    %v3869 = vmul.f32 %v3863, 0.5
    %v3870 = vtanh.pop %v3841
    %v3871 = vtanh.pop %v3845
    %v3872 = vmul.f32 %v3865, %v3732
    %v3873 = vmul.f32 %v3868, %v3733
    %v3874 = vmul.f32 %v3864, %v3870
    %v3875 = vmul.f32 %v3867, %v3871
    %v3876 = vadd.f32 %v3872, %v3874
    %v3877 = vadd.f32 %v3873, %v3875
    %v3878 = vtanh.pop %v3876
    %v3879 = vtanh.pop %v3877
    %v3880 = vmul.f32 %v3866, %v3878
    %v3881 = vmul.f32 %v3869, %v3879
    %v3882 = vpack.c.bf16 %v3881, %v3880
    %3883 = vst [vmem:[%s2022] sm:$0xff] %v3882
    %v3884 = vld [vmem:[%s2026] sm:$0xff]
    %v3885 = vld [vmem:[%s2026 + $0x8] sm:$0xff]
    %v3886 = vld [vmem:[%s2026 + $0x10] sm:$0xff]
    %v3887 = vld [vmem:[%s2026 + $0x18] sm:$0xff]
    %3888 = vmatprep.subr.bf16.mxu0 %v2817
    %3889 = vmatpush1.bf16.msra.mxu0 %v2816
    %3890 = vmatprep.subr.bf16.mxu0 %v2821
    %3891 = vmatpush1.bf16.msra.mxu0 %v2820
    %3892 = vmatprep.subr.bf16.mxu0 %v2825
    %3893 = vmatpush1.bf16.msra.mxu0 %v2824
    %3894 = vmatprep.subr.bf16.mxu0 %v2829
    %3895 = vmatpush1.bf16.msra.mxu0 %v2828
    %3896 = vmatprep.subr.bf16.mxu0 %v2833
    %3897 = vmatpush1.bf16.msra.mxu0 %v2832
    %3898 = vmatprep.subr.bf16.mxu0 %v2837
    %3899 = vmatpush1.bf16.msra.mxu0 %v2836
    %3900 = vmatprep.subr.bf16.mxu0 %v2841
    %3901 = vmatpush1.bf16.msra.mxu0 %v2840
    %3902 = vmatprep.subr.bf16.mxu0 %v2845
    %3903 = vmatpush1.bf16.msra.mxu0 %v2844
    %3904 = vmatprep.subr.bf16.mxu0 0
    %3905 = vmatpush1.bf16.msra.mxu0 0
    %3906 = vmatprep.subr.bf16.mxu0 0
    %3907 = vmatpush1.bf16.msra.mxu0 0
    %3908 = vmatprep.subr.bf16.mxu0 0
    %3909 = vmatpush1.bf16.msra.mxu0 0
    %3910 = vmatprep.subr.bf16.mxu0 0
    %3911 = vmatpush1.bf16.msra.mxu0 0
    %3912 = vmatprep.subr.bf16.mxu0 0
    %3913 = vmatpush1.bf16.msra.mxu0 0
    %3914 = vmatprep.subr.bf16.mxu0 0
    %3915 = vmatpush1.bf16.msra.mxu0 0
    %3916 = vmatprep.subr.bf16.mxu0 0
    %3917 = vmatpush1.bf16.msra.mxu0 0
    %3918 = vmatprep.subr.bf16.mxu0 0
    %3919 = vmatpush1.bf16.msra.mxu0 0
    %3920 = vmatprep.mubr.bf16.mxu0 0
    %3921 = vmatmul.mubr.bf16.gmra.mrb[0].mxu0 %v3882
    %v3922 = vpop.f32.mrb[0].mxu0
    %v3923 = vadd.f32 0.0, %v3922
    %v3924 = vpop.f32.mrb[0].mxu0
    %v3925 = vadd.f32 0.0, %v3924
    %v3926 = vpop.f32.mrb[0].mxu0
    %v3927 = vadd.f32 0.0, %v3926
    %v3928 = vpop.f32.mrb[0].mxu0
    %v3929 = vadd.f32 0.0, %v3928
    %3930 = vdwg.mxu0
    %3931 = vmatprep.subr.bf16.mxu0 %v2819
    %3932 = vmatpush1.bf16.msra.mxu0 %v2818
    %3933 = vmatprep.subr.bf16.mxu0 %v2823
    %3934 = vmatpush1.bf16.msra.mxu0 %v2822
    %3935 = vmatprep.subr.bf16.mxu0 %v2827
    %3936 = vmatpush1.bf16.msra.mxu0 %v2826
    %3937 = vmatprep.subr.bf16.mxu0 %v2831
    %3938 = vmatpush1.bf16.msra.mxu0 %v2830
    %3939 = vmatprep.subr.bf16.mxu0 %v2835
    %3940 = vmatpush1.bf16.msra.mxu0 %v2834
    %3941 = vmatprep.subr.bf16.mxu0 %v2839
    %3942 = vmatpush1.bf16.msra.mxu0 %v2838
    %3943 = vmatprep.subr.bf16.mxu0 %v2843
    %3944 = vmatpush1.bf16.msra.mxu0 %v2842
    %3945 = vmatprep.subr.bf16.mxu0 %v2847
    %3946 = vmatpush1.bf16.msra.mxu0 %v2846
    %3947 = vmatprep.subr.bf16.mxu0 0
    %3948 = vmatpush1.bf16.msra.mxu0 0
    %3949 = vmatprep.subr.bf16.mxu0 0
    %3950 = vmatpush1.bf16.msra.mxu0 0
    %3951 = vmatprep.subr.bf16.mxu0 0
    %3952 = vmatpush1.bf16.msra.mxu0 0
    %3953 = vmatprep.subr.bf16.mxu0 0
    %3954 = vmatpush1.bf16.msra.mxu0 0
    %3955 = vmatprep.subr.bf16.mxu0 0
    %3956 = vmatpush1.bf16.msra.mxu0 0
    %3957 = vmatprep.subr.bf16.mxu0 0
    %3958 = vmatpush1.bf16.msra.mxu0 0
    %3959 = vmatprep.subr.bf16.mxu0 0
    %3960 = vmatpush1.bf16.msra.mxu0 0
    %3961 = vmatprep.subr.bf16.mxu0 0
    %3962 = vmatpush1.bf16.msra.mxu0 0
    %3963 = vmatprep.mubr.bf16.mxu0 0
    %3964 = vmatmul.mubr.bf16.gmra.mrb[0].mxu0 %v3882
    %v3965 = vpop.f32.mrb[0].mxu0
    %v3966 = vadd.f32 0.0, %v3965
    %v3967 = vpop.f32.mrb[0].mxu0
    %v3968 = vadd.f32 0.0, %v3967
    %v3969 = vpop.f32.mrb[0].mxu0
    %v3970 = vadd.f32 0.0, %v3969
    %v3971 = vpop.f32.mrb[0].mxu0
    %v3972 = vadd.f32 0.0, %v3971
    %3973 = vdwg.mxu0
    %v3974 = vunpack.c.l.bf16 %v3884
    %v3975 = vunpack.c.l.bf16 %v3885
    %v3976 = vunpack.c.l.bf16 %v3886
    %v3977 = vunpack.c.l.bf16 %v3887
    %v3978 = vunpack.c.h.bf16 %v3884
    %v3979 = vunpack.c.h.bf16 %v3885
    %v3980 = vunpack.c.h.bf16 %v3886
    %v3981 = vunpack.c.h.bf16 %v3887
    %v3982 = vadd.f32 %v3974, %v3923
    %v3983 = vadd.f32 %v3975, %v3925
    %v3984 = vadd.f32 %v3976, %v3966
    %v3985 = vadd.f32 %v3977, %v3968
    %v3986 = vadd.f32 %v3978, %v3927
    %v3987 = vadd.f32 %v3979, %v3929
    %v3988 = vadd.f32 %v3980, %v3970
    %v3989 = vadd.f32 %v3981, %v3972
    %v3990 = vmul.f32 %v3982, 0.5
    %v3991 = vmul.f32 %v3983, 0.5
    %v3992 = vmul.f32 %v3984, 0.5
    %v3993 = vmul.f32 %v3986, 0.5
    %v3994 = vmul.f32 %v3987, 0.5
    %v3995 = vmul.f32 %v3988, 0.5
    %v3996 = vtanh.pop %v3990
    %v3997 = vtanh.pop %v3991
    %v3998 = vtanh.pop %v3992
    %v3999 = vtanh.pop %v3993
    %v4000 = vtanh.pop %v3994
    %v4001 = vtanh.pop %v3995
    %v4002 = vadd.f32 %v3996, 1.0
    %v4003 = vadd.f32 %v3997, 1.0
    %v4004 = vadd.f32 %v3998, 1.0
    %v4005 = vadd.f32 %v3999, 1.0
    %v4006 = vadd.f32 %v4000, 1.0
    %v4007 = vadd.f32 %v4001, 1.0
    %v4008 = vmul.f32 %v4002, 0.5
    %v4009 = vmul.f32 %v4003, 0.5
    %v4010 = vmul.f32 %v4004, 0.5
    %v4011 = vmul.f32 %v4005, 0.5
    %v4012 = vmul.f32 %v4006, 0.5
    %v4013 = vmul.f32 %v4007, 0.5
    %v4014 = vtanh.pop %v3985
    %v4015 = vtanh.pop %v3989
    %v4016 = vmul.f32 %v4009, %v3876
    %v4017 = vmul.f32 %v4012, %v3877
    %v4018 = vmul.f32 %v4008, %v4014
    %v4019 = vmul.f32 %v4011, %v4015
    %v4020 = vadd.f32 %v4016, %v4018
    %v4021 = vadd.f32 %v4017, %v4019
    %v4022 = vtanh.pop %v4020
    %v4023 = vtanh.pop %v4021
    %v4024 = vmul.f32 %v4010, %v4022
    %v4025 = vmul.f32 %v4013, %v4023
    %v4026 = vpack.c.bf16 %v4025, %v4024
    %4027 = vst [vmem:[%s2170] sm:$0xff] %v4026
    %v4028 = vld [vmem:[#allocation2] sm:$0xff]
    %v4029 = vld [vmem:[#allocation2 + $0x8] sm:$0xff]
    %v4030 = vld [vmem:[#allocation2 + $0x10] sm:$0xff]
    %v4031 = vld [vmem:[#allocation2 + $0x18] sm:$0xff]
    %v4032 = vld [vmem:[#allocation2 + $0x20] sm:$0xff]
    %v4033 = vld [vmem:[#allocation2 + $0x28] sm:$0xff]
    %v4034 = vld [vmem:[#allocation2 + $0x30] sm:$0xff]
    %v4035 = vld [vmem:[#allocation2 + $0x38] sm:$0xff]
    %v4036 = vld [vmem:[#allocation16] sm:$0xff]
    %v4037 = vld [vmem:[#allocation16 + $0x8] sm:$0xff]
    %v4038 = vld [vmem:[#allocation16 + $0x10] sm:$0xff]
    %v4039 = vld [vmem:[#allocation16 + $0x18] sm:$0xff]
    %v4040 = vld [vmem:[#allocation16 + $0x20] sm:$0xff]
    %v4041 = vld [vmem:[#allocation16 + $0x28] sm:$0xff]
    %v4042 = vld [vmem:[#allocation16 + $0x30] sm:$0xff]
    %v4043 = vld [vmem:[#allocation16 + $0x38] sm:$0xff]
    %v4044 = vld [vmem:[#allocation16 + $0x40] sm:$0xff]
    %v4045 = vld [vmem:[#allocation16 + $0x48] sm:$0xff]
    %v4046 = vld [vmem:[#allocation16 + $0x50] sm:$0xff]
    %v4047 = vld [vmem:[#allocation16 + $0x58] sm:$0xff]
    %v4048 = vld [vmem:[#allocation16 + $0x60] sm:$0xff]
    %v4049 = vld [vmem:[#allocation16 + $0x68] sm:$0xff]
    %v4050 = vld [vmem:[#allocation16 + $0x70] sm:$0xff]
    %v4051 = vld [vmem:[#allocation16 + $0x78] sm:$0xff]
    %v4052 = vld [vmem:[#allocation16 + $0x80] sm:$0xff]
    %v4053 = vld [vmem:[#allocation16 + $0x88] sm:$0xff]
    %v4054 = vld [vmem:[#allocation16 + $0x90] sm:$0xff]
    %v4055 = vld [vmem:[#allocation16 + $0x98] sm:$0xff]
    %v4056 = vld [vmem:[#allocation16 + $0xa0] sm:$0xff]
    %v4057 = vld [vmem:[#allocation16 + $0xa8] sm:$0xff]
    %v4058 = vld [vmem:[#allocation16 + $0xb0] sm:$0xff]
    %v4059 = vld [vmem:[#allocation16 + $0xb8] sm:$0xff]
    %v4060 = vld [vmem:[#allocation16 + $0xc0] sm:$0xff]
    %v4061 = vld [vmem:[#allocation16 + $0xc8] sm:$0xff]
    %v4062 = vld [vmem:[#allocation16 + $0xd0] sm:$0xff]
    %v4063 = vld [vmem:[#allocation16 + $0xd8] sm:$0xff]
    %v4064 = vld [vmem:[#allocation16 + $0xe0] sm:$0xff]
    %v4065 = vld [vmem:[#allocation16 + $0xe8] sm:$0xff]
    %v4066 = vld [vmem:[#allocation16 + $0xf0] sm:$0xff]
    %v4067 = vld [vmem:[#allocation16 + $0xf8] sm:$0xff]
    %v4068 = vld [vmem:[#allocation19] sm:$0xf]
    %v4070 = vlaneseq
    %v4071 = vshrl.u32 %v4070, 7
    %v4072 = vsub.s32 0, %v4071
    %v4073 = vrot.slane %v4068, %v4072
    %v4074 = vlaneseq
    %v4075 = vshrl.u32 %v4074, 7
    %v4076 = vsub.s32 1, %v4075
    %v4077 = vrot.slane %v4068, %v4076
    %v4078 = vlaneseq
    %v4079 = vshrl.u32 %v4078, 7
    %v4080 = vsub.s32 2, %v4079
    %v4081 = vrot.slane %v4068, %v4080
    %v4082 = vlaneseq
    %v4083 = vshrl.u32 %v4082, 7
    %v4084 = vsub.s32 3, %v4083
    %v4085 = vrot.slane %v4068, %v4084
    %v4122 = vunpack.c.l.b16 %v4036
    %v4123 = vunpack.c.h.b16 %v4036
    %v4124 = vunpack.c.l.b16 %v4037
    %v4125 = vunpack.c.h.b16 %v4037
    %v4126 = vunpack.c.l.b16 %v4038
    %v4127 = vunpack.c.h.b16 %v4038
    %v4128 = vunpack.c.l.b16 %v4039
    %v4129 = vunpack.c.h.b16 %v4039
    %v4130 = vunpack.c.l.b16 %v4040
    %v4131 = vunpack.c.h.b16 %v4040
    %v4132 = vunpack.c.l.b16 %v4041
    %v4133 = vunpack.c.h.b16 %v4041
    %v4134 = vunpack.c.l.b16 %v4042
    %v4135 = vunpack.c.h.b16 %v4042
    %v4136 = vunpack.c.l.b16 %v4043
    %v4137 = vunpack.c.h.b16 %v4043
    %v4138 = vunpack.c.l.b16 %v4044
    %v4139 = vunpack.c.h.b16 %v4044
    %v4140 = vunpack.c.l.b16 %v4045
    %v4141 = vunpack.c.h.b16 %v4045
    %v4142 = vunpack.c.l.b16 %v4046
    %v4143 = vunpack.c.h.b16 %v4046
    %v4144 = vunpack.c.l.b16 %v4047
    %v4145 = vunpack.c.h.b16 %v4047
    %v4146 = vunpack.c.l.b16 %v4048
    %v4147 = vunpack.c.h.b16 %v4048
    %v4148 = vunpack.c.l.b16 %v4049
    %v4149 = vunpack.c.h.b16 %v4049
    %v4150 = vunpack.c.l.b16 %v4050
    %v4151 = vunpack.c.h.b16 %v4050
    %v4152 = vunpack.c.l.b16 %v4051
    %v4153 = vunpack.c.h.b16 %v4051
    %v4154 = vunpack.c.l.b16 %v4052
    %v4155 = vunpack.c.h.b16 %v4052
    %v4156 = vunpack.c.l.b16 %v4053
    %v4157 = vunpack.c.h.b16 %v4053
    %v4158 = vunpack.c.l.b16 %v4054
    %v4159 = vunpack.c.h.b16 %v4054
    %v4160 = vunpack.c.l.b16 %v4055
    %v4161 = vunpack.c.h.b16 %v4055
    %v4162 = vunpack.c.l.b16 %v4056
    %v4163 = vunpack.c.h.b16 %v4056
    %v4164 = vunpack.c.l.b16 %v4057
    %v4165 = vunpack.c.h.b16 %v4057
    %v4166 = vunpack.c.l.b16 %v4058
    %v4167 = vunpack.c.h.b16 %v4058
    %v4168 = vunpack.c.l.b16 %v4059
    %v4169 = vunpack.c.h.b16 %v4059
    %v4170 = vunpack.c.l.b16 %v4060
    %v4171 = vunpack.c.h.b16 %v4060
    %v4172 = vunpack.c.l.b16 %v4061
    %v4173 = vunpack.c.h.b16 %v4061
    %v4174 = vunpack.c.l.b16 %v4062
    %v4175 = vunpack.c.h.b16 %v4062
    %v4176 = vunpack.c.l.b16 %v4063
    %v4177 = vunpack.c.h.b16 %v4063
    %v4178 = vunpack.c.l.b16 %v4064
    %v4179 = vunpack.c.h.b16 %v4064
    %v4180 = vunpack.c.l.b16 %v4065
    %v4181 = vunpack.c.h.b16 %v4065
    %v4182 = vunpack.c.l.b16 %v4066
    %v4183 = vunpack.c.h.b16 %v4066
    %v4184 = vunpack.c.l.b16 %v4067
    %v4185 = vunpack.c.h.b16 %v4067
    %v4186 = vpack.c.b16 %v4126, %v4122
    %v4187 = vpack.c.b16 %v4127, %v4123
    %v4188 = vpack.c.b16 %v4128, %v4124
    %v4189 = vpack.c.b16 %v4129, %v4125
    %v4190 = vpack.c.b16 %v4134, %v4130
    %v4191 = vpack.c.b16 %v4135, %v4131
    %v4192 = vpack.c.b16 %v4136, %v4132
    %v4193 = vpack.c.b16 %v4137, %v4133
    %v4194 = vpack.c.b16 %v4142, %v4138
    %v4195 = vpack.c.b16 %v4143, %v4139
    %v4196 = vpack.c.b16 %v4144, %v4140
    %v4197 = vpack.c.b16 %v4145, %v4141
    %v4198 = vpack.c.b16 %v4150, %v4146
    %v4199 = vpack.c.b16 %v4151, %v4147
    %v4200 = vpack.c.b16 %v4152, %v4148
    %v4201 = vpack.c.b16 %v4153, %v4149
    %v4202 = vpack.c.b16 %v4158, %v4154
    %v4203 = vpack.c.b16 %v4159, %v4155
    %v4204 = vpack.c.b16 %v4160, %v4156
    %v4205 = vpack.c.b16 %v4161, %v4157
    %v4206 = vpack.c.b16 %v4166, %v4162
    %v4207 = vpack.c.b16 %v4167, %v4163
    %v4208 = vpack.c.b16 %v4168, %v4164
    %v4209 = vpack.c.b16 %v4169, %v4165
    %v4210 = vpack.c.b16 %v4174, %v4170
    %v4211 = vpack.c.b16 %v4175, %v4171
    %v4212 = vpack.c.b16 %v4176, %v4172
    %v4213 = vpack.c.b16 %v4177, %v4173
    %v4214 = vpack.c.b16 %v4182, %v4178
    %v4215 = vpack.c.b16 %v4183, %v4179
    %v4216 = vpack.c.b16 %v4184, %v4180
    %v4217 = vpack.c.b16 %v4185, %v4181
    %4250 = vmatprep.subr.bf16.mxu0 %v4187
    %4251 = vmatpush1.bf16.msra.mxu0 %v4186
    %4252 = vmatprep.subr.bf16.mxu0 %v4191
    %4253 = vmatpush1.bf16.msra.mxu0 %v4190
    %4254 = vmatprep.subr.bf16.mxu0 %v4195
    %4255 = vmatpush1.bf16.msra.mxu0 %v4194
    %4256 = vmatprep.subr.bf16.mxu0 %v4199
    %4257 = vmatpush1.bf16.msra.mxu0 %v4198
    %4258 = vmatprep.subr.bf16.mxu0 %v4203
    %4259 = vmatpush1.bf16.msra.mxu0 %v4202
    %4260 = vmatprep.subr.bf16.mxu0 %v4207
    %4261 = vmatpush1.bf16.msra.mxu0 %v4206
    %4262 = vmatprep.subr.bf16.mxu0 %v4211
    %4263 = vmatpush1.bf16.msra.mxu0 %v4210
    %4264 = vmatprep.subr.bf16.mxu0 %v4215
    %4265 = vmatpush1.bf16.msra.mxu0 %v4214
    %4266 = vmatprep.subr.bf16.mxu0 0
    %4267 = vmatpush1.bf16.msra.mxu0 0
    %4268 = vmatprep.subr.bf16.mxu0 0
    %4269 = vmatpush1.bf16.msra.mxu0 0
    %4270 = vmatprep.subr.bf16.mxu0 0
    %4271 = vmatpush1.bf16.msra.mxu0 0
    %4272 = vmatprep.subr.bf16.mxu0 0
    %4273 = vmatpush1.bf16.msra.mxu0 0
    %4274 = vmatprep.subr.bf16.mxu0 0
    %4275 = vmatpush1.bf16.msra.mxu0 0
    %4276 = vmatprep.subr.bf16.mxu0 0
    %4277 = vmatpush1.bf16.msra.mxu0 0
    %4278 = vmatprep.subr.bf16.mxu0 0
    %4279 = vmatpush1.bf16.msra.mxu0 0
    %4280 = vmatprep.subr.bf16.mxu0 0
    %4281 = vmatpush1.bf16.msra.mxu0 0
    %4282 = vmatprep.mubr.bf16.mxu0 0
    %4283 = vmatmul.mubr.bf16.gmra.mrb[0].mxu0 %v4028
    %v4284 = vpop.f32.mrb[0].mxu0
    %v4285 = vadd.f32 %v4073, %v4284
    %v4286 = vpop.f32.mrb[0].mxu0
    %v4287 = vadd.f32 %v4077, %v4286
    %v4288 = vpop.f32.mrb[0].mxu0
    %v4289 = vadd.f32 %v4073, %v4288
    %v4290 = vpop.f32.mrb[0].mxu0
    %v4291 = vadd.f32 %v4077, %v4290
    %4292 = vmatprep.mubr.bf16.mxu0 0
    %4293 = vmatmul.mubr.bf16.gmra.mrb[0].mxu0 %v4029
    %v4294 = vpop.f32.mrb[0].mxu0
    %v4295 = vadd.f32 %v4073, %v4294
    %v4296 = vpop.f32.mrb[0].mxu0
    %v4297 = vadd.f32 %v4077, %v4296
    %v4298 = vpop.f32.mrb[0].mxu0
    %v4299 = vadd.f32 %v4073, %v4298
    %v4300 = vpop.f32.mrb[0].mxu0
    %v4301 = vadd.f32 %v4077, %v4300
    %4302 = vmatprep.mubr.bf16.mxu0 0
    %4303 = vmatmul.mubr.bf16.gmra.mrb[0].mxu0 %v4030
    %v4304 = vpop.f32.mrb[0].mxu0
    %v4305 = vadd.f32 %v4073, %v4304
    %v4306 = vpop.f32.mrb[0].mxu0
    %v4307 = vadd.f32 %v4077, %v4306
    %v4308 = vpop.f32.mrb[0].mxu0
    %v4309 = vadd.f32 %v4073, %v4308
    %v4310 = vpop.f32.mrb[0].mxu0
    %v4311 = vadd.f32 %v4077, %v4310
    %4312 = vmatprep.mubr.bf16.mxu0 0
    %4313 = vmatmul.mubr.bf16.gmra.mrb[0].mxu0 %v4031
    %v4314 = vpop.f32.mrb[0].mxu0
    %v4315 = vadd.f32 %v4073, %v4314
    %v4316 = vpop.f32.mrb[0].mxu0
    %v4317 = vadd.f32 %v4077, %v4316
    %v4318 = vpop.f32.mrb[0].mxu0
    %v4319 = vadd.f32 %v4073, %v4318
    %v4320 = vpop.f32.mrb[0].mxu0
    %v4321 = vadd.f32 %v4077, %v4320
    %4322 = vmatprep.mubr.bf16.mxu0 0
    %4323 = vmatmul.mubr.bf16.gmra.mrb[0].mxu0 %v4032
    %v4324 = vpop.f32.mrb[0].mxu0
    %v4325 = vadd.f32 %v4073, %v4324
    %v4326 = vpop.f32.mrb[0].mxu0
    %v4327 = vadd.f32 %v4077, %v4326
    %v4328 = vpop.f32.mrb[0].mxu0
    %v4329 = vadd.f32 %v4073, %v4328
    %v4330 = vpop.f32.mrb[0].mxu0
    %v4331 = vadd.f32 %v4077, %v4330
    %4332 = vmatprep.mubr.bf16.mxu0 0
    %4333 = vmatmul.mubr.bf16.gmra.mrb[0].mxu0 %v4033
    %v4334 = vpop.f32.mrb[0].mxu0
    %v4335 = vadd.f32 %v4073, %v4334
    %v4336 = vpop.f32.mrb[0].mxu0
    %v4337 = vadd.f32 %v4077, %v4336
    %v4338 = vpop.f32.mrb[0].mxu0
    %v4339 = vadd.f32 %v4073, %v4338
    %v4340 = vpop.f32.mrb[0].mxu0
    %v4341 = vadd.f32 %v4077, %v4340
    %4342 = vmatprep.mubr.bf16.mxu0 0
    %4343 = vmatmul.mubr.bf16.gmra.mrb[0].mxu0 %v4034
    %v4344 = vpop.f32.mrb[0].mxu0
    %v4345 = vadd.f32 %v4073, %v4344
    %v4346 = vpop.f32.mrb[0].mxu0
    %v4347 = vadd.f32 %v4077, %v4346
    %v4348 = vpop.f32.mrb[0].mxu0
    %v4349 = vadd.f32 %v4073, %v4348
    %v4350 = vpop.f32.mrb[0].mxu0
    %v4351 = vadd.f32 %v4077, %v4350
    %4352 = vmatprep.mubr.bf16.mxu0 0
    %4353 = vmatmul.mubr.bf16.gmra.mrb[0].mxu0 %v4035
    %v4354 = vpop.f32.mrb[0].mxu0
    %v4355 = vadd.f32 %v4073, %v4354
    %v4356 = vpop.f32.mrb[0].mxu0
    %v4357 = vadd.f32 %v4077, %v4356
    %v4358 = vpop.f32.mrb[0].mxu0
    %v4359 = vadd.f32 %v4073, %v4358
    %v4360 = vpop.f32.mrb[0].mxu0
    %v4361 = vadd.f32 %v4077, %v4360
    %4362 = vdwg.mxu0
    %4363 = vmatprep.subr.bf16.mxu0 %v4189
    %4364 = vmatpush1.bf16.msra.mxu0 %v4188
    %4365 = vmatprep.subr.bf16.mxu0 %v4193
    %4366 = vmatpush1.bf16.msra.mxu0 %v4192
    %4367 = vmatprep.subr.bf16.mxu0 %v4197
    %4368 = vmatpush1.bf16.msra.mxu0 %v4196
    %4369 = vmatprep.subr.bf16.mxu0 %v4201
    %4370 = vmatpush1.bf16.msra.mxu0 %v4200
    %4371 = vmatprep.subr.bf16.mxu0 %v4205
    %4372 = vmatpush1.bf16.msra.mxu0 %v4204
    %4373 = vmatprep.subr.bf16.mxu0 %v4209
    %4374 = vmatpush1.bf16.msra.mxu0 %v4208
    %4375 = vmatprep.subr.bf16.mxu0 %v4213
    %4376 = vmatpush1.bf16.msra.mxu0 %v4212
    %4377 = vmatprep.subr.bf16.mxu0 %v4217
    %4378 = vmatpush1.bf16.msra.mxu0 %v4216
    %4379 = vmatprep.subr.bf16.mxu0 0
    %4380 = vmatpush1.bf16.msra.mxu0 0
    %4381 = vmatprep.subr.bf16.mxu0 0
    %4382 = vmatpush1.bf16.msra.mxu0 0
    %4383 = vmatprep.subr.bf16.mxu0 0
    %4384 = vmatpush1.bf16.msra.mxu0 0
    %4385 = vmatprep.subr.bf16.mxu0 0
    %4386 = vmatpush1.bf16.msra.mxu0 0
    %4387 = vmatprep.subr.bf16.mxu0 0
    %4388 = vmatpush1.bf16.msra.mxu0 0
    %4389 = vmatprep.subr.bf16.mxu0 0
    %4390 = vmatpush1.bf16.msra.mxu0 0
    %4391 = vmatprep.subr.bf16.mxu0 0
    %4392 = vmatpush1.bf16.msra.mxu0 0
    %4393 = vmatprep.subr.bf16.mxu0 0
    %4394 = vmatpush1.bf16.msra.mxu0 0
    %4395 = vmatprep.mubr.bf16.mxu0 0
    %4396 = vmatmul.mubr.bf16.gmra.mrb[0].mxu0 %v4028
    %v4397 = vpop.f32.mrb[0].mxu0
    %v4398 = vadd.f32 %v4081, %v4397
    %v4399 = vpop.f32.mrb[0].mxu0
    %v4400 = vadd.f32 %v4085, %v4399
    %v4401 = vpop.f32.mrb[0].mxu0
    %v4402 = vadd.f32 %v4081, %v4401
    %v4403 = vpop.f32.mrb[0].mxu0
    %v4404 = vadd.f32 %v4085, %v4403
    %4405 = vmatprep.mubr.bf16.mxu0 0
    %4406 = vmatmul.mubr.bf16.gmra.mrb[0].mxu0 %v4029
    %v4407 = vpop.f32.mrb[0].mxu0
    %v4408 = vadd.f32 %v4081, %v4407
    %v4409 = vpop.f32.mrb[0].mxu0
    %v4410 = vadd.f32 %v4085, %v4409
    %v4411 = vpop.f32.mrb[0].mxu0
    %v4412 = vadd.f32 %v4081, %v4411
    %v4413 = vpop.f32.mrb[0].mxu0
    %v4414 = vadd.f32 %v4085, %v4413
    %4415 = vmatprep.mubr.bf16.mxu0 0
    %4416 = vmatmul.mubr.bf16.gmra.mrb[0].mxu0 %v4030
    %v4417 = vpop.f32.mrb[0].mxu0
    %v4418 = vadd.f32 %v4081, %v4417
    %v4419 = vpop.f32.mrb[0].mxu0
    %v4420 = vadd.f32 %v4085, %v4419
    %v4421 = vpop.f32.mrb[0].mxu0
    %v4422 = vadd.f32 %v4081, %v4421
    %v4423 = vpop.f32.mrb[0].mxu0
    %v4424 = vadd.f32 %v4085, %v4423
    %4425 = vmatprep.mubr.bf16.mxu0 0
    %4426 = vmatmul.mubr.bf16.gmra.mrb[0].mxu0 %v4031
    %v4427 = vpop.f32.mrb[0].mxu0
    %v4428 = vadd.f32 %v4081, %v4427
    %v4429 = vpop.f32.mrb[0].mxu0
    %v4430 = vadd.f32 %v4085, %v4429
    %v4431 = vpop.f32.mrb[0].mxu0
    %v4432 = vadd.f32 %v4081, %v4431
    %v4433 = vpop.f32.mrb[0].mxu0
    %v4434 = vadd.f32 %v4085, %v4433
    %4435 = vmatprep.mubr.bf16.mxu0 0
    %4436 = vmatmul.mubr.bf16.gmra.mrb[0].mxu0 %v4032
    %v4437 = vpop.f32.mrb[0].mxu0
    %v4438 = vadd.f32 %v4081, %v4437
    %v4439 = vpop.f32.mrb[0].mxu0
    %v4440 = vadd.f32 %v4085, %v4439
    %v4441 = vpop.f32.mrb[0].mxu0
    %v4442 = vadd.f32 %v4081, %v4441
    %v4443 = vpop.f32.mrb[0].mxu0
    %v4444 = vadd.f32 %v4085, %v4443
    %4445 = vmatprep.mubr.bf16.mxu0 0
    %4446 = vmatmul.mubr.bf16.gmra.mrb[0].mxu0 %v4033
    %v4447 = vpop.f32.mrb[0].mxu0
    %v4448 = vadd.f32 %v4081, %v4447
    %v4449 = vpop.f32.mrb[0].mxu0
    %v4450 = vadd.f32 %v4085, %v4449
    %v4451 = vpop.f32.mrb[0].mxu0
    %v4452 = vadd.f32 %v4081, %v4451
    %v4453 = vpop.f32.mrb[0].mxu0
    %v4454 = vadd.f32 %v4085, %v4453
    %4455 = vmatprep.mubr.bf16.mxu0 0
    %4456 = vmatmul.mubr.bf16.gmra.mrb[0].mxu0 %v4034
    %v4457 = vpop.f32.mrb[0].mxu0
    %v4458 = vadd.f32 %v4081, %v4457
    %v4459 = vpop.f32.mrb[0].mxu0
    %v4460 = vadd.f32 %v4085, %v4459
    %v4461 = vpop.f32.mrb[0].mxu0
    %v4462 = vadd.f32 %v4081, %v4461
    %v4463 = vpop.f32.mrb[0].mxu0
    %v4464 = vadd.f32 %v4085, %v4463
    %4465 = vmatprep.mubr.bf16.mxu0 0
    %4466 = vmatmul.mubr.bf16.gmra.mrb[0].mxu0 %v4035
    %v4467 = vpop.f32.mrb[0].mxu0
    %v4468 = vadd.f32 %v4081, %v4467
    %v4469 = vpop.f32.mrb[0].mxu0
    %v4470 = vadd.f32 %v4085, %v4469
    %v4471 = vpop.f32.mrb[0].mxu0
    %v4472 = vadd.f32 %v4081, %v4471
    %v4473 = vpop.f32.mrb[0].mxu0
    %v4474 = vadd.f32 %v4085, %v4473
    %4475 = vdwg.mxu0
    %v4476 = vpack.c.bf16 %v4289, %v4285
    %v4477 = vpack.c.bf16 %v4291, %v4287
    %v4478 = vpack.c.bf16 %v4402, %v4398
    %v4479 = vpack.c.bf16 %v4404, %v4400
    %v4480 = vpack.c.bf16 %v4299, %v4295
    %v4481 = vpack.c.bf16 %v4301, %v4297
    %v4482 = vpack.c.bf16 %v4412, %v4408
    %v4483 = vpack.c.bf16 %v4414, %v4410
    %v4484 = vpack.c.bf16 %v4309, %v4305
    %v4485 = vpack.c.bf16 %v4311, %v4307
    %v4486 = vpack.c.bf16 %v4422, %v4418
    %v4487 = vpack.c.bf16 %v4424, %v4420
    %v4488 = vpack.c.bf16 %v4319, %v4315
    %v4489 = vpack.c.bf16 %v4321, %v4317
    %v4490 = vpack.c.bf16 %v4432, %v4428
    %v4491 = vpack.c.bf16 %v4434, %v4430
    %v4492 = vpack.c.bf16 %v4329, %v4325
    %v4493 = vpack.c.bf16 %v4331, %v4327
    %v4494 = vpack.c.bf16 %v4442, %v4438
    %v4495 = vpack.c.bf16 %v4444, %v4440
    %v4496 = vpack.c.bf16 %v4339, %v4335
    %v4497 = vpack.c.bf16 %v4341, %v4337
    %v4498 = vpack.c.bf16 %v4452, %v4448
    %v4499 = vpack.c.bf16 %v4454, %v4450
    %v4500 = vpack.c.bf16 %v4349, %v4345
    %v4501 = vpack.c.bf16 %v4351, %v4347
    %v4502 = vpack.c.bf16 %v4462, %v4458
    %v4503 = vpack.c.bf16 %v4464, %v4460
    %v4504 = vpack.c.bf16 %v4359, %v4355
    %v4505 = vpack.c.bf16 %v4361, %v4357
    %v4506 = vpack.c.bf16 %v4472, %v4468
    %v4507 = vpack.c.bf16 %v4474, %v4470
    %4508 = vst [vmem:[#allocation3] sm:$0xff] %v4476
    %4509 = vst [vmem:[#allocation3 + $0x8] sm:$0xff] %v4477
    %4510 = vst [vmem:[#allocation3 + $0x10] sm:$0xff] %v4478
    %4511 = vst [vmem:[#allocation3 + $0x18] sm:$0xff] %v4479
    %4512 = vst [vmem:[#allocation3 + $0x20] sm:$0xff] %v4480
    %4513 = vst [vmem:[#allocation3 + $0x28] sm:$0xff] %v4481
    %4514 = vst [vmem:[#allocation3 + $0x30] sm:$0xff] %v4482
    %4515 = vst [vmem:[#allocation3 + $0x38] sm:$0xff] %v4483
    %4516 = vst [vmem:[#allocation3 + $0x40] sm:$0xff] %v4484
    %4517 = vst [vmem:[#allocation3 + $0x48] sm:$0xff] %v4485
    %4518 = vst [vmem:[#allocation3 + $0x50] sm:$0xff] %v4486
    %4519 = vst [vmem:[#allocation3 + $0x58] sm:$0xff] %v4487
    %4520 = vst [vmem:[#allocation3 + $0x60] sm:$0xff] %v4488
    %4521 = vst [vmem:[#allocation3 + $0x68] sm:$0xff] %v4489
    %4522 = vst [vmem:[#allocation3 + $0x70] sm:$0xff] %v4490
    %4523 = vst [vmem:[#allocation3 + $0x78] sm:$0xff] %v4491
    %4524 = vst [vmem:[#allocation3 + $0x80] sm:$0xff] %v4492
    %4525 = vst [vmem:[#allocation3 + $0x88] sm:$0xff] %v4493
    %4526 = vst [vmem:[#allocation3 + $0x90] sm:$0xff] %v4494
    %4527 = vst [vmem:[#allocation3 + $0x98] sm:$0xff] %v4495
    %4528 = vst [vmem:[#allocation3 + $0xa0] sm:$0xff] %v4496
    %4529 = vst [vmem:[#allocation3 + $0xa8] sm:$0xff] %v4497
    %4530 = vst [vmem:[#allocation3 + $0xb0] sm:$0xff] %v4498
    %4531 = vst [vmem:[#allocation3 + $0xb8] sm:$0xff] %v4499
    %4532 = vst [vmem:[#allocation3 + $0xc0] sm:$0xff] %v4500
    %4533 = vst [vmem:[#allocation3 + $0xc8] sm:$0xff] %v4501
    %4534 = vst [vmem:[#allocation3 + $0xd0] sm:$0xff] %v4502
    %4535 = vst [vmem:[#allocation3 + $0xd8] sm:$0xff] %v4503
    %4536 = vst [vmem:[#allocation3 + $0xe0] sm:$0xff] %v4504
    %4537 = vst [vmem:[#allocation3 + $0xe8] sm:$0xff] %v4505
    %4538 = vst [vmem:[#allocation3 + $0xf0] sm:$0xff] %v4506
    %4539 = vst [vmem:[#allocation3 + $0xf8] sm:$0xff] %v4507
    %v4540 = vld [vmem:[#allocation18] sm:$0xff]
    %v4541 = vld [vmem:[#allocation18 + $0x8] sm:$0xff]
    %v4542 = vld [vmem:[#allocation18 + $0x10] sm:$0xff]
    %v4543 = vld [vmem:[#allocation18 + $0x18] sm:$0xff]
    %v4544 = vld [vmem:[#allocation18 + $0x20] sm:$0xff]
    %v4545 = vld [vmem:[#allocation18 + $0x28] sm:$0xff]
    %v4546 = vld [vmem:[#allocation18 + $0x30] sm:$0xff]
    %v4547 = vld [vmem:[#allocation18 + $0x38] sm:$0xff]
    %v4548 = vld [vmem:[#allocation18 + $0x40] sm:$0xff]
    %v4549 = vld [vmem:[#allocation18 + $0x48] sm:$0xff]
    %v4550 = vld [vmem:[#allocation18 + $0x50] sm:$0xff]
    %v4551 = vld [vmem:[#allocation18 + $0x58] sm:$0xff]
    %v4552 = vld [vmem:[#allocation18 + $0x60] sm:$0xff]
    %v4553 = vld [vmem:[#allocation18 + $0x68] sm:$0xff]
    %v4554 = vld [vmem:[#allocation18 + $0x70] sm:$0xff]
    %v4555 = vld [vmem:[#allocation18 + $0x78] sm:$0xff]
    %v4556 = vld [vmem:[#allocation18 + $0x80] sm:$0xff]
    %v4557 = vld [vmem:[#allocation18 + $0x88] sm:$0xff]
    %v4558 = vld [vmem:[#allocation18 + $0x90] sm:$0xff]
    %v4559 = vld [vmem:[#allocation18 + $0x98] sm:$0xff]
    %v4560 = vld [vmem:[#allocation18 + $0xa0] sm:$0xff]
    %v4561 = vld [vmem:[#allocation18 + $0xa8] sm:$0xff]
    %v4562 = vld [vmem:[#allocation18 + $0xb0] sm:$0xff]
    %v4563 = vld [vmem:[#allocation18 + $0xb8] sm:$0xff]
    %v4564 = vld [vmem:[#allocation18 + $0xc0] sm:$0xff]
    %v4565 = vld [vmem:[#allocation18 + $0xc8] sm:$0xff]
    %v4566 = vld [vmem:[#allocation18 + $0xd0] sm:$0xff]
    %v4567 = vld [vmem:[#allocation18 + $0xd8] sm:$0xff]
    %v4568 = vld [vmem:[#allocation18 + $0xe0] sm:$0xff]
    %v4569 = vld [vmem:[#allocation18 + $0xe8] sm:$0xff]
    %v4570 = vld [vmem:[#allocation18 + $0xf0] sm:$0xff]
    %v4571 = vld [vmem:[#allocation18 + $0xf8] sm:$0xff]
    %v4572 = vld [vmem:[%s831] sm:$0xff]
    %v4573 = vld [vmem:[%s831 + $0x8] sm:$0xff]
    %v4574 = vld [vmem:[%s831 + $0x10] sm:$0xff]
    %v4575 = vld [vmem:[%s831 + $0x18] sm:$0xff]
    %v4608 = vunpack.c.l.b16 %v4540
    %v4609 = vunpack.c.h.b16 %v4540
    %v4610 = vunpack.c.l.b16 %v4541
    %v4611 = vunpack.c.h.b16 %v4541
    %v4612 = vunpack.c.l.b16 %v4542
    %v4613 = vunpack.c.h.b16 %v4542
    %v4614 = vunpack.c.l.b16 %v4543
    %v4615 = vunpack.c.h.b16 %v4543
    %v4616 = vunpack.c.l.b16 %v4544
    %v4617 = vunpack.c.h.b16 %v4544
    %v4618 = vunpack.c.l.b16 %v4545
    %v4619 = vunpack.c.h.b16 %v4545
    %v4620 = vunpack.c.l.b16 %v4546
    %v4621 = vunpack.c.h.b16 %v4546
    %v4622 = vunpack.c.l.b16 %v4547
    %v4623 = vunpack.c.h.b16 %v4547
    %v4624 = vunpack.c.l.b16 %v4548
    %v4625 = vunpack.c.h.b16 %v4548
    %v4626 = vunpack.c.l.b16 %v4549
    %v4627 = vunpack.c.h.b16 %v4549
    %v4628 = vunpack.c.l.b16 %v4550
    %v4629 = vunpack.c.h.b16 %v4550
    %v4630 = vunpack.c.l.b16 %v4551
    %v4631 = vunpack.c.h.b16 %v4551
    %v4632 = vunpack.c.l.b16 %v4552
    %v4633 = vunpack.c.h.b16 %v4552
    %v4634 = vunpack.c.l.b16 %v4553
    %v4635 = vunpack.c.h.b16 %v4553
    %v4636 = vunpack.c.l.b16 %v4554
    %v4637 = vunpack.c.h.b16 %v4554
    %v4638 = vunpack.c.l.b16 %v4555
    %v4639 = vunpack.c.h.b16 %v4555
    %v4640 = vunpack.c.l.b16 %v4556
    %v4641 = vunpack.c.h.b16 %v4556
    %v4642 = vunpack.c.l.b16 %v4557
    %v4643 = vunpack.c.h.b16 %v4557
    %v4644 = vunpack.c.l.b16 %v4558
    %v4645 = vunpack.c.h.b16 %v4558
    %v4646 = vunpack.c.l.b16 %v4559
    %v4647 = vunpack.c.h.b16 %v4559
    %v4648 = vunpack.c.l.b16 %v4560
    %v4649 = vunpack.c.h.b16 %v4560
    %v4650 = vunpack.c.l.b16 %v4561
    %v4651 = vunpack.c.h.b16 %v4561
    %v4652 = vunpack.c.l.b16 %v4562
    %v4653 = vunpack.c.h.b16 %v4562
    %v4654 = vunpack.c.l.b16 %v4563
    %v4655 = vunpack.c.h.b16 %v4563
    %v4656 = vunpack.c.l.b16 %v4564
    %v4657 = vunpack.c.h.b16 %v4564
    %v4658 = vunpack.c.l.b16 %v4565
    %v4659 = vunpack.c.h.b16 %v4565
    %v4660 = vunpack.c.l.b16 %v4566
    %v4661 = vunpack.c.h.b16 %v4566
    %v4662 = vunpack.c.l.b16 %v4567
    %v4663 = vunpack.c.h.b16 %v4567
    %v4664 = vunpack.c.l.b16 %v4568
    %v4665 = vunpack.c.h.b16 %v4568
    %v4666 = vunpack.c.l.b16 %v4569
    %v4667 = vunpack.c.h.b16 %v4569
    %v4668 = vunpack.c.l.b16 %v4570
    %v4669 = vunpack.c.h.b16 %v4570
    %v4670 = vunpack.c.l.b16 %v4571
    %v4671 = vunpack.c.h.b16 %v4571
    %v4672 = vpack.c.b16 %v4612, %v4608
    %v4673 = vpack.c.b16 %v4613, %v4609
    %v4674 = vpack.c.b16 %v4614, %v4610
    %v4675 = vpack.c.b16 %v4615, %v4611
    %v4676 = vpack.c.b16 %v4620, %v4616
    %v4677 = vpack.c.b16 %v4621, %v4617
    %v4678 = vpack.c.b16 %v4622, %v4618
    %v4679 = vpack.c.b16 %v4623, %v4619
    %v4680 = vpack.c.b16 %v4628, %v4624
    %v4681 = vpack.c.b16 %v4629, %v4625
    %v4682 = vpack.c.b16 %v4630, %v4626
    %v4683 = vpack.c.b16 %v4631, %v4627
    %v4684 = vpack.c.b16 %v4636, %v4632
    %v4685 = vpack.c.b16 %v4637, %v4633
    %v4686 = vpack.c.b16 %v4638, %v4634
    %v4687 = vpack.c.b16 %v4639, %v4635
    %v4688 = vpack.c.b16 %v4644, %v4640
    %v4689 = vpack.c.b16 %v4645, %v4641
    %v4690 = vpack.c.b16 %v4646, %v4642
    %v4691 = vpack.c.b16 %v4647, %v4643
    %v4692 = vpack.c.b16 %v4652, %v4648
    %v4693 = vpack.c.b16 %v4653, %v4649
    %v4694 = vpack.c.b16 %v4654, %v4650
    %v4695 = vpack.c.b16 %v4655, %v4651
    %v4696 = vpack.c.b16 %v4660, %v4656
    %v4697 = vpack.c.b16 %v4661, %v4657
    %v4698 = vpack.c.b16 %v4662, %v4658
    %v4699 = vpack.c.b16 %v4663, %v4659
    %v4700 = vpack.c.b16 %v4668, %v4664
    %v4701 = vpack.c.b16 %v4669, %v4665
    %v4702 = vpack.c.b16 %v4670, %v4666
    %v4703 = vpack.c.b16 %v4671, %v4667
    %4736 = vmatprep.subr.bf16.mxu0 %v4673
    %4737 = vmatpush1.bf16.msra.mxu0 %v4672
    %4738 = vmatprep.subr.bf16.mxu0 %v4677
    %4739 = vmatpush1.bf16.msra.mxu0 %v4676
    %4740 = vmatprep.subr.bf16.mxu0 %v4681
    %4741 = vmatpush1.bf16.msra.mxu0 %v4680
    %4742 = vmatprep.subr.bf16.mxu0 %v4685
    %4743 = vmatpush1.bf16.msra.mxu0 %v4684
    %4744 = vmatprep.subr.bf16.mxu0 %v4689
    %4745 = vmatpush1.bf16.msra.mxu0 %v4688
    %4746 = vmatprep.subr.bf16.mxu0 %v4693
    %4747 = vmatpush1.bf16.msra.mxu0 %v4692
    %4748 = vmatprep.subr.bf16.mxu0 %v4697
    %4749 = vmatpush1.bf16.msra.mxu0 %v4696
    %4750 = vmatprep.subr.bf16.mxu0 %v4701
    %4751 = vmatpush1.bf16.msra.mxu0 %v4700
    %4752 = vmatprep.subr.bf16.mxu0 0
    %4753 = vmatpush1.bf16.msra.mxu0 0
    %4754 = vmatprep.subr.bf16.mxu0 0
    %4755 = vmatpush1.bf16.msra.mxu0 0
    %4756 = vmatprep.subr.bf16.mxu0 0
    %4757 = vmatpush1.bf16.msra.mxu0 0
    %4758 = vmatprep.subr.bf16.mxu0 0
    %4759 = vmatpush1.bf16.msra.mxu0 0
    %4760 = vmatprep.subr.bf16.mxu0 0
    %4761 = vmatpush1.bf16.msra.mxu0 0
    %4762 = vmatprep.subr.bf16.mxu0 0
    %4763 = vmatpush1.bf16.msra.mxu0 0
    %4764 = vmatprep.subr.bf16.mxu0 0
    %4765 = vmatpush1.bf16.msra.mxu0 0
    %4766 = vmatprep.subr.bf16.mxu0 0
    %4767 = vmatpush1.bf16.msra.mxu0 0
    %4768 = vmatprep.mubr.bf16.mxu0 0
    %4769 = vmatmul.mubr.bf16.gmra.mrb[0].mxu0 0
    %v4770 = vpop.f32.mrb[0].mxu0
    %v4771 = vadd.f32 0.0, %v4770
    %v4772 = vpop.f32.mrb[0].mxu0
    %v4773 = vadd.f32 0.0, %v4772
    %v4774 = vpop.f32.mrb[0].mxu0
    %v4775 = vadd.f32 0.0, %v4774
    %v4776 = vpop.f32.mrb[0].mxu0
    %v4777 = vadd.f32 0.0, %v4776
    %4778 = vdwg.mxu0
    %4779 = vmatprep.subr.bf16.mxu0 %v4675
    %4780 = vmatpush1.bf16.msra.mxu0 %v4674
    %4781 = vmatprep.subr.bf16.mxu0 %v4679
    %4782 = vmatpush1.bf16.msra.mxu0 %v4678
    %4783 = vmatprep.subr.bf16.mxu0 %v4683
    %4784 = vmatpush1.bf16.msra.mxu0 %v4682
    %4785 = vmatprep.subr.bf16.mxu0 %v4687
    %4786 = vmatpush1.bf16.msra.mxu0 %v4686
    %4787 = vmatprep.subr.bf16.mxu0 %v4691
    %4788 = vmatpush1.bf16.msra.mxu0 %v4690
    %4789 = vmatprep.subr.bf16.mxu0 %v4695
    %4790 = vmatpush1.bf16.msra.mxu0 %v4694
    %4791 = vmatprep.subr.bf16.mxu0 %v4699
    %4792 = vmatpush1.bf16.msra.mxu0 %v4698
    %4793 = vmatprep.subr.bf16.mxu0 %v4703
    %4794 = vmatpush1.bf16.msra.mxu0 %v4702
    %4795 = vmatprep.subr.bf16.mxu0 0
    %4796 = vmatpush1.bf16.msra.mxu0 0
    %4797 = vmatprep.subr.bf16.mxu0 0
    %4798 = vmatpush1.bf16.msra.mxu0 0
    %4799 = vmatprep.subr.bf16.mxu0 0
    %4800 = vmatpush1.bf16.msra.mxu0 0
    %4801 = vmatprep.subr.bf16.mxu0 0
    %4802 = vmatpush1.bf16.msra.mxu0 0
    %4803 = vmatprep.subr.bf16.mxu0 0
    %4804 = vmatpush1.bf16.msra.mxu0 0
    %4805 = vmatprep.subr.bf16.mxu0 0
    %4806 = vmatpush1.bf16.msra.mxu0 0
    %4807 = vmatprep.subr.bf16.mxu0 0
    %4808 = vmatpush1.bf16.msra.mxu0 0
    %4809 = vmatprep.subr.bf16.mxu0 0
    %4810 = vmatpush1.bf16.msra.mxu0 0
    %4811 = vmatprep.mubr.bf16.mxu0 0
    %4812 = vmatmul.mubr.bf16.gmra.mrb[0].mxu0 0
    %v4813 = vpop.f32.mrb[0].mxu0
    %v4814 = vadd.f32 0.0, %v4813
    %v4815 = vpop.f32.mrb[0].mxu0
    %v4816 = vadd.f32 0.0, %v4815
    %v4817 = vpop.f32.mrb[0].mxu0
    %v4818 = vadd.f32 0.0, %v4817
    %v4819 = vpop.f32.mrb[0].mxu0
    %v4820 = vadd.f32 0.0, %v4819
    %4821 = vdwg.mxu0
    %v4822 = vunpack.c.l.bf16 %v4572
    %v4823 = vunpack.c.l.bf16 %v4573
    %v4824 = vunpack.c.l.bf16 %v4574
    %v4825 = vunpack.c.l.bf16 %v4575
    %v4826 = vunpack.c.h.bf16 %v4572
    %v4827 = vunpack.c.h.bf16 %v4573
    %v4828 = vunpack.c.h.bf16 %v4574
    %v4829 = vunpack.c.h.bf16 %v4575
    %v4830 = vadd.f32 %v4822, %v4771
    %v4831 = vadd.f32 %v4823, %v4773
    %v4832 = vadd.f32 %v4824, %v4814
    %v4833 = vadd.f32 %v4825, %v4816
    %v4834 = vadd.f32 %v4826, %v4775
    %v4835 = vadd.f32 %v4827, %v4777
    %v4836 = vadd.f32 %v4828, %v4818
    %v4837 = vadd.f32 %v4829, %v4820
    %v4838 = vmul.f32 %v4830, 0.5
    %v4839 = vmul.f32 %v4831, 0.5
    %v4840 = vmul.f32 %v4832, 0.5
    %v4841 = vmul.f32 %v4834, 0.5
    %v4842 = vmul.f32 %v4835, 0.5
    %v4843 = vmul.f32 %v4836, 0.5
    %v4844 = vtanh.pop %v4838
    %v4845 = vtanh.pop %v4839
    %v4846 = vtanh.pop %v4840
    %v4847 = vtanh.pop %v4841
    %v4848 = vtanh.pop %v4842
    %v4849 = vtanh.pop %v4843
    %v4850 = vadd.f32 %v4844, 1.0
    %v4851 = vadd.f32 %v4845, 1.0
    %v4852 = vadd.f32 %v4846, 1.0
    %v4853 = vadd.f32 %v4847, 1.0
    %v4854 = vadd.f32 %v4848, 1.0
    %v4855 = vadd.f32 %v4849, 1.0
    %v4856 = vmul.f32 %v4850, 0.5
    %v4857 = vmul.f32 %v4851, 0.5
    %v4858 = vmul.f32 %v4852, 0.5
    %v4859 = vmul.f32 %v4853, 0.5
    %v4860 = vmul.f32 %v4854, 0.5
    %v4861 = vmul.f32 %v4855, 0.5
    %v4862 = vtanh.pop %v4833
    %v4863 = vtanh.pop %v4837
    %v4864 = vmul.f32 %v4857, 0.0
    %v4865 = vmul.f32 %v4860, 0.0
    %v4866 = vmul.f32 %v4856, %v4862
    %v4867 = vmul.f32 %v4859, %v4863
    %v4868 = vadd.f32 %v4864, %v4866
    %v4869 = vadd.f32 %v4865, %v4867
    %v4870 = vtanh.pop %v4868
    %v4871 = vtanh.pop %v4869
    %v4872 = vmul.f32 %v4858, %v4870
    %v4873 = vmul.f32 %v4861, %v4871
    %v4874 = vpack.c.bf16 %v4873, %v4872
    %v4875 = vld [vmem:[%s1138] sm:$0xff]
    %v4876 = vld [vmem:[%s1138 + $0x8] sm:$0xff]
    %v4877 = vld [vmem:[%s1138 + $0x10] sm:$0xff]
    %v4878 = vld [vmem:[%s1138 + $0x18] sm:$0xff]
    %4879 = vmatprep.subr.bf16.mxu0 %v4673
    %4880 = vmatpush1.bf16.msra.mxu0 %v4672
    %4881 = vmatprep.subr.bf16.mxu0 %v4677
    %4882 = vmatpush1.bf16.msra.mxu0 %v4676
    %4883 = vmatprep.subr.bf16.mxu0 %v4681
    %4884 = vmatpush1.bf16.msra.mxu0 %v4680
    %4885 = vmatprep.subr.bf16.mxu0 %v4685
    %4886 = vmatpush1.bf16.msra.mxu0 %v4684
    %4887 = vmatprep.subr.bf16.mxu0 %v4689
    %4888 = vmatpush1.bf16.msra.mxu0 %v4688
    %4889 = vmatprep.subr.bf16.mxu0 %v4693
    %4890 = vmatpush1.bf16.msra.mxu0 %v4692
    %4891 = vmatprep.subr.bf16.mxu0 %v4697
    %4892 = vmatpush1.bf16.msra.mxu0 %v4696
    %4893 = vmatprep.subr.bf16.mxu0 %v4701
    %4894 = vmatpush1.bf16.msra.mxu0 %v4700
    %4895 = vmatprep.subr.bf16.mxu0 0
    %4896 = vmatpush1.bf16.msra.mxu0 0
    %4897 = vmatprep.subr.bf16.mxu0 0
    %4898 = vmatpush1.bf16.msra.mxu0 0
    %4899 = vmatprep.subr.bf16.mxu0 0
    %4900 = vmatpush1.bf16.msra.mxu0 0
    %4901 = vmatprep.subr.bf16.mxu0 0
    %4902 = vmatpush1.bf16.msra.mxu0 0
    %4903 = vmatprep.subr.bf16.mxu0 0
    %4904 = vmatpush1.bf16.msra.mxu0 0
    %4905 = vmatprep.subr.bf16.mxu0 0
    %4906 = vmatpush1.bf16.msra.mxu0 0
    %4907 = vmatprep.subr.bf16.mxu0 0
    %4908 = vmatpush1.bf16.msra.mxu0 0
    %4909 = vmatprep.subr.bf16.mxu0 0
    %4910 = vmatpush1.bf16.msra.mxu0 0
    %4911 = vmatprep.mubr.bf16.mxu0 0
    %4912 = vmatmul.mubr.bf16.gmra.mrb[0].mxu0 %v4874
    %v4913 = vpop.f32.mrb[0].mxu0
    %v4914 = vadd.f32 0.0, %v4913
    %v4915 = vpop.f32.mrb[0].mxu0
    %v4916 = vadd.f32 0.0, %v4915
    %v4917 = vpop.f32.mrb[0].mxu0
    %v4918 = vadd.f32 0.0, %v4917
    %v4919 = vpop.f32.mrb[0].mxu0
    %v4920 = vadd.f32 0.0, %v4919
    %4921 = vdwg.mxu0
    %4922 = vmatprep.subr.bf16.mxu0 %v4675
    %4923 = vmatpush1.bf16.msra.mxu0 %v4674
    %4924 = vmatprep.subr.bf16.mxu0 %v4679
    %4925 = vmatpush1.bf16.msra.mxu0 %v4678
    %4926 = vmatprep.subr.bf16.mxu0 %v4683
    %4927 = vmatpush1.bf16.msra.mxu0 %v4682
    %4928 = vmatprep.subr.bf16.mxu0 %v4687
    %4929 = vmatpush1.bf16.msra.mxu0 %v4686
    %4930 = vmatprep.subr.bf16.mxu0 %v4691
    %4931 = vmatpush1.bf16.msra.mxu0 %v4690
    %4932 = vmatprep.subr.bf16.mxu0 %v4695
    %4933 = vmatpush1.bf16.msra.mxu0 %v4694
    %4934 = vmatprep.subr.bf16.mxu0 %v4699
    %4935 = vmatpush1.bf16.msra.mxu0 %v4698
    %4936 = vmatprep.subr.bf16.mxu0 %v4703
    %4937 = vmatpush1.bf16.msra.mxu0 %v4702
    %4938 = vmatprep.subr.bf16.mxu0 0
    %4939 = vmatpush1.bf16.msra.mxu0 0
    %4940 = vmatprep.subr.bf16.mxu0 0
    %4941 = vmatpush1.bf16.msra.mxu0 0
    %4942 = vmatprep.subr.bf16.mxu0 0
    %4943 = vmatpush1.bf16.msra.mxu0 0
    %4944 = vmatprep.subr.bf16.mxu0 0
    %4945 = vmatpush1.bf16.msra.mxu0 0
    %4946 = vmatprep.subr.bf16.mxu0 0
    %4947 = vmatpush1.bf16.msra.mxu0 0
    %4948 = vmatprep.subr.bf16.mxu0 0
    %4949 = vmatpush1.bf16.msra.mxu0 0
    %4950 = vmatprep.subr.bf16.mxu0 0
    %4951 = vmatpush1.bf16.msra.mxu0 0
    %4952 = vmatprep.subr.bf16.mxu0 0
    %4953 = vmatpush1.bf16.msra.mxu0 0
    %4954 = vmatprep.mubr.bf16.mxu0 0
    %4955 = vmatmul.mubr.bf16.gmra.mrb[0].mxu0 %v4874
    %v4956 = vpop.f32.mrb[0].mxu0
    %v4957 = vadd.f32 0.0, %v4956
    %v4958 = vpop.f32.mrb[0].mxu0
    %v4959 = vadd.f32 0.0, %v4958
    %v4960 = vpop.f32.mrb[0].mxu0
    %v4961 = vadd.f32 0.0, %v4960
    %v4962 = vpop.f32.mrb[0].mxu0
    %v4963 = vadd.f32 0.0, %v4962
    %4964 = vdwg.mxu0
    %v4965 = vunpack.c.l.bf16 %v4875
    %v4966 = vunpack.c.l.bf16 %v4876
    %v4967 = vunpack.c.l.bf16 %v4877
    %v4968 = vunpack.c.l.bf16 %v4878
    %v4969 = vunpack.c.h.bf16 %v4875
    %v4970 = vunpack.c.h.bf16 %v4876
    %v4971 = vunpack.c.h.bf16 %v4877
    %v4972 = vunpack.c.h.bf16 %v4878
    %v4973 = vadd.f32 %v4965, %v4914
    %v4974 = vadd.f32 %v4966, %v4916
    %v4975 = vadd.f32 %v4967, %v4957
    %v4976 = vadd.f32 %v4968, %v4959
    %v4977 = vadd.f32 %v4969, %v4918
    %v4978 = vadd.f32 %v4970, %v4920
    %v4979 = vadd.f32 %v4971, %v4961
    %v4980 = vadd.f32 %v4972, %v4963
    %v4981 = vmul.f32 %v4973, 0.5
    %v4982 = vmul.f32 %v4974, 0.5
    %v4983 = vmul.f32 %v4975, 0.5
    %v4984 = vmul.f32 %v4977, 0.5
    %v4985 = vmul.f32 %v4978, 0.5
    %v4986 = vmul.f32 %v4979, 0.5
    %v4987 = vtanh.pop %v4981
    %v4988 = vtanh.pop %v4982
    %v4989 = vtanh.pop %v4983
    %v4990 = vtanh.pop %v4984
    %v4991 = vtanh.pop %v4985
    %v4992 = vtanh.pop %v4986
    %v4993 = vadd.f32 %v4987, 1.0
    %v4994 = vadd.f32 %v4988, 1.0
    %v4995 = vadd.f32 %v4989, 1.0
    %v4996 = vadd.f32 %v4990, 1.0
    %v4997 = vadd.f32 %v4991, 1.0
    %v4998 = vadd.f32 %v4992, 1.0
    %v4999 = vmul.f32 %v4993, 0.5
    %v5000 = vmul.f32 %v4994, 0.5
    %v5001 = vmul.f32 %v4995, 0.5
    %v5002 = vmul.f32 %v4996, 0.5
    %v5003 = vmul.f32 %v4997, 0.5
    %v5004 = vmul.f32 %v4998, 0.5
    %v5005 = vtanh.pop %v4976
    %v5006 = vtanh.pop %v4980
    %v5007 = vmul.f32 %v5000, %v4868
    %v5008 = vmul.f32 %v5003, %v4869
    %v5009 = vmul.f32 %v4999, %v5005
    %v5010 = vmul.f32 %v5002, %v5006
    %v5011 = vadd.f32 %v5007, %v5009
    %v5012 = vadd.f32 %v5008, %v5010
    %v5013 = vtanh.pop %v5011
    %v5014 = vtanh.pop %v5012
    %v5015 = vmul.f32 %v5001, %v5013
    %v5016 = vmul.f32 %v5004, %v5014
    %v5017 = vpack.c.bf16 %v5016, %v5015
    %v5018 = vld [vmem:[%s1286] sm:$0xff]
    %v5019 = vld [vmem:[%s1286 + $0x8] sm:$0xff]
    %v5020 = vld [vmem:[%s1286 + $0x10] sm:$0xff]
    %v5021 = vld [vmem:[%s1286 + $0x18] sm:$0xff]
    %5022 = vmatprep.subr.bf16.mxu0 %v4673
    %5023 = vmatpush1.bf16.msra.mxu0 %v4672
    %5024 = vmatprep.subr.bf16.mxu0 %v4677
    %5025 = vmatpush1.bf16.msra.mxu0 %v4676
    %5026 = vmatprep.subr.bf16.mxu0 %v4681
    %5027 = vmatpush1.bf16.msra.mxu0 %v4680
    %5028 = vmatprep.subr.bf16.mxu0 %v4685
    %5029 = vmatpush1.bf16.msra.mxu0 %v4684
    %5030 = vmatprep.subr.bf16.mxu0 %v4689
    %5031 = vmatpush1.bf16.msra.mxu0 %v4688
    %5032 = vmatprep.subr.bf16.mxu0 %v4693
    %5033 = vmatpush1.bf16.msra.mxu0 %v4692
    %5034 = vmatprep.subr.bf16.mxu0 %v4697
    %5035 = vmatpush1.bf16.msra.mxu0 %v4696
    %5036 = vmatprep.subr.bf16.mxu0 %v4701
    %5037 = vmatpush1.bf16.msra.mxu0 %v4700
    %5038 = vmatprep.subr.bf16.mxu0 0
    %5039 = vmatpush1.bf16.msra.mxu0 0
    %5040 = vmatprep.subr.bf16.mxu0 0
    %5041 = vmatpush1.bf16.msra.mxu0 0
    %5042 = vmatprep.subr.bf16.mxu0 0
    %5043 = vmatpush1.bf16.msra.mxu0 0
    %5044 = vmatprep.subr.bf16.mxu0 0
    %5045 = vmatpush1.bf16.msra.mxu0 0
    %5046 = vmatprep.subr.bf16.mxu0 0
    %5047 = vmatpush1.bf16.msra.mxu0 0
    %5048 = vmatprep.subr.bf16.mxu0 0
    %5049 = vmatpush1.bf16.msra.mxu0 0
    %5050 = vmatprep.subr.bf16.mxu0 0
    %5051 = vmatpush1.bf16.msra.mxu0 0
    %5052 = vmatprep.subr.bf16.mxu0 0
    %5053 = vmatpush1.bf16.msra.mxu0 0
    %5054 = vmatprep.mubr.bf16.mxu0 0
    %5055 = vmatmul.mubr.bf16.gmra.mrb[0].mxu0 %v5017
    %v5056 = vpop.f32.mrb[0].mxu0
    %v5057 = vadd.f32 0.0, %v5056
    %v5058 = vpop.f32.mrb[0].mxu0
    %v5059 = vadd.f32 0.0, %v5058
    %v5060 = vpop.f32.mrb[0].mxu0
    %v5061 = vadd.f32 0.0, %v5060
    %v5062 = vpop.f32.mrb[0].mxu0
    %v5063 = vadd.f32 0.0, %v5062
    %5064 = vdwg.mxu0
    %5065 = vmatprep.subr.bf16.mxu0 %v4675
    %5066 = vmatpush1.bf16.msra.mxu0 %v4674
    %5067 = vmatprep.subr.bf16.mxu0 %v4679
    %5068 = vmatpush1.bf16.msra.mxu0 %v4678
    %5069 = vmatprep.subr.bf16.mxu0 %v4683
    %5070 = vmatpush1.bf16.msra.mxu0 %v4682
    %5071 = vmatprep.subr.bf16.mxu0 %v4687
    %5072 = vmatpush1.bf16.msra.mxu0 %v4686
    %5073 = vmatprep.subr.bf16.mxu0 %v4691
    %5074 = vmatpush1.bf16.msra.mxu0 %v4690
    %5075 = vmatprep.subr.bf16.mxu0 %v4695
    %5076 = vmatpush1.bf16.msra.mxu0 %v4694
    %5077 = vmatprep.subr.bf16.mxu0 %v4699
    %5078 = vmatpush1.bf16.msra.mxu0 %v4698
    %5079 = vmatprep.subr.bf16.mxu0 %v4703
    %5080 = vmatpush1.bf16.msra.mxu0 %v4702
    %5081 = vmatprep.subr.bf16.mxu0 0
    %5082 = vmatpush1.bf16.msra.mxu0 0
    %5083 = vmatprep.subr.bf16.mxu0 0
    %5084 = vmatpush1.bf16.msra.mxu0 0
    %5085 = vmatprep.subr.bf16.mxu0 0
    %5086 = vmatpush1.bf16.msra.mxu0 0
    %5087 = vmatprep.subr.bf16.mxu0 0
    %5088 = vmatpush1.bf16.msra.mxu0 0
    %5089 = vmatprep.subr.bf16.mxu0 0
    %5090 = vmatpush1.bf16.msra.mxu0 0
    %5091 = vmatprep.subr.bf16.mxu0 0
    %5092 = vmatpush1.bf16.msra.mxu0 0
    %5093 = vmatprep.subr.bf16.mxu0 0
    %5094 = vmatpush1.bf16.msra.mxu0 0
    %5095 = vmatprep.subr.bf16.mxu0 0
    %5096 = vmatpush1.bf16.msra.mxu0 0
    %5097 = vmatprep.mubr.bf16.mxu0 0
    %5098 = vmatmul.mubr.bf16.gmra.mrb[0].mxu0 %v5017
    %v5099 = vpop.f32.mrb[0].mxu0
    %v5100 = vadd.f32 0.0, %v5099
    %v5101 = vpop.f32.mrb[0].mxu0
    %v5102 = vadd.f32 0.0, %v5101
    %v5103 = vpop.f32.mrb[0].mxu0
    %v5104 = vadd.f32 0.0, %v5103
    %v5105 = vpop.f32.mrb[0].mxu0
    %v5106 = vadd.f32 0.0, %v5105
    %5107 = vdwg.mxu0
    %v5108 = vunpack.c.l.bf16 %v5018
    %v5109 = vunpack.c.l.bf16 %v5019
    %v5110 = vunpack.c.l.bf16 %v5020
    %v5111 = vunpack.c.l.bf16 %v5021
    %v5112 = vunpack.c.h.bf16 %v5018
    %v5113 = vunpack.c.h.bf16 %v5019
    %v5114 = vunpack.c.h.bf16 %v5020
    %v5115 = vunpack.c.h.bf16 %v5021
    %v5116 = vadd.f32 %v5108, %v5057
    %v5117 = vadd.f32 %v5109, %v5059
    %v5118 = vadd.f32 %v5110, %v5100
    %v5119 = vadd.f32 %v5111, %v5102
    %v5120 = vadd.f32 %v5112, %v5061
    %v5121 = vadd.f32 %v5113, %v5063
    %v5122 = vadd.f32 %v5114, %v5104
    %v5123 = vadd.f32 %v5115, %v5106
    %v5124 = vmul.f32 %v5116, 0.5
    %v5125 = vmul.f32 %v5117, 0.5
    %v5126 = vmul.f32 %v5118, 0.5
    %v5127 = vmul.f32 %v5120, 0.5
    %v5128 = vmul.f32 %v5121, 0.5
    %v5129 = vmul.f32 %v5122, 0.5
    %v5130 = vtanh.pop %v5124
    %v5131 = vtanh.pop %v5125
    %v5132 = vtanh.pop %v5126
    %v5133 = vtanh.pop %v5127
    %v5134 = vtanh.pop %v5128
    %v5135 = vtanh.pop %v5129
    %v5136 = vadd.f32 %v5130, 1.0
    %v5137 = vadd.f32 %v5131, 1.0
    %v5138 = vadd.f32 %v5132, 1.0
    %v5139 = vadd.f32 %v5133, 1.0
    %v5140 = vadd.f32 %v5134, 1.0
    %v5141 = vadd.f32 %v5135, 1.0
    %v5142 = vmul.f32 %v5136, 0.5
    %v5143 = vmul.f32 %v5137, 0.5
    %v5144 = vmul.f32 %v5138, 0.5
    %v5145 = vmul.f32 %v5139, 0.5
    %v5146 = vmul.f32 %v5140, 0.5
    %v5147 = vmul.f32 %v5141, 0.5
    %v5148 = vtanh.pop %v5119
    %v5149 = vtanh.pop %v5123
    %v5150 = vmul.f32 %v5143, %v5011
    %v5151 = vmul.f32 %v5146, %v5012
    %v5152 = vmul.f32 %v5142, %v5148
    %v5153 = vmul.f32 %v5145, %v5149
    %v5154 = vadd.f32 %v5150, %v5152
    %v5155 = vadd.f32 %v5151, %v5153
    %v5156 = vtanh.pop %v5154
    %v5157 = vtanh.pop %v5155
    %v5158 = vmul.f32 %v5144, %v5156
    %v5159 = vmul.f32 %v5147, %v5157
    %v5160 = vpack.c.bf16 %v5159, %v5158
    %v5161 = vld [vmem:[%s1434] sm:$0xff]
    %v5162 = vld [vmem:[%s1434 + $0x8] sm:$0xff]
    %v5163 = vld [vmem:[%s1434 + $0x10] sm:$0xff]
    %v5164 = vld [vmem:[%s1434 + $0x18] sm:$0xff]
    %5165 = vmatprep.subr.bf16.mxu0 %v4673
    %5166 = vmatpush1.bf16.msra.mxu0 %v4672
    %5167 = vmatprep.subr.bf16.mxu0 %v4677
    %5168 = vmatpush1.bf16.msra.mxu0 %v4676
    %5169 = vmatprep.subr.bf16.mxu0 %v4681
    %5170 = vmatpush1.bf16.msra.mxu0 %v4680
    %5171 = vmatprep.subr.bf16.mxu0 %v4685
    %5172 = vmatpush1.bf16.msra.mxu0 %v4684
    %5173 = vmatprep.subr.bf16.mxu0 %v4689
    %5174 = vmatpush1.bf16.msra.mxu0 %v4688
    %5175 = vmatprep.subr.bf16.mxu0 %v4693
    %5176 = vmatpush1.bf16.msra.mxu0 %v4692
    %5177 = vmatprep.subr.bf16.mxu0 %v4697
    %5178 = vmatpush1.bf16.msra.mxu0 %v4696
    %5179 = vmatprep.subr.bf16.mxu0 %v4701
    %5180 = vmatpush1.bf16.msra.mxu0 %v4700
    %5181 = vmatprep.subr.bf16.mxu0 0
    %5182 = vmatpush1.bf16.msra.mxu0 0
    %5183 = vmatprep.subr.bf16.mxu0 0
    %5184 = vmatpush1.bf16.msra.mxu0 0
    %5185 = vmatprep.subr.bf16.mxu0 0
    %5186 = vmatpush1.bf16.msra.mxu0 0
    %5187 = vmatprep.subr.bf16.mxu0 0
    %5188 = vmatpush1.bf16.msra.mxu0 0
    %5189 = vmatprep.subr.bf16.mxu0 0
    %5190 = vmatpush1.bf16.msra.mxu0 0
    %5191 = vmatprep.subr.bf16.mxu0 0
    %5192 = vmatpush1.bf16.msra.mxu0 0
    %5193 = vmatprep.subr.bf16.mxu0 0
    %5194 = vmatpush1.bf16.msra.mxu0 0
    %5195 = vmatprep.subr.bf16.mxu0 0
    %5196 = vmatpush1.bf16.msra.mxu0 0
    %5197 = vmatprep.mubr.bf16.mxu0 0
    %5198 = vmatmul.mubr.bf16.gmra.mrb[0].mxu0 %v5160
    %v5199 = vpop.f32.mrb[0].mxu0
    %v5200 = vadd.f32 0.0, %v5199
    %v5201 = vpop.f32.mrb[0].mxu0
    %v5202 = vadd.f32 0.0, %v5201
    %v5203 = vpop.f32.mrb[0].mxu0
    %v5204 = vadd.f32 0.0, %v5203
    %v5205 = vpop.f32.mrb[0].mxu0
    %v5206 = vadd.f32 0.0, %v5205
    %5207 = vdwg.mxu0
    %5208 = vmatprep.subr.bf16.mxu0 %v4675
    %5209 = vmatpush1.bf16.msra.mxu0 %v4674
    %5210 = vmatprep.subr.bf16.mxu0 %v4679
    %5211 = vmatpush1.bf16.msra.mxu0 %v4678
    %5212 = vmatprep.subr.bf16.mxu0 %v4683
    %5213 = vmatpush1.bf16.msra.mxu0 %v4682
    %5214 = vmatprep.subr.bf16.mxu0 %v4687
    %5215 = vmatpush1.bf16.msra.mxu0 %v4686
    %5216 = vmatprep.subr.bf16.mxu0 %v4691
    %5217 = vmatpush1.bf16.msra.mxu0 %v4690
    %5218 = vmatprep.subr.bf16.mxu0 %v4695
    %5219 = vmatpush1.bf16.msra.mxu0 %v4694
    %5220 = vmatprep.subr.bf16.mxu0 %v4699
    %5221 = vmatpush1.bf16.msra.mxu0 %v4698
    %5222 = vmatprep.subr.bf16.mxu0 %v4703
    %5223 = vmatpush1.bf16.msra.mxu0 %v4702
    %5224 = vmatprep.subr.bf16.mxu0 0
    %5225 = vmatpush1.bf16.msra.mxu0 0
    %5226 = vmatprep.subr.bf16.mxu0 0
    %5227 = vmatpush1.bf16.msra.mxu0 0
    %5228 = vmatprep.subr.bf16.mxu0 0
    %5229 = vmatpush1.bf16.msra.mxu0 0
    %5230 = vmatprep.subr.bf16.mxu0 0
    %5231 = vmatpush1.bf16.msra.mxu0 0
    %5232 = vmatprep.subr.bf16.mxu0 0
    %5233 = vmatpush1.bf16.msra.mxu0 0
    %5234 = vmatprep.subr.bf16.mxu0 0
    %5235 = vmatpush1.bf16.msra.mxu0 0
    %5236 = vmatprep.subr.bf16.mxu0 0
    %5237 = vmatpush1.bf16.msra.mxu0 0
    %5238 = vmatprep.subr.bf16.mxu0 0
    %5239 = vmatpush1.bf16.msra.mxu0 0
    %5240 = vmatprep.mubr.bf16.mxu0 0
    %5241 = vmatmul.mubr.bf16.gmra.mrb[0].mxu0 %v5160
    %v5242 = vpop.f32.mrb[0].mxu0
    %v5243 = vadd.f32 0.0, %v5242
    %v5244 = vpop.f32.mrb[0].mxu0
    %v5245 = vadd.f32 0.0, %v5244
    %v5246 = vpop.f32.mrb[0].mxu0
    %v5247 = vadd.f32 0.0, %v5246
    %v5248 = vpop.f32.mrb[0].mxu0
    %v5249 = vadd.f32 0.0, %v5248
    %5250 = vdwg.mxu0
    %v5251 = vunpack.c.l.bf16 %v5161
    %v5252 = vunpack.c.l.bf16 %v5162
    %v5253 = vunpack.c.l.bf16 %v5163
    %v5254 = vunpack.c.l.bf16 %v5164
    %v5255 = vunpack.c.h.bf16 %v5161
    %v5256 = vunpack.c.h.bf16 %v5162
    %v5257 = vunpack.c.h.bf16 %v5163
    %v5258 = vunpack.c.h.bf16 %v5164
    %v5259 = vadd.f32 %v5251, %v5200
    %v5260 = vadd.f32 %v5252, %v5202
    %v5261 = vadd.f32 %v5253, %v5243
    %v5262 = vadd.f32 %v5254, %v5245
    %v5263 = vadd.f32 %v5255, %v5204
    %v5264 = vadd.f32 %v5256, %v5206
    %v5265 = vadd.f32 %v5257, %v5247
    %v5266 = vadd.f32 %v5258, %v5249
    %v5267 = vmul.f32 %v5259, 0.5
    %v5268 = vmul.f32 %v5260, 0.5
    %v5269 = vmul.f32 %v5261, 0.5
    %v5270 = vmul.f32 %v5263, 0.5
    %v5271 = vmul.f32 %v5264, 0.5
    %v5272 = vmul.f32 %v5265, 0.5
    %v5273 = vtanh.pop %v5267
    %v5274 = vtanh.pop %v5268
    %v5275 = vtanh.pop %v5269
    %v5276 = vtanh.pop %v5270
    %v5277 = vtanh.pop %v5271
    %v5278 = vtanh.pop %v5272
    %v5279 = vadd.f32 %v5273, 1.0
    %v5280 = vadd.f32 %v5274, 1.0
    %v5281 = vadd.f32 %v5275, 1.0
    %v5282 = vadd.f32 %v5276, 1.0
    %v5283 = vadd.f32 %v5277, 1.0
    %v5284 = vadd.f32 %v5278, 1.0
    %v5285 = vmul.f32 %v5279, 0.5
    %v5286 = vmul.f32 %v5280, 0.5
    %v5287 = vmul.f32 %v5281, 0.5
    %v5288 = vmul.f32 %v5282, 0.5
    %v5289 = vmul.f32 %v5283, 0.5
    %v5290 = vmul.f32 %v5284, 0.5
    %v5291 = vtanh.pop %v5262
    %v5292 = vtanh.pop %v5266
    %v5293 = vmul.f32 %v5286, %v5154
    %v5294 = vmul.f32 %v5289, %v5155
    %v5295 = vmul.f32 %v5285, %v5291
    %v5296 = vmul.f32 %v5288, %v5292
    %v5297 = vadd.f32 %v5293, %v5295
    %v5298 = vadd.f32 %v5294, %v5296
    %v5299 = vtanh.pop %v5297
    %v5300 = vtanh.pop %v5298
    %v5301 = vmul.f32 %v5287, %v5299
    %v5302 = vmul.f32 %v5290, %v5300
    %v5303 = vpack.c.bf16 %v5302, %v5301
    %v5304 = vld [vmem:[%s1582] sm:$0xff]
    %v5305 = vld [vmem:[%s1582 + $0x8] sm:$0xff]
    %v5306 = vld [vmem:[%s1582 + $0x10] sm:$0xff]
    %v5307 = vld [vmem:[%s1582 + $0x18] sm:$0xff]
    %5308 = vmatprep.subr.bf16.mxu0 %v4673
    %5309 = vmatpush1.bf16.msra.mxu0 %v4672
    %5310 = vmatprep.subr.bf16.mxu0 %v4677
    %5311 = vmatpush1.bf16.msra.mxu0 %v4676
    %5312 = vmatprep.subr.bf16.mxu0 %v4681
    %5313 = vmatpush1.bf16.msra.mxu0 %v4680
    %5314 = vmatprep.subr.bf16.mxu0 %v4685
    %5315 = vmatpush1.bf16.msra.mxu0 %v4684
    %5316 = vmatprep.subr.bf16.mxu0 %v4689
    %5317 = vmatpush1.bf16.msra.mxu0 %v4688
    %5318 = vmatprep.subr.bf16.mxu0 %v4693
    %5319 = vmatpush1.bf16.msra.mxu0 %v4692
    %5320 = vmatprep.subr.bf16.mxu0 %v4697
    %5321 = vmatpush1.bf16.msra.mxu0 %v4696
    %5322 = vmatprep.subr.bf16.mxu0 %v4701
    %5323 = vmatpush1.bf16.msra.mxu0 %v4700
    %5324 = vmatprep.subr.bf16.mxu0 0
    %5325 = vmatpush1.bf16.msra.mxu0 0
    %5326 = vmatprep.subr.bf16.mxu0 0
    %5327 = vmatpush1.bf16.msra.mxu0 0
    %5328 = vmatprep.subr.bf16.mxu0 0
    %5329 = vmatpush1.bf16.msra.mxu0 0
    %5330 = vmatprep.subr.bf16.mxu0 0
    %5331 = vmatpush1.bf16.msra.mxu0 0
    %5332 = vmatprep.subr.bf16.mxu0 0
    %5333 = vmatpush1.bf16.msra.mxu0 0
    %5334 = vmatprep.subr.bf16.mxu0 0
    %5335 = vmatpush1.bf16.msra.mxu0 0
    %5336 = vmatprep.subr.bf16.mxu0 0
    %5337 = vmatpush1.bf16.msra.mxu0 0
    %5338 = vmatprep.subr.bf16.mxu0 0
    %5339 = vmatpush1.bf16.msra.mxu0 0
    %5340 = vmatprep.mubr.bf16.mxu0 0
    %5341 = vmatmul.mubr.bf16.gmra.mrb[0].mxu0 %v5303
    %v5342 = vpop.f32.mrb[0].mxu0
    %v5343 = vadd.f32 0.0, %v5342
    %v5344 = vpop.f32.mrb[0].mxu0
    %v5345 = vadd.f32 0.0, %v5344
    %v5346 = vpop.f32.mrb[0].mxu0
    %v5347 = vadd.f32 0.0, %v5346
    %v5348 = vpop.f32.mrb[0].mxu0
    %v5349 = vadd.f32 0.0, %v5348
    %5350 = vdwg.mxu0
    %5351 = vmatprep.subr.bf16.mxu0 %v4675
    %5352 = vmatpush1.bf16.msra.mxu0 %v4674
    %5353 = vmatprep.subr.bf16.mxu0 %v4679
    %5354 = vmatpush1.bf16.msra.mxu0 %v4678
    %5355 = vmatprep.subr.bf16.mxu0 %v4683
    %5356 = vmatpush1.bf16.msra.mxu0 %v4682
    %5357 = vmatprep.subr.bf16.mxu0 %v4687
    %5358 = vmatpush1.bf16.msra.mxu0 %v4686
    %5359 = vmatprep.subr.bf16.mxu0 %v4691
    %5360 = vmatpush1.bf16.msra.mxu0 %v4690
    %5361 = vmatprep.subr.bf16.mxu0 %v4695
    %5362 = vmatpush1.bf16.msra.mxu0 %v4694
    %5363 = vmatprep.subr.bf16.mxu0 %v4699
    %5364 = vmatpush1.bf16.msra.mxu0 %v4698
    %5365 = vmatprep.subr.bf16.mxu0 %v4703
    %5366 = vmatpush1.bf16.msra.mxu0 %v4702
    %5367 = vmatprep.subr.bf16.mxu0 0
    %5368 = vmatpush1.bf16.msra.mxu0 0
    %5369 = vmatprep.subr.bf16.mxu0 0
    %5370 = vmatpush1.bf16.msra.mxu0 0
    %5371 = vmatprep.subr.bf16.mxu0 0
    %5372 = vmatpush1.bf16.msra.mxu0 0
    %5373 = vmatprep.subr.bf16.mxu0 0
    %5374 = vmatpush1.bf16.msra.mxu0 0
    %5375 = vmatprep.subr.bf16.mxu0 0
    %5376 = vmatpush1.bf16.msra.mxu0 0
    %5377 = vmatprep.subr.bf16.mxu0 0
    %5378 = vmatpush1.bf16.msra.mxu0 0
    %5379 = vmatprep.subr.bf16.mxu0 0
    %5380 = vmatpush1.bf16.msra.mxu0 0
    %5381 = vmatprep.subr.bf16.mxu0 0
    %5382 = vmatpush1.bf16.msra.mxu0 0
    %5383 = vmatprep.mubr.bf16.mxu0 0
    %5384 = vmatmul.mubr.bf16.gmra.mrb[0].mxu0 %v5303
    %v5385 = vpop.f32.mrb[0].mxu0
    %v5386 = vadd.f32 0.0, %v5385
    %v5387 = vpop.f32.mrb[0].mxu0
    %v5388 = vadd.f32 0.0, %v5387
    %v5389 = vpop.f32.mrb[0].mxu0
    %v5390 = vadd.f32 0.0, %v5389
    %v5391 = vpop.f32.mrb[0].mxu0
    %v5392 = vadd.f32 0.0, %v5391
    %5393 = vdwg.mxu0
    %v5394 = vunpack.c.l.bf16 %v5304
    %v5395 = vunpack.c.l.bf16 %v5305
    %v5396 = vunpack.c.l.bf16 %v5306
    %v5397 = vunpack.c.l.bf16 %v5307
    %v5398 = vunpack.c.h.bf16 %v5304
    %v5399 = vunpack.c.h.bf16 %v5305
    %v5400 = vunpack.c.h.bf16 %v5306
    %v5401 = vunpack.c.h.bf16 %v5307
    %v5402 = vadd.f32 %v5394, %v5343
    %v5403 = vadd.f32 %v5395, %v5345
    %v5404 = vadd.f32 %v5396, %v5386
    %v5405 = vadd.f32 %v5397, %v5388
    %v5406 = vadd.f32 %v5398, %v5347
    %v5407 = vadd.f32 %v5399, %v5349
    %v5408 = vadd.f32 %v5400, %v5390
    %v5409 = vadd.f32 %v5401, %v5392
    %v5410 = vmul.f32 %v5402, 0.5
    %v5411 = vmul.f32 %v5403, 0.5
    %v5412 = vmul.f32 %v5404, 0.5
    %v5413 = vmul.f32 %v5406, 0.5
    %v5414 = vmul.f32 %v5407, 0.5
    %v5415 = vmul.f32 %v5408, 0.5
    %v5416 = vtanh.pop %v5410
    %v5417 = vtanh.pop %v5411
    %v5418 = vtanh.pop %v5412
    %v5419 = vtanh.pop %v5413
    %v5420 = vtanh.pop %v5414
    %v5421 = vtanh.pop %v5415
    %v5422 = vadd.f32 %v5416, 1.0
    %v5423 = vadd.f32 %v5417, 1.0
    %v5424 = vadd.f32 %v5418, 1.0
    %v5425 = vadd.f32 %v5419, 1.0
    %v5426 = vadd.f32 %v5420, 1.0
    %v5427 = vadd.f32 %v5421, 1.0
    %v5428 = vmul.f32 %v5422, 0.5
    %v5429 = vmul.f32 %v5423, 0.5
    %v5430 = vmul.f32 %v5424, 0.5
    %v5431 = vmul.f32 %v5425, 0.5
    %v5432 = vmul.f32 %v5426, 0.5
    %v5433 = vmul.f32 %v5427, 0.5
    %v5434 = vtanh.pop %v5405
    %v5435 = vtanh.pop %v5409
    %v5436 = vmul.f32 %v5429, %v5297
    %v5437 = vmul.f32 %v5432, %v5298
    %v5438 = vmul.f32 %v5428, %v5434
    %v5439 = vmul.f32 %v5431, %v5435
    %v5440 = vadd.f32 %v5436, %v5438
    %v5441 = vadd.f32 %v5437, %v5439
    %v5442 = vtanh.pop %v5440
    %v5443 = vtanh.pop %v5441
    %v5444 = vmul.f32 %v5430, %v5442
    %v5445 = vmul.f32 %v5433, %v5443
    %v5446 = vpack.c.bf16 %v5445, %v5444
    %v5447 = vld [vmem:[%s1730] sm:$0xff]
    %v5448 = vld [vmem:[%s1730 + $0x8] sm:$0xff]
    %v5449 = vld [vmem:[%s1730 + $0x10] sm:$0xff]
    %v5450 = vld [vmem:[%s1730 + $0x18] sm:$0xff]
    %5451 = vmatprep.subr.bf16.mxu0 %v4673
    %5452 = vmatpush1.bf16.msra.mxu0 %v4672
    %5453 = vmatprep.subr.bf16.mxu0 %v4677
    %5454 = vmatpush1.bf16.msra.mxu0 %v4676
    %5455 = vmatprep.subr.bf16.mxu0 %v4681
    %5456 = vmatpush1.bf16.msra.mxu0 %v4680
    %5457 = vmatprep.subr.bf16.mxu0 %v4685
    %5458 = vmatpush1.bf16.msra.mxu0 %v4684
    %5459 = vmatprep.subr.bf16.mxu0 %v4689
    %5460 = vmatpush1.bf16.msra.mxu0 %v4688
    %5461 = vmatprep.subr.bf16.mxu0 %v4693
    %5462 = vmatpush1.bf16.msra.mxu0 %v4692
    %5463 = vmatprep.subr.bf16.mxu0 %v4697
    %5464 = vmatpush1.bf16.msra.mxu0 %v4696
    %5465 = vmatprep.subr.bf16.mxu0 %v4701
    %5466 = vmatpush1.bf16.msra.mxu0 %v4700
    %5467 = vmatprep.subr.bf16.mxu0 0
    %5468 = vmatpush1.bf16.msra.mxu0 0
    %5469 = vmatprep.subr.bf16.mxu0 0
    %5470 = vmatpush1.bf16.msra.mxu0 0
    %5471 = vmatprep.subr.bf16.mxu0 0
    %5472 = vmatpush1.bf16.msra.mxu0 0
    %5473 = vmatprep.subr.bf16.mxu0 0
    %5474 = vmatpush1.bf16.msra.mxu0 0
    %5475 = vmatprep.subr.bf16.mxu0 0
    %5476 = vmatpush1.bf16.msra.mxu0 0
    %5477 = vmatprep.subr.bf16.mxu0 0
    %5478 = vmatpush1.bf16.msra.mxu0 0
    %5479 = vmatprep.subr.bf16.mxu0 0
    %5480 = vmatpush1.bf16.msra.mxu0 0
    %5481 = vmatprep.subr.bf16.mxu0 0
    %5482 = vmatpush1.bf16.msra.mxu0 0
    %5483 = vmatprep.mubr.bf16.mxu0 0
    %5484 = vmatmul.mubr.bf16.gmra.mrb[0].mxu0 %v5446
    %v5485 = vpop.f32.mrb[0].mxu0
    %v5486 = vadd.f32 0.0, %v5485
    %v5487 = vpop.f32.mrb[0].mxu0
    %v5488 = vadd.f32 0.0, %v5487
    %v5489 = vpop.f32.mrb[0].mxu0
    %v5490 = vadd.f32 0.0, %v5489
    %v5491 = vpop.f32.mrb[0].mxu0
    %v5492 = vadd.f32 0.0, %v5491
    %5493 = vdwg.mxu0
    %5494 = vmatprep.subr.bf16.mxu0 %v4675
    %5495 = vmatpush1.bf16.msra.mxu0 %v4674
    %5496 = vmatprep.subr.bf16.mxu0 %v4679
    %5497 = vmatpush1.bf16.msra.mxu0 %v4678
    %5498 = vmatprep.subr.bf16.mxu0 %v4683
    %5499 = vmatpush1.bf16.msra.mxu0 %v4682
    %5500 = vmatprep.subr.bf16.mxu0 %v4687
    %5501 = vmatpush1.bf16.msra.mxu0 %v4686
    %5502 = vmatprep.subr.bf16.mxu0 %v4691
    %5503 = vmatpush1.bf16.msra.mxu0 %v4690
    %5504 = vmatprep.subr.bf16.mxu0 %v4695
    %5505 = vmatpush1.bf16.msra.mxu0 %v4694
    %5506 = vmatprep.subr.bf16.mxu0 %v4699
    %5507 = vmatpush1.bf16.msra.mxu0 %v4698
    %5508 = vmatprep.subr.bf16.mxu0 %v4703
    %5509 = vmatpush1.bf16.msra.mxu0 %v4702
    %5510 = vmatprep.subr.bf16.mxu0 0
    %5511 = vmatpush1.bf16.msra.mxu0 0
    %5512 = vmatprep.subr.bf16.mxu0 0
    %5513 = vmatpush1.bf16.msra.mxu0 0
    %5514 = vmatprep.subr.bf16.mxu0 0
    %5515 = vmatpush1.bf16.msra.mxu0 0
    %5516 = vmatprep.subr.bf16.mxu0 0
    %5517 = vmatpush1.bf16.msra.mxu0 0
    %5518 = vmatprep.subr.bf16.mxu0 0
    %5519 = vmatpush1.bf16.msra.mxu0 0
    %5520 = vmatprep.subr.bf16.mxu0 0
    %5521 = vmatpush1.bf16.msra.mxu0 0
    %5522 = vmatprep.subr.bf16.mxu0 0
    %5523 = vmatpush1.bf16.msra.mxu0 0
    %5524 = vmatprep.subr.bf16.mxu0 0
    %5525 = vmatpush1.bf16.msra.mxu0 0
    %5526 = vmatprep.mubr.bf16.mxu0 0
    %5527 = vmatmul.mubr.bf16.gmra.mrb[0].mxu0 %v5446
    %v5528 = vpop.f32.mrb[0].mxu0
    %v5529 = vadd.f32 0.0, %v5528
    %v5530 = vpop.f32.mrb[0].mxu0
    %v5531 = vadd.f32 0.0, %v5530
    %v5532 = vpop.f32.mrb[0].mxu0
    %v5533 = vadd.f32 0.0, %v5532
    %v5534 = vpop.f32.mrb[0].mxu0
    %v5535 = vadd.f32 0.0, %v5534
    %5536 = vdwg.mxu0
    %v5537 = vunpack.c.l.bf16 %v5447
    %v5538 = vunpack.c.l.bf16 %v5448
    %v5539 = vunpack.c.l.bf16 %v5449
    %v5540 = vunpack.c.l.bf16 %v5450
    %v5541 = vunpack.c.h.bf16 %v5447
    %v5542 = vunpack.c.h.bf16 %v5448
    %v5543 = vunpack.c.h.bf16 %v5449
    %v5544 = vunpack.c.h.bf16 %v5450
    %v5545 = vadd.f32 %v5537, %v5486
    %v5546 = vadd.f32 %v5538, %v5488
    %v5547 = vadd.f32 %v5539, %v5529
    %v5548 = vadd.f32 %v5540, %v5531
    %v5549 = vadd.f32 %v5541, %v5490
    %v5550 = vadd.f32 %v5542, %v5492
    %v5551 = vadd.f32 %v5543, %v5533
    %v5552 = vadd.f32 %v5544, %v5535
    %v5553 = vmul.f32 %v5545, 0.5
    %v5554 = vmul.f32 %v5546, 0.5
    %v5555 = vmul.f32 %v5547, 0.5
    %v5556 = vmul.f32 %v5549, 0.5
    %v5557 = vmul.f32 %v5550, 0.5
    %v5558 = vmul.f32 %v5551, 0.5
    %v5559 = vtanh.pop %v5553
    %v5560 = vtanh.pop %v5554
    %v5561 = vtanh.pop %v5555
    %v5562 = vtanh.pop %v5556
    %v5563 = vtanh.pop %v5557
    %v5564 = vtanh.pop %v5558
    %v5565 = vadd.f32 %v5559, 1.0
    %v5566 = vadd.f32 %v5560, 1.0
    %v5567 = vadd.f32 %v5561, 1.0
    %v5568 = vadd.f32 %v5562, 1.0
    %v5569 = vadd.f32 %v5563, 1.0
    %v5570 = vadd.f32 %v5564, 1.0
    %v5571 = vmul.f32 %v5565, 0.5
    %v5572 = vmul.f32 %v5566, 0.5
    %v5573 = vmul.f32 %v5567, 0.5
    %v5574 = vmul.f32 %v5568, 0.5
    %v5575 = vmul.f32 %v5569, 0.5
    %v5576 = vmul.f32 %v5570, 0.5
    %v5577 = vtanh.pop %v5548
    %v5578 = vtanh.pop %v5552
    %v5579 = vmul.f32 %v5572, %v5440
    %v5580 = vmul.f32 %v5575, %v5441
    %v5581 = vmul.f32 %v5571, %v5577
    %v5582 = vmul.f32 %v5574, %v5578
    %v5583 = vadd.f32 %v5579, %v5581
    %v5584 = vadd.f32 %v5580, %v5582
    %v5585 = vtanh.pop %v5583
    %v5586 = vtanh.pop %v5584
    %v5587 = vmul.f32 %v5573, %v5585
    %v5588 = vmul.f32 %v5576, %v5586
    %v5589 = vpack.c.bf16 %v5588, %v5587
    %v5590 = vld [vmem:[%s1878] sm:$0xff]
    %v5591 = vld [vmem:[%s1878 + $0x8] sm:$0xff]
    %v5592 = vld [vmem:[%s1878 + $0x10] sm:$0xff]
    %v5593 = vld [vmem:[%s1878 + $0x18] sm:$0xff]
    %5594 = vmatprep.subr.bf16.mxu0 %v4673
    %5595 = vmatpush1.bf16.msra.mxu0 %v4672
    %5596 = vmatprep.subr.bf16.mxu0 %v4677
    %5597 = vmatpush1.bf16.msra.mxu0 %v4676
    %5598 = vmatprep.subr.bf16.mxu0 %v4681
    %5599 = vmatpush1.bf16.msra.mxu0 %v4680
    %5600 = vmatprep.subr.bf16.mxu0 %v4685
    %5601 = vmatpush1.bf16.msra.mxu0 %v4684
    %5602 = vmatprep.subr.bf16.mxu0 %v4689
    %5603 = vmatpush1.bf16.msra.mxu0 %v4688
    %5604 = vmatprep.subr.bf16.mxu0 %v4693
    %5605 = vmatpush1.bf16.msra.mxu0 %v4692
    %5606 = vmatprep.subr.bf16.mxu0 %v4697
    %5607 = vmatpush1.bf16.msra.mxu0 %v4696
    %5608 = vmatprep.subr.bf16.mxu0 %v4701
    %5609 = vmatpush1.bf16.msra.mxu0 %v4700
    %5610 = vmatprep.subr.bf16.mxu0 0
    %5611 = vmatpush1.bf16.msra.mxu0 0
    %5612 = vmatprep.subr.bf16.mxu0 0
    %5613 = vmatpush1.bf16.msra.mxu0 0
    %5614 = vmatprep.subr.bf16.mxu0 0
    %5615 = vmatpush1.bf16.msra.mxu0 0
    %5616 = vmatprep.subr.bf16.mxu0 0
    %5617 = vmatpush1.bf16.msra.mxu0 0
    %5618 = vmatprep.subr.bf16.mxu0 0
    %5619 = vmatpush1.bf16.msra.mxu0 0
    %5620 = vmatprep.subr.bf16.mxu0 0
    %5621 = vmatpush1.bf16.msra.mxu0 0
    %5622 = vmatprep.subr.bf16.mxu0 0
    %5623 = vmatpush1.bf16.msra.mxu0 0
    %5624 = vmatprep.subr.bf16.mxu0 0
    %5625 = vmatpush1.bf16.msra.mxu0 0
    %5626 = vmatprep.mubr.bf16.mxu0 0
    %5627 = vmatmul.mubr.bf16.gmra.mrb[0].mxu0 %v5589
    %v5628 = vpop.f32.mrb[0].mxu0
    %v5629 = vadd.f32 0.0, %v5628
    %v5630 = vpop.f32.mrb[0].mxu0
    %v5631 = vadd.f32 0.0, %v5630
    %v5632 = vpop.f32.mrb[0].mxu0
    %v5633 = vadd.f32 0.0, %v5632
    %v5634 = vpop.f32.mrb[0].mxu0
    %v5635 = vadd.f32 0.0, %v5634
    %5636 = vdwg.mxu0
    %5637 = vmatprep.subr.bf16.mxu0 %v4675
    %5638 = vmatpush1.bf16.msra.mxu0 %v4674
    %5639 = vmatprep.subr.bf16.mxu0 %v4679
    %5640 = vmatpush1.bf16.msra.mxu0 %v4678
    %5641 = vmatprep.subr.bf16.mxu0 %v4683
    %5642 = vmatpush1.bf16.msra.mxu0 %v4682
    %5643 = vmatprep.subr.bf16.mxu0 %v4687
    %5644 = vmatpush1.bf16.msra.mxu0 %v4686
    %5645 = vmatprep.subr.bf16.mxu0 %v4691
    %5646 = vmatpush1.bf16.msra.mxu0 %v4690
    %5647 = vmatprep.subr.bf16.mxu0 %v4695
    %5648 = vmatpush1.bf16.msra.mxu0 %v4694
    %5649 = vmatprep.subr.bf16.mxu0 %v4699
    %5650 = vmatpush1.bf16.msra.mxu0 %v4698
    %5651 = vmatprep.subr.bf16.mxu0 %v4703
    %5652 = vmatpush1.bf16.msra.mxu0 %v4702
    %5653 = vmatprep.subr.bf16.mxu0 0
    %5654 = vmatpush1.bf16.msra.mxu0 0
    %5655 = vmatprep.subr.bf16.mxu0 0
    %5656 = vmatpush1.bf16.msra.mxu0 0
    %5657 = vmatprep.subr.bf16.mxu0 0
    %5658 = vmatpush1.bf16.msra.mxu0 0
    %5659 = vmatprep.subr.bf16.mxu0 0
    %5660 = vmatpush1.bf16.msra.mxu0 0
    %5661 = vmatprep.subr.bf16.mxu0 0
    %5662 = vmatpush1.bf16.msra.mxu0 0
    %5663 = vmatprep.subr.bf16.mxu0 0
    %5664 = vmatpush1.bf16.msra.mxu0 0
    %5665 = vmatprep.subr.bf16.mxu0 0
    %5666 = vmatpush1.bf16.msra.mxu0 0
    %5667 = vmatprep.subr.bf16.mxu0 0
    %5668 = vmatpush1.bf16.msra.mxu0 0
    %5669 = vmatprep.mubr.bf16.mxu0 0
    %5670 = vmatmul.mubr.bf16.gmra.mrb[0].mxu0 %v5589
    %v5671 = vpop.f32.mrb[0].mxu0
    %v5672 = vadd.f32 0.0, %v5671
    %v5673 = vpop.f32.mrb[0].mxu0
    %v5674 = vadd.f32 0.0, %v5673
    %v5675 = vpop.f32.mrb[0].mxu0
    %v5676 = vadd.f32 0.0, %v5675
    %v5677 = vpop.f32.mrb[0].mxu0
    %v5678 = vadd.f32 0.0, %v5677
    %5679 = vdwg.mxu0
    %v5680 = vunpack.c.l.bf16 %v5590
    %v5681 = vunpack.c.l.bf16 %v5591
    %v5682 = vunpack.c.l.bf16 %v5592
    %v5683 = vunpack.c.l.bf16 %v5593
    %v5684 = vunpack.c.h.bf16 %v5590
    %v5685 = vunpack.c.h.bf16 %v5591
    %v5686 = vunpack.c.h.bf16 %v5592
    %v5687 = vunpack.c.h.bf16 %v5593
    %v5688 = vadd.f32 %v5680, %v5629
    %v5689 = vadd.f32 %v5681, %v5631
    %v5690 = vadd.f32 %v5682, %v5672
    %v5691 = vadd.f32 %v5683, %v5674
    %v5692 = vadd.f32 %v5684, %v5633
    %v5693 = vadd.f32 %v5685, %v5635
    %v5694 = vadd.f32 %v5686, %v5676
    %v5695 = vadd.f32 %v5687, %v5678
    %v5696 = vmul.f32 %v5688, 0.5
    %v5697 = vmul.f32 %v5689, 0.5
    %v5698 = vmul.f32 %v5690, 0.5
    %v5699 = vmul.f32 %v5692, 0.5
    %v5700 = vmul.f32 %v5693, 0.5
    %v5701 = vmul.f32 %v5694, 0.5
    %v5702 = vtanh.pop %v5696
    %v5703 = vtanh.pop %v5697
    %v5704 = vtanh.pop %v5698
    %v5705 = vtanh.pop %v5699
    %v5706 = vtanh.pop %v5700
    %v5707 = vtanh.pop %v5701
    %v5708 = vadd.f32 %v5702, 1.0
    %v5709 = vadd.f32 %v5703, 1.0
    %v5710 = vadd.f32 %v5704, 1.0
    %v5711 = vadd.f32 %v5705, 1.0
    %v5712 = vadd.f32 %v5706, 1.0
    %v5713 = vadd.f32 %v5707, 1.0
    %v5714 = vmul.f32 %v5708, 0.5
    %v5715 = vmul.f32 %v5709, 0.5
    %v5716 = vmul.f32 %v5710, 0.5
    %v5717 = vmul.f32 %v5711, 0.5
    %v5718 = vmul.f32 %v5712, 0.5
    %v5719 = vmul.f32 %v5713, 0.5
    %v5720 = vtanh.pop %v5691
    %v5721 = vtanh.pop %v5695
    %v5722 = vmul.f32 %v5715, %v5583
    %v5723 = vmul.f32 %v5718, %v5584
    %v5724 = vmul.f32 %v5714, %v5720
    %v5725 = vmul.f32 %v5717, %v5721
    %v5726 = vadd.f32 %v5722, %v5724
    %v5727 = vadd.f32 %v5723, %v5725
    %v5728 = vtanh.pop %v5726
    %v5729 = vtanh.pop %v5727
    %v5730 = vmul.f32 %v5716, %v5728
    %v5731 = vmul.f32 %v5719, %v5729
    %v5732 = vpack.c.bf16 %v5731, %v5730
    %v5733 = vld [vmem:[%s2026] sm:$0xff]
    %v5734 = vld [vmem:[%s2026 + $0x8] sm:$0xff]
    %v5735 = vld [vmem:[%s2026 + $0x10] sm:$0xff]
    %v5736 = vld [vmem:[%s2026 + $0x18] sm:$0xff]
    %5737 = vmatprep.subr.bf16.mxu0 %v4673
    %5738 = vmatpush1.bf16.msra.mxu0 %v4672
    %5739 = vmatprep.subr.bf16.mxu0 %v4677
    %5740 = vmatpush1.bf16.msra.mxu0 %v4676
    %5741 = vmatprep.subr.bf16.mxu0 %v4681
    %5742 = vmatpush1.bf16.msra.mxu0 %v4680
    %5743 = vmatprep.subr.bf16.mxu0 %v4685
    %5744 = vmatpush1.bf16.msra.mxu0 %v4684
    %5745 = vmatprep.subr.bf16.mxu0 %v4689
    %5746 = vmatpush1.bf16.msra.mxu0 %v4688
    %5747 = vmatprep.subr.bf16.mxu0 %v4693
    %5748 = vmatpush1.bf16.msra.mxu0 %v4692
    %5749 = vmatprep.subr.bf16.mxu0 %v4697
    %5750 = vmatpush1.bf16.msra.mxu0 %v4696
    %5751 = vmatprep.subr.bf16.mxu0 %v4701
    %5752 = vmatpush1.bf16.msra.mxu0 %v4700
    %5753 = vmatprep.subr.bf16.mxu0 0
    %5754 = vmatpush1.bf16.msra.mxu0 0
    %5755 = vmatprep.subr.bf16.mxu0 0
    %5756 = vmatpush1.bf16.msra.mxu0 0
    %5757 = vmatprep.subr.bf16.mxu0 0
    %5758 = vmatpush1.bf16.msra.mxu0 0
    %5759 = vmatprep.subr.bf16.mxu0 0
    %5760 = vmatpush1.bf16.msra.mxu0 0
    %5761 = vmatprep.subr.bf16.mxu0 0
    %5762 = vmatpush1.bf16.msra.mxu0 0
    %5763 = vmatprep.subr.bf16.mxu0 0
    %5764 = vmatpush1.bf16.msra.mxu0 0
    %5765 = vmatprep.subr.bf16.mxu0 0
    %5766 = vmatpush1.bf16.msra.mxu0 0
    %5767 = vmatprep.subr.bf16.mxu0 0
    %5768 = vmatpush1.bf16.msra.mxu0 0
    %5769 = vmatprep.mubr.bf16.mxu0 0
    %5770 = vmatmul.mubr.bf16.gmra.mrb[0].mxu0 %v5732
    %v5771 = vpop.f32.mrb[0].mxu0
    %v5772 = vadd.f32 0.0, %v5771
    %v5773 = vpop.f32.mrb[0].mxu0
    %v5774 = vadd.f32 0.0, %v5773
    %v5775 = vpop.f32.mrb[0].mxu0
    %v5776 = vadd.f32 0.0, %v5775
    %v5777 = vpop.f32.mrb[0].mxu0
    %v5778 = vadd.f32 0.0, %v5777
    %5779 = vdwg.mxu0
    %5780 = vmatprep.subr.bf16.mxu0 %v4675
    %5781 = vmatpush1.bf16.msra.mxu0 %v4674
    %5782 = vmatprep.subr.bf16.mxu0 %v4679
    %5783 = vmatpush1.bf16.msra.mxu0 %v4678
    %5784 = vmatprep.subr.bf16.mxu0 %v4683
    %5785 = vmatpush1.bf16.msra.mxu0 %v4682
    %5786 = vmatprep.subr.bf16.mxu0 %v4687
    %5787 = vmatpush1.bf16.msra.mxu0 %v4686
    %5788 = vmatprep.subr.bf16.mxu0 %v4691
    %5789 = vmatpush1.bf16.msra.mxu0 %v4690
    %5790 = vmatprep.subr.bf16.mxu0 %v4695
    %5791 = vmatpush1.bf16.msra.mxu0 %v4694
    %5792 = vmatprep.subr.bf16.mxu0 %v4699
    %5793 = vmatpush1.bf16.msra.mxu0 %v4698
    %5794 = vmatprep.subr.bf16.mxu0 %v4703
    %5795 = vmatpush1.bf16.msra.mxu0 %v4702
    %5796 = vmatprep.subr.bf16.mxu0 0
    %5797 = vmatpush1.bf16.msra.mxu0 0
    %5798 = vmatprep.subr.bf16.mxu0 0
    %5799 = vmatpush1.bf16.msra.mxu0 0
    %5800 = vmatprep.subr.bf16.mxu0 0
    %5801 = vmatpush1.bf16.msra.mxu0 0
    %5802 = vmatprep.subr.bf16.mxu0 0
    %5803 = vmatpush1.bf16.msra.mxu0 0
    %5804 = vmatprep.subr.bf16.mxu0 0
    %5805 = vmatpush1.bf16.msra.mxu0 0
    %5806 = vmatprep.subr.bf16.mxu0 0
    %5807 = vmatpush1.bf16.msra.mxu0 0
    %5808 = vmatprep.subr.bf16.mxu0 0
    %5809 = vmatpush1.bf16.msra.mxu0 0
    %5810 = vmatprep.subr.bf16.mxu0 0
    %5811 = vmatpush1.bf16.msra.mxu0 0
    %5812 = vmatprep.mubr.bf16.mxu0 0
    %5813 = vmatmul.mubr.bf16.gmra.mrb[0].mxu0 %v5732
    %v5814 = vpop.f32.mrb[0].mxu0
    %v5815 = vadd.f32 0.0, %v5814
    %v5816 = vpop.f32.mrb[0].mxu0
    %v5817 = vadd.f32 0.0, %v5816
    %v5818 = vpop.f32.mrb[0].mxu0
    %v5819 = vadd.f32 0.0, %v5818
    %v5820 = vpop.f32.mrb[0].mxu0
    %v5821 = vadd.f32 0.0, %v5820
    %5822 = vdwg.mxu0
    %v5823 = vunpack.c.l.bf16 %v5733
    %v5824 = vunpack.c.l.bf16 %v5734
    %v5825 = vunpack.c.l.bf16 %v5735
    %v5826 = vunpack.c.l.bf16 %v5736
    %v5827 = vunpack.c.h.bf16 %v5733
    %v5828 = vunpack.c.h.bf16 %v5734
    %v5829 = vunpack.c.h.bf16 %v5735
    %v5830 = vunpack.c.h.bf16 %v5736
    %v5831 = vadd.f32 %v5823, %v5772
    %v5832 = vadd.f32 %v5824, %v5774
    %v5833 = vadd.f32 %v5825, %v5815
    %v5834 = vadd.f32 %v5826, %v5817
    %v5835 = vadd.f32 %v5827, %v5776
    %v5836 = vadd.f32 %v5828, %v5778
    %v5837 = vadd.f32 %v5829, %v5819
    %v5838 = vadd.f32 %v5830, %v5821
    %v5839 = vmul.f32 %v5831, 0.5
    %v5840 = vmul.f32 %v5832, 0.5
    %v5841 = vmul.f32 %v5833, 0.5
    %v5842 = vmul.f32 %v5835, 0.5
    %v5843 = vmul.f32 %v5836, 0.5
    %v5844 = vmul.f32 %v5837, 0.5
    %v5845 = vtanh.pop %v5839
    %v5846 = vtanh.pop %v5840
    %v5847 = vtanh.pop %v5841
    %v5848 = vtanh.pop %v5842
    %v5849 = vtanh.pop %v5843
    %v5850 = vtanh.pop %v5844
    %v5851 = vadd.f32 %v5845, 1.0
    %v5852 = vadd.f32 %v5846, 1.0
    %v5853 = vadd.f32 %v5847, 1.0
    %v5854 = vadd.f32 %v5848, 1.0
    %v5855 = vadd.f32 %v5849, 1.0
    %v5856 = vadd.f32 %v5850, 1.0
    %v5857 = vmul.f32 %v5851, 0.5
    %v5858 = vmul.f32 %v5852, 0.5
    %v5859 = vmul.f32 %v5853, 0.5
    %v5860 = vmul.f32 %v5854, 0.5
    %v5861 = vmul.f32 %v5855, 0.5
    %v5862 = vmul.f32 %v5856, 0.5
    %v5863 = vtanh.pop %v5834
    %v5864 = vtanh.pop %v5838
    %v5865 = vmul.f32 %v5858, %v5726
    %v5866 = vmul.f32 %v5861, %v5727
    %v5867 = vmul.f32 %v5857, %v5863
    %v5868 = vmul.f32 %v5860, %v5864
    %v5869 = vadd.f32 %v5865, %v5867
    %v5870 = vadd.f32 %v5866, %v5868
    %v5871 = vtanh.pop %v5869
    %v5872 = vtanh.pop %v5870
    %v5873 = vmul.f32 %v5859, %v5871
    %v5874 = vmul.f32 %v5862, %v5872
    %v5875 = vpack.c.bf16 %v5874, %v5873
    %v5876 = vld [vmem:[#allocation21] sm:$0xf]
    %v5877 = vld [vmem:[#allocation21 + $0x4] sm:$0xf]
    %v5878 = vld [vmem:[#allocation21 + $0x8] sm:$0xf]
    %v5879 = vld [vmem:[#allocation21 + $0xc] sm:$0xf]
    %v5880 = vld [vmem:[#allocation21 + $0x10] sm:$0xf]
    %v5881 = vld [vmem:[#allocation21 + $0x14] sm:$0xf]
    %v5882 = vld [vmem:[#allocation21 + $0x18] sm:$0xf]
    %v5883 = vld [vmem:[#allocation21 + $0x1c] sm:$0xf]
    %v5884 = vld [vmem:[#allocation21 + $0x20] sm:$0xf]
    %v5885 = vld [vmem:[#allocation21 + $0x24] sm:$0xf]
    %v5886 = vld [vmem:[#allocation21 + $0x28] sm:$0xf]
    %v5887 = vld [vmem:[#allocation21 + $0x2c] sm:$0xf]
    %v5888 = vld [vmem:[#allocation21 + $0x30] sm:$0xf]
    %v5889 = vld [vmem:[#allocation21 + $0x34] sm:$0xf]
    %v5890 = vld [vmem:[#allocation21 + $0x38] sm:$0xf]
    %v5891 = vld [vmem:[#allocation21 + $0x3c] sm:$0xf]
    %v5892 = vld [vmem:[#allocation22] sm:$0x1]
    %v5894 = vlaneseq
    %v5895 = vshrl.u32 %v5894, 7
    %v5896 = vsub.s32 0, %v5895
    %v5897 = vrot.slane %v5892, %v5896
    %v5915 = vunpack.c.l.b16 %v5876
    %v5916 = vunpack.c.l.b16 %v5877
    %v5917 = vunpack.c.l.b16 %v5878
    %v5918 = vunpack.c.l.b16 %v5879
    %v5919 = vunpack.c.l.b16 %v5880
    %v5920 = vunpack.c.l.b16 %v5881
    %v5921 = vunpack.c.l.b16 %v5882
    %v5922 = vunpack.c.l.b16 %v5883
    %v5923 = vunpack.c.l.b16 %v5884
    %v5924 = vunpack.c.l.b16 %v5885
    %v5925 = vunpack.c.l.b16 %v5886
    %v5926 = vunpack.c.l.b16 %v5887
    %v5927 = vunpack.c.l.b16 %v5888
    %v5928 = vunpack.c.l.b16 %v5889
    %v5929 = vunpack.c.l.b16 %v5890
    %v5930 = vunpack.c.l.b16 %v5891
    %v5931 = vpack.c.b16 %v5916, %v5915
    %v5932 = vpack.c.b16 %v5918, %v5917
    %v5933 = vpack.c.b16 %v5920, %v5919
    %v5934 = vpack.c.b16 %v5922, %v5921
    %v5935 = vpack.c.b16 %v5924, %v5923
    %v5936 = vpack.c.b16 %v5926, %v5925
    %v5937 = vpack.c.b16 %v5928, %v5927
    %v5938 = vpack.c.b16 %v5930, %v5929
    %5947 = vmatprep.subr.bf16.mxu0 0
    %5948 = vmatpush1.bf16.msra.mxu0 %v5931
    %5949 = vmatprep.subr.bf16.mxu0 0
    %5950 = vmatpush1.bf16.msra.mxu0 %v5932
    %5951 = vmatprep.subr.bf16.mxu0 0
    %5952 = vmatpush1.bf16.msra.mxu0 %v5933
    %5953 = vmatprep.subr.bf16.mxu0 0
    %5954 = vmatpush1.bf16.msra.mxu0 %v5934
    %5955 = vmatprep.subr.bf16.mxu0 0
    %5956 = vmatpush1.bf16.msra.mxu0 %v5935
    %5957 = vmatprep.subr.bf16.mxu0 0
    %5958 = vmatpush1.bf16.msra.mxu0 %v5936
    %5959 = vmatprep.subr.bf16.mxu0 0
    %5960 = vmatpush1.bf16.msra.mxu0 %v5937
    %5961 = vmatprep.subr.bf16.mxu0 0
    %5962 = vmatpush1.bf16.msra.mxu0 %v5938
    %5963 = vmatprep.subr.bf16.mxu0 0
    %5964 = vmatpush1.bf16.msra.mxu0 0
    %5965 = vmatprep.subr.bf16.mxu0 0
    %5966 = vmatpush1.bf16.msra.mxu0 0
    %5967 = vmatprep.subr.bf16.mxu0 0
    %5968 = vmatpush1.bf16.msra.mxu0 0
    %5969 = vmatprep.subr.bf16.mxu0 0
    %5970 = vmatpush1.bf16.msra.mxu0 0
    %5971 = vmatprep.subr.bf16.mxu0 0
    %5972 = vmatpush1.bf16.msra.mxu0 0
    %5973 = vmatprep.subr.bf16.mxu0 0
    %5974 = vmatpush1.bf16.msra.mxu0 0
    %5975 = vmatprep.subr.bf16.mxu0 0
    %5976 = vmatpush1.bf16.msra.mxu0 0
    %5977 = vmatprep.subr.bf16.mxu0 0
    %5978 = vmatpush1.bf16.msra.mxu0 0
    %5979 = vmatprep.mubr.bf16.mxu0 0
    %5980 = vmatmul.mubr.bf16.gmra.mrb[0].mxu0 %v5875
    %v5981 = vpop.f32.mrb[0].mxu0
    %v5982 = vadd.f32 %v5897, %v5981
    %v5983 = vpop.f32.mrb[0].mxu0
    %v5984 = vpop.f32.mrb[0].mxu0
    %v5985 = vadd.f32 %v5897, %v5984
    %v5986 = vpop.f32.mrb[0].mxu0
    %5987 = vdwg.mxu0
    %v5988 = vmax.f32 %v5982, 0.0
    %v5989 = vmax.f32 %v5985, 0.0
    %v5990 = vpack.c.bf16 %v5989, %v5988
    %v5991 = vld [vmem:[#allocation24] sm:$0xf]
    %v5992 = vld [vmem:[#allocation24 + $0x4] sm:$0xf]
    %v5993 = vld [vmem:[#allocation24 + $0x8] sm:$0xf]
    %v5994 = vld [vmem:[#allocation24 + $0xc] sm:$0xf]
    %v5995 = vld [vmem:[#allocation24 + $0x10] sm:$0xf]
    %v5996 = vld [vmem:[#allocation24 + $0x14] sm:$0xf]
    %v5997 = vld [vmem:[#allocation24 + $0x18] sm:$0xf]
    %v5998 = vld [vmem:[#allocation24 + $0x1c] sm:$0xf]
    %v5999 = vld [vmem:[#allocation24 + $0x20] sm:$0xf]
    %v6000 = vld [vmem:[#allocation24 + $0x24] sm:$0xf]
    %v6001 = vld [vmem:[#allocation24 + $0x28] sm:$0xf]
    %v6002 = vld [vmem:[#allocation24 + $0x2c] sm:$0xf]
    %v6003 = vld [vmem:[#allocation24 + $0x30] sm:$0xf]
    %v6004 = vld [vmem:[#allocation24 + $0x34] sm:$0xf]
    %v6005 = vld [vmem:[#allocation24 + $0x38] sm:$0xf]
    %v6006 = vld [vmem:[#allocation24 + $0x3c] sm:$0xf]
    %v6007 = vld [vmem:[#allocation25] sm:$0x1]
    %v6009 = vlaneseq
    %v6010 = vshrl.u32 %v6009, 7
    %v6011 = vsub.s32 0, %v6010
    %v6012 = vrot.slane %v6007, %v6011
    %v6030 = vunpack.c.l.b16 %v5991
    %v6031 = vunpack.c.l.b16 %v5992
    %v6032 = vunpack.c.l.b16 %v5993
    %v6033 = vunpack.c.l.b16 %v5994
    %v6034 = vunpack.c.l.b16 %v5995
    %v6035 = vunpack.c.l.b16 %v5996
    %v6036 = vunpack.c.l.b16 %v5997
    %v6037 = vunpack.c.l.b16 %v5998
    %v6038 = vunpack.c.l.b16 %v5999
    %v6039 = vunpack.c.l.b16 %v6000
    %v6040 = vunpack.c.l.b16 %v6001
    %v6041 = vunpack.c.l.b16 %v6002
    %v6042 = vunpack.c.l.b16 %v6003
    %v6043 = vunpack.c.l.b16 %v6004
    %v6044 = vunpack.c.l.b16 %v6005
    %v6045 = vunpack.c.l.b16 %v6006
    %v6046 = vpack.c.b16 %v6031, %v6030
    %v6047 = vpack.c.b16 %v6033, %v6032
    %v6048 = vpack.c.b16 %v6035, %v6034
    %v6049 = vpack.c.b16 %v6037, %v6036
    %v6050 = vpack.c.b16 %v6039, %v6038
    %v6051 = vpack.c.b16 %v6041, %v6040
    %v6052 = vpack.c.b16 %v6043, %v6042
    %v6053 = vpack.c.b16 %v6045, %v6044
    %6062 = vmatprep.subr.bf16.mxu0 0
    %6063 = vmatpush1.bf16.msra.mxu0 %v6046
    %6064 = vmatprep.subr.bf16.mxu0 0
    %6065 = vmatpush1.bf16.msra.mxu0 %v6047
    %6066 = vmatprep.subr.bf16.mxu0 0
    %6067 = vmatpush1.bf16.msra.mxu0 %v6048
    %6068 = vmatprep.subr.bf16.mxu0 0
    %6069 = vmatpush1.bf16.msra.mxu0 %v6049
    %6070 = vmatprep.subr.bf16.mxu0 0
    %6071 = vmatpush1.bf16.msra.mxu0 %v6050
    %6072 = vmatprep.subr.bf16.mxu0 0
    %6073 = vmatpush1.bf16.msra.mxu0 %v6051
    %6074 = vmatprep.subr.bf16.mxu0 0
    %6075 = vmatpush1.bf16.msra.mxu0 %v6052
    %6076 = vmatprep.subr.bf16.mxu0 0
    %6077 = vmatpush1.bf16.msra.mxu0 %v6053
    %6078 = vmatprep.subr.bf16.mxu0 0
    %6079 = vmatpush1.bf16.msra.mxu0 0
    %6080 = vmatprep.subr.bf16.mxu0 0
    %6081 = vmatpush1.bf16.msra.mxu0 0
    %6082 = vmatprep.subr.bf16.mxu0 0
    %6083 = vmatpush1.bf16.msra.mxu0 0
    %6084 = vmatprep.subr.bf16.mxu0 0
    %6085 = vmatpush1.bf16.msra.mxu0 0
    %6086 = vmatprep.subr.bf16.mxu0 0
    %6087 = vmatpush1.bf16.msra.mxu0 0
    %6088 = vmatprep.subr.bf16.mxu0 0
    %6089 = vmatpush1.bf16.msra.mxu0 0
    %6090 = vmatprep.subr.bf16.mxu0 0
    %6091 = vmatpush1.bf16.msra.mxu0 0
    %6092 = vmatprep.subr.bf16.mxu0 0
    %6093 = vmatpush1.bf16.msra.mxu0 0
    %6094 = vmatprep.mubr.bf16.mxu0 0
    %6095 = vmatmul.mubr.bf16.gmra.mrb[0].mxu0 %v5990
    %v6096 = vpop.f32.mrb[0].mxu0
    %v6097 = vadd.f32 %v6012, %v6096
    %v6098 = vpop.f32.mrb[0].mxu0
    %v6099 = vpop.f32.mrb[0].mxu0
    %v6100 = vadd.f32 %v6012, %v6099
    %v6101 = vpop.f32.mrb[0].mxu0
    %6102 = vdwg.mxu0
    %6103 = vst [vmem:[#allocation27] sm:$0xff] %v6097
    %6104 = vst [vmem:[#allocation27 + $0x8] sm:$0xff] %v6100
    // Predicated region
    $region114: #{tpu_custom_call.1} parent=1 // pred_check
      _
    $region115: #{tpu_custom_call.1} parent=1 // pred_check_branch
      %6106 = sbr.rel (0) target = $region117
    $region116: #{tpu_custom_call.1} parent=1 // pred_region
      %s6108 = ssub.s32 256, 256
      %6109 = vsyncadd [#allocation6], %s6108
      %s6110 = sshll.u32 [#allocation27], 4
      %s6111 = int_to_ptr.vmem [resolvable:$true] %s6110
      %6116 = dma.vmem_to_hbm [thread:$0]  %s6111, 256, %s14, [#allocation6], 128, 128, 8
    $region117: #{tpu_custom_call.1} parent=1 // pred_fallthru
      _
    // Predicated region
    $region118: #{tpu_custom_call.1} parent=1 // pred_check
      _
    $region119: #{tpu_custom_call.1} parent=1 // pred_check_branch
      %6118 = sbr.rel (0) target = $region121
    $region120: #{tpu_custom_call.1} parent=1 // pred_region
      %6119 = dma.done [#allocation6], 256
    $region121: #{tpu_custom_call.1} parent=1 // pred_fallthru
      _
    %6120 = vsyncpa [#allocation5], 1
    %6121 = vsyncpa [#allocation8], 1
    %6122 = vsyncpa [#allocation11], 1
    %6123 = vsyncpa [#allocation14], 1
    %6124 = vsyncpa [#allocation17], 1
    %6125 = vsyncpa [#allocation20], 1
    %6126 = vsyncpa [#allocation23], 1
    %6127 = vsyncpa [#allocation26], 1
    %6128 = vsyncpa [#allocation6], 1

</llo_original>
